<compile_context>
chip_gen: v5e
topology: v5e:2x2
jax: 0.10.0
libtpu: 0.0.40
codegen_flags: <defaults>
</compile_context>

<pallas_src>
import functools

import jax
import jax.numpy as jnp
from jax.experimental import pallas as pl
from jax.experimental.pallas import tpu as pltpu

EPS = 1e-5


def _ceil_to(x, m):
    return ((x + m - 1) // m) * m


def _resblock_kernel(*refs, stride, Hp, Ho, Wo, has_proj, compute_dtype):
    """One grid step = one batch tile.  Fuses conv3x3 -> BN -> ReLU ->
    conv3x3 -> BN, plus (optional 1x1 conv + BN) shortcut, add, ReLU."""
    if has_proj:
        (x_ref, w1_ref, s1_ref, b1_ref, w2_ref, s2_ref, b2_ref,
         wsc_ref, ssc_ref, bsc_ref, o_ref, pad_ref, acc_ref) = refs
    else:
        (x_ref, w1_ref, s1_ref, b1_ref, w2_ref, s2_ref, b2_ref,
         o_ref, pad_ref, acc_ref) = refs
        wsc_ref = ssc_ref = bsc_ref = None

    s = stride
    Bt = o_ref.shape[0]
    CPo = o_ref.shape[-1]
    HWo = Ho * Wo
    M = Bt * HWo

    # Clear the 1-wide zero-padding border of the conv2 input scratch.  The
    # interior is fully overwritten below, so only the border needs clearing;
    # done per step (not once) so it stays correct under megacore "parallel"
    # grid partitioning where program_id 0 may never run on a given core.
    pad_ref[:, 0:1, :, :] = jnp.zeros((Bt, 1, Wo + 2, CPo), jnp.float32)
    pad_ref[:, Ho + 1:Ho + 2, :, :] = jnp.zeros((Bt, 1, Wo + 2, CPo), jnp.float32)
    pad_ref[:, 1:Ho + 1, 0:1, :] = jnp.zeros((Bt, Ho, 1, CPo), jnp.float32)
    pad_ref[:, 1:Ho + 1, Wo + 1:Wo + 2, :] = jnp.zeros((Bt, Ho, 1, CPo), jnp.float32)

    # ---- conv1: 3x3, stride s, as nine shifted-tap matmuls with f32
    # accumulation in a VMEM scratch (stride handled via the phase layout of
    # x_ref: phase p = (kh%s)*s + (kw%s) occupies rows [p*Hp, (p+1)*Hp)).
    for kh in range(3):
        for kw in range(3):
            p = (kh % s) * s + (kw % s)
            r0 = p * Hp + kh // s
            c0 = kw // s
            tap = x_ref[:, r0:r0 + Ho, c0:c0 + Wo, :]
            tap = tap.reshape(M, tap.shape[-1]).astype(compute_dtype)
            contrib = jnp.dot(tap, w1_ref[kh * 3 + kw],
                              preferred_element_type=jnp.float32)
            if kh == 0 and kw == 0:
                acc_ref[...] = contrib
            else:
                acc_ref[...] += contrib

    # BN1 (folded per-channel scale/bias) + ReLU, written into the padded
    # conv2 input scratch (borders stay zero).
    y1 = jnp.maximum(acc_ref[...] * s1_ref[...] + b1_ref[...], 0.0)
    pad_ref[:, 1:Ho + 1, 1:Wo + 1, :] = y1.reshape(Bt, Ho, Wo, CPo)

    # ---- conv2: 3x3, stride 1, nine shifted taps from the padded scratch.
    # TODO(synk): the kw taps are sublane-offset slices; a pltpu.roll-based
    # aligned-shift variant (XLU slot) is a possible further optimization.
    for kh in range(3):
        for kw in range(3):
            tap = pad_ref[:, kh:kh + Ho, kw:kw + Wo, :]
            tap = tap.reshape(M, CPo).astype(compute_dtype)
            contrib = jnp.dot(tap, w2_ref[kh * 3 + kw],
                              preferred_element_type=jnp.float32)
            if kh == 0 and kw == 0:
                acc_ref[...] = contrib
            else:
                acc_ref[...] += contrib
    y2 = acc_ref[...] * s2_ref[...] + b2_ref[...]

    # ---- shortcut: strided 1x1 conv + BN, or identity (stride 1, Cin==Cout).
    # The strided (unpadded) sample x[:, ::s, ::s, :] lives in phase (1%s, 1%s).
    ph = 1 % s
    p_sc = ph * s + ph
    rs = p_sc * Hp + (1 - ph) // s
    cs = (1 - ph) // s
    sc_tap = x_ref[:, rs:rs + Ho, cs:cs + Wo, :]
    sc_tap = sc_tap.reshape(M, sc_tap.shape[-1])
    if has_proj:
        sc = jnp.dot(sc_tap.astype(compute_dtype), wsc_ref[...],
                     preferred_element_type=jnp.float32)
        sc = sc * ssc_ref[...] + bsc_ref[...]
    else:
        sc = sc_tap  # identity; padded channels are zero on both branches.

    o_ref[...] = jnp.maximum(y2 + sc, 0.0).reshape(Bt, HWo, CPo).astype(o_ref.dtype)


def residual_block_low(x_nchw, params, *, stride=1,
                       compute_dtype=jnp.float32, batch_tile=None):
    """Pallas implementation of ResidualBlockLow.forward.  Input/output NCHW."""
    N, Cin, H, W = x_nchw.shape
    Cout = params["w1"].shape[0]
    s = int(stride)
    has_proj = (s != 1) or (Cin != Cout)
    Ho = (H + 2 - 3) // s + 1
    Wo = (W + 2 - 3) // s + 1
    HWo = Ho * Wo
    CPi = _ceil_to(Cin, 128)   # lane-dense (padded) channels
    CPo = _ceil_to(Cout, 128)

    # Batch tile: aim for >= ~512 matmul rows per grid step.
    if batch_tile is None:
        batch_tile = min(N, max(1, 512 // max(HWo, 1)))
    Bt = int(batch_tile)
    Np = _ceil_to(N, Bt)

    # NHWC, spatial zero-pad 1, channel pad to CPi, batch pad to Np.
    x = jnp.transpose(x_nchw, (0, 2, 3, 1)).astype(jnp.float32)
    x = jnp.pad(x, ((0, Np - N), (1, 1), (1, 1), (0, CPi - Cin)))

    # Stride-phase decomposition of the padded input, concatenated along H:
    # phase (ph, pw) holds xpad[ph::s, pw::s].  Conv taps then become plain
    # static shifted windows inside the kernel (no 9x im2col blow-up); total
    # bytes ~= the padded input itself.
    Hp = Ho + -(-2 // s)
    Wp = Wo + -(-2 // s)
    phases = []
    for ph in range(s):
        for pw in range(s):
            sub = x[:, ph::s, pw::s, :][:, :Hp, :Wp, :]
            sub = jnp.pad(sub, ((0, 0), (0, Hp - sub.shape[1]),
                                (0, Wp - sub.shape[2]), (0, 0)))
            phases.append(sub)
    xph = jnp.concatenate(phases, axis=1)          # (Np, s*s*Hp, Wp, CPi)

    def fold_bn(g, b, m, v):
        sc = g / jnp.sqrt(v + EPS)
        bi = b - m * sc
        sc = jnp.pad(sc, (0, CPo - sc.shape[0])).reshape(1, CPo)
        bi = jnp.pad(bi, (0, CPo - bi.shape[0])).reshape(1, CPo)
        return sc, bi

    s1v, b1v = fold_bn(params["g1"], params["b1"], params["m1"], params["v1"])
    s2v, b2v = fold_bn(params["g2"], params["b2"], params["m2"], params["v2"])

    w1m = jnp.transpose(params["w1"], (2, 3, 1, 0)).reshape(9, Cin, Cout)
    w1m = jnp.pad(w1m, ((0, 0), (0, CPi - Cin), (0, CPo - Cout))).astype(compute_dtype)
    w2m = jnp.transpose(params["w2"], (2, 3, 1, 0)).reshape(9, Cout, Cout)
    w2m = jnp.pad(w2m, ((0, 0), (0, CPo - Cout), (0, CPo - Cout))).astype(compute_dtype)

    full2 = lambda n: (0, 0)
    full3 = lambda n: (0, 0, 0)
    in_specs = [
        pl.BlockSpec((Bt, s * s * Hp, Wp, CPi), lambda n: (n, 0, 0, 0)),
        pl.BlockSpec((9, CPi, CPo), full3),        # conv1 taps
        pl.BlockSpec((1, CPo), full2),             # BN1 scale
        pl.BlockSpec((1, CPo), full2),             # BN1 bias
        pl.BlockSpec((9, CPo, CPo), full3),        # conv2 taps
        pl.BlockSpec((1, CPo), full2),             # BN2 scale
        pl.BlockSpec((1, CPo), full2),             # BN2 bias
    ]
    args = [xph, w1m, s1v, b1v, w2m, s2v, b2v]

    if has_proj:
        sscv, bscv = fold_bn(params["gsc"], params["bsc"],
                             params["msc"], params["vsc"])
        wscm = jnp.transpose(params["wsc"][:, :, 0, 0], (1, 0))   # (Cin, Cout)
        wscm = jnp.pad(wscm, ((0, CPi - Cin), (0, CPo - Cout))).astype(compute_dtype)
        in_specs += [pl.BlockSpec((CPi, CPo), full2),
                     pl.BlockSpec((1, CPo), full2),
                     pl.BlockSpec((1, CPo), full2)]
        args += [wscm, sscv, bscv]

    kernel = functools.partial(
        _resblock_kernel, stride=s, Hp=Hp, Ho=Ho, Wo=Wo,
        has_proj=has_proj, compute_dtype=compute_dtype)

    out = pl.pallas_call(
        kernel,
        out_shape=jax.ShapeDtypeStruct((Np, HWo, CPo), jnp.float32),
        grid_spec=pltpu.PrefetchScalarGridSpec(
            num_scalar_prefetch=0,
            grid=(Np // Bt,),
            in_specs=in_specs,
            out_specs=pl.BlockSpec((Bt, HWo, CPo), lambda n: (n, 0, 0)),
            scratch_shapes=[
                pltpu.VMEM((Bt, Ho + 2, Wo + 2, CPo), jnp.float32),  # conv2 pad
                pltpu.VMEM((Bt * HWo, CPo), jnp.float32),            # accumulator
            ]),
        compiler_params=pltpu.CompilerParams(
            dimension_semantics=("parallel",),
            vmem_limit_bytes=48 * 1024 * 1024),
    )(*args)

    out = out[:N, :, :Cout].reshape(N, Ho, Wo, Cout)
    return jnp.transpose(out, (0, 3, 1, 2))        # NCHW


def residual_block_low_ref(x, P, *, stride=1):
    """Pure-JAX (XLA) reference with the same eval-mode BN semantics."""
    Cout, Cin = P["w1"].shape[0], P["w1"].shape[1]
    has_proj = (stride != 1) or (Cin != Cout)

    def conv(x, w, s, p):
        return jax.lax.conv_general_dilated(
            x, w, (s, s), [(p, p), (p, p)],
            dimension_numbers=("NCHW", "OIHW", "NCHW"),
            precision=jax.lax.Precision.HIGHEST)

    def bn(x, g, b, m, v):
        r = lambda a: a.reshape(1, -1, 1, 1)
        return (x - r(m)) / jnp.sqrt(r(v) + EPS) * r(g) + r(b)

    out = conv(x, P["w1"], stride, 1)
    out = jnp.maximum(bn(out, P["g1"], P["b1"], P["m1"], P["v1"]), 0.0)
    out = conv(out, P["w2"], 1, 1)
    out = bn(out, P["g2"], P["b2"], P["m2"], P["v2"])
    sc = x
    if has_proj:
        sc = conv(x, P["wsc"], stride, 0)
        sc = bn(sc, P["gsc"], P["bsc"], P["msc"], P["vsc"])
    return jnp.maximum(out + sc, 0.0)


def init_params(key, Cin, Cout, has_proj):
    ks = jax.random.split(key, 16)
    P = {
        "w1": 0.2 * jax.random.normal(ks[0], (Cout, Cin, 3, 3), jnp.float32),
        "g1": 1.0 + 0.1 * jax.random.normal(ks[1], (Cout,), jnp.float32),
        "b1": 0.1 * jax.random.normal(ks[2], (Cout,), jnp.float32),
        "m1": 0.1 * jax.random.normal(ks[3], (Cout,), jnp.float32),
        "v1": jax.random.uniform(ks[4], (Cout,), jnp.float32, 0.5, 1.5),
        "w2": 0.2 * jax.random.normal(ks[5], (Cout, Cout, 3, 3), jnp.float32),
        "g2": 1.0 + 0.1 * jax.random.normal(ks[6], (Cout,), jnp.float32),
        "b2": 0.1 * jax.random.normal(ks[7], (Cout,), jnp.float32),
        "m2": 0.1 * jax.random.normal(ks[8], (Cout,), jnp.float32),
        "v2": jax.random.uniform(ks[9], (Cout,), jnp.float32, 0.5, 1.5),
    }
    if has_proj:
        P.update({
            "wsc": 0.2 * jax.random.normal(ks[10], (Cout, Cin, 1, 1), jnp.float32),
            "gsc": 1.0 + 0.1 * jax.random.normal(ks[11], (Cout,), jnp.float32),
            "bsc": 0.1 * jax.random.normal(ks[12], (Cout,), jnp.float32),
            "msc": 0.1 * jax.random.normal(ks[13], (Cout,), jnp.float32),
            "vsc": jax.random.uniform(ks[14], (Cout,), jnp.float32, 0.5, 1.5),
        })
    return P


if __name__ == "__main__":
    base_key = jax.random.PRNGKey(0)

    def run_case(idx, N, Cin, Cout, H, W, stride, compute_dtype, tol):
        kx, kp = jax.random.split(jax.random.fold_in(base_key, idx))
        has_proj = (stride != 1) or (Cin != Cout)
        x = jax.random.normal(kx, (N, Cin, H, W), jnp.float32)
        params = init_params(kp, Cin, Cout, has_proj)
        out = jax.block_until_ready(
            residual_block_low(x, params, stride=stride,
                               compute_dtype=compute_dtype))
        ref = residual_block_low_ref(x, params, stride=stride)
        assert out.shape == ref.shape, (out.shape, ref.shape)
        err = float(jnp.max(jnp.abs(out - ref)))
        assert err < tol, f"case {idx}: max abs err {err} >= {tol}"

    # primary: stride-1 block with projection shortcut (Cin != Cout), f32 dots.
    run_case(0, N=2, Cin=4, Cout=8, H=16, W=16, stride=1,
             compute_dtype=jnp.float32, tol=2e-2)
    # identity-shortcut block (Cin == Cout, stride 1), f32 dots.
    run_case(1, N=2, Cin=8, Cout=8, H=16, W=16, stride=1,
             compute_dtype=jnp.float32, tol=2e-2)
    # strided block with bf16 matmul operands (f32 accumulation); looser tol.
    run_case(2, N=2, Cin=4, Cout=8, H=16, W=16, stride=2,
             compute_dtype=jnp.bfloat16, tol=1.5e-1)

    print("KERNEL_OK")
</pallas_src>

<mosaic_0001>
module attributes {stable_mosaic.version = 11 : i64} {
  func.func @_resblock_kernel(%arg0: i32, %arg1: memref<2x18x18x128xf32, #tpu.memory_space<vmem>>, %arg2: memref<9x128x128xf32, #tpu.memory_space<vmem>>, %arg3: memref<1x128xf32, #tpu.memory_space<vmem>>, %arg4: memref<1x128xf32, #tpu.memory_space<vmem>>, %arg5: memref<9x128x128xf32, #tpu.memory_space<vmem>>, %arg6: memref<1x128xf32, #tpu.memory_space<vmem>>, %arg7: memref<1x128xf32, #tpu.memory_space<vmem>>, %arg8: memref<128x128xf32, #tpu.memory_space<vmem>>, %arg9: memref<1x128xf32, #tpu.memory_space<vmem>>, %arg10: memref<1x128xf32, #tpu.memory_space<vmem>>, %arg11: memref<2x256x128xf32, #tpu.memory_space<vmem>>, %arg12: memref<2x18x18x128xf32, #tpu.memory_space<vmem>>, %arg13: memref<512x128xf32, #tpu.memory_space<vmem>>) attributes {dimension_semantics = [#tpu.dimension_semantics<parallel>], iteration_bounds = array<i64: 1>, scalar_prefetch = 0 : i64, scratch_operands = 2 : i64, tpu.core_type = #tpu.core_type<tc>, window_params = [{transform_indices = @transform_0, window_bounds = array<i64: 2, 18, 18, 128>}, {pipeline_mode = #tpu.pipeline_mode<synchronous>, transform_indices = @transform_1, window_bounds = array<i64: 9, 128, 128>}, {pipeline_mode = #tpu.pipeline_mode<synchronous>, transform_indices = @transform_2, window_bounds = array<i64: 1, 128>}, {pipeline_mode = #tpu.pipeline_mode<synchronous>, transform_indices = @transform_3, window_bounds = array<i64: 1, 128>}, {pipeline_mode = #tpu.pipeline_mode<synchronous>, transform_indices = @transform_4, window_bounds = array<i64: 9, 128, 128>}, {pipeline_mode = #tpu.pipeline_mode<synchronous>, transform_indices = @transform_5, window_bounds = array<i64: 1, 128>}, {pipeline_mode = #tpu.pipeline_mode<synchronous>, transform_indices = @transform_6, window_bounds = array<i64: 1, 128>}, {pipeline_mode = #tpu.pipeline_mode<synchronous>, transform_indices = @transform_7, window_bounds = array<i64: 128, 128>}, {pipeline_mode = #tpu.pipeline_mode<synchronous>, transform_indices = @transform_8, window_bounds = array<i64: 1, 128>}, {pipeline_mode = #tpu.pipeline_mode<synchronous>, transform_indices = @transform_9, window_bounds = array<i64: 1, 128>}, {transform_indices = @transform_10, window_bounds = array<i64: 2, 256, 128>}]} {
    %cst = arith.constant 0.000000e+00 : f32
    %0 = vector.broadcast %cst : f32 to vector<2x1x18x128xf32>
    %c0 = arith.constant 0 : index
    %c0_0 = arith.constant 0 : index
    %c0_1 = arith.constant 0 : index
    %c0_2 = arith.constant 0 : index
    %1 = vector.load %arg12[%c0, %c0_0, %c0_1, %c0_2] : memref<2x18x18x128xf32, #tpu.memory_space<vmem>>, vector<2x1x18x128xf32>
    tpu.vector_store %arg12[%c0, %c0_0, %c0_1, %c0_2], %0 {strides = array<i32>} : memref<2x18x18x128xf32, #tpu.memory_space<vmem>>, vector<2x1x18x128xf32>,
    %cst_3 = arith.constant 0.000000e+00 : f32
    %2 = vector.broadcast %cst_3 : f32 to vector<2x1x18x128xf32>
    %c0_4 = arith.constant 0 : index
    %c17 = arith.constant 17 : index
    %c0_5 = arith.constant 0 : index
    %c0_6 = arith.constant 0 : index
    %3 = vector.load %arg12[%c0_4, %c17, %c0_5, %c0_6] : memref<2x18x18x128xf32, #tpu.memory_space<vmem>>, vector<2x1x18x128xf32>
    tpu.vector_store %arg12[%c0_4, %c17, %c0_5, %c0_6], %2 {strides = array<i32>} : memref<2x18x18x128xf32, #tpu.memory_space<vmem>>, vector<2x1x18x128xf32>,
    %cst_7 = arith.constant 0.000000e+00 : f32
    %4 = vector.broadcast %cst_7 : f32 to vector<2x16x1x128xf32>
    %c0_8 = arith.constant 0 : index
    %c1 = arith.constant 1 : index
    %c0_9 = arith.constant 0 : index
    %c0_10 = arith.constant 0 : index
    %5 = vector.load %arg12[%c0_8, %c1, %c0_9, %c0_10] : memref<2x18x18x128xf32, #tpu.memory_space<vmem>>, vector<2x16x1x128xf32>
    tpu.vector_store %arg12[%c0_8, %c1, %c0_9, %c0_10], %4 {strides = array<i32>} : memref<2x18x18x128xf32, #tpu.memory_space<vmem>>, vector<2x16x1x128xf32>,
    %cst_11 = arith.constant 0.000000e+00 : f32
    %6 = vector.broadcast %cst_11 : f32 to vector<2x16x1x128xf32>
    %c0_12 = arith.constant 0 : index
    %c1_13 = arith.constant 1 : index
    %c17_14 = arith.constant 17 : index
    %c0_15 = arith.constant 0 : index
    %7 = vector.load %arg12[%c0_12, %c1_13, %c17_14, %c0_15] : memref<2x18x18x128xf32, #tpu.memory_space<vmem>>, vector<2x16x1x128xf32>
    tpu.vector_store %arg12[%c0_12, %c1_13, %c17_14, %c0_15], %6 {strides = array<i32>} : memref<2x18x18x128xf32, #tpu.memory_space<vmem>>, vector<2x16x1x128xf32>,
    %c0_16 = arith.constant 0 : index
    %c0_17 = arith.constant 0 : index
    %c0_18 = arith.constant 0 : index
    %c0_19 = arith.constant 0 : index
    %8 = vector.load %arg1[%c0_16, %c0_17, %c0_18, %c0_19] : memref<2x18x18x128xf32, #tpu.memory_space<vmem>>, vector<2x16x16x128xf32>
    %9 = vector.shape_cast %8 : vector<2x16x16x128xf32> to vector<512x128xf32>
    %c0_20 = arith.constant 0 : index
    %c0_21 = arith.constant 0 : index
    %c0_22 = arith.constant 0 : index
    %10 = vector.load %arg2[%c0_20, %c0_21, %c0_22] : memref<9x128x128xf32, #tpu.memory_space<vmem>>, vector<1x128x128xf32>
    %11 = vector.shape_cast %10 : vector<1x128x128xf32> to vector<128x128xf32>
    %cst_23 = arith.constant dense<0.000000e+00> : vector<512x128xf32>
    %12 = tpu.matmul %9, %11, %cst_23 {dimension_numbers = #tpu.dot_dimension_numbers<[1], [0], [0], [1], [0, 0, 1, 1], [], []>} : vector<512x128xf32>, vector<128x128xf32>, vector<512x128xf32> -> vector<512x128xf32>
    %c0_24 = arith.constant 0 : index
    %c0_25 = arith.constant 0 : index
    %13 = vector.load %arg13[%c0_24, %c0_25] : memref<512x128xf32, #tpu.memory_space<vmem>>, vector<512x128xf32>
    tpu.vector_store %arg13[%c0_24, %c0_25], %12 {strides = array<i32>} : memref<512x128xf32, #tpu.memory_space<vmem>>, vector<512x128xf32>,
    %c0_26 = arith.constant 0 : index
    %c0_27 = arith.constant 0 : index
    %c1_28 = arith.constant 1 : index
    %c0_29 = arith.constant 0 : index
    %14 = vector.load %arg1[%c0_26, %c0_27, %c1_28, %c0_29] : memref<2x18x18x128xf32, #tpu.memory_space<vmem>>, vector<2x16x16x128xf32>
    %15 = vector.shape_cast %14 : vector<2x16x16x128xf32> to vector<512x128xf32>
    %c1_30 = arith.constant 1 : index
    %c0_31 = arith.constant 0 : index
    %c0_32 = arith.constant 0 : index
    %16 = vector.load %arg2[%c1_30, %c0_31, %c0_32] : memref<9x128x128xf32, #tpu.memory_space<vmem>>, vector<1x128x128xf32>
    %17 = vector.shape_cast %16 : vector<1x128x128xf32> to vector<128x128xf32>
    %cst_33 = arith.constant dense<0.000000e+00> : vector<512x128xf32>
    %18 = tpu.matmul %15, %17, %cst_33 {dimension_numbers = #tpu.dot_dimension_numbers<[1], [0], [0], [1], [0, 0, 1, 1], [], []>} : vector<512x128xf32>, vector<128x128xf32>, vector<512x128xf32> -> vector<512x128xf32>
    %c0_34 = arith.constant 0 : index
    %c0_35 = arith.constant 0 : index
    %19 = vector.load %arg13[%c0_34, %c0_35] : memref<512x128xf32, #tpu.memory_space<vmem>>, vector<512x128xf32>
    %20 = arith.addf %19, %18 : vector<512x128xf32>
    %c0_36 = arith.constant 0 : index
    %c0_37 = arith.constant 0 : index
    %21 = vector.load %arg13[%c0_36, %c0_37] : memref<512x128xf32, #tpu.memory_space<vmem>>, vector<512x128xf32>
    tpu.vector_store %arg13[%c0_36, %c0_37], %20 {strides = array<i32>} : memref<512x128xf32, #tpu.memory_space<vmem>>, vector<512x128xf32>,
    %c0_38 = arith.constant 0 : index
    %c0_39 = arith.constant 0 : index
    %c2 = arith.constant 2 : index
    %c0_40 = arith.constant 0 : index
    %22 = vector.load %arg1[%c0_38, %c0_39, %c2, %c0_40] : memref<2x18x18x128xf32, #tpu.memory_space<vmem>>, vector<2x16x16x128xf32>
    %23 = vector.shape_cast %22 : vector<2x16x16x128xf32> to vector<512x128xf32>
    %c2_41 = arith.constant 2 : index
    %c0_42 = arith.constant 0 : index
    %c0_43 = arith.constant 0 : index
    %24 = vector.load %arg2[%c2_41, %c0_42, %c0_43] : memref<9x128x128xf32, #tpu.memory_space<vmem>>, vector<1x128x128xf32>
    %25 = vector.shape_cast %24 : vector<1x128x128xf32> to vector<128x128xf32>
    %cst_44 = arith.constant dense<0.000000e+00> : vector<512x128xf32>
    %26 = tpu.matmul %23, %25, %cst_44 {dimension_numbers = #tpu.dot_dimension_numbers<[1], [0], [0], [1], [0, 0, 1, 1], [], []>} : vector<512x128xf32>, vector<128x128xf32>, vector<512x128xf32> -> vector<512x128xf32>
    %c0_45 = arith.constant 0 : index
    %c0_46 = arith.constant 0 : index
    %27 = vector.load %arg13[%c0_45, %c0_46] : memref<512x128xf32, #tpu.memory_space<vmem>>, vector<512x128xf32>
    %28 = arith.addf %27, %26 : vector<512x128xf32>
    %c0_47 = arith.constant 0 : index
    %c0_48 = arith.constant 0 : index
    %29 = vector.load %arg13[%c0_47, %c0_48] : memref<512x128xf32, #tpu.memory_space<vmem>>, vector<512x128xf32>
    tpu.vector_store %arg13[%c0_47, %c0_48], %28 {strides = array<i32>} : memref<512x128xf32, #tpu.memory_space<vmem>>, vector<512x128xf32>,
    %c0_49 = arith.constant 0 : index
    %c1_50 = arith.constant 1 : index
    %c0_51 = arith.constant 0 : index
    %c0_52 = arith.constant 0 : index
    %30 = vector.load %arg1[%c0_49, %c1_50, %c0_51, %c0_52] : memref<2x18x18x128xf32, #tpu.memory_space<vmem>>, vector<2x16x16x128xf32>
    %31 = vector.shape_cast %30 : vector<2x16x16x128xf32> to vector<512x128xf32>
    %c3 = arith.constant 3 : index
    %c0_53 = arith.constant 0 : index
    %c0_54 = arith.constant 0 : index
    %32 = vector.load %arg2[%c3, %c0_53, %c0_54] : memref<9x128x128xf32, #tpu.memory_space<vmem>>, vector<1x128x128xf32>
    %33 = vector.shape_cast %32 : vector<1x128x128xf32> to vector<128x128xf32>
    %cst_55 = arith.constant dense<0.000000e+00> : vector<512x128xf32>
    %34 = tpu.matmul %31, %33, %cst_55 {dimension_numbers = #tpu.dot_dimension_numbers<[1], [0], [0], [1], [0, 0, 1, 1], [], []>} : vector<512x128xf32>, vector<128x128xf32>, vector<512x128xf32> -> vector<512x128xf32>
    %c0_56 = arith.constant 0 : index
    %c0_57 = arith.constant 0 : index
    %35 = vector.load %arg13[%c0_56, %c0_57] : memref<512x128xf32, #tpu.memory_space<vmem>>, vector<512x128xf32>
    %36 = arith.addf %35, %34 : vector<512x128xf32>
    %c0_58 = arith.constant 0 : index
    %c0_59 = arith.constant 0 : index
    %37 = vector.load %arg13[%c0_58, %c0_59] : memref<512x128xf32, #tpu.memory_space<vmem>>, vector<512x128xf32>
    tpu.vector_store %arg13[%c0_58, %c0_59], %36 {strides = array<i32>} : memref<512x128xf32, #tpu.memory_space<vmem>>, vector<512x128xf32>,
    %c0_60 = arith.constant 0 : index
    %c1_61 = arith.constant 1 : index
    %c1_62 = arith.constant 1 : index
    %c0_63 = arith.constant 0 : index
    %38 = vector.load %arg1[%c0_60, %c1_61, %c1_62, %c0_63] : memref<2x18x18x128xf32, #tpu.memory_space<vmem>>, vector<2x16x16x128xf32>
    %39 = vector.shape_cast %38 : vector<2x16x16x128xf32> to vector<512x128xf32>
    %c4 = arith.constant 4 : index
    %c0_64 = arith.constant 0 : index
    %c0_65 = arith.constant 0 : index
    %40 = vector.load %arg2[%c4, %c0_64, %c0_65] : memref<9x128x128xf32, #tpu.memory_space<vmem>>, vector<1x128x128xf32>
    %41 = vector.shape_cast %40 : vector<1x128x128xf32> to vector<128x128xf32>
    %cst_66 = arith.constant dense<0.000000e+00> : vector<512x128xf32>
    %42 = tpu.matmul %39, %41, %cst_66 {dimension_numbers = #tpu.dot_dimension_numbers<[1], [0], [0], [1], [0, 0, 1, 1], [], []>} : vector<512x128xf32>, vector<128x128xf32>, vector<512x128xf32> -> vector<512x128xf32>
    %c0_67 = arith.constant 0 : index
    %c0_68 = arith.constant 0 : index
    %43 = vector.load %arg13[%c0_67, %c0_68] : memref<512x128xf32, #tpu.memory_space<vmem>>, vector<512x128xf32>
    %44 = arith.addf %43, %42 : vector<512x128xf32>
    %c0_69 = arith.constant 0 : index
    %c0_70 = arith.constant 0 : index
    %45 = vector.load %arg13[%c0_69, %c0_70] : memref<512x128xf32, #tpu.memory_space<vmem>>, vector<512x128xf32>
    tpu.vector_store %arg13[%c0_69, %c0_70], %44 {strides = array<i32>} : memref<512x128xf32, #tpu.memory_space<vmem>>, vector<512x128xf32>,
    %c0_71 = arith.constant 0 : index
    %c1_72 = arith.constant 1 : index
    %c2_73 = arith.constant 2 : index
    %c0_74 = arith.constant 0 : index
    %46 = vector.load %arg1[%c0_71, %c1_72, %c2_73, %c0_74] : memref<2x18x18x128xf32, #tpu.memory_space<vmem>>, vector<2x16x16x128xf32>
    %47 = vector.shape_cast %46 : vector<2x16x16x128xf32> to vector<512x128xf32>
    %c5 = arith.constant 5 : index
    %c0_75 = arith.constant 0 : index
    %c0_76 = arith.constant 0 : index
    %48 = vector.load %arg2[%c5, %c0_75, %c0_76] : memref<9x128x128xf32, #tpu.memory_space<vmem>>, vector<1x128x128xf32>
    %49 = vector.shape_cast %48 : vector<1x128x128xf32> to vector<128x128xf32>
    %cst_77 = arith.constant dense<0.000000e+00> : vector<512x128xf32>
    %50 = tpu.matmul %47, %49, %cst_77 {dimension_numbers = #tpu.dot_dimension_numbers<[1], [0], [0], [1], [0, 0, 1, 1], [], []>} : vector<512x128xf32>, vector<128x128xf32>, vector<512x128xf32> -> vector<512x128xf32>
    %c0_78 = arith.constant 0 : index
    %c0_79 = arith.constant 0 : index
    %51 = vector.load %arg13[%c0_78, %c0_79] : memref<512x128xf32, #tpu.memory_space<vmem>>, vector<512x128xf32>
    %52 = arith.addf %51, %50 : vector<512x128xf32>
    %c0_80 = arith.constant 0 : index
    %c0_81 = arith.constant 0 : index
    %53 = vector.load %arg13[%c0_80, %c0_81] : memref<512x128xf32, #tpu.memory_space<vmem>>, vector<512x128xf32>
    tpu.vector_store %arg13[%c0_80, %c0_81], %52 {strides = array<i32>} : memref<512x128xf32, #tpu.memory_space<vmem>>, vector<512x128xf32>,
    %c0_82 = arith.constant 0 : index
    %c2_83 = arith.constant 2 : index
    %c0_84 = arith.constant 0 : index
    %c0_85 = arith.constant 0 : index
    %54 = vector.load %arg1[%c0_82, %c2_83, %c0_84, %c0_85] : memref<2x18x18x128xf32, #tpu.memory_space<vmem>>, vector<2x16x16x128xf32>
    %55 = vector.shape_cast %54 : vector<2x16x16x128xf32> to vector<512x128xf32>
    %c6 = arith.constant 6 : index
    %c0_86 = arith.constant 0 : index
    %c0_87 = arith.constant 0 : index
    %56 = vector.load %arg2[%c6, %c0_86, %c0_87] : memref<9x128x128xf32, #tpu.memory_space<vmem>>, vector<1x128x128xf32>
    %57 = vector.shape_cast %56 : vector<1x128x128xf32> to vector<128x128xf32>
    %cst_88 = arith.constant dense<0.000000e+00> : vector<512x128xf32>
    %58 = tpu.matmul %55, %57, %cst_88 {dimension_numbers = #tpu.dot_dimension_numbers<[1], [0], [0], [1], [0, 0, 1, 1], [], []>} : vector<512x128xf32>, vector<128x128xf32>, vector<512x128xf32> -> vector<512x128xf32>
    %c0_89 = arith.constant 0 : index
    %c0_90 = arith.constant 0 : index
    %59 = vector.load %arg13[%c0_89, %c0_90] : memref<512x128xf32, #tpu.memory_space<vmem>>, vector<512x128xf32>
    %60 = arith.addf %59, %58 : vector<512x128xf32>
    %c0_91 = arith.constant 0 : index
    %c0_92 = arith.constant 0 : index
    %61 = vector.load %arg13[%c0_91, %c0_92] : memref<512x128xf32, #tpu.memory_space<vmem>>, vector<512x128xf32>
    tpu.vector_store %arg13[%c0_91, %c0_92], %60 {strides = array<i32>} : memref<512x128xf32, #tpu.memory_space<vmem>>, vector<512x128xf32>,
    %c0_93 = arith.constant 0 : index
    %c2_94 = arith.constant 2 : index
    %c1_95 = arith.constant 1 : index
    %c0_96 = arith.constant 0 : index
    %62 = vector.load %arg1[%c0_93, %c2_94, %c1_95, %c0_96] : memref<2x18x18x128xf32, #tpu.memory_space<vmem>>, vector<2x16x16x128xf32>
    %63 = vector.shape_cast %62 : vector<2x16x16x128xf32> to vector<512x128xf32>
    %c7 = arith.constant 7 : index
    %c0_97 = arith.constant 0 : index
    %c0_98 = arith.constant 0 : index
    %64 = vector.load %arg2[%c7, %c0_97, %c0_98] : memref<9x128x128xf32, #tpu.memory_space<vmem>>, vector<1x128x128xf32>
    %65 = vector.shape_cast %64 : vector<1x128x128xf32> to vector<128x128xf32>
    %cst_99 = arith.constant dense<0.000000e+00> : vector<512x128xf32>
    %66 = tpu.matmul %63, %65, %cst_99 {dimension_numbers = #tpu.dot_dimension_numbers<[1], [0], [0], [1], [0, 0, 1, 1], [], []>} : vector<512x128xf32>, vector<128x128xf32>, vector<512x128xf32> -> vector<512x128xf32>
    %c0_100 = arith.constant 0 : index
    %c0_101 = arith.constant 0 : index
    %67 = vector.load %arg13[%c0_100, %c0_101] : memref<512x128xf32, #tpu.memory_space<vmem>>, vector<512x128xf32>
    %68 = arith.addf %67, %66 : vector<512x128xf32>
    %c0_102 = arith.constant 0 : index
    %c0_103 = arith.constant 0 : index
    %69 = vector.load %arg13[%c0_102, %c0_103] : memref<512x128xf32, #tpu.memory_space<vmem>>, vector<512x128xf32>
    tpu.vector_store %arg13[%c0_102, %c0_103], %68 {strides = array<i32>} : memref<512x128xf32, #tpu.memory_space<vmem>>, vector<512x128xf32>,
    %c0_104 = arith.constant 0 : index
    %c2_105 = arith.constant 2 : index
    %c2_106 = arith.constant 2 : index
    %c0_107 = arith.constant 0 : index
    %70 = vector.load %arg1[%c0_104, %c2_105, %c2_106, %c0_107] : memref<2x18x18x128xf32, #tpu.memory_space<vmem>>, vector<2x16x16x128xf32>
    %71 = vector.shape_cast %70 : vector<2x16x16x128xf32> to vector<512x128xf32>
    %c8 = arith.constant 8 : index
    %c0_108 = arith.constant 0 : index
    %c0_109 = arith.constant 0 : index
    %72 = vector.load %arg2[%c8, %c0_108, %c0_109] : memref<9x128x128xf32, #tpu.memory_space<vmem>>, vector<1x128x128xf32>
    %73 = vector.shape_cast %72 : vector<1x128x128xf32> to vector<128x128xf32>
    %cst_110 = arith.constant dense<0.000000e+00> : vector<512x128xf32>
    %74 = tpu.matmul %71, %73, %cst_110 {dimension_numbers = #tpu.dot_dimension_numbers<[1], [0], [0], [1], [0, 0, 1, 1], [], []>} : vector<512x128xf32>, vector<128x128xf32>, vector<512x128xf32> -> vector<512x128xf32>
    %c0_111 = arith.constant 0 : index
    %c0_112 = arith.constant 0 : index
    %75 = vector.load %arg13[%c0_111, %c0_112] : memref<512x128xf32, #tpu.memory_space<vmem>>, vector<512x128xf32>
    %76 = arith.addf %75, %74 : vector<512x128xf32>
    %c0_113 = arith.constant 0 : index
    %c0_114 = arith.constant 0 : index
    %77 = vector.load %arg13[%c0_113, %c0_114] : memref<512x128xf32, #tpu.memory_space<vmem>>, vector<512x128xf32>
    tpu.vector_store %arg13[%c0_113, %c0_114], %76 {strides = array<i32>} : memref<512x128xf32, #tpu.memory_space<vmem>>, vector<512x128xf32>,
    %c0_115 = arith.constant 0 : index
    %c0_116 = arith.constant 0 : index
    %78 = vector.load %arg13[%c0_115, %c0_116] : memref<512x128xf32, #tpu.memory_space<vmem>>, vector<512x128xf32>
    %c0_117 = arith.constant 0 : index
    %c0_118 = arith.constant 0 : index
    %79 = vector.load %arg3[%c0_117, %c0_118] : memref<1x128xf32, #tpu.memory_space<vmem>>, vector<1x128xf32>
    %80 = vector.broadcast %79 : vector<1x128xf32> to vector<512x128xf32>
    %81 = arith.mulf %78, %80 : vector<512x128xf32>
    %c0_119 = arith.constant 0 : index
    %c0_120 = arith.constant 0 : index
    %82 = vector.load %arg4[%c0_119, %c0_120] : memref<1x128xf32, #tpu.memory_space<vmem>>, vector<1x128xf32>
    %83 = vector.broadcast %82 : vector<1x128xf32> to vector<512x128xf32>
    %84 = arith.addf %81, %83 : vector<512x128xf32>
    %cst_121 = arith.constant 0.000000e+00 : f32
    %85 = vector.broadcast %cst_121 : f32 to vector<512x128xf32>
    %86 = arith.maximumf %84, %85 : vector<512x128xf32>
    %87 = vector.shape_cast %86 : vector<512x128xf32> to vector<2x16x16x128xf32>
    %c0_122 = arith.constant 0 : index
    %c1_123 = arith.constant 1 : index
    %c1_124 = arith.constant 1 : index
    %c0_125 = arith.constant 0 : index
    %88 = vector.load %arg12[%c0_122, %c1_123, %c1_124, %c0_125] : memref<2x18x18x128xf32, #tpu.memory_space<vmem>>, vector<2x16x16x128xf32>
    tpu.vector_store %arg12[%c0_122, %c1_123, %c1_124, %c0_125], %87 {strides = array<i32>} : memref<2x18x18x128xf32, #tpu.memory_space<vmem>>, vector<2x16x16x128xf32>,
    %c0_126 = arith.constant 0 : index
    %c0_127 = arith.constant 0 : index
    %c0_128 = arith.constant 0 : index
    %c0_129 = arith.constant 0 : index
    %89 = vector.load %arg12[%c0_126, %c0_127, %c0_128, %c0_129] : memref<2x18x18x128xf32, #tpu.memory_space<vmem>>, vector<2x16x16x128xf32>
    %90 = vector.shape_cast %89 : vector<2x16x16x128xf32> to vector<512x128xf32>
    %c0_130 = arith.constant 0 : index
    %c0_131 = arith.constant 0 : index
    %c0_132 = arith.constant 0 : index
    %91 = vector.load %arg5[%c0_130, %c0_131, %c0_132] : memref<9x128x128xf32, #tpu.memory_space<vmem>>, vector<1x128x128xf32>
    %92 = vector.shape_cast %91 : vector<1x128x128xf32> to vector<128x128xf32>
    %cst_133 = arith.constant dense<0.000000e+00> : vector<512x128xf32>
    %93 = tpu.matmul %90, %92, %cst_133 {dimension_numbers = #tpu.dot_dimension_numbers<[1], [0], [0], [1], [0, 0, 1, 1], [], []>} : vector<512x128xf32>, vector<128x128xf32>, vector<512x128xf32> -> vector<512x128xf32>
    %c0_134 = arith.constant 0 : index
    %c0_135 = arith.constant 0 : index
    %94 = vector.load %arg13[%c0_134, %c0_135] : memref<512x128xf32, #tpu.memory_space<vmem>>, vector<512x128xf32>
    tpu.vector_store %arg13[%c0_134, %c0_135], %93 {strides = array<i32>} : memref<512x128xf32, #tpu.memory_space<vmem>>, vector<512x128xf32>,
    %c0_136 = arith.constant 0 : index
    %c0_137 = arith.constant 0 : index
    %c1_138 = arith.constant 1 : index
    %c0_139 = arith.constant 0 : index
    %95 = vector.load %arg12[%c0_136, %c0_137, %c1_138, %c0_139] : memref<2x18x18x128xf32, #tpu.memory_space<vmem>>, vector<2x16x16x128xf32>
    %96 = vector.shape_cast %95 : vector<2x16x16x128xf32> to vector<512x128xf32>
    %c1_140 = arith.constant 1 : index
    %c0_141 = arith.constant 0 : index
    %c0_142 = arith.constant 0 : index
    %97 = vector.load %arg5[%c1_140, %c0_141, %c0_142] : memref<9x128x128xf32, #tpu.memory_space<vmem>>, vector<1x128x128xf32>
    %98 = vector.shape_cast %97 : vector<1x128x128xf32> to vector<128x128xf32>
    %cst_143 = arith.constant dense<0.000000e+00> : vector<512x128xf32>
    %99 = tpu.matmul %96, %98, %cst_143 {dimension_numbers = #tpu.dot_dimension_numbers<[1], [0], [0], [1], [0, 0, 1, 1], [], []>} : vector<512x128xf32>, vector<128x128xf32>, vector<512x128xf32> -> vector<512x128xf32>
    %c0_144 = arith.constant 0 : index
    %c0_145 = arith.constant 0 : index
    %100 = vector.load %arg13[%c0_144, %c0_145] : memref<512x128xf32, #tpu.memory_space<vmem>>, vector<512x128xf32>
    %101 = arith.addf %100, %99 : vector<512x128xf32>
    %c0_146 = arith.constant 0 : index
    %c0_147 = arith.constant 0 : index
    %102 = vector.load %arg13[%c0_146, %c0_147] : memref<512x128xf32, #tpu.memory_space<vmem>>, vector<512x128xf32>
    tpu.vector_store %arg13[%c0_146, %c0_147], %101 {strides = array<i32>} : memref<512x128xf32, #tpu.memory_space<vmem>>, vector<512x128xf32>,
    %c0_148 = arith.constant 0 : index
    %c0_149 = arith.constant 0 : index
    %c2_150 = arith.constant 2 : index
    %c0_151 = arith.constant 0 : index
    %103 = vector.load %arg12[%c0_148, %c0_149, %c2_150, %c0_151] : memref<2x18x18x128xf32, #tpu.memory_space<vmem>>, vector<2x16x16x128xf32>
    %104 = vector.shape_cast %103 : vector<2x16x16x128xf32> to vector<512x128xf32>
    %c2_152 = arith.constant 2 : index
    %c0_153 = arith.constant 0 : index
    %c0_154 = arith.constant 0 : index
    %105 = vector.load %arg5[%c2_152, %c0_153, %c0_154] : memref<9x128x128xf32, #tpu.memory_space<vmem>>, vector<1x128x128xf32>
    %106 = vector.shape_cast %105 : vector<1x128x128xf32> to vector<128x128xf32>
    %cst_155 = arith.constant dense<0.000000e+00> : vector<512x128xf32>
    %107 = tpu.matmul %104, %106, %cst_155 {dimension_numbers = #tpu.dot_dimension_numbers<[1], [0], [0], [1], [0, 0, 1, 1], [], []>} : vector<512x128xf32>, vector<128x128xf32>, vector<512x128xf32> -> vector<512x128xf32>
    %c0_156 = arith.constant 0 : index
    %c0_157 = arith.constant 0 : index
    %108 = vector.load %arg13[%c0_156, %c0_157] : memref<512x128xf32, #tpu.memory_space<vmem>>, vector<512x128xf32>
    %109 = arith.addf %108, %107 : vector<512x128xf32>
    %c0_158 = arith.constant 0 : index
    %c0_159 = arith.constant 0 : index
    %110 = vector.load %arg13[%c0_158, %c0_159] : memref<512x128xf32, #tpu.memory_space<vmem>>, vector<512x128xf32>
    tpu.vector_store %arg13[%c0_158, %c0_159], %109 {strides = array<i32>} : memref<512x128xf32, #tpu.memory_space<vmem>>, vector<512x128xf32>,
    %c0_160 = arith.constant 0 : index
    %c1_161 = arith.constant 1 : index
    %c0_162 = arith.constant 0 : index
    %c0_163 = arith.constant 0 : index
    %111 = vector.load %arg12[%c0_160, %c1_161, %c0_162, %c0_163] : memref<2x18x18x128xf32, #tpu.memory_space<vmem>>, vector<2x16x16x128xf32>
    %112 = vector.shape_cast %111 : vector<2x16x16x128xf32> to vector<512x128xf32>
    %c3_164 = arith.constant 3 : index
    %c0_165 = arith.constant 0 : index
    %c0_166 = arith.constant 0 : index
    %113 = vector.load %arg5[%c3_164, %c0_165, %c0_166] : memref<9x128x128xf32, #tpu.memory_space<vmem>>, vector<1x128x128xf32>
    %114 = vector.shape_cast %113 : vector<1x128x128xf32> to vector<128x128xf32>
    %cst_167 = arith.constant dense<0.000000e+00> : vector<512x128xf32>
    %115 = tpu.matmul %112, %114, %cst_167 {dimension_numbers = #tpu.dot_dimension_numbers<[1], [0], [0], [1], [0, 0, 1, 1], [], []>} : vector<512x128xf32>, vector<128x128xf32>, vector<512x128xf32> -> vector<512x128xf32>
    %c0_168 = arith.constant 0 : index
    %c0_169 = arith.constant 0 : index
    %116 = vector.load %arg13[%c0_168, %c0_169] : memref<512x128xf32, #tpu.memory_space<vmem>>, vector<512x128xf32>
    %117 = arith.addf %116, %115 : vector<512x128xf32>
    %c0_170 = arith.constant 0 : index
    %c0_171 = arith.constant 0 : index
    %118 = vector.load %arg13[%c0_170, %c0_171] : memref<512x128xf32, #tpu.memory_space<vmem>>, vector<512x128xf32>
    tpu.vector_store %arg13[%c0_170, %c0_171], %117 {strides = array<i32>} : memref<512x128xf32, #tpu.memory_space<vmem>>, vector<512x128xf32>,
    %c0_172 = arith.constant 0 : index
    %c1_173 = arith.constant 1 : index
    %c1_174 = arith.constant 1 : index
    %c0_175 = arith.constant 0 : index
    %119 = vector.load %arg12[%c0_172, %c1_173, %c1_174, %c0_175] : memref<2x18x18x128xf32, #tpu.memory_space<vmem>>, vector<2x16x16x128xf32>
    %120 = vector.shape_cast %119 : vector<2x16x16x128xf32> to vector<512x128xf32>
    %c4_176 = arith.constant 4 : index
    %c0_177 = arith.constant 0 : index
    %c0_178 = arith.constant 0 : index
    %121 = vector.load %arg5[%c4_176, %c0_177, %c0_178] : memref<9x128x128xf32, #tpu.memory_space<vmem>>, vector<1x128x128xf32>
    %122 = vector.shape_cast %121 : vector<1x128x128xf32> to vector<128x128xf32>
    %cst_179 = arith.constant dense<0.000000e+00> : vector<512x128xf32>
    %123 = tpu.matmul %120, %122, %cst_179 {dimension_numbers = #tpu.dot_dimension_numbers<[1], [0], [0], [1], [0, 0, 1, 1], [], []>} : vector<512x128xf32>, vector<128x128xf32>, vector<512x128xf32> -> vector<512x128xf32>
    %c0_180 = arith.constant 0 : index
    %c0_181 = arith.constant 0 : index
    %124 = vector.load %arg13[%c0_180, %c0_181] : memref<512x128xf32, #tpu.memory_space<vmem>>, vector<512x128xf32>
    %125 = arith.addf %124, %123 : vector<512x128xf32>
    %c0_182 = arith.constant 0 : index
    %c0_183 = arith.constant 0 : index
    %126 = vector.load %arg13[%c0_182, %c0_183] : memref<512x128xf32, #tpu.memory_space<vmem>>, vector<512x128xf32>
    tpu.vector_store %arg13[%c0_182, %c0_183], %125 {strides = array<i32>} : memref<512x128xf32, #tpu.memory_space<vmem>>, vector<512x128xf32>,
    %c0_184 = arith.constant 0 : index
    %c1_185 = arith.constant 1 : index
    %c2_186 = arith.constant 2 : index
    %c0_187 = arith.constant 0 : index
    %127 = vector.load %arg12[%c0_184, %c1_185, %c2_186, %c0_187] : memref<2x18x18x128xf32, #tpu.memory_space<vmem>>, vector<2x16x16x128xf32>
    %128 = vector.shape_cast %127 : vector<2x16x16x128xf32> to vector<512x128xf32>
    %c5_188 = arith.constant 5 : index
    %c0_189 = arith.constant 0 : index
    %c0_190 = arith.constant 0 : index
    %129 = vector.load %arg5[%c5_188, %c0_189, %c0_190] : memref<9x128x128xf32, #tpu.memory_space<vmem>>, vector<1x128x128xf32>
    %130 = vector.shape_cast %129 : vector<1x128x128xf32> to vector<128x128xf32>
    %cst_191 = arith.constant dense<0.000000e+00> : vector<512x128xf32>
    %131 = tpu.matmul %128, %130, %cst_191 {dimension_numbers = #tpu.dot_dimension_numbers<[1], [0], [0], [1], [0, 0, 1, 1], [], []>} : vector<512x128xf32>, vector<128x128xf32>, vector<512x128xf32> -> vector<512x128xf32>
    %c0_192 = arith.constant 0 : index
    %c0_193 = arith.constant 0 : index
    %132 = vector.load %arg13[%c0_192, %c0_193] : memref<512x128xf32, #tpu.memory_space<vmem>>, vector<512x128xf32>
    %133 = arith.addf %132, %131 : vector<512x128xf32>
    %c0_194 = arith.constant 0 : index
    %c0_195 = arith.constant 0 : index
    %134 = vector.load %arg13[%c0_194, %c0_195] : memref<512x128xf32, #tpu.memory_space<vmem>>, vector<512x128xf32>
    tpu.vector_store %arg13[%c0_194, %c0_195], %133 {strides = array<i32>} : memref<512x128xf32, #tpu.memory_space<vmem>>, vector<512x128xf32>,
    %c0_196 = arith.constant 0 : index
    %c2_197 = arith.constant 2 : index
    %c0_198 = arith.constant 0 : index
    %c0_199 = arith.constant 0 : index
    %135 = vector.load %arg12[%c0_196, %c2_197, %c0_198, %c0_199] : memref<2x18x18x128xf32, #tpu.memory_space<vmem>>, vector<2x16x16x128xf32>
    %136 = vector.shape_cast %135 : vector<2x16x16x128xf32> to vector<512x128xf32>
    %c6_200 = arith.constant 6 : index
    %c0_201 = arith.constant 0 : index
    %c0_202 = arith.constant 0 : index
    %137 = vector.load %arg5[%c6_200, %c0_201, %c0_202] : memref<9x128x128xf32, #tpu.memory_space<vmem>>, vector<1x128x128xf32>
    %138 = vector.shape_cast %137 : vector<1x128x128xf32> to vector<128x128xf32>
    %cst_203 = arith.constant dense<0.000000e+00> : vector<512x128xf32>
    %139 = tpu.matmul %136, %138, %cst_203 {dimension_numbers = #tpu.dot_dimension_numbers<[1], [0], [0], [1], [0, 0, 1, 1], [], []>} : vector<512x128xf32>, vector<128x128xf32>, vector<512x128xf32> -> vector<512x128xf32>
    %c0_204 = arith.constant 0 : index
    %c0_205 = arith.constant 0 : index
    %140 = vector.load %arg13[%c0_204, %c0_205] : memref<512x128xf32, #tpu.memory_space<vmem>>, vector<512x128xf32>
    %141 = arith.addf %140, %139 : vector<512x128xf32>
    %c0_206 = arith.constant 0 : index
    %c0_207 = arith.constant 0 : index
    %142 = vector.load %arg13[%c0_206, %c0_207] : memref<512x128xf32, #tpu.memory_space<vmem>>, vector<512x128xf32>
    tpu.vector_store %arg13[%c0_206, %c0_207], %141 {strides = array<i32>} : memref<512x128xf32, #tpu.memory_space<vmem>>, vector<512x128xf32>,
    %c0_208 = arith.constant 0 : index
    %c2_209 = arith.constant 2 : index
    %c1_210 = arith.constant 1 : index
    %c0_211 = arith.constant 0 : index
    %143 = vector.load %arg12[%c0_208, %c2_209, %c1_210, %c0_211] : memref<2x18x18x128xf32, #tpu.memory_space<vmem>>, vector<2x16x16x128xf32>
    %144 = vector.shape_cast %143 : vector<2x16x16x128xf32> to vector<512x128xf32>
    %c7_212 = arith.constant 7 : index
    %c0_213 = arith.constant 0 : index
    %c0_214 = arith.constant 0 : index
    %145 = vector.load %arg5[%c7_212, %c0_213, %c0_214] : memref<9x128x128xf32, #tpu.memory_space<vmem>>, vector<1x128x128xf32>
    %146 = vector.shape_cast %145 : vector<1x128x128xf32> to vector<128x128xf32>
    %cst_215 = arith.constant dense<0.000000e+00> : vector<512x128xf32>
    %147 = tpu.matmul %144, %146, %cst_215 {dimension_numbers = #tpu.dot_dimension_numbers<[1], [0], [0], [1], [0, 0, 1, 1], [], []>} : vector<512x128xf32>, vector<128x128xf32>, vector<512x128xf32> -> vector<512x128xf32>
    %c0_216 = arith.constant 0 : index
    %c0_217 = arith.constant 0 : index
    %148 = vector.load %arg13[%c0_216, %c0_217] : memref<512x128xf32, #tpu.memory_space<vmem>>, vector<512x128xf32>
    %149 = arith.addf %148, %147 : vector<512x128xf32>
    %c0_218 = arith.constant 0 : index
    %c0_219 = arith.constant 0 : index
    %150 = vector.load %arg13[%c0_218, %c0_219] : memref<512x128xf32, #tpu.memory_space<vmem>>, vector<512x128xf32>
    tpu.vector_store %arg13[%c0_218, %c0_219], %149 {strides = array<i32>} : memref<512x128xf32, #tpu.memory_space<vmem>>, vector<512x128xf32>,
    %c0_220 = arith.constant 0 : index
    %c2_221 = arith.constant 2 : index
    %c2_222 = arith.constant 2 : index
    %c0_223 = arith.constant 0 : index
    %151 = vector.load %arg12[%c0_220, %c2_221, %c2_222, %c0_223] : memref<2x18x18x128xf32, #tpu.memory_space<vmem>>, vector<2x16x16x128xf32>
    %152 = vector.shape_cast %151 : vector<2x16x16x128xf32> to vector<512x128xf32>
    %c8_224 = arith.constant 8 : index
    %c0_225 = arith.constant 0 : index
    %c0_226 = arith.constant 0 : index
    %153 = vector.load %arg5[%c8_224, %c0_225, %c0_226] : memref<9x128x128xf32, #tpu.memory_space<vmem>>, vector<1x128x128xf32>
    %154 = vector.shape_cast %153 : vector<1x128x128xf32> to vector<128x128xf32>
    %cst_227 = arith.constant dense<0.000000e+00> : vector<512x128xf32>
    %155 = tpu.matmul %152, %154, %cst_227 {dimension_numbers = #tpu.dot_dimension_numbers<[1], [0], [0], [1], [0, 0, 1, 1], [], []>} : vector<512x128xf32>, vector<128x128xf32>, vector<512x128xf32> -> vector<512x128xf32>
    %c0_228 = arith.constant 0 : index
    %c0_229 = arith.constant 0 : index
    %156 = vector.load %arg13[%c0_228, %c0_229] : memref<512x128xf32, #tpu.memory_space<vmem>>, vector<512x128xf32>
    %157 = arith.addf %156, %155 : vector<512x128xf32>
    %c0_230 = arith.constant 0 : index
    %c0_231 = arith.constant 0 : index
    %158 = vector.load %arg13[%c0_230, %c0_231] : memref<512x128xf32, #tpu.memory_space<vmem>>, vector<512x128xf32>
    tpu.vector_store %arg13[%c0_230, %c0_231], %157 {strides = array<i32>} : memref<512x128xf32, #tpu.memory_space<vmem>>, vector<512x128xf32>,
    %c0_232 = arith.constant 0 : index
    %c0_233 = arith.constant 0 : index
    %159 = vector.load %arg13[%c0_232, %c0_233] : memref<512x128xf32, #tpu.memory_space<vmem>>, vector<512x128xf32>
    %c0_234 = arith.constant 0 : index
    %c0_235 = arith.constant 0 : index
    %160 = vector.load %arg6[%c0_234, %c0_235] : memref<1x128xf32, #tpu.memory_space<vmem>>, vector<1x128xf32>
    %161 = vector.broadcast %160 : vector<1x128xf32> to vector<512x128xf32>
    %162 = arith.mulf %159, %161 : vector<512x128xf32>
    %c0_236 = arith.constant 0 : index
    %c0_237 = arith.constant 0 : index
    %163 = vector.load %arg7[%c0_236, %c0_237] : memref<1x128xf32, #tpu.memory_space<vmem>>, vector<1x128xf32>
    %164 = vector.broadcast %163 : vector<1x128xf32> to vector<512x128xf32>
    %165 = arith.addf %162, %164 : vector<512x128xf32>
    %c0_238 = arith.constant 0 : index
    %c1_239 = arith.constant 1 : index
    %c1_240 = arith.constant 1 : index
    %c0_241 = arith.constant 0 : index
    %166 = vector.load %arg1[%c0_238, %c1_239, %c1_240, %c0_241] : memref<2x18x18x128xf32, #tpu.memory_space<vmem>>, vector<2x16x16x128xf32>
    %167 = vector.shape_cast %166 : vector<2x16x16x128xf32> to vector<512x128xf32>
    %c0_242 = arith.constant 0 : index
    %c0_243 = arith.constant 0 : index
    %168 = vector.load %arg8[%c0_242, %c0_243] : memref<128x128xf32, #tpu.memory_space<vmem>>, vector<128x128xf32>
    %cst_244 = arith.constant dense<0.000000e+00> : vector<512x128xf32>
    %169 = tpu.matmul %167, %168, %cst_244 {dimension_numbers = #tpu.dot_dimension_numbers<[1], [0], [0], [1], [0, 0, 1, 1], [], []>} : vector<512x128xf32>, vector<128x128xf32>, vector<512x128xf32> -> vector<512x128xf32>
    %c0_245 = arith.constant 0 : index
    %c0_246 = arith.constant 0 : index
    %170 = vector.load %arg9[%c0_245, %c0_246] : memref<1x128xf32, #tpu.memory_space<vmem>>, vector<1x128xf32>
    %171 = vector.broadcast %170 : vector<1x128xf32> to vector<512x128xf32>
    %172 = arith.mulf %169, %171 : vector<512x128xf32>
    %c0_247 = arith.constant 0 : index
    %c0_248 = arith.constant 0 : index
    %173 = vector.load %arg10[%c0_247, %c0_248] : memref<1x128xf32, #tpu.memory_space<vmem>>, vector<1x128xf32>
    %174 = vector.broadcast %173 : vector<1x128xf32> to vector<512x128xf32>
    %175 = arith.addf %172, %174 : vector<512x128xf32>
    %176 = arith.addf %165, %175 : vector<512x128xf32>
    %cst_249 = arith.constant 0.000000e+00 : f32
    %177 = vector.broadcast %cst_249 : f32 to vector<512x128xf32>
    %178 = arith.maximumf %176, %177 : vector<512x128xf32>
    %179 = vector.shape_cast %178 : vector<512x128xf32> to vector<2x256x128xf32>
    %c0_250 = arith.constant 0 : index
    %c0_251 = arith.constant 0 : index
    %c0_252 = arith.constant 0 : index
    %180 = vector.load %arg11[%c0_250, %c0_251, %c0_252] : memref<2x256x128xf32, #tpu.memory_space<vmem>>, vector<2x256x128xf32>
    tpu.vector_store %arg11[%c0_250, %c0_251, %c0_252], %179 {strides = array<i32>} : memref<2x256x128xf32, #tpu.memory_space<vmem>>, vector<2x256x128xf32>,
    return
  }
  func.func @transform_0(%arg0: i32) -> (i32, i32, i32, i32) {
    %c0_i32 = arith.constant 0 : i32
    %c0_i32_0 = arith.constant 0 : i32
    %c0_i32_1 = arith.constant 0 : i32
    %c0_i32_2 = arith.constant 0 : i32
    return %arg0, %c0_i32, %c0_i32_0, %c0_i32_1 : i32, i32, i32, i32
  }
  func.func @transform_1(%arg0: i32) -> (i32, i32, i32) {
    %c0_i32 = arith.constant 0 : i32
    %c0_i32_0 = arith.constant 0 : i32
    %c0_i32_1 = arith.constant 0 : i32
    %c0_i32_2 = arith.constant 0 : i32
    return %c0_i32, %c0_i32_0, %c0_i32_1 : i32, i32, i32
  }
  func.func @transform_2(%arg0: i32) -> (i32, i32) {
    %c0_i32 = arith.constant 0 : i32
    %c0_i32_0 = arith.constant 0 : i32
    %c0_i32_1 = arith.constant 0 : i32
    return %c0_i32, %c0_i32_0 : i32, i32
  }
  func.func @transform_3(%arg0: i32) -> (i32, i32) {
    %c0_i32 = arith.constant 0 : i32
    %c0_i32_0 = arith.constant 0 : i32
    %c0_i32_1 = arith.constant 0 : i32
    return %c0_i32, %c0_i32_0 : i32, i32
  }
  func.func @transform_4(%arg0: i32) -> (i32, i32, i32) {
    %c0_i32 = arith.constant 0 : i32
    %c0_i32_0 = arith.constant 0 : i32
    %c0_i32_1 = arith.constant 0 : i32
    %c0_i32_2 = arith.constant 0 : i32
    return %c0_i32, %c0_i32_0, %c0_i32_1 : i32, i32, i32
  }
  func.func @transform_5(%arg0: i32) -> (i32, i32) {
    %c0_i32 = arith.constant 0 : i32
    %c0_i32_0 = arith.constant 0 : i32
    %c0_i32_1 = arith.constant 0 : i32
    return %c0_i32, %c0_i32_0 : i32, i32
  }
  func.func @transform_6(%arg0: i32) -> (i32, i32) {
    %c0_i32 = arith.constant 0 : i32
    %c0_i32_0 = arith.constant 0 : i32
    %c0_i32_1 = arith.constant 0 : i32
    return %c0_i32, %c0_i32_0 : i32, i32
  }
  func.func @transform_7(%arg0: i32) -> (i32, i32) {
    %c0_i32 = arith.constant 0 : i32
    %c0_i32_0 = arith.constant 0 : i32
    %c0_i32_1 = arith.constant 0 : i32
    return %c0_i32, %c0_i32_0 : i32, i32
  }
  func.func @transform_8(%arg0: i32) -> (i32, i32) {
    %c0_i32 = arith.constant 0 : i32
    %c0_i32_0 = arith.constant 0 : i32
    %c0_i32_1 = arith.constant 0 : i32
    return %c0_i32, %c0_i32_0 : i32, i32
  }
  func.func @transform_9(%arg0: i32) -> (i32, i32) {
    %c0_i32 = arith.constant 0 : i32
    %c0_i32_0 = arith.constant 0 : i32
    %c0_i32_1 = arith.constant 0 : i32
    return %c0_i32, %c0_i32_0 : i32, i32
  }
  func.func @transform_10(%arg0: i32) -> (i32, i32, i32) {
    %c0_i32 = arith.constant 0 : i32
    %c0_i32_0 = arith.constant 0 : i32
    %c0_i32_1 = arith.constant 0 : i32
    return %arg0, %c0_i32, %c0_i32_0 : i32, i32, i32
  }
}

</mosaic_0001>

<llo_original>
// kernel: tpu_custom_call.1
$region0: #{tpu_custom_call.1}
  #allocation0 [shape = 'u32[]', space=smem, size = 0x4, offset = 0x4, fixed_abs, tag = 'smem constant byte address 0x4 - core index']
  #allocation1 [shape = 'u32[72,128]{1,0:T(1,128)}', space=vmem, size = 0x9000, scoped, tag = 'internal scratch']
  #allocation2 [shape = 'f32[2,18,18,128]{3,2,1,0:T(8,128)}', space=vmem, size = 0x6c000, scoped, tag = 'scratch operand']
  #allocation3 [shape = 'f32[512,128]{1,0:T(8,128)}', space=vmem, size = 0x40000, scoped, tag = 'scratch operand']
  %s0 = inlined_call_operand.vmem [shape: f32[2,18,18,128], index: 0, kind: input, shape index: {}]
  %s1 = inlined_call_operand.vmem [shape: f32[9,128,128], index: 1, kind: input, shape index: {}]
  %s2 = inlined_call_operand.vmem [shape: f32[1,128], index: 2, kind: input, shape index: {}]
  %s3 = inlined_call_operand.vmem [shape: f32[1,128], index: 3, kind: input, shape index: {}]
  %s4 = inlined_call_operand.hbm [shape: f32[9,128,128], index: 4, kind: input, shape index: {}]
  %s5 = inlined_call_operand.vmem [shape: f32[1,128], index: 5, kind: input, shape index: {}]
  %s6 = inlined_call_operand.vmem [shape: f32[1,128], index: 6, kind: input, shape index: {}]
  %s7 = inlined_call_operand.vmem [shape: f32[128,128], index: 7, kind: input, shape index: {}]
  %s8 = inlined_call_operand.vmem [shape: f32[1,128], index: 8, kind: input, shape index: {}]
  %s9 = inlined_call_operand.vmem [shape: f32[1,128], index: 9, kind: input, shape index: {}]
  %s10 = inlined_call_operand.hbm [shape: f32[2,256,128], index: 10, kind: output, shape index: {}]
  %s11 = sld [smem:[#allocation0]]
  $region54: #{tpu_custom_call.1} parent=0
    _
  %s13 = ssub.s32 1, %s11
  %s14 = scalar_select 0, %s13, %s11
  $region1: #{tpu_custom_call.1} parent=0
    #allocation4 [shape = 'u8[589824]{0}', space=vmem, size = 0x90000, scoped, tag = 'input window, operand 4, single buffered']
    #allocation5 [shape = 's32[1]{0}', space=sflag, size = 0x4, scoped, tag = 'scoped memory for tpu_custom_call.1']
    #allocation6 [shape = 's32[1]{0}', space=sflag, size = 0x4, scoped, tag = 'scoped memory for tpu_custom_call.1']
    #allocation7 [shape = 'u8[262144]{0}', space=vmem, size = 0x40000, scoped, tag = 'output window, operand 0, single buffered']
    %15 = vsyncpa [#allocation5], 0
    %16 = vsyncpa [#allocation6], 0
    // Predicated region
    $region2: #{tpu_custom_call.1} parent=1 // pred_check
      _
    $region3: #{tpu_custom_call.1} parent=1 // pred_check_branch
      %18 = sbr.rel (0) target = $region5
    $region4: #{tpu_custom_call.1} parent=1 // pred_region
      _
    $region5: #{tpu_custom_call.1} parent=1 // pred_fallthru
      _
    // Predicated region
    $region6: #{tpu_custom_call.1} parent=1 // pred_check
      _
    $region7: #{tpu_custom_call.1} parent=1 // pred_check_branch
      %20 = sbr.rel (0) target = $region9
    $region8: #{tpu_custom_call.1} parent=1 // pred_region
      _
    $region9: #{tpu_custom_call.1} parent=1 // pred_fallthru
      _
    // Predicated region
    $region10: #{tpu_custom_call.1} parent=1 // pred_check
      _
    $region11: #{tpu_custom_call.1} parent=1 // pred_check_branch
      %22 = sbr.rel (0) target = $region13
    $region12: #{tpu_custom_call.1} parent=1 // pred_region
      _
    $region13: #{tpu_custom_call.1} parent=1 // pred_fallthru
      _
    // Predicated region
    $region14: #{tpu_custom_call.1} parent=1 // pred_check
      _
    $region15: #{tpu_custom_call.1} parent=1 // pred_check_branch
      %24 = sbr.rel (0) target = $region17
    $region16: #{tpu_custom_call.1} parent=1 // pred_region
      _
    $region17: #{tpu_custom_call.1} parent=1 // pred_fallthru
      _
    // Predicated region
    $region18: #{tpu_custom_call.1} parent=1 // pred_check
      _
    $region19: #{tpu_custom_call.1} parent=1 // pred_check_branch
      %26 = sbr.rel (0) target = $region21
    $region20: #{tpu_custom_call.1} parent=1 // pred_region
      %28 = vsyncadd [#allocation5], 0
      %s29 = sshll.u32 %s4, 4
      %s30 = int_to_ptr.hbm [resolvable:$true] %s29
      %s31 = sshll.u32 [#allocation4], 4
      %s32 = int_to_ptr.vmem [resolvable:$true] %s31
      %37 = dma.hbm_to_vmem [thread:$0]  %s30, 18432, %s32, [#allocation5], 128, 128, 8
    $region21: #{tpu_custom_call.1} parent=1 // pred_fallthru
      _
    // Predicated region
    $region22: #{tpu_custom_call.1} parent=1 // pred_check
      _
    $region23: #{tpu_custom_call.1} parent=1 // pred_check_branch
      %39 = sbr.rel (0) target = $region25
    $region24: #{tpu_custom_call.1} parent=1 // pred_region
      _
    $region25: #{tpu_custom_call.1} parent=1 // pred_fallthru
      _
    // Predicated region
    $region26: #{tpu_custom_call.1} parent=1 // pred_check
      _
    $region27: #{tpu_custom_call.1} parent=1 // pred_check_branch
      %41 = sbr.rel (0) target = $region29
    $region28: #{tpu_custom_call.1} parent=1 // pred_region
      _
    $region29: #{tpu_custom_call.1} parent=1 // pred_fallthru
      _
    // Predicated region
    $region30: #{tpu_custom_call.1} parent=1 // pred_check
      _
    $region31: #{tpu_custom_call.1} parent=1 // pred_check_branch
      %43 = sbr.rel (0) target = $region33
    $region32: #{tpu_custom_call.1} parent=1 // pred_region
      _
    $region33: #{tpu_custom_call.1} parent=1 // pred_fallthru
      _
    // Predicated region
    $region34: #{tpu_custom_call.1} parent=1 // pred_check
      _
    $region35: #{tpu_custom_call.1} parent=1 // pred_check_branch
      %45 = sbr.rel (0) target = $region37
    $region36: #{tpu_custom_call.1} parent=1 // pred_region
      _
    $region37: #{tpu_custom_call.1} parent=1 // pred_fallthru
      _
    // Predicated region
    $region38: #{tpu_custom_call.1} parent=1 // pred_check
      _
    $region39: #{tpu_custom_call.1} parent=1 // pred_check_branch
      %47 = sbr.rel (0) target = $region41
    $region40: #{tpu_custom_call.1} parent=1 // pred_region
      _
    $region41: #{tpu_custom_call.1} parent=1 // pred_fallthru
      _
    // Predicated region
    $region42: #{tpu_custom_call.1} parent=1 // pred_check
      _
    $region43: #{tpu_custom_call.1} parent=1 // pred_check_branch
      %49 = sbr.rel (0) target = $region45
    $region44: #{tpu_custom_call.1} parent=1 // pred_region
      %51 = dma.done [#allocation5], 18432
    $region45: #{tpu_custom_call.1} parent=1 // pred_fallthru
      _
    %52 = vst [vmem:[#allocation2] sm:$0xff] 0.0
    %53 = vst [vmem:[#allocation2 + $0x8] sm:$0xff] 0.0
    %54 = vst [vmem:[#allocation2 + $0x10] sm:$0x3] 0.0
    %55 = vst [vmem:[#allocation2 + $0x1b0] sm:$0xff] 0.0
    %56 = vst [vmem:[#allocation2 + $0x1b8] sm:$0xff] 0.0
    %57 = vst [vmem:[#allocation2 + $0x1c0] sm:$0x3] 0.0
    %s58 = scalar_lea.vmem [#allocation2], 408
    %59 = vst [vmem:[%s58] sm:$0xff] 0.0
    %60 = vst [vmem:[%s58 + $0x8] sm:$0xff] 0.0
    %61 = vst [vmem:[%s58 + $0x10] sm:$0x3] 0.0
    %62 = vst [vmem:[%s58 + $0x1b0] sm:$0xff] 0.0
    %63 = vst [vmem:[%s58 + $0x1b8] sm:$0xff] 0.0
    %64 = vst [vmem:[%s58 + $0x1c0] sm:$0x3] 0.0
    %s65 = scalar_lea.vmem [#allocation2], 24
    %66 = vst [vmem:[%s65] sm:$0x1] 0.0
    %67 = vst [vmem:[%s65 + $0x18] sm:$0x1] 0.0
    %68 = vst [vmem:[%s65 + $0x30] sm:$0x1] 0.0
    %69 = vst [vmem:[%s65 + $0x48] sm:$0x1] 0.0
    %70 = vst [vmem:[%s65 + $0x60] sm:$0x1] 0.0
    %71 = vst [vmem:[%s65 + $0x78] sm:$0x1] 0.0
    %72 = vst [vmem:[%s65 + $0x90] sm:$0x1] 0.0
    %73 = vst [vmem:[%s65 + $0xa8] sm:$0x1] 0.0
    %74 = vst [vmem:[%s65 + $0xc0] sm:$0x1] 0.0
    %75 = vst [vmem:[%s65 + $0xd8] sm:$0x1] 0.0
    %76 = vst [vmem:[%s65 + $0xf0] sm:$0x1] 0.0
    %77 = vst [vmem:[%s65 + $0x108] sm:$0x1] 0.0
    %78 = vst [vmem:[%s65 + $0x120] sm:$0x1] 0.0
    %79 = vst [vmem:[%s65 + $0x138] sm:$0x1] 0.0
    %80 = vst [vmem:[%s65 + $0x150] sm:$0x1] 0.0
    %81 = vst [vmem:[%s65 + $0x168] sm:$0x1] 0.0
    %82 = vst [vmem:[%s65 + $0x1b0] sm:$0x1] 0.0
    %83 = vst [vmem:[%s65 + $0x1c8] sm:$0x1] 0.0
    %84 = vst [vmem:[%s65 + $0x1e0] sm:$0x1] 0.0
    %85 = vst [vmem:[%s65 + $0x1f8] sm:$0x1] 0.0
    %86 = vst [vmem:[%s65 + $0x210] sm:$0x1] 0.0
    %87 = vst [vmem:[%s65 + $0x228] sm:$0x1] 0.0
    %88 = vst [vmem:[%s65 + $0x240] sm:$0x1] 0.0
    %89 = vst [vmem:[%s65 + $0x258] sm:$0x1] 0.0
    %90 = vst [vmem:[%s65 + $0x270] sm:$0x1] 0.0
    %91 = vst [vmem:[%s65 + $0x288] sm:$0x1] 0.0
    %92 = vst [vmem:[%s65 + $0x2a0] sm:$0x1] 0.0
    %93 = vst [vmem:[%s65 + $0x2b8] sm:$0x1] 0.0
    %94 = vst [vmem:[%s65 + $0x2d0] sm:$0x1] 0.0
    %95 = vst [vmem:[%s65 + $0x2e8] sm:$0x1] 0.0
    %96 = vst [vmem:[%s65 + $0x300] sm:$0x1] 0.0
    %97 = vst [vmem:[%s65 + $0x318] sm:$0x1] 0.0
    %98 = vst [vmem:[%s65 + $0x11] sm:$0x1] 0.0
    %99 = vst [vmem:[%s65 + $0x29] sm:$0x1] 0.0
    %100 = vst [vmem:[%s65 + $0x41] sm:$0x1] 0.0
    %101 = vst [vmem:[%s65 + $0x59] sm:$0x1] 0.0
    %102 = vst [vmem:[%s65 + $0x71] sm:$0x1] 0.0
    %103 = vst [vmem:[%s65 + $0x89] sm:$0x1] 0.0
    %104 = vst [vmem:[%s65 + $0xa1] sm:$0x1] 0.0
    %105 = vst [vmem:[%s65 + $0xb9] sm:$0x1] 0.0
    %106 = vst [vmem:[%s65 + $0xd1] sm:$0x1] 0.0
    %107 = vst [vmem:[%s65 + $0xe9] sm:$0x1] 0.0
    %108 = vst [vmem:[%s65 + $0x101] sm:$0x1] 0.0
    %109 = vst [vmem:[%s65 + $0x119] sm:$0x1] 0.0
    %110 = vst [vmem:[%s65 + $0x131] sm:$0x1] 0.0
    %111 = vst [vmem:[%s65 + $0x149] sm:$0x1] 0.0
    %112 = vst [vmem:[%s65 + $0x161] sm:$0x1] 0.0
    %113 = vst [vmem:[%s65 + $0x179] sm:$0x1] 0.0
    %114 = vst [vmem:[%s65 + $0x1c1] sm:$0x1] 0.0
    %115 = vst [vmem:[%s65 + $0x1d9] sm:$0x1] 0.0
    %116 = vst [vmem:[%s65 + $0x1f1] sm:$0x1] 0.0
    %117 = vst [vmem:[%s65 + $0x209] sm:$0x1] 0.0
    %118 = vst [vmem:[%s65 + $0x221] sm:$0x1] 0.0
    %119 = vst [vmem:[%s65 + $0x239] sm:$0x1] 0.0
    %120 = vst [vmem:[%s65 + $0x251] sm:$0x1] 0.0
    %121 = vst [vmem:[%s65 + $0x269] sm:$0x1] 0.0
    %122 = vst [vmem:[%s65 + $0x281] sm:$0x1] 0.0
    %123 = vst [vmem:[%s65 + $0x299] sm:$0x1] 0.0
    %124 = vst [vmem:[%s65 + $0x2b1] sm:$0x1] 0.0
    %125 = vst [vmem:[%s65 + $0x2c9] sm:$0x1] 0.0
    %126 = vst [vmem:[%s65 + $0x2e1] sm:$0x1] 0.0
    %127 = vst [vmem:[%s65 + $0x2f9] sm:$0x1] 0.0
    %128 = vst [vmem:[%s65 + $0x311] sm:$0x1] 0.0
    %129 = vst [vmem:[%s65 + $0x329] sm:$0x1] 0.0
    %v130 = vld [vmem:[%s0] sm:$0xff]
    %v131 = vld [vmem:[%s0 + $0x8] sm:$0xff]
    %v132 = vld [vmem:[%s0 + $0x18] sm:$0xff]
    %v133 = vld [vmem:[%s0 + $0x20] sm:$0xff]
    %v134 = vld [vmem:[%s0 + $0x30] sm:$0xff]
    %v135 = vld [vmem:[%s0 + $0x38] sm:$0xff]
    %v136 = vld [vmem:[%s0 + $0x48] sm:$0xff]
    %v137 = vld [vmem:[%s0 + $0x50] sm:$0xff]
    %v138 = vld [vmem:[%s0 + $0x60] sm:$0xff]
    %v139 = vld [vmem:[%s0 + $0x68] sm:$0xff]
    %v140 = vld [vmem:[%s0 + $0x78] sm:$0xff]
    %v141 = vld [vmem:[%s0 + $0x80] sm:$0xff]
    %v142 = vld [vmem:[%s0 + $0x90] sm:$0xff]
    %v143 = vld [vmem:[%s0 + $0x98] sm:$0xff]
    %v144 = vld [vmem:[%s0 + $0xa8] sm:$0xff]
    %v145 = vld [vmem:[%s0 + $0xb0] sm:$0xff]
    %v146 = vld [vmem:[%s0 + $0xc0] sm:$0xff]
    %v147 = vld [vmem:[%s0 + $0xc8] sm:$0xff]
    %v148 = vld [vmem:[%s0 + $0xd8] sm:$0xff]
    %v149 = vld [vmem:[%s0 + $0xe0] sm:$0xff]
    %v150 = vld [vmem:[%s0 + $0xf0] sm:$0xff]
    %v151 = vld [vmem:[%s0 + $0xf8] sm:$0xff]
    %v152 = vld [vmem:[%s0 + $0x108] sm:$0xff]
    %v153 = vld [vmem:[%s0 + $0x110] sm:$0xff]
    %v154 = vld [vmem:[%s0 + $0x120] sm:$0xff]
    %v155 = vld [vmem:[%s0 + $0x128] sm:$0xff]
    %v156 = vld [vmem:[%s0 + $0x138] sm:$0xff]
    %v157 = vld [vmem:[%s0 + $0x140] sm:$0xff]
    %v158 = vld [vmem:[%s0 + $0x150] sm:$0xff]
    %v159 = vld [vmem:[%s0 + $0x158] sm:$0xff]
    %v160 = vld [vmem:[%s0 + $0x168] sm:$0xff]
    %v161 = vld [vmem:[%s0 + $0x170] sm:$0xff]
    %v162 = vld [vmem:[%s0 + $0x1b0] sm:$0xff]
    %v163 = vld [vmem:[%s0 + $0x1b8] sm:$0xff]
    %v164 = vld [vmem:[%s0 + $0x1c8] sm:$0xff]
    %v165 = vld [vmem:[%s0 + $0x1d0] sm:$0xff]
    %v166 = vld [vmem:[%s0 + $0x1e0] sm:$0xff]
    %v167 = vld [vmem:[%s0 + $0x1e8] sm:$0xff]
    %v168 = vld [vmem:[%s0 + $0x1f8] sm:$0xff]
    %v169 = vld [vmem:[%s0 + $0x200] sm:$0xff]
    %v170 = vld [vmem:[%s0 + $0x210] sm:$0xff]
    %v171 = vld [vmem:[%s0 + $0x218] sm:$0xff]
    %v172 = vld [vmem:[%s0 + $0x228] sm:$0xff]
    %v173 = vld [vmem:[%s0 + $0x230] sm:$0xff]
    %v174 = vld [vmem:[%s0 + $0x240] sm:$0xff]
    %v175 = vld [vmem:[%s0 + $0x248] sm:$0xff]
    %v176 = vld [vmem:[%s0 + $0x258] sm:$0xff]
    %v177 = vld [vmem:[%s0 + $0x260] sm:$0xff]
    %v178 = vld [vmem:[%s0 + $0x270] sm:$0xff]
    %v179 = vld [vmem:[%s0 + $0x278] sm:$0xff]
    %v180 = vld [vmem:[%s0 + $0x288] sm:$0xff]
    %v181 = vld [vmem:[%s0 + $0x290] sm:$0xff]
    %v182 = vld [vmem:[%s0 + $0x2a0] sm:$0xff]
    %v183 = vld [vmem:[%s0 + $0x2a8] sm:$0xff]
    %v184 = vld [vmem:[%s0 + $0x2b8] sm:$0xff]
    %v185 = vld [vmem:[%s0 + $0x2c0] sm:$0xff]
    %v186 = vld [vmem:[%s0 + $0x2d0] sm:$0xff]
    %v187 = vld [vmem:[%s0 + $0x2d8] sm:$0xff]
    %v188 = vld [vmem:[%s0 + $0x2e8] sm:$0xff]
    %v189 = vld [vmem:[%s0 + $0x2f0] sm:$0xff]
    %v190 = vld [vmem:[%s0 + $0x300] sm:$0xff]
    %v191 = vld [vmem:[%s0 + $0x308] sm:$0xff]
    %v192 = vld [vmem:[%s0 + $0x318] sm:$0xff]
    %v193 = vld [vmem:[%s0 + $0x320] sm:$0xff]
    %v194 = vld [vmem:[%s1] sm:$0xff]
    %v195 = vld [vmem:[%s1 + $0x8] sm:$0xff]
    %v196 = vld [vmem:[%s1 + $0x10] sm:$0xff]
    %v197 = vld [vmem:[%s1 + $0x18] sm:$0xff]
    %v198 = vld [vmem:[%s1 + $0x20] sm:$0xff]
    %v199 = vld [vmem:[%s1 + $0x28] sm:$0xff]
    %v200 = vld [vmem:[%s1 + $0x30] sm:$0xff]
    %v201 = vld [vmem:[%s1 + $0x38] sm:$0xff]
    %v202 = vld [vmem:[%s1 + $0x40] sm:$0xff]
    %v203 = vld [vmem:[%s1 + $0x48] sm:$0xff]
    %v204 = vld [vmem:[%s1 + $0x50] sm:$0xff]
    %v205 = vld [vmem:[%s1 + $0x58] sm:$0xff]
    %v206 = vld [vmem:[%s1 + $0x60] sm:$0xff]
    %v207 = vld [vmem:[%s1 + $0x68] sm:$0xff]
    %v208 = vld [vmem:[%s1 + $0x70] sm:$0xff]
    %v209 = vld [vmem:[%s1 + $0x78] sm:$0xff]
    %210 = vmatpush.msra.mxu0 %v209
    %211 = vmatpush.msra.mxu0 %v208
    %212 = vmatpush.msra.mxu0 %v207
    %213 = vmatpush.msra.mxu0 %v206
    %214 = vmatpush.msra.mxu0 %v205
    %215 = vmatpush.msra.mxu0 %v204
    %216 = vmatpush.msra.mxu0 %v203
    %217 = vmatpush.msra.mxu0 %v202
    %218 = vmatpush.msra.mxu0 %v201
    %219 = vmatpush.msra.mxu0 %v200
    %220 = vmatpush.msra.mxu0 %v199
    %221 = vmatpush.msra.mxu0 %v198
    %222 = vmatpush.msra.mxu0 %v197
    %223 = vmatpush.msra.mxu0 %v196
    %224 = vmatpush.msra.mxu0 %v195
    %225 = vmatpush.msra.mxu0 %v194
    %226 = vmatmul.f32.gmra.mxu0 %v130
    %v227 = vpop.f32.mrf.mxu0
    %v228 = vadd.f32 0.0, %v227
    %229 = vmatmul.f32.gmra.mxu0 %v131
    %v230 = vpop.f32.mrf.mxu0
    %v231 = vadd.f32 0.0, %v230
    %232 = vmatmul.f32.gmra.mxu0 %v132
    %v233 = vpop.f32.mrf.mxu0
    %v234 = vadd.f32 0.0, %v233
    %235 = vmatmul.f32.gmra.mxu0 %v133
    %v236 = vpop.f32.mrf.mxu0
    %v237 = vadd.f32 0.0, %v236
    %238 = vmatmul.f32.gmra.mxu0 %v134
    %v239 = vpop.f32.mrf.mxu0
    %v240 = vadd.f32 0.0, %v239
    %241 = vmatmul.f32.gmra.mxu0 %v135
    %v242 = vpop.f32.mrf.mxu0
    %v243 = vadd.f32 0.0, %v242
    %244 = vmatmul.f32.gmra.mxu0 %v136
    %v245 = vpop.f32.mrf.mxu0
    %v246 = vadd.f32 0.0, %v245
    %247 = vmatmul.f32.gmra.mxu0 %v137
    %v248 = vpop.f32.mrf.mxu0
    %v249 = vadd.f32 0.0, %v248
    %250 = vmatmul.f32.gmra.mxu0 %v138
    %v251 = vpop.f32.mrf.mxu0
    %v252 = vadd.f32 0.0, %v251
    %253 = vmatmul.f32.gmra.mxu0 %v139
    %v254 = vpop.f32.mrf.mxu0
    %v255 = vadd.f32 0.0, %v254
    %256 = vmatmul.f32.gmra.mxu0 %v140
    %v257 = vpop.f32.mrf.mxu0
    %v258 = vadd.f32 0.0, %v257
    %259 = vmatmul.f32.gmra.mxu0 %v141
    %v260 = vpop.f32.mrf.mxu0
    %v261 = vadd.f32 0.0, %v260
    %262 = vmatmul.f32.gmra.mxu0 %v142
    %v263 = vpop.f32.mrf.mxu0
    %v264 = vadd.f32 0.0, %v263
    %265 = vmatmul.f32.gmra.mxu0 %v143
    %v266 = vpop.f32.mrf.mxu0
    %v267 = vadd.f32 0.0, %v266
    %268 = vmatmul.f32.gmra.mxu0 %v144
    %v269 = vpop.f32.mrf.mxu0
    %v270 = vadd.f32 0.0, %v269
    %271 = vmatmul.f32.gmra.mxu0 %v145
    %v272 = vpop.f32.mrf.mxu0
    %v273 = vadd.f32 0.0, %v272
    %274 = vmatmul.f32.gmra.mxu0 %v146
    %v275 = vpop.f32.mrf.mxu0
    %v276 = vadd.f32 0.0, %v275
    %277 = vmatmul.f32.gmra.mxu0 %v147
    %v278 = vpop.f32.mrf.mxu0
    %v279 = vadd.f32 0.0, %v278
    %280 = vmatmul.f32.gmra.mxu0 %v148
    %v281 = vpop.f32.mrf.mxu0
    %v282 = vadd.f32 0.0, %v281
    %283 = vmatmul.f32.gmra.mxu0 %v149
    %v284 = vpop.f32.mrf.mxu0
    %v285 = vadd.f32 0.0, %v284
    %286 = vmatmul.f32.gmra.mxu0 %v150
    %v287 = vpop.f32.mrf.mxu0
    %v288 = vadd.f32 0.0, %v287
    %289 = vmatmul.f32.gmra.mxu0 %v151
    %v290 = vpop.f32.mrf.mxu0
    %v291 = vadd.f32 0.0, %v290
    %292 = vmatmul.f32.gmra.mxu0 %v152
    %v293 = vpop.f32.mrf.mxu0
    %v294 = vadd.f32 0.0, %v293
    %295 = vmatmul.f32.gmra.mxu0 %v153
    %v296 = vpop.f32.mrf.mxu0
    %v297 = vadd.f32 0.0, %v296
    %298 = vmatmul.f32.gmra.mxu0 %v154
    %v299 = vpop.f32.mrf.mxu0
    %v300 = vadd.f32 0.0, %v299
    %301 = vmatmul.f32.gmra.mxu0 %v155
    %v302 = vpop.f32.mrf.mxu0
    %v303 = vadd.f32 0.0, %v302
    %304 = vmatmul.f32.gmra.mxu0 %v156
    %v305 = vpop.f32.mrf.mxu0
    %v306 = vadd.f32 0.0, %v305
    %307 = vmatmul.f32.gmra.mxu0 %v157
    %v308 = vpop.f32.mrf.mxu0
    %v309 = vadd.f32 0.0, %v308
    %310 = vmatmul.f32.gmra.mxu0 %v158
    %v311 = vpop.f32.mrf.mxu0
    %v312 = vadd.f32 0.0, %v311
    %313 = vmatmul.f32.gmra.mxu0 %v159
    %v314 = vpop.f32.mrf.mxu0
    %v315 = vadd.f32 0.0, %v314
    %316 = vmatmul.f32.gmra.mxu0 %v160
    %v317 = vpop.f32.mrf.mxu0
    %v318 = vadd.f32 0.0, %v317
    %319 = vmatmul.f32.gmra.mxu0 %v161
    %v320 = vpop.f32.mrf.mxu0
    %v321 = vadd.f32 0.0, %v320
    %322 = vmatmul.f32.gmra.mxu0 %v162
    %v323 = vpop.f32.mrf.mxu0
    %v324 = vadd.f32 0.0, %v323
    %325 = vmatmul.f32.gmra.mxu0 %v163
    %v326 = vpop.f32.mrf.mxu0
    %v327 = vadd.f32 0.0, %v326
    %328 = vmatmul.f32.gmra.mxu0 %v164
    %v329 = vpop.f32.mrf.mxu0
    %v330 = vadd.f32 0.0, %v329
    %331 = vmatmul.f32.gmra.mxu0 %v165
    %v332 = vpop.f32.mrf.mxu0
    %v333 = vadd.f32 0.0, %v332
    %334 = vmatmul.f32.gmra.mxu0 %v166
    %v335 = vpop.f32.mrf.mxu0
    %v336 = vadd.f32 0.0, %v335
    %337 = vmatmul.f32.gmra.mxu0 %v167
    %v338 = vpop.f32.mrf.mxu0
    %v339 = vadd.f32 0.0, %v338
    %340 = vmatmul.f32.gmra.mxu0 %v168
    %v341 = vpop.f32.mrf.mxu0
    %v342 = vadd.f32 0.0, %v341
    %343 = vmatmul.f32.gmra.mxu0 %v169
    %v344 = vpop.f32.mrf.mxu0
    %v345 = vadd.f32 0.0, %v344
    %346 = vmatmul.f32.gmra.mxu0 %v170
    %v347 = vpop.f32.mrf.mxu0
    %v348 = vadd.f32 0.0, %v347
    %349 = vmatmul.f32.gmra.mxu0 %v171
    %v350 = vpop.f32.mrf.mxu0
    %v351 = vadd.f32 0.0, %v350
    %352 = vmatmul.f32.gmra.mxu0 %v172
    %v353 = vpop.f32.mrf.mxu0
    %v354 = vadd.f32 0.0, %v353
    %355 = vmatmul.f32.gmra.mxu0 %v173
    %v356 = vpop.f32.mrf.mxu0
    %v357 = vadd.f32 0.0, %v356
    %358 = vmatmul.f32.gmra.mxu0 %v174
    %v359 = vpop.f32.mrf.mxu0
    %v360 = vadd.f32 0.0, %v359
    %361 = vmatmul.f32.gmra.mxu0 %v175
    %v362 = vpop.f32.mrf.mxu0
    %v363 = vadd.f32 0.0, %v362
    %364 = vmatmul.f32.gmra.mxu0 %v176
    %v365 = vpop.f32.mrf.mxu0
    %v366 = vadd.f32 0.0, %v365
    %367 = vmatmul.f32.gmra.mxu0 %v177
    %v368 = vpop.f32.mrf.mxu0
    %v369 = vadd.f32 0.0, %v368
    %370 = vmatmul.f32.gmra.mxu0 %v178
    %v371 = vpop.f32.mrf.mxu0
    %v372 = vadd.f32 0.0, %v371
    %373 = vmatmul.f32.gmra.mxu0 %v179
    %v374 = vpop.f32.mrf.mxu0
    %v375 = vadd.f32 0.0, %v374
    %376 = vmatmul.f32.gmra.mxu0 %v180
    %v377 = vpop.f32.mrf.mxu0
    %v378 = vadd.f32 0.0, %v377
    %379 = vmatmul.f32.gmra.mxu0 %v181
    %v380 = vpop.f32.mrf.mxu0
    %v381 = vadd.f32 0.0, %v380
    %382 = vmatmul.f32.gmra.mxu0 %v182
    %v383 = vpop.f32.mrf.mxu0
    %v384 = vadd.f32 0.0, %v383
    %385 = vmatmul.f32.gmra.mxu0 %v183
    %v386 = vpop.f32.mrf.mxu0
    %v387 = vadd.f32 0.0, %v386
    %388 = vmatmul.f32.gmra.mxu0 %v184
    %v389 = vpop.f32.mrf.mxu0
    %v390 = vadd.f32 0.0, %v389
    %391 = vmatmul.f32.gmra.mxu0 %v185
    %v392 = vpop.f32.mrf.mxu0
    %v393 = vadd.f32 0.0, %v392
    %394 = vmatmul.f32.gmra.mxu0 %v186
    %v395 = vpop.f32.mrf.mxu0
    %v396 = vadd.f32 0.0, %v395
    %397 = vmatmul.f32.gmra.mxu0 %v187
    %v398 = vpop.f32.mrf.mxu0
    %v399 = vadd.f32 0.0, %v398
    %400 = vmatmul.f32.gmra.mxu0 %v188
    %v401 = vpop.f32.mrf.mxu0
    %v402 = vadd.f32 0.0, %v401
    %403 = vmatmul.f32.gmra.mxu0 %v189
    %v404 = vpop.f32.mrf.mxu0
    %v405 = vadd.f32 0.0, %v404
    %406 = vmatmul.f32.gmra.mxu0 %v190
    %v407 = vpop.f32.mrf.mxu0
    %v408 = vadd.f32 0.0, %v407
    %409 = vmatmul.f32.gmra.mxu0 %v191
    %v410 = vpop.f32.mrf.mxu0
    %v411 = vadd.f32 0.0, %v410
    %412 = vmatmul.f32.gmra.mxu0 %v192
    %v413 = vpop.f32.mrf.mxu0
    %v414 = vadd.f32 0.0, %v413
    %415 = vmatmul.f32.gmra.mxu0 %v193
    %v416 = vpop.f32.mrf.mxu0
    %v417 = vadd.f32 0.0, %v416
    %418 = vdwg.mxu0
    %419 = vst [vmem:[#allocation3] sm:$0xff] %v228
    %420 = vst [vmem:[#allocation3 + $0x8] sm:$0xff] %v231
    %421 = vst [vmem:[#allocation3 + $0x10] sm:$0xff] %v234
    %422 = vst [vmem:[#allocation3 + $0x18] sm:$0xff] %v237
    %423 = vst [vmem:[#allocation3 + $0x20] sm:$0xff] %v240
    %424 = vst [vmem:[#allocation3 + $0x28] sm:$0xff] %v243
    %425 = vst [vmem:[#allocation3 + $0x30] sm:$0xff] %v246
    %426 = vst [vmem:[#allocation3 + $0x38] sm:$0xff] %v249
    %427 = vst [vmem:[#allocation3 + $0x40] sm:$0xff] %v252
    %428 = vst [vmem:[#allocation3 + $0x48] sm:$0xff] %v255
    %429 = vst [vmem:[#allocation3 + $0x50] sm:$0xff] %v258
    %430 = vst [vmem:[#allocation3 + $0x58] sm:$0xff] %v261
    %431 = vst [vmem:[#allocation3 + $0x60] sm:$0xff] %v264
    %432 = vst [vmem:[#allocation3 + $0x68] sm:$0xff] %v267
    %433 = vst [vmem:[#allocation3 + $0x70] sm:$0xff] %v270
    %434 = vst [vmem:[#allocation3 + $0x78] sm:$0xff] %v273
    %435 = vst [vmem:[#allocation3 + $0x80] sm:$0xff] %v276
    %436 = vst [vmem:[#allocation3 + $0x88] sm:$0xff] %v279
    %437 = vst [vmem:[#allocation3 + $0x90] sm:$0xff] %v282
    %438 = vst [vmem:[#allocation3 + $0x98] sm:$0xff] %v285
    %439 = vst [vmem:[#allocation3 + $0xa0] sm:$0xff] %v288
    %440 = vst [vmem:[#allocation3 + $0xa8] sm:$0xff] %v291
    %441 = vst [vmem:[#allocation3 + $0xb0] sm:$0xff] %v294
    %442 = vst [vmem:[#allocation3 + $0xb8] sm:$0xff] %v297
    %443 = vst [vmem:[#allocation3 + $0xc0] sm:$0xff] %v300
    %444 = vst [vmem:[#allocation3 + $0xc8] sm:$0xff] %v303
    %445 = vst [vmem:[#allocation3 + $0xd0] sm:$0xff] %v306
    %446 = vst [vmem:[#allocation3 + $0xd8] sm:$0xff] %v309
    %447 = vst [vmem:[#allocation3 + $0xe0] sm:$0xff] %v312
    %448 = vst [vmem:[#allocation3 + $0xe8] sm:$0xff] %v315
    %449 = vst [vmem:[#allocation3 + $0xf0] sm:$0xff] %v318
    %450 = vst [vmem:[#allocation3 + $0xf8] sm:$0xff] %v321
    %451 = vst [vmem:[#allocation3 + $0x100] sm:$0xff] %v324
    %452 = vst [vmem:[#allocation3 + $0x108] sm:$0xff] %v327
    %453 = vst [vmem:[#allocation3 + $0x110] sm:$0xff] %v330
    %454 = vst [vmem:[#allocation3 + $0x118] sm:$0xff] %v333
    %455 = vst [vmem:[#allocation3 + $0x120] sm:$0xff] %v336
    %456 = vst [vmem:[#allocation3 + $0x128] sm:$0xff] %v339
    %457 = vst [vmem:[#allocation3 + $0x130] sm:$0xff] %v342
    %458 = vst [vmem:[#allocation3 + $0x138] sm:$0xff] %v345
    %459 = vst [vmem:[#allocation3 + $0x140] sm:$0xff] %v348
    %460 = vst [vmem:[#allocation3 + $0x148] sm:$0xff] %v351
    %461 = vst [vmem:[#allocation3 + $0x150] sm:$0xff] %v354
    %462 = vst [vmem:[#allocation3 + $0x158] sm:$0xff] %v357
    %463 = vst [vmem:[#allocation3 + $0x160] sm:$0xff] %v360
    %464 = vst [vmem:[#allocation3 + $0x168] sm:$0xff] %v363
    %465 = vst [vmem:[#allocation3 + $0x170] sm:$0xff] %v366
    %466 = vst [vmem:[#allocation3 + $0x178] sm:$0xff] %v369
    %467 = vst [vmem:[#allocation3 + $0x180] sm:$0xff] %v372
    %468 = vst [vmem:[#allocation3 + $0x188] sm:$0xff] %v375
    %469 = vst [vmem:[#allocation3 + $0x190] sm:$0xff] %v378
    %470 = vst [vmem:[#allocation3 + $0x198] sm:$0xff] %v381
    %471 = vst [vmem:[#allocation3 + $0x1a0] sm:$0xff] %v384
    %472 = vst [vmem:[#allocation3 + $0x1a8] sm:$0xff] %v387
    %473 = vst [vmem:[#allocation3 + $0x1b0] sm:$0xff] %v390
    %474 = vst [vmem:[#allocation3 + $0x1b8] sm:$0xff] %v393
    %475 = vst [vmem:[#allocation3 + $0x1c0] sm:$0xff] %v396
    %476 = vst [vmem:[#allocation3 + $0x1c8] sm:$0xff] %v399
    %477 = vst [vmem:[#allocation3 + $0x1d0] sm:$0xff] %v402
    %478 = vst [vmem:[#allocation3 + $0x1d8] sm:$0xff] %v405
    %479 = vst [vmem:[#allocation3 + $0x1e0] sm:$0xff] %v408
    %480 = vst [vmem:[#allocation3 + $0x1e8] sm:$0xff] %v411
    %481 = vst [vmem:[#allocation3 + $0x1f0] sm:$0xff] %v414
    %482 = vst [vmem:[#allocation3 + $0x1f8] sm:$0xff] %v417
    %v483 = vld [vmem:[%s0 + $0x1] sm:$0xff]
    %v484 = vld [vmem:[%s0 + $0x9] sm:$0xff]
    %v485 = vld [vmem:[%s0 + $0x19] sm:$0xff]
    %v486 = vld [vmem:[%s0 + $0x21] sm:$0xff]
    %v487 = vld [vmem:[%s0 + $0x31] sm:$0xff]
    %v488 = vld [vmem:[%s0 + $0x39] sm:$0xff]
    %v489 = vld [vmem:[%s0 + $0x49] sm:$0xff]
    %v490 = vld [vmem:[%s0 + $0x51] sm:$0xff]
    %v491 = vld [vmem:[%s0 + $0x61] sm:$0xff]
    %v492 = vld [vmem:[%s0 + $0x69] sm:$0xff]
    %v493 = vld [vmem:[%s0 + $0x79] sm:$0xff]
    %v494 = vld [vmem:[%s0 + $0x81] sm:$0xff]
    %v495 = vld [vmem:[%s0 + $0x91] sm:$0xff]
    %v496 = vld [vmem:[%s0 + $0x99] sm:$0xff]
    %v497 = vld [vmem:[%s0 + $0xa9] sm:$0xff]
    %v498 = vld [vmem:[%s0 + $0xb1] sm:$0xff]
    %v499 = vld [vmem:[%s0 + $0xc1] sm:$0xff]
    %v500 = vld [vmem:[%s0 + $0xc9] sm:$0xff]
    %v501 = vld [vmem:[%s0 + $0xd9] sm:$0xff]
    %v502 = vld [vmem:[%s0 + $0xe1] sm:$0xff]
    %v503 = vld [vmem:[%s0 + $0xf1] sm:$0xff]
    %v504 = vld [vmem:[%s0 + $0xf9] sm:$0xff]
    %v505 = vld [vmem:[%s0 + $0x109] sm:$0xff]
    %v506 = vld [vmem:[%s0 + $0x111] sm:$0xff]
    %v507 = vld [vmem:[%s0 + $0x121] sm:$0xff]
    %v508 = vld [vmem:[%s0 + $0x129] sm:$0xff]
    %v509 = vld [vmem:[%s0 + $0x139] sm:$0xff]
    %v510 = vld [vmem:[%s0 + $0x141] sm:$0xff]
    %v511 = vld [vmem:[%s0 + $0x151] sm:$0xff]
    %v512 = vld [vmem:[%s0 + $0x159] sm:$0xff]
    %v513 = vld [vmem:[%s0 + $0x169] sm:$0xff]
    %v514 = vld [vmem:[%s0 + $0x171] sm:$0xff]
    %v515 = vld [vmem:[%s0 + $0x1b1] sm:$0xff]
    %v516 = vld [vmem:[%s0 + $0x1b9] sm:$0xff]
    %v517 = vld [vmem:[%s0 + $0x1c9] sm:$0xff]
    %v518 = vld [vmem:[%s0 + $0x1d1] sm:$0xff]
    %v519 = vld [vmem:[%s0 + $0x1e1] sm:$0xff]
    %v520 = vld [vmem:[%s0 + $0x1e9] sm:$0xff]
    %v521 = vld [vmem:[%s0 + $0x1f9] sm:$0xff]
    %v522 = vld [vmem:[%s0 + $0x201] sm:$0xff]
    %v523 = vld [vmem:[%s0 + $0x211] sm:$0xff]
    %v524 = vld [vmem:[%s0 + $0x219] sm:$0xff]
    %v525 = vld [vmem:[%s0 + $0x229] sm:$0xff]
    %v526 = vld [vmem:[%s0 + $0x231] sm:$0xff]
    %v527 = vld [vmem:[%s0 + $0x241] sm:$0xff]
    %v528 = vld [vmem:[%s0 + $0x249] sm:$0xff]
    %v529 = vld [vmem:[%s0 + $0x259] sm:$0xff]
    %v530 = vld [vmem:[%s0 + $0x261] sm:$0xff]
    %v531 = vld [vmem:[%s0 + $0x271] sm:$0xff]
    %v532 = vld [vmem:[%s0 + $0x279] sm:$0xff]
    %v533 = vld [vmem:[%s0 + $0x289] sm:$0xff]
    %v534 = vld [vmem:[%s0 + $0x291] sm:$0xff]
    %v535 = vld [vmem:[%s0 + $0x2a1] sm:$0xff]
    %v536 = vld [vmem:[%s0 + $0x2a9] sm:$0xff]
    %v537 = vld [vmem:[%s0 + $0x2b9] sm:$0xff]
    %v538 = vld [vmem:[%s0 + $0x2c1] sm:$0xff]
    %v539 = vld [vmem:[%s0 + $0x2d1] sm:$0xff]
    %v540 = vld [vmem:[%s0 + $0x2d9] sm:$0xff]
    %v541 = vld [vmem:[%s0 + $0x2e9] sm:$0xff]
    %v542 = vld [vmem:[%s0 + $0x2f1] sm:$0xff]
    %v543 = vld [vmem:[%s0 + $0x301] sm:$0xff]
    %v544 = vld [vmem:[%s0 + $0x309] sm:$0xff]
    %v545 = vld [vmem:[%s0 + $0x319] sm:$0xff]
    %v546 = vld [vmem:[%s0 + $0x321] sm:$0xff]
    %s547 = scalar_lea.vmem %s1, 128
    %v548 = vld [vmem:[%s547] sm:$0xff]
    %v549 = vld [vmem:[%s547 + $0x8] sm:$0xff]
    %v550 = vld [vmem:[%s547 + $0x10] sm:$0xff]
    %v551 = vld [vmem:[%s547 + $0x18] sm:$0xff]
    %v552 = vld [vmem:[%s547 + $0x20] sm:$0xff]
    %v553 = vld [vmem:[%s547 + $0x28] sm:$0xff]
    %v554 = vld [vmem:[%s547 + $0x30] sm:$0xff]
    %v555 = vld [vmem:[%s547 + $0x38] sm:$0xff]
    %v556 = vld [vmem:[%s547 + $0x40] sm:$0xff]
    %v557 = vld [vmem:[%s547 + $0x48] sm:$0xff]
    %v558 = vld [vmem:[%s547 + $0x50] sm:$0xff]
    %v559 = vld [vmem:[%s547 + $0x58] sm:$0xff]
    %v560 = vld [vmem:[%s547 + $0x60] sm:$0xff]
    %v561 = vld [vmem:[%s547 + $0x68] sm:$0xff]
    %v562 = vld [vmem:[%s547 + $0x70] sm:$0xff]
    %v563 = vld [vmem:[%s547 + $0x78] sm:$0xff]
    %564 = vmatpush.msra.mxu0 %v563
    %565 = vmatpush.msra.mxu0 %v562
    %566 = vmatpush.msra.mxu0 %v561
    %567 = vmatpush.msra.mxu0 %v560
    %568 = vmatpush.msra.mxu0 %v559
    %569 = vmatpush.msra.mxu0 %v558
    %570 = vmatpush.msra.mxu0 %v557
    %571 = vmatpush.msra.mxu0 %v556
    %572 = vmatpush.msra.mxu0 %v555
    %573 = vmatpush.msra.mxu0 %v554
    %574 = vmatpush.msra.mxu0 %v553
    %575 = vmatpush.msra.mxu0 %v552
    %576 = vmatpush.msra.mxu0 %v551
    %577 = vmatpush.msra.mxu0 %v550
    %578 = vmatpush.msra.mxu0 %v549
    %579 = vmatpush.msra.mxu0 %v548
    %580 = vmatmul.f32.gmra.mxu0 %v483
    %v581 = vpop.f32.mrf.mxu0
    %v582 = vadd.f32 0.0, %v581
    %583 = vmatmul.f32.gmra.mxu0 %v484
    %v584 = vpop.f32.mrf.mxu0
    %v585 = vadd.f32 0.0, %v584
    %586 = vmatmul.f32.gmra.mxu0 %v485
    %v587 = vpop.f32.mrf.mxu0
    %v588 = vadd.f32 0.0, %v587
    %589 = vmatmul.f32.gmra.mxu0 %v486
    %v590 = vpop.f32.mrf.mxu0
    %v591 = vadd.f32 0.0, %v590
    %592 = vmatmul.f32.gmra.mxu0 %v487
    %v593 = vpop.f32.mrf.mxu0
    %v594 = vadd.f32 0.0, %v593
    %595 = vmatmul.f32.gmra.mxu0 %v488
    %v596 = vpop.f32.mrf.mxu0
    %v597 = vadd.f32 0.0, %v596
    %598 = vmatmul.f32.gmra.mxu0 %v489
    %v599 = vpop.f32.mrf.mxu0
    %v600 = vadd.f32 0.0, %v599
    %601 = vmatmul.f32.gmra.mxu0 %v490
    %v602 = vpop.f32.mrf.mxu0
    %v603 = vadd.f32 0.0, %v602
    %604 = vmatmul.f32.gmra.mxu0 %v491
    %v605 = vpop.f32.mrf.mxu0
    %v606 = vadd.f32 0.0, %v605
    %607 = vmatmul.f32.gmra.mxu0 %v492
    %v608 = vpop.f32.mrf.mxu0
    %v609 = vadd.f32 0.0, %v608
    %610 = vmatmul.f32.gmra.mxu0 %v493
    %v611 = vpop.f32.mrf.mxu0
    %v612 = vadd.f32 0.0, %v611
    %613 = vmatmul.f32.gmra.mxu0 %v494
    %v614 = vpop.f32.mrf.mxu0
    %v615 = vadd.f32 0.0, %v614
    %616 = vmatmul.f32.gmra.mxu0 %v495
    %v617 = vpop.f32.mrf.mxu0
    %v618 = vadd.f32 0.0, %v617
    %619 = vmatmul.f32.gmra.mxu0 %v496
    %v620 = vpop.f32.mrf.mxu0
    %v621 = vadd.f32 0.0, %v620
    %622 = vmatmul.f32.gmra.mxu0 %v497
    %v623 = vpop.f32.mrf.mxu0
    %v624 = vadd.f32 0.0, %v623
    %625 = vmatmul.f32.gmra.mxu0 %v498
    %v626 = vpop.f32.mrf.mxu0
    %v627 = vadd.f32 0.0, %v626
    %628 = vmatmul.f32.gmra.mxu0 %v499
    %v629 = vpop.f32.mrf.mxu0
    %v630 = vadd.f32 0.0, %v629
    %631 = vmatmul.f32.gmra.mxu0 %v500
    %v632 = vpop.f32.mrf.mxu0
    %v633 = vadd.f32 0.0, %v632
    %634 = vmatmul.f32.gmra.mxu0 %v501
    %v635 = vpop.f32.mrf.mxu0
    %v636 = vadd.f32 0.0, %v635
    %637 = vmatmul.f32.gmra.mxu0 %v502
    %v638 = vpop.f32.mrf.mxu0
    %v639 = vadd.f32 0.0, %v638
    %640 = vmatmul.f32.gmra.mxu0 %v503
    %v641 = vpop.f32.mrf.mxu0
    %v642 = vadd.f32 0.0, %v641
    %643 = vmatmul.f32.gmra.mxu0 %v504
    %v644 = vpop.f32.mrf.mxu0
    %v645 = vadd.f32 0.0, %v644
    %646 = vmatmul.f32.gmra.mxu0 %v505
    %v647 = vpop.f32.mrf.mxu0
    %v648 = vadd.f32 0.0, %v647
    %649 = vmatmul.f32.gmra.mxu0 %v506
    %v650 = vpop.f32.mrf.mxu0
    %v651 = vadd.f32 0.0, %v650
    %652 = vmatmul.f32.gmra.mxu0 %v507
    %v653 = vpop.f32.mrf.mxu0
    %v654 = vadd.f32 0.0, %v653
    %655 = vmatmul.f32.gmra.mxu0 %v508
    %v656 = vpop.f32.mrf.mxu0
    %v657 = vadd.f32 0.0, %v656
    %658 = vmatmul.f32.gmra.mxu0 %v509
    %v659 = vpop.f32.mrf.mxu0
    %v660 = vadd.f32 0.0, %v659
    %661 = vmatmul.f32.gmra.mxu0 %v510
    %v662 = vpop.f32.mrf.mxu0
    %v663 = vadd.f32 0.0, %v662
    %664 = vmatmul.f32.gmra.mxu0 %v511
    %v665 = vpop.f32.mrf.mxu0
    %v666 = vadd.f32 0.0, %v665
    %667 = vmatmul.f32.gmra.mxu0 %v512
    %v668 = vpop.f32.mrf.mxu0
    %v669 = vadd.f32 0.0, %v668
    %670 = vmatmul.f32.gmra.mxu0 %v513
    %v671 = vpop.f32.mrf.mxu0
    %v672 = vadd.f32 0.0, %v671
    %673 = vmatmul.f32.gmra.mxu0 %v514
    %v674 = vpop.f32.mrf.mxu0
    %v675 = vadd.f32 0.0, %v674
    %676 = vmatmul.f32.gmra.mxu0 %v515
    %v677 = vpop.f32.mrf.mxu0
    %v678 = vadd.f32 0.0, %v677
    %679 = vmatmul.f32.gmra.mxu0 %v516
    %v680 = vpop.f32.mrf.mxu0
    %v681 = vadd.f32 0.0, %v680
    %682 = vmatmul.f32.gmra.mxu0 %v517
    %v683 = vpop.f32.mrf.mxu0
    %v684 = vadd.f32 0.0, %v683
    %685 = vmatmul.f32.gmra.mxu0 %v518
    %v686 = vpop.f32.mrf.mxu0
    %v687 = vadd.f32 0.0, %v686
    %688 = vmatmul.f32.gmra.mxu0 %v519
    %v689 = vpop.f32.mrf.mxu0
    %v690 = vadd.f32 0.0, %v689
    %691 = vmatmul.f32.gmra.mxu0 %v520
    %v692 = vpop.f32.mrf.mxu0
    %v693 = vadd.f32 0.0, %v692
    %694 = vmatmul.f32.gmra.mxu0 %v521
    %v695 = vpop.f32.mrf.mxu0
    %v696 = vadd.f32 0.0, %v695
    %697 = vmatmul.f32.gmra.mxu0 %v522
    %v698 = vpop.f32.mrf.mxu0
    %v699 = vadd.f32 0.0, %v698
    %700 = vmatmul.f32.gmra.mxu0 %v523
    %v701 = vpop.f32.mrf.mxu0
    %v702 = vadd.f32 0.0, %v701
    %703 = vmatmul.f32.gmra.mxu0 %v524
    %v704 = vpop.f32.mrf.mxu0
    %v705 = vadd.f32 0.0, %v704
    %706 = vmatmul.f32.gmra.mxu0 %v525
    %v707 = vpop.f32.mrf.mxu0
    %v708 = vadd.f32 0.0, %v707
    %709 = vmatmul.f32.gmra.mxu0 %v526
    %v710 = vpop.f32.mrf.mxu0
    %v711 = vadd.f32 0.0, %v710
    %712 = vmatmul.f32.gmra.mxu0 %v527
    %v713 = vpop.f32.mrf.mxu0
    %v714 = vadd.f32 0.0, %v713
    %715 = vmatmul.f32.gmra.mxu0 %v528
    %v716 = vpop.f32.mrf.mxu0
    %v717 = vadd.f32 0.0, %v716
    %718 = vmatmul.f32.gmra.mxu0 %v529
    %v719 = vpop.f32.mrf.mxu0
    %v720 = vadd.f32 0.0, %v719
    %721 = vmatmul.f32.gmra.mxu0 %v530
    %v722 = vpop.f32.mrf.mxu0
    %v723 = vadd.f32 0.0, %v722
    %724 = vmatmul.f32.gmra.mxu0 %v531
    %v725 = vpop.f32.mrf.mxu0
    %v726 = vadd.f32 0.0, %v725
    %727 = vmatmul.f32.gmra.mxu0 %v532
    %v728 = vpop.f32.mrf.mxu0
    %v729 = vadd.f32 0.0, %v728
    %730 = vmatmul.f32.gmra.mxu0 %v533
    %v731 = vpop.f32.mrf.mxu0
    %v732 = vadd.f32 0.0, %v731
    %733 = vmatmul.f32.gmra.mxu0 %v534
    %v734 = vpop.f32.mrf.mxu0
    %v735 = vadd.f32 0.0, %v734
    %736 = vmatmul.f32.gmra.mxu0 %v535
    %v737 = vpop.f32.mrf.mxu0
    %v738 = vadd.f32 0.0, %v737
    %739 = vmatmul.f32.gmra.mxu0 %v536
    %v740 = vpop.f32.mrf.mxu0
    %v741 = vadd.f32 0.0, %v740
    %742 = vmatmul.f32.gmra.mxu0 %v537
    %v743 = vpop.f32.mrf.mxu0
    %v744 = vadd.f32 0.0, %v743
    %745 = vmatmul.f32.gmra.mxu0 %v538
    %v746 = vpop.f32.mrf.mxu0
    %v747 = vadd.f32 0.0, %v746
    %748 = vmatmul.f32.gmra.mxu0 %v539
    %v749 = vpop.f32.mrf.mxu0
    %v750 = vadd.f32 0.0, %v749
    %751 = vmatmul.f32.gmra.mxu0 %v540
    %v752 = vpop.f32.mrf.mxu0
    %v753 = vadd.f32 0.0, %v752
    %754 = vmatmul.f32.gmra.mxu0 %v541
    %v755 = vpop.f32.mrf.mxu0
    %v756 = vadd.f32 0.0, %v755
    %757 = vmatmul.f32.gmra.mxu0 %v542
    %v758 = vpop.f32.mrf.mxu0
    %v759 = vadd.f32 0.0, %v758
    %760 = vmatmul.f32.gmra.mxu0 %v543
    %v761 = vpop.f32.mrf.mxu0
    %v762 = vadd.f32 0.0, %v761
    %763 = vmatmul.f32.gmra.mxu0 %v544
    %v764 = vpop.f32.mrf.mxu0
    %v765 = vadd.f32 0.0, %v764
    %766 = vmatmul.f32.gmra.mxu0 %v545
    %v767 = vpop.f32.mrf.mxu0
    %v768 = vadd.f32 0.0, %v767
    %769 = vmatmul.f32.gmra.mxu0 %v546
    %v770 = vpop.f32.mrf.mxu0
    %v771 = vadd.f32 0.0, %v770
    %772 = vdwg.mxu0
    %v773 = vld [vmem:[#allocation3] sm:$0xff]
    %v774 = vld [vmem:[#allocation3 + $0x8] sm:$0xff]
    %v775 = vld [vmem:[#allocation3 + $0x10] sm:$0xff]
    %v776 = vld [vmem:[#allocation3 + $0x18] sm:$0xff]
    %v777 = vld [vmem:[#allocation3 + $0x20] sm:$0xff]
    %v778 = vld [vmem:[#allocation3 + $0x28] sm:$0xff]
    %v779 = vld [vmem:[#allocation3 + $0x30] sm:$0xff]
    %v780 = vld [vmem:[#allocation3 + $0x38] sm:$0xff]
    %v781 = vld [vmem:[#allocation3 + $0x40] sm:$0xff]
    %v782 = vld [vmem:[#allocation3 + $0x48] sm:$0xff]
    %v783 = vld [vmem:[#allocation3 + $0x50] sm:$0xff]
    %v784 = vld [vmem:[#allocation3 + $0x58] sm:$0xff]
    %v785 = vld [vmem:[#allocation3 + $0x60] sm:$0xff]
    %v786 = vld [vmem:[#allocation3 + $0x68] sm:$0xff]
    %v787 = vld [vmem:[#allocation3 + $0x70] sm:$0xff]
    %v788 = vld [vmem:[#allocation3 + $0x78] sm:$0xff]
    %v789 = vld [vmem:[#allocation3 + $0x80] sm:$0xff]
    %v790 = vld [vmem:[#allocation3 + $0x88] sm:$0xff]
    %v791 = vld [vmem:[#allocation3 + $0x90] sm:$0xff]
    %v792 = vld [vmem:[#allocation3 + $0x98] sm:$0xff]
    %v793 = vld [vmem:[#allocation3 + $0xa0] sm:$0xff]
    %v794 = vld [vmem:[#allocation3 + $0xa8] sm:$0xff]
    %v795 = vld [vmem:[#allocation3 + $0xb0] sm:$0xff]
    %v796 = vld [vmem:[#allocation3 + $0xb8] sm:$0xff]
    %v797 = vld [vmem:[#allocation3 + $0xc0] sm:$0xff]
    %v798 = vld [vmem:[#allocation3 + $0xc8] sm:$0xff]
    %v799 = vld [vmem:[#allocation3 + $0xd0] sm:$0xff]
    %v800 = vld [vmem:[#allocation3 + $0xd8] sm:$0xff]
    %v801 = vld [vmem:[#allocation3 + $0xe0] sm:$0xff]
    %v802 = vld [vmem:[#allocation3 + $0xe8] sm:$0xff]
    %v803 = vld [vmem:[#allocation3 + $0xf0] sm:$0xff]
    %v804 = vld [vmem:[#allocation3 + $0xf8] sm:$0xff]
    %v805 = vld [vmem:[#allocation3 + $0x100] sm:$0xff]
    %v806 = vld [vmem:[#allocation3 + $0x108] sm:$0xff]
    %v807 = vld [vmem:[#allocation3 + $0x110] sm:$0xff]
    %v808 = vld [vmem:[#allocation3 + $0x118] sm:$0xff]
    %v809 = vld [vmem:[#allocation3 + $0x120] sm:$0xff]
    %v810 = vld [vmem:[#allocation3 + $0x128] sm:$0xff]
    %v811 = vld [vmem:[#allocation3 + $0x130] sm:$0xff]
    %v812 = vld [vmem:[#allocation3 + $0x138] sm:$0xff]
    %v813 = vld [vmem:[#allocation3 + $0x140] sm:$0xff]
    %v814 = vld [vmem:[#allocation3 + $0x148] sm:$0xff]
    %v815 = vld [vmem:[#allocation3 + $0x150] sm:$0xff]
    %v816 = vld [vmem:[#allocation3 + $0x158] sm:$0xff]
    %v817 = vld [vmem:[#allocation3 + $0x160] sm:$0xff]
    %v818 = vld [vmem:[#allocation3 + $0x168] sm:$0xff]
    %v819 = vld [vmem:[#allocation3 + $0x170] sm:$0xff]
    %v820 = vld [vmem:[#allocation3 + $0x178] sm:$0xff]
    %v821 = vld [vmem:[#allocation3 + $0x180] sm:$0xff]
    %v822 = vld [vmem:[#allocation3 + $0x188] sm:$0xff]
    %v823 = vld [vmem:[#allocation3 + $0x190] sm:$0xff]
    %v824 = vld [vmem:[#allocation3 + $0x198] sm:$0xff]
    %v825 = vld [vmem:[#allocation3 + $0x1a0] sm:$0xff]
    %v826 = vld [vmem:[#allocation3 + $0x1a8] sm:$0xff]
    %v827 = vld [vmem:[#allocation3 + $0x1b0] sm:$0xff]
    %v828 = vld [vmem:[#allocation3 + $0x1b8] sm:$0xff]
    %v829 = vld [vmem:[#allocation3 + $0x1c0] sm:$0xff]
    %v830 = vld [vmem:[#allocation3 + $0x1c8] sm:$0xff]
    %v831 = vld [vmem:[#allocation3 + $0x1d0] sm:$0xff]
    %v832 = vld [vmem:[#allocation3 + $0x1d8] sm:$0xff]
    %v833 = vld [vmem:[#allocation3 + $0x1e0] sm:$0xff]
    %v834 = vld [vmem:[#allocation3 + $0x1e8] sm:$0xff]
    %v835 = vld [vmem:[#allocation3 + $0x1f0] sm:$0xff]
    %v836 = vld [vmem:[#allocation3 + $0x1f8] sm:$0xff]
    %v837 = vadd.f32 %v773, %v582
    %v838 = vadd.f32 %v774, %v585
    %v839 = vadd.f32 %v775, %v588
    %v840 = vadd.f32 %v776, %v591
    %v841 = vadd.f32 %v777, %v594
    %v842 = vadd.f32 %v778, %v597
    %v843 = vadd.f32 %v779, %v600
    %v844 = vadd.f32 %v780, %v603
    %v845 = vadd.f32 %v781, %v606
    %v846 = vadd.f32 %v782, %v609
    %v847 = vadd.f32 %v783, %v612
    %v848 = vadd.f32 %v784, %v615
    %v849 = vadd.f32 %v785, %v618
    %v850 = vadd.f32 %v786, %v621
    %v851 = vadd.f32 %v787, %v624
    %v852 = vadd.f32 %v788, %v627
    %v853 = vadd.f32 %v789, %v630
    %v854 = vadd.f32 %v790, %v633
    %v855 = vadd.f32 %v791, %v636
    %v856 = vadd.f32 %v792, %v639
    %v857 = vadd.f32 %v793, %v642
    %v858 = vadd.f32 %v794, %v645
    %v859 = vadd.f32 %v795, %v648
    %v860 = vadd.f32 %v796, %v651
    %v861 = vadd.f32 %v797, %v654
    %v862 = vadd.f32 %v798, %v657
    %v863 = vadd.f32 %v799, %v660
    %v864 = vadd.f32 %v800, %v663
    %v865 = vadd.f32 %v801, %v666
    %v866 = vadd.f32 %v802, %v669
    %v867 = vadd.f32 %v803, %v672
    %v868 = vadd.f32 %v804, %v675
    %v869 = vadd.f32 %v805, %v678
    %v870 = vadd.f32 %v806, %v681
    %v871 = vadd.f32 %v807, %v684
    %v872 = vadd.f32 %v808, %v687
    %v873 = vadd.f32 %v809, %v690
    %v874 = vadd.f32 %v810, %v693
    %v875 = vadd.f32 %v811, %v696
    %v876 = vadd.f32 %v812, %v699
    %v877 = vadd.f32 %v813, %v702
    %v878 = vadd.f32 %v814, %v705
    %v879 = vadd.f32 %v815, %v708
    %v880 = vadd.f32 %v816, %v711
    %v881 = vadd.f32 %v817, %v714
    %v882 = vadd.f32 %v818, %v717
    %v883 = vadd.f32 %v819, %v720
    %v884 = vadd.f32 %v820, %v723
    %v885 = vadd.f32 %v821, %v726
    %v886 = vadd.f32 %v822, %v729
    %v887 = vadd.f32 %v823, %v732
    %v888 = vadd.f32 %v824, %v735
    %v889 = vadd.f32 %v825, %v738
    %v890 = vadd.f32 %v826, %v741
    %v891 = vadd.f32 %v827, %v744
    %v892 = vadd.f32 %v828, %v747
    %v893 = vadd.f32 %v829, %v750
    %v894 = vadd.f32 %v830, %v753
    %v895 = vadd.f32 %v831, %v756
    %v896 = vadd.f32 %v832, %v759
    %v897 = vadd.f32 %v833, %v762
    %v898 = vadd.f32 %v834, %v765
    %v899 = vadd.f32 %v835, %v768
    %v900 = vadd.f32 %v836, %v771
    %901 = vst [vmem:[#allocation3] sm:$0xff] %v837
    %902 = vst [vmem:[#allocation3 + $0x8] sm:$0xff] %v838
    %903 = vst [vmem:[#allocation3 + $0x10] sm:$0xff] %v839
    %904 = vst [vmem:[#allocation3 + $0x18] sm:$0xff] %v840
    %905 = vst [vmem:[#allocation3 + $0x20] sm:$0xff] %v841
    %906 = vst [vmem:[#allocation3 + $0x28] sm:$0xff] %v842
    %907 = vst [vmem:[#allocation3 + $0x30] sm:$0xff] %v843
    %908 = vst [vmem:[#allocation3 + $0x38] sm:$0xff] %v844
    %909 = vst [vmem:[#allocation3 + $0x40] sm:$0xff] %v845
    %910 = vst [vmem:[#allocation3 + $0x48] sm:$0xff] %v846
    %911 = vst [vmem:[#allocation3 + $0x50] sm:$0xff] %v847
    %912 = vst [vmem:[#allocation3 + $0x58] sm:$0xff] %v848
    %913 = vst [vmem:[#allocation3 + $0x60] sm:$0xff] %v849
    %914 = vst [vmem:[#allocation3 + $0x68] sm:$0xff] %v850
    %915 = vst [vmem:[#allocation3 + $0x70] sm:$0xff] %v851
    %916 = vst [vmem:[#allocation3 + $0x78] sm:$0xff] %v852
    %917 = vst [vmem:[#allocation3 + $0x80] sm:$0xff] %v853
    %918 = vst [vmem:[#allocation3 + $0x88] sm:$0xff] %v854
    %919 = vst [vmem:[#allocation3 + $0x90] sm:$0xff] %v855
    %920 = vst [vmem:[#allocation3 + $0x98] sm:$0xff] %v856
    %921 = vst [vmem:[#allocation3 + $0xa0] sm:$0xff] %v857
    %922 = vst [vmem:[#allocation3 + $0xa8] sm:$0xff] %v858
    %923 = vst [vmem:[#allocation3 + $0xb0] sm:$0xff] %v859
    %924 = vst [vmem:[#allocation3 + $0xb8] sm:$0xff] %v860
    %925 = vst [vmem:[#allocation3 + $0xc0] sm:$0xff] %v861
    %926 = vst [vmem:[#allocation3 + $0xc8] sm:$0xff] %v862
    %927 = vst [vmem:[#allocation3 + $0xd0] sm:$0xff] %v863
    %928 = vst [vmem:[#allocation3 + $0xd8] sm:$0xff] %v864
    %929 = vst [vmem:[#allocation3 + $0xe0] sm:$0xff] %v865
    %930 = vst [vmem:[#allocation3 + $0xe8] sm:$0xff] %v866
    %931 = vst [vmem:[#allocation3 + $0xf0] sm:$0xff] %v867
    %932 = vst [vmem:[#allocation3 + $0xf8] sm:$0xff] %v868
    %933 = vst [vmem:[#allocation3 + $0x100] sm:$0xff] %v869
    %934 = vst [vmem:[#allocation3 + $0x108] sm:$0xff] %v870
    %935 = vst [vmem:[#allocation3 + $0x110] sm:$0xff] %v871
    %936 = vst [vmem:[#allocation3 + $0x118] sm:$0xff] %v872
    %937 = vst [vmem:[#allocation3 + $0x120] sm:$0xff] %v873
    %938 = vst [vmem:[#allocation3 + $0x128] sm:$0xff] %v874
    %939 = vst [vmem:[#allocation3 + $0x130] sm:$0xff] %v875
    %940 = vst [vmem:[#allocation3 + $0x138] sm:$0xff] %v876
    %941 = vst [vmem:[#allocation3 + $0x140] sm:$0xff] %v877
    %942 = vst [vmem:[#allocation3 + $0x148] sm:$0xff] %v878
    %943 = vst [vmem:[#allocation3 + $0x150] sm:$0xff] %v879
    %944 = vst [vmem:[#allocation3 + $0x158] sm:$0xff] %v880
    %945 = vst [vmem:[#allocation3 + $0x160] sm:$0xff] %v881
    %946 = vst [vmem:[#allocation3 + $0x168] sm:$0xff] %v882
    %947 = vst [vmem:[#allocation3 + $0x170] sm:$0xff] %v883
    %948 = vst [vmem:[#allocation3 + $0x178] sm:$0xff] %v884
    %949 = vst [vmem:[#allocation3 + $0x180] sm:$0xff] %v885
    %950 = vst [vmem:[#allocation3 + $0x188] sm:$0xff] %v886
    %951 = vst [vmem:[#allocation3 + $0x190] sm:$0xff] %v887
    %952 = vst [vmem:[#allocation3 + $0x198] sm:$0xff] %v888
    %953 = vst [vmem:[#allocation3 + $0x1a0] sm:$0xff] %v889
    %954 = vst [vmem:[#allocation3 + $0x1a8] sm:$0xff] %v890
    %955 = vst [vmem:[#allocation3 + $0x1b0] sm:$0xff] %v891
    %956 = vst [vmem:[#allocation3 + $0x1b8] sm:$0xff] %v892
    %957 = vst [vmem:[#allocation3 + $0x1c0] sm:$0xff] %v893
    %958 = vst [vmem:[#allocation3 + $0x1c8] sm:$0xff] %v894
    %959 = vst [vmem:[#allocation3 + $0x1d0] sm:$0xff] %v895
    %960 = vst [vmem:[#allocation3 + $0x1d8] sm:$0xff] %v896
    %961 = vst [vmem:[#allocation3 + $0x1e0] sm:$0xff] %v897
    %962 = vst [vmem:[#allocation3 + $0x1e8] sm:$0xff] %v898
    %963 = vst [vmem:[#allocation3 + $0x1f0] sm:$0xff] %v899
    %964 = vst [vmem:[#allocation3 + $0x1f8] sm:$0xff] %v900
    %v965 = vld [vmem:[%s0 + $0x2] sm:$0xff]
    %v966 = vld [vmem:[%s0 + $0xa] sm:$0xff]
    %v967 = vld [vmem:[%s0 + $0x1a] sm:$0xff]
    %v968 = vld [vmem:[%s0 + $0x22] sm:$0xff]
    %v969 = vld [vmem:[%s0 + $0x32] sm:$0xff]
    %v970 = vld [vmem:[%s0 + $0x3a] sm:$0xff]
    %v971 = vld [vmem:[%s0 + $0x4a] sm:$0xff]
    %v972 = vld [vmem:[%s0 + $0x52] sm:$0xff]
    %v973 = vld [vmem:[%s0 + $0x62] sm:$0xff]
    %v974 = vld [vmem:[%s0 + $0x6a] sm:$0xff]
    %v975 = vld [vmem:[%s0 + $0x7a] sm:$0xff]
    %v976 = vld [vmem:[%s0 + $0x82] sm:$0xff]
    %v977 = vld [vmem:[%s0 + $0x92] sm:$0xff]
    %v978 = vld [vmem:[%s0 + $0x9a] sm:$0xff]
    %v979 = vld [vmem:[%s0 + $0xaa] sm:$0xff]
    %v980 = vld [vmem:[%s0 + $0xb2] sm:$0xff]
    %v981 = vld [vmem:[%s0 + $0xc2] sm:$0xff]
    %v982 = vld [vmem:[%s0 + $0xca] sm:$0xff]
    %v983 = vld [vmem:[%s0 + $0xda] sm:$0xff]
    %v984 = vld [vmem:[%s0 + $0xe2] sm:$0xff]
    %v985 = vld [vmem:[%s0 + $0xf2] sm:$0xff]
    %v986 = vld [vmem:[%s0 + $0xfa] sm:$0xff]
    %v987 = vld [vmem:[%s0 + $0x10a] sm:$0xff]
    %v988 = vld [vmem:[%s0 + $0x112] sm:$0xff]
    %v989 = vld [vmem:[%s0 + $0x122] sm:$0xff]
    %v990 = vld [vmem:[%s0 + $0x12a] sm:$0xff]
    %v991 = vld [vmem:[%s0 + $0x13a] sm:$0xff]
    %v992 = vld [vmem:[%s0 + $0x142] sm:$0xff]
    %v993 = vld [vmem:[%s0 + $0x152] sm:$0xff]
    %v994 = vld [vmem:[%s0 + $0x15a] sm:$0xff]
    %v995 = vld [vmem:[%s0 + $0x16a] sm:$0xff]
    %v996 = vld [vmem:[%s0 + $0x172] sm:$0xff]
    %v997 = vld [vmem:[%s0 + $0x1b2] sm:$0xff]
    %v998 = vld [vmem:[%s0 + $0x1ba] sm:$0xff]
    %v999 = vld [vmem:[%s0 + $0x1ca] sm:$0xff]
    %v1000 = vld [vmem:[%s0 + $0x1d2] sm:$0xff]
    %v1001 = vld [vmem:[%s0 + $0x1e2] sm:$0xff]
    %v1002 = vld [vmem:[%s0 + $0x1ea] sm:$0xff]
    %v1003 = vld [vmem:[%s0 + $0x1fa] sm:$0xff]
    %v1004 = vld [vmem:[%s0 + $0x202] sm:$0xff]
    %v1005 = vld [vmem:[%s0 + $0x212] sm:$0xff]
    %v1006 = vld [vmem:[%s0 + $0x21a] sm:$0xff]
    %v1007 = vld [vmem:[%s0 + $0x22a] sm:$0xff]
    %v1008 = vld [vmem:[%s0 + $0x232] sm:$0xff]
    %v1009 = vld [vmem:[%s0 + $0x242] sm:$0xff]
    %v1010 = vld [vmem:[%s0 + $0x24a] sm:$0xff]
    %v1011 = vld [vmem:[%s0 + $0x25a] sm:$0xff]
    %v1012 = vld [vmem:[%s0 + $0x262] sm:$0xff]
    %v1013 = vld [vmem:[%s0 + $0x272] sm:$0xff]
    %v1014 = vld [vmem:[%s0 + $0x27a] sm:$0xff]
    %v1015 = vld [vmem:[%s0 + $0x28a] sm:$0xff]
    %v1016 = vld [vmem:[%s0 + $0x292] sm:$0xff]
    %v1017 = vld [vmem:[%s0 + $0x2a2] sm:$0xff]
    %v1018 = vld [vmem:[%s0 + $0x2aa] sm:$0xff]
    %v1019 = vld [vmem:[%s0 + $0x2ba] sm:$0xff]
    %v1020 = vld [vmem:[%s0 + $0x2c2] sm:$0xff]
    %v1021 = vld [vmem:[%s0 + $0x2d2] sm:$0xff]
    %v1022 = vld [vmem:[%s0 + $0x2da] sm:$0xff]
    %v1023 = vld [vmem:[%s0 + $0x2ea] sm:$0xff]
    %v1024 = vld [vmem:[%s0 + $0x2f2] sm:$0xff]
    %v1025 = vld [vmem:[%s0 + $0x302] sm:$0xff]
    %v1026 = vld [vmem:[%s0 + $0x30a] sm:$0xff]
    %v1027 = vld [vmem:[%s0 + $0x31a] sm:$0xff]
    %v1028 = vld [vmem:[%s0 + $0x322] sm:$0xff]
    %s1029 = scalar_lea.vmem %s1, 256
    %v1030 = vld [vmem:[%s1029] sm:$0xff]
    %v1031 = vld [vmem:[%s1029 + $0x8] sm:$0xff]
    %v1032 = vld [vmem:[%s1029 + $0x10] sm:$0xff]
    %v1033 = vld [vmem:[%s1029 + $0x18] sm:$0xff]
    %v1034 = vld [vmem:[%s1029 + $0x20] sm:$0xff]
    %v1035 = vld [vmem:[%s1029 + $0x28] sm:$0xff]
    %v1036 = vld [vmem:[%s1029 + $0x30] sm:$0xff]
    %v1037 = vld [vmem:[%s1029 + $0x38] sm:$0xff]
    %v1038 = vld [vmem:[%s1029 + $0x40] sm:$0xff]
    %v1039 = vld [vmem:[%s1029 + $0x48] sm:$0xff]
    %v1040 = vld [vmem:[%s1029 + $0x50] sm:$0xff]
    %v1041 = vld [vmem:[%s1029 + $0x58] sm:$0xff]
    %v1042 = vld [vmem:[%s1029 + $0x60] sm:$0xff]
    %v1043 = vld [vmem:[%s1029 + $0x68] sm:$0xff]
    %v1044 = vld [vmem:[%s1029 + $0x70] sm:$0xff]
    %v1045 = vld [vmem:[%s1029 + $0x78] sm:$0xff]
    %1046 = vmatpush.msra.mxu0 %v1045
    %1047 = vmatpush.msra.mxu0 %v1044
    %1048 = vmatpush.msra.mxu0 %v1043
    %1049 = vmatpush.msra.mxu0 %v1042
    %1050 = vmatpush.msra.mxu0 %v1041
    %1051 = vmatpush.msra.mxu0 %v1040
    %1052 = vmatpush.msra.mxu0 %v1039
    %1053 = vmatpush.msra.mxu0 %v1038
    %1054 = vmatpush.msra.mxu0 %v1037
    %1055 = vmatpush.msra.mxu0 %v1036
    %1056 = vmatpush.msra.mxu0 %v1035
    %1057 = vmatpush.msra.mxu0 %v1034
    %1058 = vmatpush.msra.mxu0 %v1033
    %1059 = vmatpush.msra.mxu0 %v1032
    %1060 = vmatpush.msra.mxu0 %v1031
    %1061 = vmatpush.msra.mxu0 %v1030
    %1062 = vmatmul.f32.gmra.mxu0 %v965
    %v1063 = vpop.f32.mrf.mxu0
    %v1064 = vadd.f32 0.0, %v1063
    %1065 = vmatmul.f32.gmra.mxu0 %v966
    %v1066 = vpop.f32.mrf.mxu0
    %v1067 = vadd.f32 0.0, %v1066
    %1068 = vmatmul.f32.gmra.mxu0 %v967
    %v1069 = vpop.f32.mrf.mxu0
    %v1070 = vadd.f32 0.0, %v1069
    %1071 = vmatmul.f32.gmra.mxu0 %v968
    %v1072 = vpop.f32.mrf.mxu0
    %v1073 = vadd.f32 0.0, %v1072
    %1074 = vmatmul.f32.gmra.mxu0 %v969
    %v1075 = vpop.f32.mrf.mxu0
    %v1076 = vadd.f32 0.0, %v1075
    %1077 = vmatmul.f32.gmra.mxu0 %v970
    %v1078 = vpop.f32.mrf.mxu0
    %v1079 = vadd.f32 0.0, %v1078
    %1080 = vmatmul.f32.gmra.mxu0 %v971
    %v1081 = vpop.f32.mrf.mxu0
    %v1082 = vadd.f32 0.0, %v1081
    %1083 = vmatmul.f32.gmra.mxu0 %v972
    %v1084 = vpop.f32.mrf.mxu0
    %v1085 = vadd.f32 0.0, %v1084
    %1086 = vmatmul.f32.gmra.mxu0 %v973
    %v1087 = vpop.f32.mrf.mxu0
    %v1088 = vadd.f32 0.0, %v1087
    %1089 = vmatmul.f32.gmra.mxu0 %v974
    %v1090 = vpop.f32.mrf.mxu0
    %v1091 = vadd.f32 0.0, %v1090
    %1092 = vmatmul.f32.gmra.mxu0 %v975
    %v1093 = vpop.f32.mrf.mxu0
    %v1094 = vadd.f32 0.0, %v1093
    %1095 = vmatmul.f32.gmra.mxu0 %v976
    %v1096 = vpop.f32.mrf.mxu0
    %v1097 = vadd.f32 0.0, %v1096
    %1098 = vmatmul.f32.gmra.mxu0 %v977
    %v1099 = vpop.f32.mrf.mxu0
    %v1100 = vadd.f32 0.0, %v1099
    %1101 = vmatmul.f32.gmra.mxu0 %v978
    %v1102 = vpop.f32.mrf.mxu0
    %v1103 = vadd.f32 0.0, %v1102
    %1104 = vmatmul.f32.gmra.mxu0 %v979
    %v1105 = vpop.f32.mrf.mxu0
    %v1106 = vadd.f32 0.0, %v1105
    %1107 = vmatmul.f32.gmra.mxu0 %v980
    %v1108 = vpop.f32.mrf.mxu0
    %v1109 = vadd.f32 0.0, %v1108
    %1110 = vmatmul.f32.gmra.mxu0 %v981
    %v1111 = vpop.f32.mrf.mxu0
    %v1112 = vadd.f32 0.0, %v1111
    %1113 = vmatmul.f32.gmra.mxu0 %v982
    %v1114 = vpop.f32.mrf.mxu0
    %v1115 = vadd.f32 0.0, %v1114
    %1116 = vmatmul.f32.gmra.mxu0 %v983
    %v1117 = vpop.f32.mrf.mxu0
    %v1118 = vadd.f32 0.0, %v1117
    %1119 = vmatmul.f32.gmra.mxu0 %v984
    %v1120 = vpop.f32.mrf.mxu0
    %v1121 = vadd.f32 0.0, %v1120
    %1122 = vmatmul.f32.gmra.mxu0 %v985
    %v1123 = vpop.f32.mrf.mxu0
    %v1124 = vadd.f32 0.0, %v1123
    %1125 = vmatmul.f32.gmra.mxu0 %v986
    %v1126 = vpop.f32.mrf.mxu0
    %v1127 = vadd.f32 0.0, %v1126
    %1128 = vmatmul.f32.gmra.mxu0 %v987
    %v1129 = vpop.f32.mrf.mxu0
    %v1130 = vadd.f32 0.0, %v1129
    %1131 = vmatmul.f32.gmra.mxu0 %v988
    %v1132 = vpop.f32.mrf.mxu0
    %v1133 = vadd.f32 0.0, %v1132
    %1134 = vmatmul.f32.gmra.mxu0 %v989
    %v1135 = vpop.f32.mrf.mxu0
    %v1136 = vadd.f32 0.0, %v1135
    %1137 = vmatmul.f32.gmra.mxu0 %v990
    %v1138 = vpop.f32.mrf.mxu0
    %v1139 = vadd.f32 0.0, %v1138
    %1140 = vmatmul.f32.gmra.mxu0 %v991
    %v1141 = vpop.f32.mrf.mxu0
    %v1142 = vadd.f32 0.0, %v1141
    %1143 = vmatmul.f32.gmra.mxu0 %v992
    %v1144 = vpop.f32.mrf.mxu0
    %v1145 = vadd.f32 0.0, %v1144
    %1146 = vmatmul.f32.gmra.mxu0 %v993
    %v1147 = vpop.f32.mrf.mxu0
    %v1148 = vadd.f32 0.0, %v1147
    %1149 = vmatmul.f32.gmra.mxu0 %v994
    %v1150 = vpop.f32.mrf.mxu0
    %v1151 = vadd.f32 0.0, %v1150
    %1152 = vmatmul.f32.gmra.mxu0 %v995
    %v1153 = vpop.f32.mrf.mxu0
    %v1154 = vadd.f32 0.0, %v1153
    %1155 = vmatmul.f32.gmra.mxu0 %v996
    %v1156 = vpop.f32.mrf.mxu0
    %v1157 = vadd.f32 0.0, %v1156
    %1158 = vmatmul.f32.gmra.mxu0 %v997
    %v1159 = vpop.f32.mrf.mxu0
    %v1160 = vadd.f32 0.0, %v1159
    %1161 = vmatmul.f32.gmra.mxu0 %v998
    %v1162 = vpop.f32.mrf.mxu0
    %v1163 = vadd.f32 0.0, %v1162
    %1164 = vmatmul.f32.gmra.mxu0 %v999
    %v1165 = vpop.f32.mrf.mxu0
    %v1166 = vadd.f32 0.0, %v1165
    %1167 = vmatmul.f32.gmra.mxu0 %v1000
    %v1168 = vpop.f32.mrf.mxu0
    %v1169 = vadd.f32 0.0, %v1168
    %1170 = vmatmul.f32.gmra.mxu0 %v1001
    %v1171 = vpop.f32.mrf.mxu0
    %v1172 = vadd.f32 0.0, %v1171
    %1173 = vmatmul.f32.gmra.mxu0 %v1002
    %v1174 = vpop.f32.mrf.mxu0
    %v1175 = vadd.f32 0.0, %v1174
    %1176 = vmatmul.f32.gmra.mxu0 %v1003
    %v1177 = vpop.f32.mrf.mxu0
    %v1178 = vadd.f32 0.0, %v1177
    %1179 = vmatmul.f32.gmra.mxu0 %v1004
    %v1180 = vpop.f32.mrf.mxu0
    %v1181 = vadd.f32 0.0, %v1180
    %1182 = vmatmul.f32.gmra.mxu0 %v1005
    %v1183 = vpop.f32.mrf.mxu0
    %v1184 = vadd.f32 0.0, %v1183
    %1185 = vmatmul.f32.gmra.mxu0 %v1006
    %v1186 = vpop.f32.mrf.mxu0
    %v1187 = vadd.f32 0.0, %v1186
    %1188 = vmatmul.f32.gmra.mxu0 %v1007
    %v1189 = vpop.f32.mrf.mxu0
    %v1190 = vadd.f32 0.0, %v1189
    %1191 = vmatmul.f32.gmra.mxu0 %v1008
    %v1192 = vpop.f32.mrf.mxu0
    %v1193 = vadd.f32 0.0, %v1192
    %1194 = vmatmul.f32.gmra.mxu0 %v1009
    %v1195 = vpop.f32.mrf.mxu0
    %v1196 = vadd.f32 0.0, %v1195
    %1197 = vmatmul.f32.gmra.mxu0 %v1010
    %v1198 = vpop.f32.mrf.mxu0
    %v1199 = vadd.f32 0.0, %v1198
    %1200 = vmatmul.f32.gmra.mxu0 %v1011
    %v1201 = vpop.f32.mrf.mxu0
    %v1202 = vadd.f32 0.0, %v1201
    %1203 = vmatmul.f32.gmra.mxu0 %v1012
    %v1204 = vpop.f32.mrf.mxu0
    %v1205 = vadd.f32 0.0, %v1204
    %1206 = vmatmul.f32.gmra.mxu0 %v1013
    %v1207 = vpop.f32.mrf.mxu0
    %v1208 = vadd.f32 0.0, %v1207
    %1209 = vmatmul.f32.gmra.mxu0 %v1014
    %v1210 = vpop.f32.mrf.mxu0
    %v1211 = vadd.f32 0.0, %v1210
    %1212 = vmatmul.f32.gmra.mxu0 %v1015
    %v1213 = vpop.f32.mrf.mxu0
    %v1214 = vadd.f32 0.0, %v1213
    %1215 = vmatmul.f32.gmra.mxu0 %v1016
    %v1216 = vpop.f32.mrf.mxu0
    %v1217 = vadd.f32 0.0, %v1216
    %1218 = vmatmul.f32.gmra.mxu0 %v1017
    %v1219 = vpop.f32.mrf.mxu0
    %v1220 = vadd.f32 0.0, %v1219
    %1221 = vmatmul.f32.gmra.mxu0 %v1018
    %v1222 = vpop.f32.mrf.mxu0
    %v1223 = vadd.f32 0.0, %v1222
    %1224 = vmatmul.f32.gmra.mxu0 %v1019
    %v1225 = vpop.f32.mrf.mxu0
    %v1226 = vadd.f32 0.0, %v1225
    %1227 = vmatmul.f32.gmra.mxu0 %v1020
    %v1228 = vpop.f32.mrf.mxu0
    %v1229 = vadd.f32 0.0, %v1228
    %1230 = vmatmul.f32.gmra.mxu0 %v1021
    %v1231 = vpop.f32.mrf.mxu0
    %v1232 = vadd.f32 0.0, %v1231
    %1233 = vmatmul.f32.gmra.mxu0 %v1022
    %v1234 = vpop.f32.mrf.mxu0
    %v1235 = vadd.f32 0.0, %v1234
    %1236 = vmatmul.f32.gmra.mxu0 %v1023
    %v1237 = vpop.f32.mrf.mxu0
    %v1238 = vadd.f32 0.0, %v1237
    %1239 = vmatmul.f32.gmra.mxu0 %v1024
    %v1240 = vpop.f32.mrf.mxu0
    %v1241 = vadd.f32 0.0, %v1240
    %1242 = vmatmul.f32.gmra.mxu0 %v1025
    %v1243 = vpop.f32.mrf.mxu0
    %v1244 = vadd.f32 0.0, %v1243
    %1245 = vmatmul.f32.gmra.mxu0 %v1026
    %v1246 = vpop.f32.mrf.mxu0
    %v1247 = vadd.f32 0.0, %v1246
    %1248 = vmatmul.f32.gmra.mxu0 %v1027
    %v1249 = vpop.f32.mrf.mxu0
    %v1250 = vadd.f32 0.0, %v1249
    %1251 = vmatmul.f32.gmra.mxu0 %v1028
    %v1252 = vpop.f32.mrf.mxu0
    %v1253 = vadd.f32 0.0, %v1252
    %1254 = vdwg.mxu0
    %v1255 = vld [vmem:[#allocation3] sm:$0xff]
    %v1256 = vld [vmem:[#allocation3 + $0x8] sm:$0xff]
    %v1257 = vld [vmem:[#allocation3 + $0x10] sm:$0xff]
    %v1258 = vld [vmem:[#allocation3 + $0x18] sm:$0xff]
    %v1259 = vld [vmem:[#allocation3 + $0x20] sm:$0xff]
    %v1260 = vld [vmem:[#allocation3 + $0x28] sm:$0xff]
    %v1261 = vld [vmem:[#allocation3 + $0x30] sm:$0xff]
    %v1262 = vld [vmem:[#allocation3 + $0x38] sm:$0xff]
    %v1263 = vld [vmem:[#allocation3 + $0x40] sm:$0xff]
    %v1264 = vld [vmem:[#allocation3 + $0x48] sm:$0xff]
    %v1265 = vld [vmem:[#allocation3 + $0x50] sm:$0xff]
    %v1266 = vld [vmem:[#allocation3 + $0x58] sm:$0xff]
    %v1267 = vld [vmem:[#allocation3 + $0x60] sm:$0xff]
    %v1268 = vld [vmem:[#allocation3 + $0x68] sm:$0xff]
    %v1269 = vld [vmem:[#allocation3 + $0x70] sm:$0xff]
    %v1270 = vld [vmem:[#allocation3 + $0x78] sm:$0xff]
    %v1271 = vld [vmem:[#allocation3 + $0x80] sm:$0xff]
    %v1272 = vld [vmem:[#allocation3 + $0x88] sm:$0xff]
    %v1273 = vld [vmem:[#allocation3 + $0x90] sm:$0xff]
    %v1274 = vld [vmem:[#allocation3 + $0x98] sm:$0xff]
    %v1275 = vld [vmem:[#allocation3 + $0xa0] sm:$0xff]
    %v1276 = vld [vmem:[#allocation3 + $0xa8] sm:$0xff]
    %v1277 = vld [vmem:[#allocation3 + $0xb0] sm:$0xff]
    %v1278 = vld [vmem:[#allocation3 + $0xb8] sm:$0xff]
    %v1279 = vld [vmem:[#allocation3 + $0xc0] sm:$0xff]
    %v1280 = vld [vmem:[#allocation3 + $0xc8] sm:$0xff]
    %v1281 = vld [vmem:[#allocation3 + $0xd0] sm:$0xff]
    %v1282 = vld [vmem:[#allocation3 + $0xd8] sm:$0xff]
    %v1283 = vld [vmem:[#allocation3 + $0xe0] sm:$0xff]
    %v1284 = vld [vmem:[#allocation3 + $0xe8] sm:$0xff]
    %v1285 = vld [vmem:[#allocation3 + $0xf0] sm:$0xff]
    %v1286 = vld [vmem:[#allocation3 + $0xf8] sm:$0xff]
    %v1287 = vld [vmem:[#allocation3 + $0x100] sm:$0xff]
    %v1288 = vld [vmem:[#allocation3 + $0x108] sm:$0xff]
    %v1289 = vld [vmem:[#allocation3 + $0x110] sm:$0xff]
    %v1290 = vld [vmem:[#allocation3 + $0x118] sm:$0xff]
    %v1291 = vld [vmem:[#allocation3 + $0x120] sm:$0xff]
    %v1292 = vld [vmem:[#allocation3 + $0x128] sm:$0xff]
    %v1293 = vld [vmem:[#allocation3 + $0x130] sm:$0xff]
    %v1294 = vld [vmem:[#allocation3 + $0x138] sm:$0xff]
    %v1295 = vld [vmem:[#allocation3 + $0x140] sm:$0xff]
    %v1296 = vld [vmem:[#allocation3 + $0x148] sm:$0xff]
    %v1297 = vld [vmem:[#allocation3 + $0x150] sm:$0xff]
    %v1298 = vld [vmem:[#allocation3 + $0x158] sm:$0xff]
    %v1299 = vld [vmem:[#allocation3 + $0x160] sm:$0xff]
    %v1300 = vld [vmem:[#allocation3 + $0x168] sm:$0xff]
    %v1301 = vld [vmem:[#allocation3 + $0x170] sm:$0xff]
    %v1302 = vld [vmem:[#allocation3 + $0x178] sm:$0xff]
    %v1303 = vld [vmem:[#allocation3 + $0x180] sm:$0xff]
    %v1304 = vld [vmem:[#allocation3 + $0x188] sm:$0xff]
    %v1305 = vld [vmem:[#allocation3 + $0x190] sm:$0xff]
    %v1306 = vld [vmem:[#allocation3 + $0x198] sm:$0xff]
    %v1307 = vld [vmem:[#allocation3 + $0x1a0] sm:$0xff]
    %v1308 = vld [vmem:[#allocation3 + $0x1a8] sm:$0xff]
    %v1309 = vld [vmem:[#allocation3 + $0x1b0] sm:$0xff]
    %v1310 = vld [vmem:[#allocation3 + $0x1b8] sm:$0xff]
    %v1311 = vld [vmem:[#allocation3 + $0x1c0] sm:$0xff]
    %v1312 = vld [vmem:[#allocation3 + $0x1c8] sm:$0xff]
    %v1313 = vld [vmem:[#allocation3 + $0x1d0] sm:$0xff]
    %v1314 = vld [vmem:[#allocation3 + $0x1d8] sm:$0xff]
    %v1315 = vld [vmem:[#allocation3 + $0x1e0] sm:$0xff]
    %v1316 = vld [vmem:[#allocation3 + $0x1e8] sm:$0xff]
    %v1317 = vld [vmem:[#allocation3 + $0x1f0] sm:$0xff]
    %v1318 = vld [vmem:[#allocation3 + $0x1f8] sm:$0xff]
    %v1319 = vadd.f32 %v1255, %v1064
    %v1320 = vadd.f32 %v1256, %v1067
    %v1321 = vadd.f32 %v1257, %v1070
    %v1322 = vadd.f32 %v1258, %v1073
    %v1323 = vadd.f32 %v1259, %v1076
    %v1324 = vadd.f32 %v1260, %v1079
    %v1325 = vadd.f32 %v1261, %v1082
    %v1326 = vadd.f32 %v1262, %v1085
    %v1327 = vadd.f32 %v1263, %v1088
    %v1328 = vadd.f32 %v1264, %v1091
    %v1329 = vadd.f32 %v1265, %v1094
    %v1330 = vadd.f32 %v1266, %v1097
    %v1331 = vadd.f32 %v1267, %v1100
    %v1332 = vadd.f32 %v1268, %v1103
    %v1333 = vadd.f32 %v1269, %v1106
    %v1334 = vadd.f32 %v1270, %v1109
    %v1335 = vadd.f32 %v1271, %v1112
    %v1336 = vadd.f32 %v1272, %v1115
    %v1337 = vadd.f32 %v1273, %v1118
    %v1338 = vadd.f32 %v1274, %v1121
    %v1339 = vadd.f32 %v1275, %v1124
    %v1340 = vadd.f32 %v1276, %v1127
    %v1341 = vadd.f32 %v1277, %v1130
    %v1342 = vadd.f32 %v1278, %v1133
    %v1343 = vadd.f32 %v1279, %v1136
    %v1344 = vadd.f32 %v1280, %v1139
    %v1345 = vadd.f32 %v1281, %v1142
    %v1346 = vadd.f32 %v1282, %v1145
    %v1347 = vadd.f32 %v1283, %v1148
    %v1348 = vadd.f32 %v1284, %v1151
    %v1349 = vadd.f32 %v1285, %v1154
    %v1350 = vadd.f32 %v1286, %v1157
    %v1351 = vadd.f32 %v1287, %v1160
    %v1352 = vadd.f32 %v1288, %v1163
    %v1353 = vadd.f32 %v1289, %v1166
    %v1354 = vadd.f32 %v1290, %v1169
    %v1355 = vadd.f32 %v1291, %v1172
    %v1356 = vadd.f32 %v1292, %v1175
    %v1357 = vadd.f32 %v1293, %v1178
    %v1358 = vadd.f32 %v1294, %v1181
    %v1359 = vadd.f32 %v1295, %v1184
    %v1360 = vadd.f32 %v1296, %v1187
    %v1361 = vadd.f32 %v1297, %v1190
    %v1362 = vadd.f32 %v1298, %v1193
    %v1363 = vadd.f32 %v1299, %v1196
    %v1364 = vadd.f32 %v1300, %v1199
    %v1365 = vadd.f32 %v1301, %v1202
    %v1366 = vadd.f32 %v1302, %v1205
    %v1367 = vadd.f32 %v1303, %v1208
    %v1368 = vadd.f32 %v1304, %v1211
    %v1369 = vadd.f32 %v1305, %v1214
    %v1370 = vadd.f32 %v1306, %v1217
    %v1371 = vadd.f32 %v1307, %v1220
    %v1372 = vadd.f32 %v1308, %v1223
    %v1373 = vadd.f32 %v1309, %v1226
    %v1374 = vadd.f32 %v1310, %v1229
    %v1375 = vadd.f32 %v1311, %v1232
    %v1376 = vadd.f32 %v1312, %v1235
    %v1377 = vadd.f32 %v1313, %v1238
    %v1378 = vadd.f32 %v1314, %v1241
    %v1379 = vadd.f32 %v1315, %v1244
    %v1380 = vadd.f32 %v1316, %v1247
    %v1381 = vadd.f32 %v1317, %v1250
    %v1382 = vadd.f32 %v1318, %v1253
    %1383 = vst [vmem:[#allocation3] sm:$0xff] %v1319
    %1384 = vst [vmem:[#allocation3 + $0x8] sm:$0xff] %v1320
    %1385 = vst [vmem:[#allocation3 + $0x10] sm:$0xff] %v1321
    %1386 = vst [vmem:[#allocation3 + $0x18] sm:$0xff] %v1322
    %1387 = vst [vmem:[#allocation3 + $0x20] sm:$0xff] %v1323
    %1388 = vst [vmem:[#allocation3 + $0x28] sm:$0xff] %v1324
    %1389 = vst [vmem:[#allocation3 + $0x30] sm:$0xff] %v1325
    %1390 = vst [vmem:[#allocation3 + $0x38] sm:$0xff] %v1326
    %1391 = vst [vmem:[#allocation3 + $0x40] sm:$0xff] %v1327
    %1392 = vst [vmem:[#allocation3 + $0x48] sm:$0xff] %v1328
    %1393 = vst [vmem:[#allocation3 + $0x50] sm:$0xff] %v1329
    %1394 = vst [vmem:[#allocation3 + $0x58] sm:$0xff] %v1330
    %1395 = vst [vmem:[#allocation3 + $0x60] sm:$0xff] %v1331
    %1396 = vst [vmem:[#allocation3 + $0x68] sm:$0xff] %v1332
    %1397 = vst [vmem:[#allocation3 + $0x70] sm:$0xff] %v1333
    %1398 = vst [vmem:[#allocation3 + $0x78] sm:$0xff] %v1334
    %1399 = vst [vmem:[#allocation3 + $0x80] sm:$0xff] %v1335
    %1400 = vst [vmem:[#allocation3 + $0x88] sm:$0xff] %v1336
    %1401 = vst [vmem:[#allocation3 + $0x90] sm:$0xff] %v1337
    %1402 = vst [vmem:[#allocation3 + $0x98] sm:$0xff] %v1338
    %1403 = vst [vmem:[#allocation3 + $0xa0] sm:$0xff] %v1339
    %1404 = vst [vmem:[#allocation3 + $0xa8] sm:$0xff] %v1340
    %1405 = vst [vmem:[#allocation3 + $0xb0] sm:$0xff] %v1341
    %1406 = vst [vmem:[#allocation3 + $0xb8] sm:$0xff] %v1342
    %1407 = vst [vmem:[#allocation3 + $0xc0] sm:$0xff] %v1343
    %1408 = vst [vmem:[#allocation3 + $0xc8] sm:$0xff] %v1344
    %1409 = vst [vmem:[#allocation3 + $0xd0] sm:$0xff] %v1345
    %1410 = vst [vmem:[#allocation3 + $0xd8] sm:$0xff] %v1346
    %1411 = vst [vmem:[#allocation3 + $0xe0] sm:$0xff] %v1347
    %1412 = vst [vmem:[#allocation3 + $0xe8] sm:$0xff] %v1348
    %1413 = vst [vmem:[#allocation3 + $0xf0] sm:$0xff] %v1349
    %1414 = vst [vmem:[#allocation3 + $0xf8] sm:$0xff] %v1350
    %1415 = vst [vmem:[#allocation3 + $0x100] sm:$0xff] %v1351
    %1416 = vst [vmem:[#allocation3 + $0x108] sm:$0xff] %v1352
    %1417 = vst [vmem:[#allocation3 + $0x110] sm:$0xff] %v1353
    %1418 = vst [vmem:[#allocation3 + $0x118] sm:$0xff] %v1354
    %1419 = vst [vmem:[#allocation3 + $0x120] sm:$0xff] %v1355
    %1420 = vst [vmem:[#allocation3 + $0x128] sm:$0xff] %v1356
    %1421 = vst [vmem:[#allocation3 + $0x130] sm:$0xff] %v1357
    %1422 = vst [vmem:[#allocation3 + $0x138] sm:$0xff] %v1358
    %1423 = vst [vmem:[#allocation3 + $0x140] sm:$0xff] %v1359
    %1424 = vst [vmem:[#allocation3 + $0x148] sm:$0xff] %v1360
    %1425 = vst [vmem:[#allocation3 + $0x150] sm:$0xff] %v1361
    %1426 = vst [vmem:[#allocation3 + $0x158] sm:$0xff] %v1362
    %1427 = vst [vmem:[#allocation3 + $0x160] sm:$0xff] %v1363
    %1428 = vst [vmem:[#allocation3 + $0x168] sm:$0xff] %v1364
    %1429 = vst [vmem:[#allocation3 + $0x170] sm:$0xff] %v1365
    %1430 = vst [vmem:[#allocation3 + $0x178] sm:$0xff] %v1366
    %1431 = vst [vmem:[#allocation3 + $0x180] sm:$0xff] %v1367
    %1432 = vst [vmem:[#allocation3 + $0x188] sm:$0xff] %v1368
    %1433 = vst [vmem:[#allocation3 + $0x190] sm:$0xff] %v1369
    %1434 = vst [vmem:[#allocation3 + $0x198] sm:$0xff] %v1370
    %1435 = vst [vmem:[#allocation3 + $0x1a0] sm:$0xff] %v1371
    %1436 = vst [vmem:[#allocation3 + $0x1a8] sm:$0xff] %v1372
    %1437 = vst [vmem:[#allocation3 + $0x1b0] sm:$0xff] %v1373
    %1438 = vst [vmem:[#allocation3 + $0x1b8] sm:$0xff] %v1374
    %1439 = vst [vmem:[#allocation3 + $0x1c0] sm:$0xff] %v1375
    %1440 = vst [vmem:[#allocation3 + $0x1c8] sm:$0xff] %v1376
    %1441 = vst [vmem:[#allocation3 + $0x1d0] sm:$0xff] %v1377
    %1442 = vst [vmem:[#allocation3 + $0x1d8] sm:$0xff] %v1378
    %1443 = vst [vmem:[#allocation3 + $0x1e0] sm:$0xff] %v1379
    %1444 = vst [vmem:[#allocation3 + $0x1e8] sm:$0xff] %v1380
    %1445 = vst [vmem:[#allocation3 + $0x1f0] sm:$0xff] %v1381
    %1446 = vst [vmem:[#allocation3 + $0x1f8] sm:$0xff] %v1382
    %s1447 = scalar_lea.vmem %s0, 24
    %v1448 = vld [vmem:[%s1447] sm:$0xff]
    %v1449 = vld [vmem:[%s1447 + $0x8] sm:$0xff]
    %v1450 = vld [vmem:[%s1447 + $0x18] sm:$0xff]
    %v1451 = vld [vmem:[%s1447 + $0x20] sm:$0xff]
    %v1452 = vld [vmem:[%s1447 + $0x30] sm:$0xff]
    %v1453 = vld [vmem:[%s1447 + $0x38] sm:$0xff]
    %v1454 = vld [vmem:[%s1447 + $0x48] sm:$0xff]
    %v1455 = vld [vmem:[%s1447 + $0x50] sm:$0xff]
    %v1456 = vld [vmem:[%s1447 + $0x60] sm:$0xff]
    %v1457 = vld [vmem:[%s1447 + $0x68] sm:$0xff]
    %v1458 = vld [vmem:[%s1447 + $0x78] sm:$0xff]
    %v1459 = vld [vmem:[%s1447 + $0x80] sm:$0xff]
    %v1460 = vld [vmem:[%s1447 + $0x90] sm:$0xff]
    %v1461 = vld [vmem:[%s1447 + $0x98] sm:$0xff]
    %v1462 = vld [vmem:[%s1447 + $0xa8] sm:$0xff]
    %v1463 = vld [vmem:[%s1447 + $0xb0] sm:$0xff]
    %v1464 = vld [vmem:[%s1447 + $0xc0] sm:$0xff]
    %v1465 = vld [vmem:[%s1447 + $0xc8] sm:$0xff]
    %v1466 = vld [vmem:[%s1447 + $0xd8] sm:$0xff]
    %v1467 = vld [vmem:[%s1447 + $0xe0] sm:$0xff]
    %v1468 = vld [vmem:[%s1447 + $0xf0] sm:$0xff]
    %v1469 = vld [vmem:[%s1447 + $0xf8] sm:$0xff]
    %v1470 = vld [vmem:[%s1447 + $0x108] sm:$0xff]
    %v1471 = vld [vmem:[%s1447 + $0x110] sm:$0xff]
    %v1472 = vld [vmem:[%s1447 + $0x120] sm:$0xff]
    %v1473 = vld [vmem:[%s1447 + $0x128] sm:$0xff]
    %v1474 = vld [vmem:[%s1447 + $0x138] sm:$0xff]
    %v1475 = vld [vmem:[%s1447 + $0x140] sm:$0xff]
    %v1476 = vld [vmem:[%s1447 + $0x150] sm:$0xff]
    %v1477 = vld [vmem:[%s1447 + $0x158] sm:$0xff]
    %v1478 = vld [vmem:[%s1447 + $0x168] sm:$0xff]
    %v1479 = vld [vmem:[%s1447 + $0x170] sm:$0xff]
    %v1480 = vld [vmem:[%s1447 + $0x1b0] sm:$0xff]
    %v1481 = vld [vmem:[%s1447 + $0x1b8] sm:$0xff]
    %v1482 = vld [vmem:[%s1447 + $0x1c8] sm:$0xff]
    %v1483 = vld [vmem:[%s1447 + $0x1d0] sm:$0xff]
    %v1484 = vld [vmem:[%s1447 + $0x1e0] sm:$0xff]
    %v1485 = vld [vmem:[%s1447 + $0x1e8] sm:$0xff]
    %v1486 = vld [vmem:[%s1447 + $0x1f8] sm:$0xff]
    %v1487 = vld [vmem:[%s1447 + $0x200] sm:$0xff]
    %v1488 = vld [vmem:[%s1447 + $0x210] sm:$0xff]
    %v1489 = vld [vmem:[%s1447 + $0x218] sm:$0xff]
    %v1490 = vld [vmem:[%s1447 + $0x228] sm:$0xff]
    %v1491 = vld [vmem:[%s1447 + $0x230] sm:$0xff]
    %v1492 = vld [vmem:[%s1447 + $0x240] sm:$0xff]
    %v1493 = vld [vmem:[%s1447 + $0x248] sm:$0xff]
    %v1494 = vld [vmem:[%s1447 + $0x258] sm:$0xff]
    %v1495 = vld [vmem:[%s1447 + $0x260] sm:$0xff]
    %v1496 = vld [vmem:[%s1447 + $0x270] sm:$0xff]
    %v1497 = vld [vmem:[%s1447 + $0x278] sm:$0xff]
    %v1498 = vld [vmem:[%s1447 + $0x288] sm:$0xff]
    %v1499 = vld [vmem:[%s1447 + $0x290] sm:$0xff]
    %v1500 = vld [vmem:[%s1447 + $0x2a0] sm:$0xff]
    %v1501 = vld [vmem:[%s1447 + $0x2a8] sm:$0xff]
    %v1502 = vld [vmem:[%s1447 + $0x2b8] sm:$0xff]
    %v1503 = vld [vmem:[%s1447 + $0x2c0] sm:$0xff]
    %v1504 = vld [vmem:[%s1447 + $0x2d0] sm:$0xff]
    %v1505 = vld [vmem:[%s1447 + $0x2d8] sm:$0xff]
    %v1506 = vld [vmem:[%s1447 + $0x2e8] sm:$0xff]
    %v1507 = vld [vmem:[%s1447 + $0x2f0] sm:$0xff]
    %v1508 = vld [vmem:[%s1447 + $0x300] sm:$0xff]
    %v1509 = vld [vmem:[%s1447 + $0x308] sm:$0xff]
    %v1510 = vld [vmem:[%s1447 + $0x318] sm:$0xff]
    %v1511 = vld [vmem:[%s1447 + $0x320] sm:$0xff]
    %s1512 = scalar_lea.vmem %s1, 384
    %v1513 = vld [vmem:[%s1512] sm:$0xff]
    %v1514 = vld [vmem:[%s1512 + $0x8] sm:$0xff]
    %v1515 = vld [vmem:[%s1512 + $0x10] sm:$0xff]
    %v1516 = vld [vmem:[%s1512 + $0x18] sm:$0xff]
    %v1517 = vld [vmem:[%s1512 + $0x20] sm:$0xff]
    %v1518 = vld [vmem:[%s1512 + $0x28] sm:$0xff]
    %v1519 = vld [vmem:[%s1512 + $0x30] sm:$0xff]
    %v1520 = vld [vmem:[%s1512 + $0x38] sm:$0xff]
    %v1521 = vld [vmem:[%s1512 + $0x40] sm:$0xff]
    %v1522 = vld [vmem:[%s1512 + $0x48] sm:$0xff]
    %v1523 = vld [vmem:[%s1512 + $0x50] sm:$0xff]
    %v1524 = vld [vmem:[%s1512 + $0x58] sm:$0xff]
    %v1525 = vld [vmem:[%s1512 + $0x60] sm:$0xff]
    %v1526 = vld [vmem:[%s1512 + $0x68] sm:$0xff]
    %v1527 = vld [vmem:[%s1512 + $0x70] sm:$0xff]
    %v1528 = vld [vmem:[%s1512 + $0x78] sm:$0xff]
    %1529 = vmatpush.msra.mxu0 %v1528
    %1530 = vmatpush.msra.mxu0 %v1527
    %1531 = vmatpush.msra.mxu0 %v1526
    %1532 = vmatpush.msra.mxu0 %v1525
    %1533 = vmatpush.msra.mxu0 %v1524
    %1534 = vmatpush.msra.mxu0 %v1523
    %1535 = vmatpush.msra.mxu0 %v1522
    %1536 = vmatpush.msra.mxu0 %v1521
    %1537 = vmatpush.msra.mxu0 %v1520
    %1538 = vmatpush.msra.mxu0 %v1519
    %1539 = vmatpush.msra.mxu0 %v1518
    %1540 = vmatpush.msra.mxu0 %v1517
    %1541 = vmatpush.msra.mxu0 %v1516
    %1542 = vmatpush.msra.mxu0 %v1515
    %1543 = vmatpush.msra.mxu0 %v1514
    %1544 = vmatpush.msra.mxu0 %v1513
    %1545 = vmatmul.f32.gmra.mxu0 %v1448
    %v1546 = vpop.f32.mrf.mxu0
    %v1547 = vadd.f32 0.0, %v1546
    %1548 = vmatmul.f32.gmra.mxu0 %v1449
    %v1549 = vpop.f32.mrf.mxu0
    %v1550 = vadd.f32 0.0, %v1549
    %1551 = vmatmul.f32.gmra.mxu0 %v1450
    %v1552 = vpop.f32.mrf.mxu0
    %v1553 = vadd.f32 0.0, %v1552
    %1554 = vmatmul.f32.gmra.mxu0 %v1451
    %v1555 = vpop.f32.mrf.mxu0
    %v1556 = vadd.f32 0.0, %v1555
    %1557 = vmatmul.f32.gmra.mxu0 %v1452
    %v1558 = vpop.f32.mrf.mxu0
    %v1559 = vadd.f32 0.0, %v1558
    %1560 = vmatmul.f32.gmra.mxu0 %v1453
    %v1561 = vpop.f32.mrf.mxu0
    %v1562 = vadd.f32 0.0, %v1561
    %1563 = vmatmul.f32.gmra.mxu0 %v1454
    %v1564 = vpop.f32.mrf.mxu0
    %v1565 = vadd.f32 0.0, %v1564
    %1566 = vmatmul.f32.gmra.mxu0 %v1455
    %v1567 = vpop.f32.mrf.mxu0
    %v1568 = vadd.f32 0.0, %v1567
    %1569 = vmatmul.f32.gmra.mxu0 %v1456
    %v1570 = vpop.f32.mrf.mxu0
    %v1571 = vadd.f32 0.0, %v1570
    %1572 = vmatmul.f32.gmra.mxu0 %v1457
    %v1573 = vpop.f32.mrf.mxu0
    %v1574 = vadd.f32 0.0, %v1573
    %1575 = vmatmul.f32.gmra.mxu0 %v1458
    %v1576 = vpop.f32.mrf.mxu0
    %v1577 = vadd.f32 0.0, %v1576
    %1578 = vmatmul.f32.gmra.mxu0 %v1459
    %v1579 = vpop.f32.mrf.mxu0
    %v1580 = vadd.f32 0.0, %v1579
    %1581 = vmatmul.f32.gmra.mxu0 %v1460
    %v1582 = vpop.f32.mrf.mxu0
    %v1583 = vadd.f32 0.0, %v1582
    %1584 = vmatmul.f32.gmra.mxu0 %v1461
    %v1585 = vpop.f32.mrf.mxu0
    %v1586 = vadd.f32 0.0, %v1585
    %1587 = vmatmul.f32.gmra.mxu0 %v1462
    %v1588 = vpop.f32.mrf.mxu0
    %v1589 = vadd.f32 0.0, %v1588
    %1590 = vmatmul.f32.gmra.mxu0 %v1463
    %v1591 = vpop.f32.mrf.mxu0
    %v1592 = vadd.f32 0.0, %v1591
    %1593 = vmatmul.f32.gmra.mxu0 %v1464
    %v1594 = vpop.f32.mrf.mxu0
    %v1595 = vadd.f32 0.0, %v1594
    %1596 = vmatmul.f32.gmra.mxu0 %v1465
    %v1597 = vpop.f32.mrf.mxu0
    %v1598 = vadd.f32 0.0, %v1597
    %1599 = vmatmul.f32.gmra.mxu0 %v1466
    %v1600 = vpop.f32.mrf.mxu0
    %v1601 = vadd.f32 0.0, %v1600
    %1602 = vmatmul.f32.gmra.mxu0 %v1467
    %v1603 = vpop.f32.mrf.mxu0
    %v1604 = vadd.f32 0.0, %v1603
    %1605 = vmatmul.f32.gmra.mxu0 %v1468
    %v1606 = vpop.f32.mrf.mxu0
    %v1607 = vadd.f32 0.0, %v1606
    %1608 = vmatmul.f32.gmra.mxu0 %v1469
    %v1609 = vpop.f32.mrf.mxu0
    %v1610 = vadd.f32 0.0, %v1609
    %1611 = vmatmul.f32.gmra.mxu0 %v1470
    %v1612 = vpop.f32.mrf.mxu0
    %v1613 = vadd.f32 0.0, %v1612
    %1614 = vmatmul.f32.gmra.mxu0 %v1471
    %v1615 = vpop.f32.mrf.mxu0
    %v1616 = vadd.f32 0.0, %v1615
    %1617 = vmatmul.f32.gmra.mxu0 %v1472
    %v1618 = vpop.f32.mrf.mxu0
    %v1619 = vadd.f32 0.0, %v1618
    %1620 = vmatmul.f32.gmra.mxu0 %v1473
    %v1621 = vpop.f32.mrf.mxu0
    %v1622 = vadd.f32 0.0, %v1621
    %1623 = vmatmul.f32.gmra.mxu0 %v1474
    %v1624 = vpop.f32.mrf.mxu0
    %v1625 = vadd.f32 0.0, %v1624
    %1626 = vmatmul.f32.gmra.mxu0 %v1475
    %v1627 = vpop.f32.mrf.mxu0
    %v1628 = vadd.f32 0.0, %v1627
    %1629 = vmatmul.f32.gmra.mxu0 %v1476
    %v1630 = vpop.f32.mrf.mxu0
    %v1631 = vadd.f32 0.0, %v1630
    %1632 = vmatmul.f32.gmra.mxu0 %v1477
    %v1633 = vpop.f32.mrf.mxu0
    %v1634 = vadd.f32 0.0, %v1633
    %1635 = vmatmul.f32.gmra.mxu0 %v1478
    %v1636 = vpop.f32.mrf.mxu0
    %v1637 = vadd.f32 0.0, %v1636
    %1638 = vmatmul.f32.gmra.mxu0 %v1479
    %v1639 = vpop.f32.mrf.mxu0
    %v1640 = vadd.f32 0.0, %v1639
    %1641 = vmatmul.f32.gmra.mxu0 %v1480
    %v1642 = vpop.f32.mrf.mxu0
    %v1643 = vadd.f32 0.0, %v1642
    %1644 = vmatmul.f32.gmra.mxu0 %v1481
    %v1645 = vpop.f32.mrf.mxu0
    %v1646 = vadd.f32 0.0, %v1645
    %1647 = vmatmul.f32.gmra.mxu0 %v1482
    %v1648 = vpop.f32.mrf.mxu0
    %v1649 = vadd.f32 0.0, %v1648
    %1650 = vmatmul.f32.gmra.mxu0 %v1483
    %v1651 = vpop.f32.mrf.mxu0
    %v1652 = vadd.f32 0.0, %v1651
    %1653 = vmatmul.f32.gmra.mxu0 %v1484
    %v1654 = vpop.f32.mrf.mxu0
    %v1655 = vadd.f32 0.0, %v1654
    %1656 = vmatmul.f32.gmra.mxu0 %v1485
    %v1657 = vpop.f32.mrf.mxu0
    %v1658 = vadd.f32 0.0, %v1657
    %1659 = vmatmul.f32.gmra.mxu0 %v1486
    %v1660 = vpop.f32.mrf.mxu0
    %v1661 = vadd.f32 0.0, %v1660
    %1662 = vmatmul.f32.gmra.mxu0 %v1487
    %v1663 = vpop.f32.mrf.mxu0
    %v1664 = vadd.f32 0.0, %v1663
    %1665 = vmatmul.f32.gmra.mxu0 %v1488
    %v1666 = vpop.f32.mrf.mxu0
    %v1667 = vadd.f32 0.0, %v1666
    %1668 = vmatmul.f32.gmra.mxu0 %v1489
    %v1669 = vpop.f32.mrf.mxu0
    %v1670 = vadd.f32 0.0, %v1669
    %1671 = vmatmul.f32.gmra.mxu0 %v1490
    %v1672 = vpop.f32.mrf.mxu0
    %v1673 = vadd.f32 0.0, %v1672
    %1674 = vmatmul.f32.gmra.mxu0 %v1491
    %v1675 = vpop.f32.mrf.mxu0
    %v1676 = vadd.f32 0.0, %v1675
    %1677 = vmatmul.f32.gmra.mxu0 %v1492
    %v1678 = vpop.f32.mrf.mxu0
    %v1679 = vadd.f32 0.0, %v1678
    %1680 = vmatmul.f32.gmra.mxu0 %v1493
    %v1681 = vpop.f32.mrf.mxu0
    %v1682 = vadd.f32 0.0, %v1681
    %1683 = vmatmul.f32.gmra.mxu0 %v1494
    %v1684 = vpop.f32.mrf.mxu0
    %v1685 = vadd.f32 0.0, %v1684
    %1686 = vmatmul.f32.gmra.mxu0 %v1495
    %v1687 = vpop.f32.mrf.mxu0
    %v1688 = vadd.f32 0.0, %v1687
    %1689 = vmatmul.f32.gmra.mxu0 %v1496
    %v1690 = vpop.f32.mrf.mxu0
    %v1691 = vadd.f32 0.0, %v1690
    %1692 = vmatmul.f32.gmra.mxu0 %v1497
    %v1693 = vpop.f32.mrf.mxu0
    %v1694 = vadd.f32 0.0, %v1693
    %1695 = vmatmul.f32.gmra.mxu0 %v1498
    %v1696 = vpop.f32.mrf.mxu0
    %v1697 = vadd.f32 0.0, %v1696
    %1698 = vmatmul.f32.gmra.mxu0 %v1499
    %v1699 = vpop.f32.mrf.mxu0
    %v1700 = vadd.f32 0.0, %v1699
    %1701 = vmatmul.f32.gmra.mxu0 %v1500
    %v1702 = vpop.f32.mrf.mxu0
    %v1703 = vadd.f32 0.0, %v1702
    %1704 = vmatmul.f32.gmra.mxu0 %v1501
    %v1705 = vpop.f32.mrf.mxu0
    %v1706 = vadd.f32 0.0, %v1705
    %1707 = vmatmul.f32.gmra.mxu0 %v1502
    %v1708 = vpop.f32.mrf.mxu0
    %v1709 = vadd.f32 0.0, %v1708
    %1710 = vmatmul.f32.gmra.mxu0 %v1503
    %v1711 = vpop.f32.mrf.mxu0
    %v1712 = vadd.f32 0.0, %v1711
    %1713 = vmatmul.f32.gmra.mxu0 %v1504
    %v1714 = vpop.f32.mrf.mxu0
    %v1715 = vadd.f32 0.0, %v1714
    %1716 = vmatmul.f32.gmra.mxu0 %v1505
    %v1717 = vpop.f32.mrf.mxu0
    %v1718 = vadd.f32 0.0, %v1717
    %1719 = vmatmul.f32.gmra.mxu0 %v1506
    %v1720 = vpop.f32.mrf.mxu0
    %v1721 = vadd.f32 0.0, %v1720
    %1722 = vmatmul.f32.gmra.mxu0 %v1507
    %v1723 = vpop.f32.mrf.mxu0
    %v1724 = vadd.f32 0.0, %v1723
    %1725 = vmatmul.f32.gmra.mxu0 %v1508
    %v1726 = vpop.f32.mrf.mxu0
    %v1727 = vadd.f32 0.0, %v1726
    %1728 = vmatmul.f32.gmra.mxu0 %v1509
    %v1729 = vpop.f32.mrf.mxu0
    %v1730 = vadd.f32 0.0, %v1729
    %1731 = vmatmul.f32.gmra.mxu0 %v1510
    %v1732 = vpop.f32.mrf.mxu0
    %v1733 = vadd.f32 0.0, %v1732
    %1734 = vmatmul.f32.gmra.mxu0 %v1511
    %v1735 = vpop.f32.mrf.mxu0
    %v1736 = vadd.f32 0.0, %v1735
    %1737 = vdwg.mxu0
    %v1738 = vld [vmem:[#allocation3] sm:$0xff]
    %v1739 = vld [vmem:[#allocation3 + $0x8] sm:$0xff]
    %v1740 = vld [vmem:[#allocation3 + $0x10] sm:$0xff]
    %v1741 = vld [vmem:[#allocation3 + $0x18] sm:$0xff]
    %v1742 = vld [vmem:[#allocation3 + $0x20] sm:$0xff]
    %v1743 = vld [vmem:[#allocation3 + $0x28] sm:$0xff]
    %v1744 = vld [vmem:[#allocation3 + $0x30] sm:$0xff]
    %v1745 = vld [vmem:[#allocation3 + $0x38] sm:$0xff]
    %v1746 = vld [vmem:[#allocation3 + $0x40] sm:$0xff]
    %v1747 = vld [vmem:[#allocation3 + $0x48] sm:$0xff]
    %v1748 = vld [vmem:[#allocation3 + $0x50] sm:$0xff]
    %v1749 = vld [vmem:[#allocation3 + $0x58] sm:$0xff]
    %v1750 = vld [vmem:[#allocation3 + $0x60] sm:$0xff]
    %v1751 = vld [vmem:[#allocation3 + $0x68] sm:$0xff]
    %v1752 = vld [vmem:[#allocation3 + $0x70] sm:$0xff]
    %v1753 = vld [vmem:[#allocation3 + $0x78] sm:$0xff]
    %v1754 = vld [vmem:[#allocation3 + $0x80] sm:$0xff]
    %v1755 = vld [vmem:[#allocation3 + $0x88] sm:$0xff]
    %v1756 = vld [vmem:[#allocation3 + $0x90] sm:$0xff]
    %v1757 = vld [vmem:[#allocation3 + $0x98] sm:$0xff]
    %v1758 = vld [vmem:[#allocation3 + $0xa0] sm:$0xff]
    %v1759 = vld [vmem:[#allocation3 + $0xa8] sm:$0xff]
    %v1760 = vld [vmem:[#allocation3 + $0xb0] sm:$0xff]
    %v1761 = vld [vmem:[#allocation3 + $0xb8] sm:$0xff]
    %v1762 = vld [vmem:[#allocation3 + $0xc0] sm:$0xff]
    %v1763 = vld [vmem:[#allocation3 + $0xc8] sm:$0xff]
    %v1764 = vld [vmem:[#allocation3 + $0xd0] sm:$0xff]
    %v1765 = vld [vmem:[#allocation3 + $0xd8] sm:$0xff]
    %v1766 = vld [vmem:[#allocation3 + $0xe0] sm:$0xff]
    %v1767 = vld [vmem:[#allocation3 + $0xe8] sm:$0xff]
    %v1768 = vld [vmem:[#allocation3 + $0xf0] sm:$0xff]
    %v1769 = vld [vmem:[#allocation3 + $0xf8] sm:$0xff]
    %v1770 = vld [vmem:[#allocation3 + $0x100] sm:$0xff]
    %v1771 = vld [vmem:[#allocation3 + $0x108] sm:$0xff]
    %v1772 = vld [vmem:[#allocation3 + $0x110] sm:$0xff]
    %v1773 = vld [vmem:[#allocation3 + $0x118] sm:$0xff]
    %v1774 = vld [vmem:[#allocation3 + $0x120] sm:$0xff]
    %v1775 = vld [vmem:[#allocation3 + $0x128] sm:$0xff]
    %v1776 = vld [vmem:[#allocation3 + $0x130] sm:$0xff]
    %v1777 = vld [vmem:[#allocation3 + $0x138] sm:$0xff]
    %v1778 = vld [vmem:[#allocation3 + $0x140] sm:$0xff]
    %v1779 = vld [vmem:[#allocation3 + $0x148] sm:$0xff]
    %v1780 = vld [vmem:[#allocation3 + $0x150] sm:$0xff]
    %v1781 = vld [vmem:[#allocation3 + $0x158] sm:$0xff]
    %v1782 = vld [vmem:[#allocation3 + $0x160] sm:$0xff]
    %v1783 = vld [vmem:[#allocation3 + $0x168] sm:$0xff]
    %v1784 = vld [vmem:[#allocation3 + $0x170] sm:$0xff]
    %v1785 = vld [vmem:[#allocation3 + $0x178] sm:$0xff]
    %v1786 = vld [vmem:[#allocation3 + $0x180] sm:$0xff]
    %v1787 = vld [vmem:[#allocation3 + $0x188] sm:$0xff]
    %v1788 = vld [vmem:[#allocation3 + $0x190] sm:$0xff]
    %v1789 = vld [vmem:[#allocation3 + $0x198] sm:$0xff]
    %v1790 = vld [vmem:[#allocation3 + $0x1a0] sm:$0xff]
    %v1791 = vld [vmem:[#allocation3 + $0x1a8] sm:$0xff]
    %v1792 = vld [vmem:[#allocation3 + $0x1b0] sm:$0xff]
    %v1793 = vld [vmem:[#allocation3 + $0x1b8] sm:$0xff]
    %v1794 = vld [vmem:[#allocation3 + $0x1c0] sm:$0xff]
    %v1795 = vld [vmem:[#allocation3 + $0x1c8] sm:$0xff]
    %v1796 = vld [vmem:[#allocation3 + $0x1d0] sm:$0xff]
    %v1797 = vld [vmem:[#allocation3 + $0x1d8] sm:$0xff]
    %v1798 = vld [vmem:[#allocation3 + $0x1e0] sm:$0xff]
    %v1799 = vld [vmem:[#allocation3 + $0x1e8] sm:$0xff]
    %v1800 = vld [vmem:[#allocation3 + $0x1f0] sm:$0xff]
    %v1801 = vld [vmem:[#allocation3 + $0x1f8] sm:$0xff]
    %v1802 = vadd.f32 %v1738, %v1547
    %v1803 = vadd.f32 %v1739, %v1550
    %v1804 = vadd.f32 %v1740, %v1553
    %v1805 = vadd.f32 %v1741, %v1556
    %v1806 = vadd.f32 %v1742, %v1559
    %v1807 = vadd.f32 %v1743, %v1562
    %v1808 = vadd.f32 %v1744, %v1565
    %v1809 = vadd.f32 %v1745, %v1568
    %v1810 = vadd.f32 %v1746, %v1571
    %v1811 = vadd.f32 %v1747, %v1574
    %v1812 = vadd.f32 %v1748, %v1577
    %v1813 = vadd.f32 %v1749, %v1580
    %v1814 = vadd.f32 %v1750, %v1583
    %v1815 = vadd.f32 %v1751, %v1586
    %v1816 = vadd.f32 %v1752, %v1589
    %v1817 = vadd.f32 %v1753, %v1592
    %v1818 = vadd.f32 %v1754, %v1595
    %v1819 = vadd.f32 %v1755, %v1598
    %v1820 = vadd.f32 %v1756, %v1601
    %v1821 = vadd.f32 %v1757, %v1604
    %v1822 = vadd.f32 %v1758, %v1607
    %v1823 = vadd.f32 %v1759, %v1610
    %v1824 = vadd.f32 %v1760, %v1613
    %v1825 = vadd.f32 %v1761, %v1616
    %v1826 = vadd.f32 %v1762, %v1619
    %v1827 = vadd.f32 %v1763, %v1622
    %v1828 = vadd.f32 %v1764, %v1625
    %v1829 = vadd.f32 %v1765, %v1628
    %v1830 = vadd.f32 %v1766, %v1631
    %v1831 = vadd.f32 %v1767, %v1634
    %v1832 = vadd.f32 %v1768, %v1637
    %v1833 = vadd.f32 %v1769, %v1640
    %v1834 = vadd.f32 %v1770, %v1643
    %v1835 = vadd.f32 %v1771, %v1646
    %v1836 = vadd.f32 %v1772, %v1649
    %v1837 = vadd.f32 %v1773, %v1652
    %v1838 = vadd.f32 %v1774, %v1655
    %v1839 = vadd.f32 %v1775, %v1658
    %v1840 = vadd.f32 %v1776, %v1661
    %v1841 = vadd.f32 %v1777, %v1664
    %v1842 = vadd.f32 %v1778, %v1667
    %v1843 = vadd.f32 %v1779, %v1670
    %v1844 = vadd.f32 %v1780, %v1673
    %v1845 = vadd.f32 %v1781, %v1676
    %v1846 = vadd.f32 %v1782, %v1679
    %v1847 = vadd.f32 %v1783, %v1682
    %v1848 = vadd.f32 %v1784, %v1685
    %v1849 = vadd.f32 %v1785, %v1688
    %v1850 = vadd.f32 %v1786, %v1691
    %v1851 = vadd.f32 %v1787, %v1694
    %v1852 = vadd.f32 %v1788, %v1697
    %v1853 = vadd.f32 %v1789, %v1700
    %v1854 = vadd.f32 %v1790, %v1703
    %v1855 = vadd.f32 %v1791, %v1706
    %v1856 = vadd.f32 %v1792, %v1709
    %v1857 = vadd.f32 %v1793, %v1712
    %v1858 = vadd.f32 %v1794, %v1715
    %v1859 = vadd.f32 %v1795, %v1718
    %v1860 = vadd.f32 %v1796, %v1721
    %v1861 = vadd.f32 %v1797, %v1724
    %v1862 = vadd.f32 %v1798, %v1727
    %v1863 = vadd.f32 %v1799, %v1730
    %v1864 = vadd.f32 %v1800, %v1733
    %v1865 = vadd.f32 %v1801, %v1736
    %1866 = vst [vmem:[#allocation3] sm:$0xff] %v1802
    %1867 = vst [vmem:[#allocation3 + $0x8] sm:$0xff] %v1803
    %1868 = vst [vmem:[#allocation3 + $0x10] sm:$0xff] %v1804
    %1869 = vst [vmem:[#allocation3 + $0x18] sm:$0xff] %v1805
    %1870 = vst [vmem:[#allocation3 + $0x20] sm:$0xff] %v1806
    %1871 = vst [vmem:[#allocation3 + $0x28] sm:$0xff] %v1807
    %1872 = vst [vmem:[#allocation3 + $0x30] sm:$0xff] %v1808
    %1873 = vst [vmem:[#allocation3 + $0x38] sm:$0xff] %v1809
    %1874 = vst [vmem:[#allocation3 + $0x40] sm:$0xff] %v1810
    %1875 = vst [vmem:[#allocation3 + $0x48] sm:$0xff] %v1811
    %1876 = vst [vmem:[#allocation3 + $0x50] sm:$0xff] %v1812
    %1877 = vst [vmem:[#allocation3 + $0x58] sm:$0xff] %v1813
    %1878 = vst [vmem:[#allocation3 + $0x60] sm:$0xff] %v1814
    %1879 = vst [vmem:[#allocation3 + $0x68] sm:$0xff] %v1815
    %1880 = vst [vmem:[#allocation3 + $0x70] sm:$0xff] %v1816
    %1881 = vst [vmem:[#allocation3 + $0x78] sm:$0xff] %v1817
    %1882 = vst [vmem:[#allocation3 + $0x80] sm:$0xff] %v1818
    %1883 = vst [vmem:[#allocation3 + $0x88] sm:$0xff] %v1819
    %1884 = vst [vmem:[#allocation3 + $0x90] sm:$0xff] %v1820
    %1885 = vst [vmem:[#allocation3 + $0x98] sm:$0xff] %v1821
    %1886 = vst [vmem:[#allocation3 + $0xa0] sm:$0xff] %v1822
    %1887 = vst [vmem:[#allocation3 + $0xa8] sm:$0xff] %v1823
    %1888 = vst [vmem:[#allocation3 + $0xb0] sm:$0xff] %v1824
    %1889 = vst [vmem:[#allocation3 + $0xb8] sm:$0xff] %v1825
    %1890 = vst [vmem:[#allocation3 + $0xc0] sm:$0xff] %v1826
    %1891 = vst [vmem:[#allocation3 + $0xc8] sm:$0xff] %v1827
    %1892 = vst [vmem:[#allocation3 + $0xd0] sm:$0xff] %v1828
    %1893 = vst [vmem:[#allocation3 + $0xd8] sm:$0xff] %v1829
    %1894 = vst [vmem:[#allocation3 + $0xe0] sm:$0xff] %v1830
    %1895 = vst [vmem:[#allocation3 + $0xe8] sm:$0xff] %v1831
    %1896 = vst [vmem:[#allocation3 + $0xf0] sm:$0xff] %v1832
    %1897 = vst [vmem:[#allocation3 + $0xf8] sm:$0xff] %v1833
    %1898 = vst [vmem:[#allocation3 + $0x100] sm:$0xff] %v1834
    %1899 = vst [vmem:[#allocation3 + $0x108] sm:$0xff] %v1835
    %1900 = vst [vmem:[#allocation3 + $0x110] sm:$0xff] %v1836
    %1901 = vst [vmem:[#allocation3 + $0x118] sm:$0xff] %v1837
    %1902 = vst [vmem:[#allocation3 + $0x120] sm:$0xff] %v1838
    %1903 = vst [vmem:[#allocation3 + $0x128] sm:$0xff] %v1839
    %1904 = vst [vmem:[#allocation3 + $0x130] sm:$0xff] %v1840
    %1905 = vst [vmem:[#allocation3 + $0x138] sm:$0xff] %v1841
    %1906 = vst [vmem:[#allocation3 + $0x140] sm:$0xff] %v1842
    %1907 = vst [vmem:[#allocation3 + $0x148] sm:$0xff] %v1843
    %1908 = vst [vmem:[#allocation3 + $0x150] sm:$0xff] %v1844
    %1909 = vst [vmem:[#allocation3 + $0x158] sm:$0xff] %v1845
    %1910 = vst [vmem:[#allocation3 + $0x160] sm:$0xff] %v1846
    %1911 = vst [vmem:[#allocation3 + $0x168] sm:$0xff] %v1847
    %1912 = vst [vmem:[#allocation3 + $0x170] sm:$0xff] %v1848
    %1913 = vst [vmem:[#allocation3 + $0x178] sm:$0xff] %v1849
    %1914 = vst [vmem:[#allocation3 + $0x180] sm:$0xff] %v1850
    %1915 = vst [vmem:[#allocation3 + $0x188] sm:$0xff] %v1851
    %1916 = vst [vmem:[#allocation3 + $0x190] sm:$0xff] %v1852
    %1917 = vst [vmem:[#allocation3 + $0x198] sm:$0xff] %v1853
    %1918 = vst [vmem:[#allocation3 + $0x1a0] sm:$0xff] %v1854
    %1919 = vst [vmem:[#allocation3 + $0x1a8] sm:$0xff] %v1855
    %1920 = vst [vmem:[#allocation3 + $0x1b0] sm:$0xff] %v1856
    %1921 = vst [vmem:[#allocation3 + $0x1b8] sm:$0xff] %v1857
    %1922 = vst [vmem:[#allocation3 + $0x1c0] sm:$0xff] %v1858
    %1923 = vst [vmem:[#allocation3 + $0x1c8] sm:$0xff] %v1859
    %1924 = vst [vmem:[#allocation3 + $0x1d0] sm:$0xff] %v1860
    %1925 = vst [vmem:[#allocation3 + $0x1d8] sm:$0xff] %v1861
    %1926 = vst [vmem:[#allocation3 + $0x1e0] sm:$0xff] %v1862
    %1927 = vst [vmem:[#allocation3 + $0x1e8] sm:$0xff] %v1863
    %1928 = vst [vmem:[#allocation3 + $0x1f0] sm:$0xff] %v1864
    %1929 = vst [vmem:[#allocation3 + $0x1f8] sm:$0xff] %v1865
    %v1930 = vld [vmem:[%s1447 + $0x1] sm:$0xff]
    %v1931 = vld [vmem:[%s1447 + $0x9] sm:$0xff]
    %v1932 = vld [vmem:[%s1447 + $0x19] sm:$0xff]
    %v1933 = vld [vmem:[%s1447 + $0x21] sm:$0xff]
    %v1934 = vld [vmem:[%s1447 + $0x31] sm:$0xff]
    %v1935 = vld [vmem:[%s1447 + $0x39] sm:$0xff]
    %v1936 = vld [vmem:[%s1447 + $0x49] sm:$0xff]
    %v1937 = vld [vmem:[%s1447 + $0x51] sm:$0xff]
    %v1938 = vld [vmem:[%s1447 + $0x61] sm:$0xff]
    %v1939 = vld [vmem:[%s1447 + $0x69] sm:$0xff]
    %v1940 = vld [vmem:[%s1447 + $0x79] sm:$0xff]
    %v1941 = vld [vmem:[%s1447 + $0x81] sm:$0xff]
    %v1942 = vld [vmem:[%s1447 + $0x91] sm:$0xff]
    %v1943 = vld [vmem:[%s1447 + $0x99] sm:$0xff]
    %v1944 = vld [vmem:[%s1447 + $0xa9] sm:$0xff]
    %v1945 = vld [vmem:[%s1447 + $0xb1] sm:$0xff]
    %v1946 = vld [vmem:[%s1447 + $0xc1] sm:$0xff]
    %v1947 = vld [vmem:[%s1447 + $0xc9] sm:$0xff]
    %v1948 = vld [vmem:[%s1447 + $0xd9] sm:$0xff]
    %v1949 = vld [vmem:[%s1447 + $0xe1] sm:$0xff]
    %v1950 = vld [vmem:[%s1447 + $0xf1] sm:$0xff]
    %v1951 = vld [vmem:[%s1447 + $0xf9] sm:$0xff]
    %v1952 = vld [vmem:[%s1447 + $0x109] sm:$0xff]
    %v1953 = vld [vmem:[%s1447 + $0x111] sm:$0xff]
    %v1954 = vld [vmem:[%s1447 + $0x121] sm:$0xff]
    %v1955 = vld [vmem:[%s1447 + $0x129] sm:$0xff]
    %v1956 = vld [vmem:[%s1447 + $0x139] sm:$0xff]
    %v1957 = vld [vmem:[%s1447 + $0x141] sm:$0xff]
    %v1958 = vld [vmem:[%s1447 + $0x151] sm:$0xff]
    %v1959 = vld [vmem:[%s1447 + $0x159] sm:$0xff]
    %v1960 = vld [vmem:[%s1447 + $0x169] sm:$0xff]
    %v1961 = vld [vmem:[%s1447 + $0x171] sm:$0xff]
    %v1962 = vld [vmem:[%s1447 + $0x1b1] sm:$0xff]
    %v1963 = vld [vmem:[%s1447 + $0x1b9] sm:$0xff]
    %v1964 = vld [vmem:[%s1447 + $0x1c9] sm:$0xff]
    %v1965 = vld [vmem:[%s1447 + $0x1d1] sm:$0xff]
    %v1966 = vld [vmem:[%s1447 + $0x1e1] sm:$0xff]
    %v1967 = vld [vmem:[%s1447 + $0x1e9] sm:$0xff]
    %v1968 = vld [vmem:[%s1447 + $0x1f9] sm:$0xff]
    %v1969 = vld [vmem:[%s1447 + $0x201] sm:$0xff]
    %v1970 = vld [vmem:[%s1447 + $0x211] sm:$0xff]
    %v1971 = vld [vmem:[%s1447 + $0x219] sm:$0xff]
    %v1972 = vld [vmem:[%s1447 + $0x229] sm:$0xff]
    %v1973 = vld [vmem:[%s1447 + $0x231] sm:$0xff]
    %v1974 = vld [vmem:[%s1447 + $0x241] sm:$0xff]
    %v1975 = vld [vmem:[%s1447 + $0x249] sm:$0xff]
    %v1976 = vld [vmem:[%s1447 + $0x259] sm:$0xff]
    %v1977 = vld [vmem:[%s1447 + $0x261] sm:$0xff]
    %v1978 = vld [vmem:[%s1447 + $0x271] sm:$0xff]
    %v1979 = vld [vmem:[%s1447 + $0x279] sm:$0xff]
    %v1980 = vld [vmem:[%s1447 + $0x289] sm:$0xff]
    %v1981 = vld [vmem:[%s1447 + $0x291] sm:$0xff]
    %v1982 = vld [vmem:[%s1447 + $0x2a1] sm:$0xff]
    %v1983 = vld [vmem:[%s1447 + $0x2a9] sm:$0xff]
    %v1984 = vld [vmem:[%s1447 + $0x2b9] sm:$0xff]
    %v1985 = vld [vmem:[%s1447 + $0x2c1] sm:$0xff]
    %v1986 = vld [vmem:[%s1447 + $0x2d1] sm:$0xff]
    %v1987 = vld [vmem:[%s1447 + $0x2d9] sm:$0xff]
    %v1988 = vld [vmem:[%s1447 + $0x2e9] sm:$0xff]
    %v1989 = vld [vmem:[%s1447 + $0x2f1] sm:$0xff]
    %v1990 = vld [vmem:[%s1447 + $0x301] sm:$0xff]
    %v1991 = vld [vmem:[%s1447 + $0x309] sm:$0xff]
    %v1992 = vld [vmem:[%s1447 + $0x319] sm:$0xff]
    %v1993 = vld [vmem:[%s1447 + $0x321] sm:$0xff]
    %s1994 = scalar_lea.vmem %s1, 512
    %v1995 = vld [vmem:[%s1994] sm:$0xff]
    %v1996 = vld [vmem:[%s1994 + $0x8] sm:$0xff]
    %v1997 = vld [vmem:[%s1994 + $0x10] sm:$0xff]
    %v1998 = vld [vmem:[%s1994 + $0x18] sm:$0xff]
    %v1999 = vld [vmem:[%s1994 + $0x20] sm:$0xff]
    %v2000 = vld [vmem:[%s1994 + $0x28] sm:$0xff]
    %v2001 = vld [vmem:[%s1994 + $0x30] sm:$0xff]
    %v2002 = vld [vmem:[%s1994 + $0x38] sm:$0xff]
    %v2003 = vld [vmem:[%s1994 + $0x40] sm:$0xff]
    %v2004 = vld [vmem:[%s1994 + $0x48] sm:$0xff]
    %v2005 = vld [vmem:[%s1994 + $0x50] sm:$0xff]
    %v2006 = vld [vmem:[%s1994 + $0x58] sm:$0xff]
    %v2007 = vld [vmem:[%s1994 + $0x60] sm:$0xff]
    %v2008 = vld [vmem:[%s1994 + $0x68] sm:$0xff]
    %v2009 = vld [vmem:[%s1994 + $0x70] sm:$0xff]
    %v2010 = vld [vmem:[%s1994 + $0x78] sm:$0xff]
    %2011 = vmatpush.msra.mxu0 %v2010
    %2012 = vmatpush.msra.mxu0 %v2009
    %2013 = vmatpush.msra.mxu0 %v2008
    %2014 = vmatpush.msra.mxu0 %v2007
    %2015 = vmatpush.msra.mxu0 %v2006
    %2016 = vmatpush.msra.mxu0 %v2005
    %2017 = vmatpush.msra.mxu0 %v2004
    %2018 = vmatpush.msra.mxu0 %v2003
    %2019 = vmatpush.msra.mxu0 %v2002
    %2020 = vmatpush.msra.mxu0 %v2001
    %2021 = vmatpush.msra.mxu0 %v2000
    %2022 = vmatpush.msra.mxu0 %v1999
    %2023 = vmatpush.msra.mxu0 %v1998
    %2024 = vmatpush.msra.mxu0 %v1997
    %2025 = vmatpush.msra.mxu0 %v1996
    %2026 = vmatpush.msra.mxu0 %v1995
    %2027 = vmatmul.f32.gmra.mxu0 %v1930
    %v2028 = vpop.f32.mrf.mxu0
    %v2029 = vadd.f32 0.0, %v2028
    %2030 = vmatmul.f32.gmra.mxu0 %v1931
    %v2031 = vpop.f32.mrf.mxu0
    %v2032 = vadd.f32 0.0, %v2031
    %2033 = vmatmul.f32.gmra.mxu0 %v1932
    %v2034 = vpop.f32.mrf.mxu0
    %v2035 = vadd.f32 0.0, %v2034
    %2036 = vmatmul.f32.gmra.mxu0 %v1933
    %v2037 = vpop.f32.mrf.mxu0
    %v2038 = vadd.f32 0.0, %v2037
    %2039 = vmatmul.f32.gmra.mxu0 %v1934
    %v2040 = vpop.f32.mrf.mxu0
    %v2041 = vadd.f32 0.0, %v2040
    %2042 = vmatmul.f32.gmra.mxu0 %v1935
    %v2043 = vpop.f32.mrf.mxu0
    %v2044 = vadd.f32 0.0, %v2043
    %2045 = vmatmul.f32.gmra.mxu0 %v1936
    %v2046 = vpop.f32.mrf.mxu0
    %v2047 = vadd.f32 0.0, %v2046
    %2048 = vmatmul.f32.gmra.mxu0 %v1937
    %v2049 = vpop.f32.mrf.mxu0
    %v2050 = vadd.f32 0.0, %v2049
    %2051 = vmatmul.f32.gmra.mxu0 %v1938
    %v2052 = vpop.f32.mrf.mxu0
    %v2053 = vadd.f32 0.0, %v2052
    %2054 = vmatmul.f32.gmra.mxu0 %v1939
    %v2055 = vpop.f32.mrf.mxu0
    %v2056 = vadd.f32 0.0, %v2055
    %2057 = vmatmul.f32.gmra.mxu0 %v1940
    %v2058 = vpop.f32.mrf.mxu0
    %v2059 = vadd.f32 0.0, %v2058
    %2060 = vmatmul.f32.gmra.mxu0 %v1941
    %v2061 = vpop.f32.mrf.mxu0
    %v2062 = vadd.f32 0.0, %v2061
    %2063 = vmatmul.f32.gmra.mxu0 %v1942
    %v2064 = vpop.f32.mrf.mxu0
    %v2065 = vadd.f32 0.0, %v2064
    %2066 = vmatmul.f32.gmra.mxu0 %v1943
    %v2067 = vpop.f32.mrf.mxu0
    %v2068 = vadd.f32 0.0, %v2067
    %2069 = vmatmul.f32.gmra.mxu0 %v1944
    %v2070 = vpop.f32.mrf.mxu0
    %v2071 = vadd.f32 0.0, %v2070
    %2072 = vmatmul.f32.gmra.mxu0 %v1945
    %v2073 = vpop.f32.mrf.mxu0
    %v2074 = vadd.f32 0.0, %v2073
    %2075 = vmatmul.f32.gmra.mxu0 %v1946
    %v2076 = vpop.f32.mrf.mxu0
    %v2077 = vadd.f32 0.0, %v2076
    %2078 = vmatmul.f32.gmra.mxu0 %v1947
    %v2079 = vpop.f32.mrf.mxu0
    %v2080 = vadd.f32 0.0, %v2079
    %2081 = vmatmul.f32.gmra.mxu0 %v1948
    %v2082 = vpop.f32.mrf.mxu0
    %v2083 = vadd.f32 0.0, %v2082
    %2084 = vmatmul.f32.gmra.mxu0 %v1949
    %v2085 = vpop.f32.mrf.mxu0
    %v2086 = vadd.f32 0.0, %v2085
    %2087 = vmatmul.f32.gmra.mxu0 %v1950
    %v2088 = vpop.f32.mrf.mxu0
    %v2089 = vadd.f32 0.0, %v2088
    %2090 = vmatmul.f32.gmra.mxu0 %v1951
    %v2091 = vpop.f32.mrf.mxu0
    %v2092 = vadd.f32 0.0, %v2091
    %2093 = vmatmul.f32.gmra.mxu0 %v1952
    %v2094 = vpop.f32.mrf.mxu0
    %v2095 = vadd.f32 0.0, %v2094
    %2096 = vmatmul.f32.gmra.mxu0 %v1953
    %v2097 = vpop.f32.mrf.mxu0
    %v2098 = vadd.f32 0.0, %v2097
    %2099 = vmatmul.f32.gmra.mxu0 %v1954
    %v2100 = vpop.f32.mrf.mxu0
    %v2101 = vadd.f32 0.0, %v2100
    %2102 = vmatmul.f32.gmra.mxu0 %v1955
    %v2103 = vpop.f32.mrf.mxu0
    %v2104 = vadd.f32 0.0, %v2103
    %2105 = vmatmul.f32.gmra.mxu0 %v1956
    %v2106 = vpop.f32.mrf.mxu0
    %v2107 = vadd.f32 0.0, %v2106
    %2108 = vmatmul.f32.gmra.mxu0 %v1957
    %v2109 = vpop.f32.mrf.mxu0
    %v2110 = vadd.f32 0.0, %v2109
    %2111 = vmatmul.f32.gmra.mxu0 %v1958
    %v2112 = vpop.f32.mrf.mxu0
    %v2113 = vadd.f32 0.0, %v2112
    %2114 = vmatmul.f32.gmra.mxu0 %v1959
    %v2115 = vpop.f32.mrf.mxu0
    %v2116 = vadd.f32 0.0, %v2115
    %2117 = vmatmul.f32.gmra.mxu0 %v1960
    %v2118 = vpop.f32.mrf.mxu0
    %v2119 = vadd.f32 0.0, %v2118
    %2120 = vmatmul.f32.gmra.mxu0 %v1961
    %v2121 = vpop.f32.mrf.mxu0
    %v2122 = vadd.f32 0.0, %v2121
    %2123 = vmatmul.f32.gmra.mxu0 %v1962
    %v2124 = vpop.f32.mrf.mxu0
    %v2125 = vadd.f32 0.0, %v2124
    %2126 = vmatmul.f32.gmra.mxu0 %v1963
    %v2127 = vpop.f32.mrf.mxu0
    %v2128 = vadd.f32 0.0, %v2127
    %2129 = vmatmul.f32.gmra.mxu0 %v1964
    %v2130 = vpop.f32.mrf.mxu0
    %v2131 = vadd.f32 0.0, %v2130
    %2132 = vmatmul.f32.gmra.mxu0 %v1965
    %v2133 = vpop.f32.mrf.mxu0
    %v2134 = vadd.f32 0.0, %v2133
    %2135 = vmatmul.f32.gmra.mxu0 %v1966
    %v2136 = vpop.f32.mrf.mxu0
    %v2137 = vadd.f32 0.0, %v2136
    %2138 = vmatmul.f32.gmra.mxu0 %v1967
    %v2139 = vpop.f32.mrf.mxu0
    %v2140 = vadd.f32 0.0, %v2139
    %2141 = vmatmul.f32.gmra.mxu0 %v1968
    %v2142 = vpop.f32.mrf.mxu0
    %v2143 = vadd.f32 0.0, %v2142
    %2144 = vmatmul.f32.gmra.mxu0 %v1969
    %v2145 = vpop.f32.mrf.mxu0
    %v2146 = vadd.f32 0.0, %v2145
    %2147 = vmatmul.f32.gmra.mxu0 %v1970
    %v2148 = vpop.f32.mrf.mxu0
    %v2149 = vadd.f32 0.0, %v2148
    %2150 = vmatmul.f32.gmra.mxu0 %v1971
    %v2151 = vpop.f32.mrf.mxu0
    %v2152 = vadd.f32 0.0, %v2151
    %2153 = vmatmul.f32.gmra.mxu0 %v1972
    %v2154 = vpop.f32.mrf.mxu0
    %v2155 = vadd.f32 0.0, %v2154
    %2156 = vmatmul.f32.gmra.mxu0 %v1973
    %v2157 = vpop.f32.mrf.mxu0
    %v2158 = vadd.f32 0.0, %v2157
    %2159 = vmatmul.f32.gmra.mxu0 %v1974
    %v2160 = vpop.f32.mrf.mxu0
    %v2161 = vadd.f32 0.0, %v2160
    %2162 = vmatmul.f32.gmra.mxu0 %v1975
    %v2163 = vpop.f32.mrf.mxu0
    %v2164 = vadd.f32 0.0, %v2163
    %2165 = vmatmul.f32.gmra.mxu0 %v1976
    %v2166 = vpop.f32.mrf.mxu0
    %v2167 = vadd.f32 0.0, %v2166
    %2168 = vmatmul.f32.gmra.mxu0 %v1977
    %v2169 = vpop.f32.mrf.mxu0
    %v2170 = vadd.f32 0.0, %v2169
    %2171 = vmatmul.f32.gmra.mxu0 %v1978
    %v2172 = vpop.f32.mrf.mxu0
    %v2173 = vadd.f32 0.0, %v2172
    %2174 = vmatmul.f32.gmra.mxu0 %v1979
    %v2175 = vpop.f32.mrf.mxu0
    %v2176 = vadd.f32 0.0, %v2175
    %2177 = vmatmul.f32.gmra.mxu0 %v1980
    %v2178 = vpop.f32.mrf.mxu0
    %v2179 = vadd.f32 0.0, %v2178
    %2180 = vmatmul.f32.gmra.mxu0 %v1981
    %v2181 = vpop.f32.mrf.mxu0
    %v2182 = vadd.f32 0.0, %v2181
    %2183 = vmatmul.f32.gmra.mxu0 %v1982
    %v2184 = vpop.f32.mrf.mxu0
    %v2185 = vadd.f32 0.0, %v2184
    %2186 = vmatmul.f32.gmra.mxu0 %v1983
    %v2187 = vpop.f32.mrf.mxu0
    %v2188 = vadd.f32 0.0, %v2187
    %2189 = vmatmul.f32.gmra.mxu0 %v1984
    %v2190 = vpop.f32.mrf.mxu0
    %v2191 = vadd.f32 0.0, %v2190
    %2192 = vmatmul.f32.gmra.mxu0 %v1985
    %v2193 = vpop.f32.mrf.mxu0
    %v2194 = vadd.f32 0.0, %v2193
    %2195 = vmatmul.f32.gmra.mxu0 %v1986
    %v2196 = vpop.f32.mrf.mxu0
    %v2197 = vadd.f32 0.0, %v2196
    %2198 = vmatmul.f32.gmra.mxu0 %v1987
    %v2199 = vpop.f32.mrf.mxu0
    %v2200 = vadd.f32 0.0, %v2199
    %2201 = vmatmul.f32.gmra.mxu0 %v1988
    %v2202 = vpop.f32.mrf.mxu0
    %v2203 = vadd.f32 0.0, %v2202
    %2204 = vmatmul.f32.gmra.mxu0 %v1989
    %v2205 = vpop.f32.mrf.mxu0
    %v2206 = vadd.f32 0.0, %v2205
    %2207 = vmatmul.f32.gmra.mxu0 %v1990
    %v2208 = vpop.f32.mrf.mxu0
    %v2209 = vadd.f32 0.0, %v2208
    %2210 = vmatmul.f32.gmra.mxu0 %v1991
    %v2211 = vpop.f32.mrf.mxu0
    %v2212 = vadd.f32 0.0, %v2211
    %2213 = vmatmul.f32.gmra.mxu0 %v1992
    %v2214 = vpop.f32.mrf.mxu0
    %v2215 = vadd.f32 0.0, %v2214
    %2216 = vmatmul.f32.gmra.mxu0 %v1993
    %v2217 = vpop.f32.mrf.mxu0
    %v2218 = vadd.f32 0.0, %v2217
    %2219 = vdwg.mxu0
    %v2220 = vld [vmem:[#allocation3] sm:$0xff]
    %v2221 = vld [vmem:[#allocation3 + $0x8] sm:$0xff]
    %v2222 = vld [vmem:[#allocation3 + $0x10] sm:$0xff]
    %v2223 = vld [vmem:[#allocation3 + $0x18] sm:$0xff]
    %v2224 = vld [vmem:[#allocation3 + $0x20] sm:$0xff]
    %v2225 = vld [vmem:[#allocation3 + $0x28] sm:$0xff]
    %v2226 = vld [vmem:[#allocation3 + $0x30] sm:$0xff]
    %v2227 = vld [vmem:[#allocation3 + $0x38] sm:$0xff]
    %v2228 = vld [vmem:[#allocation3 + $0x40] sm:$0xff]
    %v2229 = vld [vmem:[#allocation3 + $0x48] sm:$0xff]
    %v2230 = vld [vmem:[#allocation3 + $0x50] sm:$0xff]
    %v2231 = vld [vmem:[#allocation3 + $0x58] sm:$0xff]
    %v2232 = vld [vmem:[#allocation3 + $0x60] sm:$0xff]
    %v2233 = vld [vmem:[#allocation3 + $0x68] sm:$0xff]
    %v2234 = vld [vmem:[#allocation3 + $0x70] sm:$0xff]
    %v2235 = vld [vmem:[#allocation3 + $0x78] sm:$0xff]
    %v2236 = vld [vmem:[#allocation3 + $0x80] sm:$0xff]
    %v2237 = vld [vmem:[#allocation3 + $0x88] sm:$0xff]
    %v2238 = vld [vmem:[#allocation3 + $0x90] sm:$0xff]
    %v2239 = vld [vmem:[#allocation3 + $0x98] sm:$0xff]
    %v2240 = vld [vmem:[#allocation3 + $0xa0] sm:$0xff]
    %v2241 = vld [vmem:[#allocation3 + $0xa8] sm:$0xff]
    %v2242 = vld [vmem:[#allocation3 + $0xb0] sm:$0xff]
    %v2243 = vld [vmem:[#allocation3 + $0xb8] sm:$0xff]
    %v2244 = vld [vmem:[#allocation3 + $0xc0] sm:$0xff]
    %v2245 = vld [vmem:[#allocation3 + $0xc8] sm:$0xff]
    %v2246 = vld [vmem:[#allocation3 + $0xd0] sm:$0xff]
    %v2247 = vld [vmem:[#allocation3 + $0xd8] sm:$0xff]
    %v2248 = vld [vmem:[#allocation3 + $0xe0] sm:$0xff]
    %v2249 = vld [vmem:[#allocation3 + $0xe8] sm:$0xff]
    %v2250 = vld [vmem:[#allocation3 + $0xf0] sm:$0xff]
    %v2251 = vld [vmem:[#allocation3 + $0xf8] sm:$0xff]
    %v2252 = vld [vmem:[#allocation3 + $0x100] sm:$0xff]
    %v2253 = vld [vmem:[#allocation3 + $0x108] sm:$0xff]
    %v2254 = vld [vmem:[#allocation3 + $0x110] sm:$0xff]
    %v2255 = vld [vmem:[#allocation3 + $0x118] sm:$0xff]
    %v2256 = vld [vmem:[#allocation3 + $0x120] sm:$0xff]
    %v2257 = vld [vmem:[#allocation3 + $0x128] sm:$0xff]
    %v2258 = vld [vmem:[#allocation3 + $0x130] sm:$0xff]
    %v2259 = vld [vmem:[#allocation3 + $0x138] sm:$0xff]
    %v2260 = vld [vmem:[#allocation3 + $0x140] sm:$0xff]
    %v2261 = vld [vmem:[#allocation3 + $0x148] sm:$0xff]
    %v2262 = vld [vmem:[#allocation3 + $0x150] sm:$0xff]
    %v2263 = vld [vmem:[#allocation3 + $0x158] sm:$0xff]
    %v2264 = vld [vmem:[#allocation3 + $0x160] sm:$0xff]
    %v2265 = vld [vmem:[#allocation3 + $0x168] sm:$0xff]
    %v2266 = vld [vmem:[#allocation3 + $0x170] sm:$0xff]
    %v2267 = vld [vmem:[#allocation3 + $0x178] sm:$0xff]
    %v2268 = vld [vmem:[#allocation3 + $0x180] sm:$0xff]
    %v2269 = vld [vmem:[#allocation3 + $0x188] sm:$0xff]
    %v2270 = vld [vmem:[#allocation3 + $0x190] sm:$0xff]
    %v2271 = vld [vmem:[#allocation3 + $0x198] sm:$0xff]
    %v2272 = vld [vmem:[#allocation3 + $0x1a0] sm:$0xff]
    %v2273 = vld [vmem:[#allocation3 + $0x1a8] sm:$0xff]
    %v2274 = vld [vmem:[#allocation3 + $0x1b0] sm:$0xff]
    %v2275 = vld [vmem:[#allocation3 + $0x1b8] sm:$0xff]
    %v2276 = vld [vmem:[#allocation3 + $0x1c0] sm:$0xff]
    %v2277 = vld [vmem:[#allocation3 + $0x1c8] sm:$0xff]
    %v2278 = vld [vmem:[#allocation3 + $0x1d0] sm:$0xff]
    %v2279 = vld [vmem:[#allocation3 + $0x1d8] sm:$0xff]
    %v2280 = vld [vmem:[#allocation3 + $0x1e0] sm:$0xff]
    %v2281 = vld [vmem:[#allocation3 + $0x1e8] sm:$0xff]
    %v2282 = vld [vmem:[#allocation3 + $0x1f0] sm:$0xff]
    %v2283 = vld [vmem:[#allocation3 + $0x1f8] sm:$0xff]
    %v2284 = vadd.f32 %v2220, %v2029
    %v2285 = vadd.f32 %v2221, %v2032
    %v2286 = vadd.f32 %v2222, %v2035
    %v2287 = vadd.f32 %v2223, %v2038
    %v2288 = vadd.f32 %v2224, %v2041
    %v2289 = vadd.f32 %v2225, %v2044
    %v2290 = vadd.f32 %v2226, %v2047
    %v2291 = vadd.f32 %v2227, %v2050
    %v2292 = vadd.f32 %v2228, %v2053
    %v2293 = vadd.f32 %v2229, %v2056
    %v2294 = vadd.f32 %v2230, %v2059
    %v2295 = vadd.f32 %v2231, %v2062
    %v2296 = vadd.f32 %v2232, %v2065
    %v2297 = vadd.f32 %v2233, %v2068
    %v2298 = vadd.f32 %v2234, %v2071
    %v2299 = vadd.f32 %v2235, %v2074
    %v2300 = vadd.f32 %v2236, %v2077
    %v2301 = vadd.f32 %v2237, %v2080
    %v2302 = vadd.f32 %v2238, %v2083
    %v2303 = vadd.f32 %v2239, %v2086
    %v2304 = vadd.f32 %v2240, %v2089
    %v2305 = vadd.f32 %v2241, %v2092
    %v2306 = vadd.f32 %v2242, %v2095
    %v2307 = vadd.f32 %v2243, %v2098
    %v2308 = vadd.f32 %v2244, %v2101
    %v2309 = vadd.f32 %v2245, %v2104
    %v2310 = vadd.f32 %v2246, %v2107
    %v2311 = vadd.f32 %v2247, %v2110
    %v2312 = vadd.f32 %v2248, %v2113
    %v2313 = vadd.f32 %v2249, %v2116
    %v2314 = vadd.f32 %v2250, %v2119
    %v2315 = vadd.f32 %v2251, %v2122
    %v2316 = vadd.f32 %v2252, %v2125
    %v2317 = vadd.f32 %v2253, %v2128
    %v2318 = vadd.f32 %v2254, %v2131
    %v2319 = vadd.f32 %v2255, %v2134
    %v2320 = vadd.f32 %v2256, %v2137
    %v2321 = vadd.f32 %v2257, %v2140
    %v2322 = vadd.f32 %v2258, %v2143
    %v2323 = vadd.f32 %v2259, %v2146
    %v2324 = vadd.f32 %v2260, %v2149
    %v2325 = vadd.f32 %v2261, %v2152
    %v2326 = vadd.f32 %v2262, %v2155
    %v2327 = vadd.f32 %v2263, %v2158
    %v2328 = vadd.f32 %v2264, %v2161
    %v2329 = vadd.f32 %v2265, %v2164
    %v2330 = vadd.f32 %v2266, %v2167
    %v2331 = vadd.f32 %v2267, %v2170
    %v2332 = vadd.f32 %v2268, %v2173
    %v2333 = vadd.f32 %v2269, %v2176
    %v2334 = vadd.f32 %v2270, %v2179
    %v2335 = vadd.f32 %v2271, %v2182
    %v2336 = vadd.f32 %v2272, %v2185
    %v2337 = vadd.f32 %v2273, %v2188
    %v2338 = vadd.f32 %v2274, %v2191
    %v2339 = vadd.f32 %v2275, %v2194
    %v2340 = vadd.f32 %v2276, %v2197
    %v2341 = vadd.f32 %v2277, %v2200
    %v2342 = vadd.f32 %v2278, %v2203
    %v2343 = vadd.f32 %v2279, %v2206
    %v2344 = vadd.f32 %v2280, %v2209
    %v2345 = vadd.f32 %v2281, %v2212
    %v2346 = vadd.f32 %v2282, %v2215
    %v2347 = vadd.f32 %v2283, %v2218
    %2348 = vst [vmem:[#allocation3] sm:$0xff] %v2284
    %2349 = vst [vmem:[#allocation3 + $0x8] sm:$0xff] %v2285
    %2350 = vst [vmem:[#allocation3 + $0x10] sm:$0xff] %v2286
    %2351 = vst [vmem:[#allocation3 + $0x18] sm:$0xff] %v2287
    %2352 = vst [vmem:[#allocation3 + $0x20] sm:$0xff] %v2288
    %2353 = vst [vmem:[#allocation3 + $0x28] sm:$0xff] %v2289
    %2354 = vst [vmem:[#allocation3 + $0x30] sm:$0xff] %v2290
    %2355 = vst [vmem:[#allocation3 + $0x38] sm:$0xff] %v2291
    %2356 = vst [vmem:[#allocation3 + $0x40] sm:$0xff] %v2292
    %2357 = vst [vmem:[#allocation3 + $0x48] sm:$0xff] %v2293
    %2358 = vst [vmem:[#allocation3 + $0x50] sm:$0xff] %v2294
    %2359 = vst [vmem:[#allocation3 + $0x58] sm:$0xff] %v2295
    %2360 = vst [vmem:[#allocation3 + $0x60] sm:$0xff] %v2296
    %2361 = vst [vmem:[#allocation3 + $0x68] sm:$0xff] %v2297
    %2362 = vst [vmem:[#allocation3 + $0x70] sm:$0xff] %v2298
    %2363 = vst [vmem:[#allocation3 + $0x78] sm:$0xff] %v2299
    %2364 = vst [vmem:[#allocation3 + $0x80] sm:$0xff] %v2300
    %2365 = vst [vmem:[#allocation3 + $0x88] sm:$0xff] %v2301
    %2366 = vst [vmem:[#allocation3 + $0x90] sm:$0xff] %v2302
    %2367 = vst [vmem:[#allocation3 + $0x98] sm:$0xff] %v2303
    %2368 = vst [vmem:[#allocation3 + $0xa0] sm:$0xff] %v2304
    %2369 = vst [vmem:[#allocation3 + $0xa8] sm:$0xff] %v2305
    %2370 = vst [vmem:[#allocation3 + $0xb0] sm:$0xff] %v2306
    %2371 = vst [vmem:[#allocation3 + $0xb8] sm:$0xff] %v2307
    %2372 = vst [vmem:[#allocation3 + $0xc0] sm:$0xff] %v2308
    %2373 = vst [vmem:[#allocation3 + $0xc8] sm:$0xff] %v2309
    %2374 = vst [vmem:[#allocation3 + $0xd0] sm:$0xff] %v2310
    %2375 = vst [vmem:[#allocation3 + $0xd8] sm:$0xff] %v2311
    %2376 = vst [vmem:[#allocation3 + $0xe0] sm:$0xff] %v2312
    %2377 = vst [vmem:[#allocation3 + $0xe8] sm:$0xff] %v2313
    %2378 = vst [vmem:[#allocation3 + $0xf0] sm:$0xff] %v2314
    %2379 = vst [vmem:[#allocation3 + $0xf8] sm:$0xff] %v2315
    %2380 = vst [vmem:[#allocation3 + $0x100] sm:$0xff] %v2316
    %2381 = vst [vmem:[#allocation3 + $0x108] sm:$0xff] %v2317
    %2382 = vst [vmem:[#allocation3 + $0x110] sm:$0xff] %v2318
    %2383 = vst [vmem:[#allocation3 + $0x118] sm:$0xff] %v2319
    %2384 = vst [vmem:[#allocation3 + $0x120] sm:$0xff] %v2320
    %2385 = vst [vmem:[#allocation3 + $0x128] sm:$0xff] %v2321
    %2386 = vst [vmem:[#allocation3 + $0x130] sm:$0xff] %v2322
    %2387 = vst [vmem:[#allocation3 + $0x138] sm:$0xff] %v2323
    %2388 = vst [vmem:[#allocation3 + $0x140] sm:$0xff] %v2324
    %2389 = vst [vmem:[#allocation3 + $0x148] sm:$0xff] %v2325
    %2390 = vst [vmem:[#allocation3 + $0x150] sm:$0xff] %v2326
    %2391 = vst [vmem:[#allocation3 + $0x158] sm:$0xff] %v2327
    %2392 = vst [vmem:[#allocation3 + $0x160] sm:$0xff] %v2328
    %2393 = vst [vmem:[#allocation3 + $0x168] sm:$0xff] %v2329
    %2394 = vst [vmem:[#allocation3 + $0x170] sm:$0xff] %v2330
    %2395 = vst [vmem:[#allocation3 + $0x178] sm:$0xff] %v2331
    %2396 = vst [vmem:[#allocation3 + $0x180] sm:$0xff] %v2332
    %2397 = vst [vmem:[#allocation3 + $0x188] sm:$0xff] %v2333
    %2398 = vst [vmem:[#allocation3 + $0x190] sm:$0xff] %v2334
    %2399 = vst [vmem:[#allocation3 + $0x198] sm:$0xff] %v2335
    %2400 = vst [vmem:[#allocation3 + $0x1a0] sm:$0xff] %v2336
    %2401 = vst [vmem:[#allocation3 + $0x1a8] sm:$0xff] %v2337
    %2402 = vst [vmem:[#allocation3 + $0x1b0] sm:$0xff] %v2338
    %2403 = vst [vmem:[#allocation3 + $0x1b8] sm:$0xff] %v2339
    %2404 = vst [vmem:[#allocation3 + $0x1c0] sm:$0xff] %v2340
    %2405 = vst [vmem:[#allocation3 + $0x1c8] sm:$0xff] %v2341
    %2406 = vst [vmem:[#allocation3 + $0x1d0] sm:$0xff] %v2342
    %2407 = vst [vmem:[#allocation3 + $0x1d8] sm:$0xff] %v2343
    %2408 = vst [vmem:[#allocation3 + $0x1e0] sm:$0xff] %v2344
    %2409 = vst [vmem:[#allocation3 + $0x1e8] sm:$0xff] %v2345
    %2410 = vst [vmem:[#allocation3 + $0x1f0] sm:$0xff] %v2346
    %2411 = vst [vmem:[#allocation3 + $0x1f8] sm:$0xff] %v2347
    %v2412 = vld [vmem:[%s1447 + $0x2] sm:$0xff]
    %v2413 = vld [vmem:[%s1447 + $0xa] sm:$0xff]
    %v2414 = vld [vmem:[%s1447 + $0x1a] sm:$0xff]
    %v2415 = vld [vmem:[%s1447 + $0x22] sm:$0xff]
    %v2416 = vld [vmem:[%s1447 + $0x32] sm:$0xff]
    %v2417 = vld [vmem:[%s1447 + $0x3a] sm:$0xff]
    %v2418 = vld [vmem:[%s1447 + $0x4a] sm:$0xff]
    %v2419 = vld [vmem:[%s1447 + $0x52] sm:$0xff]
    %v2420 = vld [vmem:[%s1447 + $0x62] sm:$0xff]
    %v2421 = vld [vmem:[%s1447 + $0x6a] sm:$0xff]
    %v2422 = vld [vmem:[%s1447 + $0x7a] sm:$0xff]
    %v2423 = vld [vmem:[%s1447 + $0x82] sm:$0xff]
    %v2424 = vld [vmem:[%s1447 + $0x92] sm:$0xff]
    %v2425 = vld [vmem:[%s1447 + $0x9a] sm:$0xff]
    %v2426 = vld [vmem:[%s1447 + $0xaa] sm:$0xff]
    %v2427 = vld [vmem:[%s1447 + $0xb2] sm:$0xff]
    %v2428 = vld [vmem:[%s1447 + $0xc2] sm:$0xff]
    %v2429 = vld [vmem:[%s1447 + $0xca] sm:$0xff]
    %v2430 = vld [vmem:[%s1447 + $0xda] sm:$0xff]
    %v2431 = vld [vmem:[%s1447 + $0xe2] sm:$0xff]
    %v2432 = vld [vmem:[%s1447 + $0xf2] sm:$0xff]
    %v2433 = vld [vmem:[%s1447 + $0xfa] sm:$0xff]
    %v2434 = vld [vmem:[%s1447 + $0x10a] sm:$0xff]
    %v2435 = vld [vmem:[%s1447 + $0x112] sm:$0xff]
    %v2436 = vld [vmem:[%s1447 + $0x122] sm:$0xff]
    %v2437 = vld [vmem:[%s1447 + $0x12a] sm:$0xff]
    %v2438 = vld [vmem:[%s1447 + $0x13a] sm:$0xff]
    %v2439 = vld [vmem:[%s1447 + $0x142] sm:$0xff]
    %v2440 = vld [vmem:[%s1447 + $0x152] sm:$0xff]
    %v2441 = vld [vmem:[%s1447 + $0x15a] sm:$0xff]
    %v2442 = vld [vmem:[%s1447 + $0x16a] sm:$0xff]
    %v2443 = vld [vmem:[%s1447 + $0x172] sm:$0xff]
    %v2444 = vld [vmem:[%s1447 + $0x1b2] sm:$0xff]
    %v2445 = vld [vmem:[%s1447 + $0x1ba] sm:$0xff]
    %v2446 = vld [vmem:[%s1447 + $0x1ca] sm:$0xff]
    %v2447 = vld [vmem:[%s1447 + $0x1d2] sm:$0xff]
    %v2448 = vld [vmem:[%s1447 + $0x1e2] sm:$0xff]
    %v2449 = vld [vmem:[%s1447 + $0x1ea] sm:$0xff]
    %v2450 = vld [vmem:[%s1447 + $0x1fa] sm:$0xff]
    %v2451 = vld [vmem:[%s1447 + $0x202] sm:$0xff]
    %v2452 = vld [vmem:[%s1447 + $0x212] sm:$0xff]
    %v2453 = vld [vmem:[%s1447 + $0x21a] sm:$0xff]
    %v2454 = vld [vmem:[%s1447 + $0x22a] sm:$0xff]
    %v2455 = vld [vmem:[%s1447 + $0x232] sm:$0xff]
    %v2456 = vld [vmem:[%s1447 + $0x242] sm:$0xff]
    %v2457 = vld [vmem:[%s1447 + $0x24a] sm:$0xff]
    %v2458 = vld [vmem:[%s1447 + $0x25a] sm:$0xff]
    %v2459 = vld [vmem:[%s1447 + $0x262] sm:$0xff]
    %v2460 = vld [vmem:[%s1447 + $0x272] sm:$0xff]
    %v2461 = vld [vmem:[%s1447 + $0x27a] sm:$0xff]
    %v2462 = vld [vmem:[%s1447 + $0x28a] sm:$0xff]
    %v2463 = vld [vmem:[%s1447 + $0x292] sm:$0xff]
    %v2464 = vld [vmem:[%s1447 + $0x2a2] sm:$0xff]
    %v2465 = vld [vmem:[%s1447 + $0x2aa] sm:$0xff]
    %v2466 = vld [vmem:[%s1447 + $0x2ba] sm:$0xff]
    %v2467 = vld [vmem:[%s1447 + $0x2c2] sm:$0xff]
    %v2468 = vld [vmem:[%s1447 + $0x2d2] sm:$0xff]
    %v2469 = vld [vmem:[%s1447 + $0x2da] sm:$0xff]
    %v2470 = vld [vmem:[%s1447 + $0x2ea] sm:$0xff]
    %v2471 = vld [vmem:[%s1447 + $0x2f2] sm:$0xff]
    %v2472 = vld [vmem:[%s1447 + $0x302] sm:$0xff]
    %v2473 = vld [vmem:[%s1447 + $0x30a] sm:$0xff]
    %v2474 = vld [vmem:[%s1447 + $0x31a] sm:$0xff]
    %v2475 = vld [vmem:[%s1447 + $0x322] sm:$0xff]
    %s2476 = scalar_lea.vmem %s1, 640
    %v2477 = vld [vmem:[%s2476] sm:$0xff]
    %v2478 = vld [vmem:[%s2476 + $0x8] sm:$0xff]
    %v2479 = vld [vmem:[%s2476 + $0x10] sm:$0xff]
    %v2480 = vld [vmem:[%s2476 + $0x18] sm:$0xff]
    %v2481 = vld [vmem:[%s2476 + $0x20] sm:$0xff]
    %v2482 = vld [vmem:[%s2476 + $0x28] sm:$0xff]
    %v2483 = vld [vmem:[%s2476 + $0x30] sm:$0xff]
    %v2484 = vld [vmem:[%s2476 + $0x38] sm:$0xff]
    %v2485 = vld [vmem:[%s2476 + $0x40] sm:$0xff]
    %v2486 = vld [vmem:[%s2476 + $0x48] sm:$0xff]
    %v2487 = vld [vmem:[%s2476 + $0x50] sm:$0xff]
    %v2488 = vld [vmem:[%s2476 + $0x58] sm:$0xff]
    %v2489 = vld [vmem:[%s2476 + $0x60] sm:$0xff]
    %v2490 = vld [vmem:[%s2476 + $0x68] sm:$0xff]
    %v2491 = vld [vmem:[%s2476 + $0x70] sm:$0xff]
    %v2492 = vld [vmem:[%s2476 + $0x78] sm:$0xff]
    %2493 = vmatpush.msra.mxu0 %v2492
    %2494 = vmatpush.msra.mxu0 %v2491
    %2495 = vmatpush.msra.mxu0 %v2490
    %2496 = vmatpush.msra.mxu0 %v2489
    %2497 = vmatpush.msra.mxu0 %v2488
    %2498 = vmatpush.msra.mxu0 %v2487
    %2499 = vmatpush.msra.mxu0 %v2486
    %2500 = vmatpush.msra.mxu0 %v2485
    %2501 = vmatpush.msra.mxu0 %v2484
    %2502 = vmatpush.msra.mxu0 %v2483
    %2503 = vmatpush.msra.mxu0 %v2482
    %2504 = vmatpush.msra.mxu0 %v2481
    %2505 = vmatpush.msra.mxu0 %v2480
    %2506 = vmatpush.msra.mxu0 %v2479
    %2507 = vmatpush.msra.mxu0 %v2478
    %2508 = vmatpush.msra.mxu0 %v2477
    %2509 = vmatmul.f32.gmra.mxu0 %v2412
    %v2510 = vpop.f32.mrf.mxu0
    %v2511 = vadd.f32 0.0, %v2510
    %2512 = vmatmul.f32.gmra.mxu0 %v2413
    %v2513 = vpop.f32.mrf.mxu0
    %v2514 = vadd.f32 0.0, %v2513
    %2515 = vmatmul.f32.gmra.mxu0 %v2414
    %v2516 = vpop.f32.mrf.mxu0
    %v2517 = vadd.f32 0.0, %v2516
    %2518 = vmatmul.f32.gmra.mxu0 %v2415
    %v2519 = vpop.f32.mrf.mxu0
    %v2520 = vadd.f32 0.0, %v2519
    %2521 = vmatmul.f32.gmra.mxu0 %v2416
    %v2522 = vpop.f32.mrf.mxu0
    %v2523 = vadd.f32 0.0, %v2522
    %2524 = vmatmul.f32.gmra.mxu0 %v2417
    %v2525 = vpop.f32.mrf.mxu0
    %v2526 = vadd.f32 0.0, %v2525
    %2527 = vmatmul.f32.gmra.mxu0 %v2418
    %v2528 = vpop.f32.mrf.mxu0
    %v2529 = vadd.f32 0.0, %v2528
    %2530 = vmatmul.f32.gmra.mxu0 %v2419
    %v2531 = vpop.f32.mrf.mxu0
    %v2532 = vadd.f32 0.0, %v2531
    %2533 = vmatmul.f32.gmra.mxu0 %v2420
    %v2534 = vpop.f32.mrf.mxu0
    %v2535 = vadd.f32 0.0, %v2534
    %2536 = vmatmul.f32.gmra.mxu0 %v2421
    %v2537 = vpop.f32.mrf.mxu0
    %v2538 = vadd.f32 0.0, %v2537
    %2539 = vmatmul.f32.gmra.mxu0 %v2422
    %v2540 = vpop.f32.mrf.mxu0
    %v2541 = vadd.f32 0.0, %v2540
    %2542 = vmatmul.f32.gmra.mxu0 %v2423
    %v2543 = vpop.f32.mrf.mxu0
    %v2544 = vadd.f32 0.0, %v2543
    %2545 = vmatmul.f32.gmra.mxu0 %v2424
    %v2546 = vpop.f32.mrf.mxu0
    %v2547 = vadd.f32 0.0, %v2546
    %2548 = vmatmul.f32.gmra.mxu0 %v2425
    %v2549 = vpop.f32.mrf.mxu0
    %v2550 = vadd.f32 0.0, %v2549
    %2551 = vmatmul.f32.gmra.mxu0 %v2426
    %v2552 = vpop.f32.mrf.mxu0
    %v2553 = vadd.f32 0.0, %v2552
    %2554 = vmatmul.f32.gmra.mxu0 %v2427
    %v2555 = vpop.f32.mrf.mxu0
    %v2556 = vadd.f32 0.0, %v2555
    %2557 = vmatmul.f32.gmra.mxu0 %v2428
    %v2558 = vpop.f32.mrf.mxu0
    %v2559 = vadd.f32 0.0, %v2558
    %2560 = vmatmul.f32.gmra.mxu0 %v2429
    %v2561 = vpop.f32.mrf.mxu0
    %v2562 = vadd.f32 0.0, %v2561
    %2563 = vmatmul.f32.gmra.mxu0 %v2430
    %v2564 = vpop.f32.mrf.mxu0
    %v2565 = vadd.f32 0.0, %v2564
    %2566 = vmatmul.f32.gmra.mxu0 %v2431
    %v2567 = vpop.f32.mrf.mxu0
    %v2568 = vadd.f32 0.0, %v2567
    %2569 = vmatmul.f32.gmra.mxu0 %v2432
    %v2570 = vpop.f32.mrf.mxu0
    %v2571 = vadd.f32 0.0, %v2570
    %2572 = vmatmul.f32.gmra.mxu0 %v2433
    %v2573 = vpop.f32.mrf.mxu0
    %v2574 = vadd.f32 0.0, %v2573
    %2575 = vmatmul.f32.gmra.mxu0 %v2434
    %v2576 = vpop.f32.mrf.mxu0
    %v2577 = vadd.f32 0.0, %v2576
    %2578 = vmatmul.f32.gmra.mxu0 %v2435
    %v2579 = vpop.f32.mrf.mxu0
    %v2580 = vadd.f32 0.0, %v2579
    %2581 = vmatmul.f32.gmra.mxu0 %v2436
    %v2582 = vpop.f32.mrf.mxu0
    %v2583 = vadd.f32 0.0, %v2582
    %2584 = vmatmul.f32.gmra.mxu0 %v2437
    %v2585 = vpop.f32.mrf.mxu0
    %v2586 = vadd.f32 0.0, %v2585
    %2587 = vmatmul.f32.gmra.mxu0 %v2438
    %v2588 = vpop.f32.mrf.mxu0
    %v2589 = vadd.f32 0.0, %v2588
    %2590 = vmatmul.f32.gmra.mxu0 %v2439
    %v2591 = vpop.f32.mrf.mxu0
    %v2592 = vadd.f32 0.0, %v2591
    %2593 = vmatmul.f32.gmra.mxu0 %v2440
    %v2594 = vpop.f32.mrf.mxu0
    %v2595 = vadd.f32 0.0, %v2594
    %2596 = vmatmul.f32.gmra.mxu0 %v2441
    %v2597 = vpop.f32.mrf.mxu0
    %v2598 = vadd.f32 0.0, %v2597
    %2599 = vmatmul.f32.gmra.mxu0 %v2442
    %v2600 = vpop.f32.mrf.mxu0
    %v2601 = vadd.f32 0.0, %v2600
    %2602 = vmatmul.f32.gmra.mxu0 %v2443
    %v2603 = vpop.f32.mrf.mxu0
    %v2604 = vadd.f32 0.0, %v2603
    %2605 = vmatmul.f32.gmra.mxu0 %v2444
    %v2606 = vpop.f32.mrf.mxu0
    %v2607 = vadd.f32 0.0, %v2606
    %2608 = vmatmul.f32.gmra.mxu0 %v2445
    %v2609 = vpop.f32.mrf.mxu0
    %v2610 = vadd.f32 0.0, %v2609
    %2611 = vmatmul.f32.gmra.mxu0 %v2446
    %v2612 = vpop.f32.mrf.mxu0
    %v2613 = vadd.f32 0.0, %v2612
    %2614 = vmatmul.f32.gmra.mxu0 %v2447
    %v2615 = vpop.f32.mrf.mxu0
    %v2616 = vadd.f32 0.0, %v2615
    %2617 = vmatmul.f32.gmra.mxu0 %v2448
    %v2618 = vpop.f32.mrf.mxu0
    %v2619 = vadd.f32 0.0, %v2618
    %2620 = vmatmul.f32.gmra.mxu0 %v2449
    %v2621 = vpop.f32.mrf.mxu0
    %v2622 = vadd.f32 0.0, %v2621
    %2623 = vmatmul.f32.gmra.mxu0 %v2450
    %v2624 = vpop.f32.mrf.mxu0
    %v2625 = vadd.f32 0.0, %v2624
    %2626 = vmatmul.f32.gmra.mxu0 %v2451
    %v2627 = vpop.f32.mrf.mxu0
    %v2628 = vadd.f32 0.0, %v2627
    %2629 = vmatmul.f32.gmra.mxu0 %v2452
    %v2630 = vpop.f32.mrf.mxu0
    %v2631 = vadd.f32 0.0, %v2630
    %2632 = vmatmul.f32.gmra.mxu0 %v2453
    %v2633 = vpop.f32.mrf.mxu0
    %v2634 = vadd.f32 0.0, %v2633
    %2635 = vmatmul.f32.gmra.mxu0 %v2454
    %v2636 = vpop.f32.mrf.mxu0
    %v2637 = vadd.f32 0.0, %v2636
    %2638 = vmatmul.f32.gmra.mxu0 %v2455
    %v2639 = vpop.f32.mrf.mxu0
    %v2640 = vadd.f32 0.0, %v2639
    %2641 = vmatmul.f32.gmra.mxu0 %v2456
    %v2642 = vpop.f32.mrf.mxu0
    %v2643 = vadd.f32 0.0, %v2642
    %2644 = vmatmul.f32.gmra.mxu0 %v2457
    %v2645 = vpop.f32.mrf.mxu0
    %v2646 = vadd.f32 0.0, %v2645
    %2647 = vmatmul.f32.gmra.mxu0 %v2458
    %v2648 = vpop.f32.mrf.mxu0
    %v2649 = vadd.f32 0.0, %v2648
    %2650 = vmatmul.f32.gmra.mxu0 %v2459
    %v2651 = vpop.f32.mrf.mxu0
    %v2652 = vadd.f32 0.0, %v2651
    %2653 = vmatmul.f32.gmra.mxu0 %v2460
    %v2654 = vpop.f32.mrf.mxu0
    %v2655 = vadd.f32 0.0, %v2654
    %2656 = vmatmul.f32.gmra.mxu0 %v2461
    %v2657 = vpop.f32.mrf.mxu0
    %v2658 = vadd.f32 0.0, %v2657
    %2659 = vmatmul.f32.gmra.mxu0 %v2462
    %v2660 = vpop.f32.mrf.mxu0
    %v2661 = vadd.f32 0.0, %v2660
    %2662 = vmatmul.f32.gmra.mxu0 %v2463
    %v2663 = vpop.f32.mrf.mxu0
    %v2664 = vadd.f32 0.0, %v2663
    %2665 = vmatmul.f32.gmra.mxu0 %v2464
    %v2666 = vpop.f32.mrf.mxu0
    %v2667 = vadd.f32 0.0, %v2666
    %2668 = vmatmul.f32.gmra.mxu0 %v2465
    %v2669 = vpop.f32.mrf.mxu0
    %v2670 = vadd.f32 0.0, %v2669
    %2671 = vmatmul.f32.gmra.mxu0 %v2466
    %v2672 = vpop.f32.mrf.mxu0
    %v2673 = vadd.f32 0.0, %v2672
    %2674 = vmatmul.f32.gmra.mxu0 %v2467
    %v2675 = vpop.f32.mrf.mxu0
    %v2676 = vadd.f32 0.0, %v2675
    %2677 = vmatmul.f32.gmra.mxu0 %v2468
    %v2678 = vpop.f32.mrf.mxu0
    %v2679 = vadd.f32 0.0, %v2678
    %2680 = vmatmul.f32.gmra.mxu0 %v2469
    %v2681 = vpop.f32.mrf.mxu0
    %v2682 = vadd.f32 0.0, %v2681
    %2683 = vmatmul.f32.gmra.mxu0 %v2470
    %v2684 = vpop.f32.mrf.mxu0
    %v2685 = vadd.f32 0.0, %v2684
    %2686 = vmatmul.f32.gmra.mxu0 %v2471
    %v2687 = vpop.f32.mrf.mxu0
    %v2688 = vadd.f32 0.0, %v2687
    %2689 = vmatmul.f32.gmra.mxu0 %v2472
    %v2690 = vpop.f32.mrf.mxu0
    %v2691 = vadd.f32 0.0, %v2690
    %2692 = vmatmul.f32.gmra.mxu0 %v2473
    %v2693 = vpop.f32.mrf.mxu0
    %v2694 = vadd.f32 0.0, %v2693
    %2695 = vmatmul.f32.gmra.mxu0 %v2474
    %v2696 = vpop.f32.mrf.mxu0
    %v2697 = vadd.f32 0.0, %v2696
    %2698 = vmatmul.f32.gmra.mxu0 %v2475
    %v2699 = vpop.f32.mrf.mxu0
    %v2700 = vadd.f32 0.0, %v2699
    %2701 = vdwg.mxu0
    %v2702 = vld [vmem:[#allocation3] sm:$0xff]
    %v2703 = vld [vmem:[#allocation3 + $0x8] sm:$0xff]
    %v2704 = vld [vmem:[#allocation3 + $0x10] sm:$0xff]
    %v2705 = vld [vmem:[#allocation3 + $0x18] sm:$0xff]
    %v2706 = vld [vmem:[#allocation3 + $0x20] sm:$0xff]
    %v2707 = vld [vmem:[#allocation3 + $0x28] sm:$0xff]
    %v2708 = vld [vmem:[#allocation3 + $0x30] sm:$0xff]
    %v2709 = vld [vmem:[#allocation3 + $0x38] sm:$0xff]
    %v2710 = vld [vmem:[#allocation3 + $0x40] sm:$0xff]
    %v2711 = vld [vmem:[#allocation3 + $0x48] sm:$0xff]
    %v2712 = vld [vmem:[#allocation3 + $0x50] sm:$0xff]
    %v2713 = vld [vmem:[#allocation3 + $0x58] sm:$0xff]
    %v2714 = vld [vmem:[#allocation3 + $0x60] sm:$0xff]
    %v2715 = vld [vmem:[#allocation3 + $0x68] sm:$0xff]
    %v2716 = vld [vmem:[#allocation3 + $0x70] sm:$0xff]
    %v2717 = vld [vmem:[#allocation3 + $0x78] sm:$0xff]
    %v2718 = vld [vmem:[#allocation3 + $0x80] sm:$0xff]
    %v2719 = vld [vmem:[#allocation3 + $0x88] sm:$0xff]
    %v2720 = vld [vmem:[#allocation3 + $0x90] sm:$0xff]
    %v2721 = vld [vmem:[#allocation3 + $0x98] sm:$0xff]
    %v2722 = vld [vmem:[#allocation3 + $0xa0] sm:$0xff]
    %v2723 = vld [vmem:[#allocation3 + $0xa8] sm:$0xff]
    %v2724 = vld [vmem:[#allocation3 + $0xb0] sm:$0xff]
    %v2725 = vld [vmem:[#allocation3 + $0xb8] sm:$0xff]
    %v2726 = vld [vmem:[#allocation3 + $0xc0] sm:$0xff]
    %v2727 = vld [vmem:[#allocation3 + $0xc8] sm:$0xff]
    %v2728 = vld [vmem:[#allocation3 + $0xd0] sm:$0xff]
    %v2729 = vld [vmem:[#allocation3 + $0xd8] sm:$0xff]
    %v2730 = vld [vmem:[#allocation3 + $0xe0] sm:$0xff]
    %v2731 = vld [vmem:[#allocation3 + $0xe8] sm:$0xff]
    %v2732 = vld [vmem:[#allocation3 + $0xf0] sm:$0xff]
    %v2733 = vld [vmem:[#allocation3 + $0xf8] sm:$0xff]
    %v2734 = vld [vmem:[#allocation3 + $0x100] sm:$0xff]
    %v2735 = vld [vmem:[#allocation3 + $0x108] sm:$0xff]
    %v2736 = vld [vmem:[#allocation3 + $0x110] sm:$0xff]
    %v2737 = vld [vmem:[#allocation3 + $0x118] sm:$0xff]
    %v2738 = vld [vmem:[#allocation3 + $0x120] sm:$0xff]
    %v2739 = vld [vmem:[#allocation3 + $0x128] sm:$0xff]
    %v2740 = vld [vmem:[#allocation3 + $0x130] sm:$0xff]
    %v2741 = vld [vmem:[#allocation3 + $0x138] sm:$0xff]
    %v2742 = vld [vmem:[#allocation3 + $0x140] sm:$0xff]
    %v2743 = vld [vmem:[#allocation3 + $0x148] sm:$0xff]
    %v2744 = vld [vmem:[#allocation3 + $0x150] sm:$0xff]
    %v2745 = vld [vmem:[#allocation3 + $0x158] sm:$0xff]
    %v2746 = vld [vmem:[#allocation3 + $0x160] sm:$0xff]
    %v2747 = vld [vmem:[#allocation3 + $0x168] sm:$0xff]
    %v2748 = vld [vmem:[#allocation3 + $0x170] sm:$0xff]
    %v2749 = vld [vmem:[#allocation3 + $0x178] sm:$0xff]
    %v2750 = vld [vmem:[#allocation3 + $0x180] sm:$0xff]
    %v2751 = vld [vmem:[#allocation3 + $0x188] sm:$0xff]
    %v2752 = vld [vmem:[#allocation3 + $0x190] sm:$0xff]
    %v2753 = vld [vmem:[#allocation3 + $0x198] sm:$0xff]
    %v2754 = vld [vmem:[#allocation3 + $0x1a0] sm:$0xff]
    %v2755 = vld [vmem:[#allocation3 + $0x1a8] sm:$0xff]
    %v2756 = vld [vmem:[#allocation3 + $0x1b0] sm:$0xff]
    %v2757 = vld [vmem:[#allocation3 + $0x1b8] sm:$0xff]
    %v2758 = vld [vmem:[#allocation3 + $0x1c0] sm:$0xff]
    %v2759 = vld [vmem:[#allocation3 + $0x1c8] sm:$0xff]
    %v2760 = vld [vmem:[#allocation3 + $0x1d0] sm:$0xff]
    %v2761 = vld [vmem:[#allocation3 + $0x1d8] sm:$0xff]
    %v2762 = vld [vmem:[#allocation3 + $0x1e0] sm:$0xff]
    %v2763 = vld [vmem:[#allocation3 + $0x1e8] sm:$0xff]
    %v2764 = vld [vmem:[#allocation3 + $0x1f0] sm:$0xff]
    %v2765 = vld [vmem:[#allocation3 + $0x1f8] sm:$0xff]
    %v2766 = vadd.f32 %v2702, %v2511
    %v2767 = vadd.f32 %v2703, %v2514
    %v2768 = vadd.f32 %v2704, %v2517
    %v2769 = vadd.f32 %v2705, %v2520
    %v2770 = vadd.f32 %v2706, %v2523
    %v2771 = vadd.f32 %v2707, %v2526
    %v2772 = vadd.f32 %v2708, %v2529
    %v2773 = vadd.f32 %v2709, %v2532
    %v2774 = vadd.f32 %v2710, %v2535
    %v2775 = vadd.f32 %v2711, %v2538
    %v2776 = vadd.f32 %v2712, %v2541
    %v2777 = vadd.f32 %v2713, %v2544
    %v2778 = vadd.f32 %v2714, %v2547
    %v2779 = vadd.f32 %v2715, %v2550
    %v2780 = vadd.f32 %v2716, %v2553
    %v2781 = vadd.f32 %v2717, %v2556
    %v2782 = vadd.f32 %v2718, %v2559
    %v2783 = vadd.f32 %v2719, %v2562
    %v2784 = vadd.f32 %v2720, %v2565
    %v2785 = vadd.f32 %v2721, %v2568
    %v2786 = vadd.f32 %v2722, %v2571
    %v2787 = vadd.f32 %v2723, %v2574
    %v2788 = vadd.f32 %v2724, %v2577
    %v2789 = vadd.f32 %v2725, %v2580
    %v2790 = vadd.f32 %v2726, %v2583
    %v2791 = vadd.f32 %v2727, %v2586
    %v2792 = vadd.f32 %v2728, %v2589
    %v2793 = vadd.f32 %v2729, %v2592
    %v2794 = vadd.f32 %v2730, %v2595
    %v2795 = vadd.f32 %v2731, %v2598
    %v2796 = vadd.f32 %v2732, %v2601
    %v2797 = vadd.f32 %v2733, %v2604
    %v2798 = vadd.f32 %v2734, %v2607
    %v2799 = vadd.f32 %v2735, %v2610
    %v2800 = vadd.f32 %v2736, %v2613
    %v2801 = vadd.f32 %v2737, %v2616
    %v2802 = vadd.f32 %v2738, %v2619
    %v2803 = vadd.f32 %v2739, %v2622
    %v2804 = vadd.f32 %v2740, %v2625
    %v2805 = vadd.f32 %v2741, %v2628
    %v2806 = vadd.f32 %v2742, %v2631
    %v2807 = vadd.f32 %v2743, %v2634
    %v2808 = vadd.f32 %v2744, %v2637
    %v2809 = vadd.f32 %v2745, %v2640
    %v2810 = vadd.f32 %v2746, %v2643
    %v2811 = vadd.f32 %v2747, %v2646
    %v2812 = vadd.f32 %v2748, %v2649
    %v2813 = vadd.f32 %v2749, %v2652
    %v2814 = vadd.f32 %v2750, %v2655
    %v2815 = vadd.f32 %v2751, %v2658
    %v2816 = vadd.f32 %v2752, %v2661
    %v2817 = vadd.f32 %v2753, %v2664
    %v2818 = vadd.f32 %v2754, %v2667
    %v2819 = vadd.f32 %v2755, %v2670
    %v2820 = vadd.f32 %v2756, %v2673
    %v2821 = vadd.f32 %v2757, %v2676
    %v2822 = vadd.f32 %v2758, %v2679
    %v2823 = vadd.f32 %v2759, %v2682
    %v2824 = vadd.f32 %v2760, %v2685
    %v2825 = vadd.f32 %v2761, %v2688
    %v2826 = vadd.f32 %v2762, %v2691
    %v2827 = vadd.f32 %v2763, %v2694
    %v2828 = vadd.f32 %v2764, %v2697
    %v2829 = vadd.f32 %v2765, %v2700
    %2830 = vst [vmem:[#allocation3] sm:$0xff] %v2766
    %2831 = vst [vmem:[#allocation3 + $0x8] sm:$0xff] %v2767
    %2832 = vst [vmem:[#allocation3 + $0x10] sm:$0xff] %v2768
    %2833 = vst [vmem:[#allocation3 + $0x18] sm:$0xff] %v2769
    %2834 = vst [vmem:[#allocation3 + $0x20] sm:$0xff] %v2770
    %2835 = vst [vmem:[#allocation3 + $0x28] sm:$0xff] %v2771
    %2836 = vst [vmem:[#allocation3 + $0x30] sm:$0xff] %v2772
    %2837 = vst [vmem:[#allocation3 + $0x38] sm:$0xff] %v2773
    %2838 = vst [vmem:[#allocation3 + $0x40] sm:$0xff] %v2774
    %2839 = vst [vmem:[#allocation3 + $0x48] sm:$0xff] %v2775
    %2840 = vst [vmem:[#allocation3 + $0x50] sm:$0xff] %v2776
    %2841 = vst [vmem:[#allocation3 + $0x58] sm:$0xff] %v2777
    %2842 = vst [vmem:[#allocation3 + $0x60] sm:$0xff] %v2778
    %2843 = vst [vmem:[#allocation3 + $0x68] sm:$0xff] %v2779
    %2844 = vst [vmem:[#allocation3 + $0x70] sm:$0xff] %v2780
    %2845 = vst [vmem:[#allocation3 + $0x78] sm:$0xff] %v2781
    %2846 = vst [vmem:[#allocation3 + $0x80] sm:$0xff] %v2782
    %2847 = vst [vmem:[#allocation3 + $0x88] sm:$0xff] %v2783
    %2848 = vst [vmem:[#allocation3 + $0x90] sm:$0xff] %v2784
    %2849 = vst [vmem:[#allocation3 + $0x98] sm:$0xff] %v2785
    %2850 = vst [vmem:[#allocation3 + $0xa0] sm:$0xff] %v2786
    %2851 = vst [vmem:[#allocation3 + $0xa8] sm:$0xff] %v2787
    %2852 = vst [vmem:[#allocation3 + $0xb0] sm:$0xff] %v2788
    %2853 = vst [vmem:[#allocation3 + $0xb8] sm:$0xff] %v2789
    %2854 = vst [vmem:[#allocation3 + $0xc0] sm:$0xff] %v2790
    %2855 = vst [vmem:[#allocation3 + $0xc8] sm:$0xff] %v2791
    %2856 = vst [vmem:[#allocation3 + $0xd0] sm:$0xff] %v2792
    %2857 = vst [vmem:[#allocation3 + $0xd8] sm:$0xff] %v2793
    %2858 = vst [vmem:[#allocation3 + $0xe0] sm:$0xff] %v2794
    %2859 = vst [vmem:[#allocation3 + $0xe8] sm:$0xff] %v2795
    %2860 = vst [vmem:[#allocation3 + $0xf0] sm:$0xff] %v2796
    %2861 = vst [vmem:[#allocation3 + $0xf8] sm:$0xff] %v2797
    %2862 = vst [vmem:[#allocation3 + $0x100] sm:$0xff] %v2798
    %2863 = vst [vmem:[#allocation3 + $0x108] sm:$0xff] %v2799
    %2864 = vst [vmem:[#allocation3 + $0x110] sm:$0xff] %v2800
    %2865 = vst [vmem:[#allocation3 + $0x118] sm:$0xff] %v2801
    %2866 = vst [vmem:[#allocation3 + $0x120] sm:$0xff] %v2802
    %2867 = vst [vmem:[#allocation3 + $0x128] sm:$0xff] %v2803
    %2868 = vst [vmem:[#allocation3 + $0x130] sm:$0xff] %v2804
    %2869 = vst [vmem:[#allocation3 + $0x138] sm:$0xff] %v2805
    %2870 = vst [vmem:[#allocation3 + $0x140] sm:$0xff] %v2806
    %2871 = vst [vmem:[#allocation3 + $0x148] sm:$0xff] %v2807
    %2872 = vst [vmem:[#allocation3 + $0x150] sm:$0xff] %v2808
    %2873 = vst [vmem:[#allocation3 + $0x158] sm:$0xff] %v2809
    %2874 = vst [vmem:[#allocation3 + $0x160] sm:$0xff] %v2810
    %2875 = vst [vmem:[#allocation3 + $0x168] sm:$0xff] %v2811
    %2876 = vst [vmem:[#allocation3 + $0x170] sm:$0xff] %v2812
    %2877 = vst [vmem:[#allocation3 + $0x178] sm:$0xff] %v2813
    %2878 = vst [vmem:[#allocation3 + $0x180] sm:$0xff] %v2814
    %2879 = vst [vmem:[#allocation3 + $0x188] sm:$0xff] %v2815
    %2880 = vst [vmem:[#allocation3 + $0x190] sm:$0xff] %v2816
    %2881 = vst [vmem:[#allocation3 + $0x198] sm:$0xff] %v2817
    %2882 = vst [vmem:[#allocation3 + $0x1a0] sm:$0xff] %v2818
    %2883 = vst [vmem:[#allocation3 + $0x1a8] sm:$0xff] %v2819
    %2884 = vst [vmem:[#allocation3 + $0x1b0] sm:$0xff] %v2820
    %2885 = vst [vmem:[#allocation3 + $0x1b8] sm:$0xff] %v2821
    %2886 = vst [vmem:[#allocation3 + $0x1c0] sm:$0xff] %v2822
    %2887 = vst [vmem:[#allocation3 + $0x1c8] sm:$0xff] %v2823
    %2888 = vst [vmem:[#allocation3 + $0x1d0] sm:$0xff] %v2824
    %2889 = vst [vmem:[#allocation3 + $0x1d8] sm:$0xff] %v2825
    %2890 = vst [vmem:[#allocation3 + $0x1e0] sm:$0xff] %v2826
    %2891 = vst [vmem:[#allocation3 + $0x1e8] sm:$0xff] %v2827
    %2892 = vst [vmem:[#allocation3 + $0x1f0] sm:$0xff] %v2828
    %2893 = vst [vmem:[#allocation3 + $0x1f8] sm:$0xff] %v2829
    %s2894 = scalar_lea.vmem %s0, 48
    %v2895 = vld [vmem:[%s2894] sm:$0xff]
    %v2896 = vld [vmem:[%s2894 + $0x8] sm:$0xff]
    %v2897 = vld [vmem:[%s2894 + $0x18] sm:$0xff]
    %v2898 = vld [vmem:[%s2894 + $0x20] sm:$0xff]
    %v2899 = vld [vmem:[%s2894 + $0x30] sm:$0xff]
    %v2900 = vld [vmem:[%s2894 + $0x38] sm:$0xff]
    %v2901 = vld [vmem:[%s2894 + $0x48] sm:$0xff]
    %v2902 = vld [vmem:[%s2894 + $0x50] sm:$0xff]
    %v2903 = vld [vmem:[%s2894 + $0x60] sm:$0xff]
    %v2904 = vld [vmem:[%s2894 + $0x68] sm:$0xff]
    %v2905 = vld [vmem:[%s2894 + $0x78] sm:$0xff]
    %v2906 = vld [vmem:[%s2894 + $0x80] sm:$0xff]
    %v2907 = vld [vmem:[%s2894 + $0x90] sm:$0xff]
    %v2908 = vld [vmem:[%s2894 + $0x98] sm:$0xff]
    %v2909 = vld [vmem:[%s2894 + $0xa8] sm:$0xff]
    %v2910 = vld [vmem:[%s2894 + $0xb0] sm:$0xff]
    %v2911 = vld [vmem:[%s2894 + $0xc0] sm:$0xff]
    %v2912 = vld [vmem:[%s2894 + $0xc8] sm:$0xff]
    %v2913 = vld [vmem:[%s2894 + $0xd8] sm:$0xff]
    %v2914 = vld [vmem:[%s2894 + $0xe0] sm:$0xff]
    %v2915 = vld [vmem:[%s2894 + $0xf0] sm:$0xff]
    %v2916 = vld [vmem:[%s2894 + $0xf8] sm:$0xff]
    %v2917 = vld [vmem:[%s2894 + $0x108] sm:$0xff]
    %v2918 = vld [vmem:[%s2894 + $0x110] sm:$0xff]
    %v2919 = vld [vmem:[%s2894 + $0x120] sm:$0xff]
    %v2920 = vld [vmem:[%s2894 + $0x128] sm:$0xff]
    %v2921 = vld [vmem:[%s2894 + $0x138] sm:$0xff]
    %v2922 = vld [vmem:[%s2894 + $0x140] sm:$0xff]
    %v2923 = vld [vmem:[%s2894 + $0x150] sm:$0xff]
    %v2924 = vld [vmem:[%s2894 + $0x158] sm:$0xff]
    %v2925 = vld [vmem:[%s2894 + $0x168] sm:$0xff]
    %v2926 = vld [vmem:[%s2894 + $0x170] sm:$0xff]
    %v2927 = vld [vmem:[%s2894 + $0x1b0] sm:$0xff]
    %v2928 = vld [vmem:[%s2894 + $0x1b8] sm:$0xff]
    %v2929 = vld [vmem:[%s2894 + $0x1c8] sm:$0xff]
    %v2930 = vld [vmem:[%s2894 + $0x1d0] sm:$0xff]
    %v2931 = vld [vmem:[%s2894 + $0x1e0] sm:$0xff]
    %v2932 = vld [vmem:[%s2894 + $0x1e8] sm:$0xff]
    %v2933 = vld [vmem:[%s2894 + $0x1f8] sm:$0xff]
    %v2934 = vld [vmem:[%s2894 + $0x200] sm:$0xff]
    %v2935 = vld [vmem:[%s2894 + $0x210] sm:$0xff]
    %v2936 = vld [vmem:[%s2894 + $0x218] sm:$0xff]
    %v2937 = vld [vmem:[%s2894 + $0x228] sm:$0xff]
    %v2938 = vld [vmem:[%s2894 + $0x230] sm:$0xff]
    %v2939 = vld [vmem:[%s2894 + $0x240] sm:$0xff]
    %v2940 = vld [vmem:[%s2894 + $0x248] sm:$0xff]
    %v2941 = vld [vmem:[%s2894 + $0x258] sm:$0xff]
    %v2942 = vld [vmem:[%s2894 + $0x260] sm:$0xff]
    %v2943 = vld [vmem:[%s2894 + $0x270] sm:$0xff]
    %v2944 = vld [vmem:[%s2894 + $0x278] sm:$0xff]
    %v2945 = vld [vmem:[%s2894 + $0x288] sm:$0xff]
    %v2946 = vld [vmem:[%s2894 + $0x290] sm:$0xff]
    %v2947 = vld [vmem:[%s2894 + $0x2a0] sm:$0xff]
    %v2948 = vld [vmem:[%s2894 + $0x2a8] sm:$0xff]
    %v2949 = vld [vmem:[%s2894 + $0x2b8] sm:$0xff]
    %v2950 = vld [vmem:[%s2894 + $0x2c0] sm:$0xff]
    %v2951 = vld [vmem:[%s2894 + $0x2d0] sm:$0xff]
    %v2952 = vld [vmem:[%s2894 + $0x2d8] sm:$0xff]
    %v2953 = vld [vmem:[%s2894 + $0x2e8] sm:$0xff]
    %v2954 = vld [vmem:[%s2894 + $0x2f0] sm:$0xff]
    %v2955 = vld [vmem:[%s2894 + $0x300] sm:$0xff]
    %v2956 = vld [vmem:[%s2894 + $0x308] sm:$0xff]
    %v2957 = vld [vmem:[%s2894 + $0x318] sm:$0xff]
    %v2958 = vld [vmem:[%s2894 + $0x320] sm:$0xff]
    %s2959 = scalar_lea.vmem %s1, 768
    %v2960 = vld [vmem:[%s2959] sm:$0xff]
    %v2961 = vld [vmem:[%s2959 + $0x8] sm:$0xff]
    %v2962 = vld [vmem:[%s2959 + $0x10] sm:$0xff]
    %v2963 = vld [vmem:[%s2959 + $0x18] sm:$0xff]
    %v2964 = vld [vmem:[%s2959 + $0x20] sm:$0xff]
    %v2965 = vld [vmem:[%s2959 + $0x28] sm:$0xff]
    %v2966 = vld [vmem:[%s2959 + $0x30] sm:$0xff]
    %v2967 = vld [vmem:[%s2959 + $0x38] sm:$0xff]
    %v2968 = vld [vmem:[%s2959 + $0x40] sm:$0xff]
    %v2969 = vld [vmem:[%s2959 + $0x48] sm:$0xff]
    %v2970 = vld [vmem:[%s2959 + $0x50] sm:$0xff]
    %v2971 = vld [vmem:[%s2959 + $0x58] sm:$0xff]
    %v2972 = vld [vmem:[%s2959 + $0x60] sm:$0xff]
    %v2973 = vld [vmem:[%s2959 + $0x68] sm:$0xff]
    %v2974 = vld [vmem:[%s2959 + $0x70] sm:$0xff]
    %v2975 = vld [vmem:[%s2959 + $0x78] sm:$0xff]
    %2976 = vmatpush.msra.mxu0 %v2975
    %2977 = vmatpush.msra.mxu0 %v2974
    %2978 = vmatpush.msra.mxu0 %v2973
    %2979 = vmatpush.msra.mxu0 %v2972
    %2980 = vmatpush.msra.mxu0 %v2971
    %2981 = vmatpush.msra.mxu0 %v2970
    %2982 = vmatpush.msra.mxu0 %v2969
    %2983 = vmatpush.msra.mxu0 %v2968
    %2984 = vmatpush.msra.mxu0 %v2967
    %2985 = vmatpush.msra.mxu0 %v2966
    %2986 = vmatpush.msra.mxu0 %v2965
    %2987 = vmatpush.msra.mxu0 %v2964
    %2988 = vmatpush.msra.mxu0 %v2963
    %2989 = vmatpush.msra.mxu0 %v2962
    %2990 = vmatpush.msra.mxu0 %v2961
    %2991 = vmatpush.msra.mxu0 %v2960
    %2992 = vmatmul.f32.gmra.mxu0 %v2895
    %v2993 = vpop.f32.mrf.mxu0
    %v2994 = vadd.f32 0.0, %v2993
    %2995 = vmatmul.f32.gmra.mxu0 %v2896
    %v2996 = vpop.f32.mrf.mxu0
    %v2997 = vadd.f32 0.0, %v2996
    %2998 = vmatmul.f32.gmra.mxu0 %v2897
    %v2999 = vpop.f32.mrf.mxu0
    %v3000 = vadd.f32 0.0, %v2999
    %3001 = vmatmul.f32.gmra.mxu0 %v2898
    %v3002 = vpop.f32.mrf.mxu0
    %v3003 = vadd.f32 0.0, %v3002
    %3004 = vmatmul.f32.gmra.mxu0 %v2899
    %v3005 = vpop.f32.mrf.mxu0
    %v3006 = vadd.f32 0.0, %v3005
    %3007 = vmatmul.f32.gmra.mxu0 %v2900
    %v3008 = vpop.f32.mrf.mxu0
    %v3009 = vadd.f32 0.0, %v3008
    %3010 = vmatmul.f32.gmra.mxu0 %v2901
    %v3011 = vpop.f32.mrf.mxu0
    %v3012 = vadd.f32 0.0, %v3011
    %3013 = vmatmul.f32.gmra.mxu0 %v2902
    %v3014 = vpop.f32.mrf.mxu0
    %v3015 = vadd.f32 0.0, %v3014
    %3016 = vmatmul.f32.gmra.mxu0 %v2903
    %v3017 = vpop.f32.mrf.mxu0
    %v3018 = vadd.f32 0.0, %v3017
    %3019 = vmatmul.f32.gmra.mxu0 %v2904
    %v3020 = vpop.f32.mrf.mxu0
    %v3021 = vadd.f32 0.0, %v3020
    %3022 = vmatmul.f32.gmra.mxu0 %v2905
    %v3023 = vpop.f32.mrf.mxu0
    %v3024 = vadd.f32 0.0, %v3023
    %3025 = vmatmul.f32.gmra.mxu0 %v2906
    %v3026 = vpop.f32.mrf.mxu0
    %v3027 = vadd.f32 0.0, %v3026
    %3028 = vmatmul.f32.gmra.mxu0 %v2907
    %v3029 = vpop.f32.mrf.mxu0
    %v3030 = vadd.f32 0.0, %v3029
    %3031 = vmatmul.f32.gmra.mxu0 %v2908
    %v3032 = vpop.f32.mrf.mxu0
    %v3033 = vadd.f32 0.0, %v3032
    %3034 = vmatmul.f32.gmra.mxu0 %v2909
    %v3035 = vpop.f32.mrf.mxu0
    %v3036 = vadd.f32 0.0, %v3035
    %3037 = vmatmul.f32.gmra.mxu0 %v2910
    %v3038 = vpop.f32.mrf.mxu0
    %v3039 = vadd.f32 0.0, %v3038
    %3040 = vmatmul.f32.gmra.mxu0 %v2911
    %v3041 = vpop.f32.mrf.mxu0
    %v3042 = vadd.f32 0.0, %v3041
    %3043 = vmatmul.f32.gmra.mxu0 %v2912
    %v3044 = vpop.f32.mrf.mxu0
    %v3045 = vadd.f32 0.0, %v3044
    %3046 = vmatmul.f32.gmra.mxu0 %v2913
    %v3047 = vpop.f32.mrf.mxu0
    %v3048 = vadd.f32 0.0, %v3047
    %3049 = vmatmul.f32.gmra.mxu0 %v2914
    %v3050 = vpop.f32.mrf.mxu0
    %v3051 = vadd.f32 0.0, %v3050
    %3052 = vmatmul.f32.gmra.mxu0 %v2915
    %v3053 = vpop.f32.mrf.mxu0
    %v3054 = vadd.f32 0.0, %v3053
    %3055 = vmatmul.f32.gmra.mxu0 %v2916
    %v3056 = vpop.f32.mrf.mxu0
    %v3057 = vadd.f32 0.0, %v3056
    %3058 = vmatmul.f32.gmra.mxu0 %v2917
    %v3059 = vpop.f32.mrf.mxu0
    %v3060 = vadd.f32 0.0, %v3059
    %3061 = vmatmul.f32.gmra.mxu0 %v2918
    %v3062 = vpop.f32.mrf.mxu0
    %v3063 = vadd.f32 0.0, %v3062
    %3064 = vmatmul.f32.gmra.mxu0 %v2919
    %v3065 = vpop.f32.mrf.mxu0
    %v3066 = vadd.f32 0.0, %v3065
    %3067 = vmatmul.f32.gmra.mxu0 %v2920
    %v3068 = vpop.f32.mrf.mxu0
    %v3069 = vadd.f32 0.0, %v3068
    %3070 = vmatmul.f32.gmra.mxu0 %v2921
    %v3071 = vpop.f32.mrf.mxu0
    %v3072 = vadd.f32 0.0, %v3071
    %3073 = vmatmul.f32.gmra.mxu0 %v2922
    %v3074 = vpop.f32.mrf.mxu0
    %v3075 = vadd.f32 0.0, %v3074
    %3076 = vmatmul.f32.gmra.mxu0 %v2923
    %v3077 = vpop.f32.mrf.mxu0
    %v3078 = vadd.f32 0.0, %v3077
    %3079 = vmatmul.f32.gmra.mxu0 %v2924
    %v3080 = vpop.f32.mrf.mxu0
    %v3081 = vadd.f32 0.0, %v3080
    %3082 = vmatmul.f32.gmra.mxu0 %v2925
    %v3083 = vpop.f32.mrf.mxu0
    %v3084 = vadd.f32 0.0, %v3083
    %3085 = vmatmul.f32.gmra.mxu0 %v2926
    %v3086 = vpop.f32.mrf.mxu0
    %v3087 = vadd.f32 0.0, %v3086
    %3088 = vmatmul.f32.gmra.mxu0 %v2927
    %v3089 = vpop.f32.mrf.mxu0
    %v3090 = vadd.f32 0.0, %v3089
    %3091 = vmatmul.f32.gmra.mxu0 %v2928
    %v3092 = vpop.f32.mrf.mxu0
    %v3093 = vadd.f32 0.0, %v3092
    %3094 = vmatmul.f32.gmra.mxu0 %v2929
    %v3095 = vpop.f32.mrf.mxu0
    %v3096 = vadd.f32 0.0, %v3095
    %3097 = vmatmul.f32.gmra.mxu0 %v2930
    %v3098 = vpop.f32.mrf.mxu0
    %v3099 = vadd.f32 0.0, %v3098
    %3100 = vmatmul.f32.gmra.mxu0 %v2931
    %v3101 = vpop.f32.mrf.mxu0
    %v3102 = vadd.f32 0.0, %v3101
    %3103 = vmatmul.f32.gmra.mxu0 %v2932
    %v3104 = vpop.f32.mrf.mxu0
    %v3105 = vadd.f32 0.0, %v3104
    %3106 = vmatmul.f32.gmra.mxu0 %v2933
    %v3107 = vpop.f32.mrf.mxu0
    %v3108 = vadd.f32 0.0, %v3107
    %3109 = vmatmul.f32.gmra.mxu0 %v2934
    %v3110 = vpop.f32.mrf.mxu0
    %v3111 = vadd.f32 0.0, %v3110
    %3112 = vmatmul.f32.gmra.mxu0 %v2935
    %v3113 = vpop.f32.mrf.mxu0
    %v3114 = vadd.f32 0.0, %v3113
    %3115 = vmatmul.f32.gmra.mxu0 %v2936
    %v3116 = vpop.f32.mrf.mxu0
    %v3117 = vadd.f32 0.0, %v3116
    %3118 = vmatmul.f32.gmra.mxu0 %v2937
    %v3119 = vpop.f32.mrf.mxu0
    %v3120 = vadd.f32 0.0, %v3119
    %3121 = vmatmul.f32.gmra.mxu0 %v2938
    %v3122 = vpop.f32.mrf.mxu0
    %v3123 = vadd.f32 0.0, %v3122
    %3124 = vmatmul.f32.gmra.mxu0 %v2939
    %v3125 = vpop.f32.mrf.mxu0
    %v3126 = vadd.f32 0.0, %v3125
    %3127 = vmatmul.f32.gmra.mxu0 %v2940
    %v3128 = vpop.f32.mrf.mxu0
    %v3129 = vadd.f32 0.0, %v3128
    %3130 = vmatmul.f32.gmra.mxu0 %v2941
    %v3131 = vpop.f32.mrf.mxu0
    %v3132 = vadd.f32 0.0, %v3131
    %3133 = vmatmul.f32.gmra.mxu0 %v2942
    %v3134 = vpop.f32.mrf.mxu0
    %v3135 = vadd.f32 0.0, %v3134
    %3136 = vmatmul.f32.gmra.mxu0 %v2943
    %v3137 = vpop.f32.mrf.mxu0
    %v3138 = vadd.f32 0.0, %v3137
    %3139 = vmatmul.f32.gmra.mxu0 %v2944
    %v3140 = vpop.f32.mrf.mxu0
    %v3141 = vadd.f32 0.0, %v3140
    %3142 = vmatmul.f32.gmra.mxu0 %v2945
    %v3143 = vpop.f32.mrf.mxu0
    %v3144 = vadd.f32 0.0, %v3143
    %3145 = vmatmul.f32.gmra.mxu0 %v2946
    %v3146 = vpop.f32.mrf.mxu0
    %v3147 = vadd.f32 0.0, %v3146
    %3148 = vmatmul.f32.gmra.mxu0 %v2947
    %v3149 = vpop.f32.mrf.mxu0
    %v3150 = vadd.f32 0.0, %v3149
    %3151 = vmatmul.f32.gmra.mxu0 %v2948
    %v3152 = vpop.f32.mrf.mxu0
    %v3153 = vadd.f32 0.0, %v3152
    %3154 = vmatmul.f32.gmra.mxu0 %v2949
    %v3155 = vpop.f32.mrf.mxu0
    %v3156 = vadd.f32 0.0, %v3155
    %3157 = vmatmul.f32.gmra.mxu0 %v2950
    %v3158 = vpop.f32.mrf.mxu0
    %v3159 = vadd.f32 0.0, %v3158
    %3160 = vmatmul.f32.gmra.mxu0 %v2951
    %v3161 = vpop.f32.mrf.mxu0
    %v3162 = vadd.f32 0.0, %v3161
    %3163 = vmatmul.f32.gmra.mxu0 %v2952
    %v3164 = vpop.f32.mrf.mxu0
    %v3165 = vadd.f32 0.0, %v3164
    %3166 = vmatmul.f32.gmra.mxu0 %v2953
    %v3167 = vpop.f32.mrf.mxu0
    %v3168 = vadd.f32 0.0, %v3167
    %3169 = vmatmul.f32.gmra.mxu0 %v2954
    %v3170 = vpop.f32.mrf.mxu0
    %v3171 = vadd.f32 0.0, %v3170
    %3172 = vmatmul.f32.gmra.mxu0 %v2955
    %v3173 = vpop.f32.mrf.mxu0
    %v3174 = vadd.f32 0.0, %v3173
    %3175 = vmatmul.f32.gmra.mxu0 %v2956
    %v3176 = vpop.f32.mrf.mxu0
    %v3177 = vadd.f32 0.0, %v3176
    %3178 = vmatmul.f32.gmra.mxu0 %v2957
    %v3179 = vpop.f32.mrf.mxu0
    %v3180 = vadd.f32 0.0, %v3179
    %3181 = vmatmul.f32.gmra.mxu0 %v2958
    %v3182 = vpop.f32.mrf.mxu0
    %v3183 = vadd.f32 0.0, %v3182
    %3184 = vdwg.mxu0
    %v3185 = vld [vmem:[#allocation3] sm:$0xff]
    %v3186 = vld [vmem:[#allocation3 + $0x8] sm:$0xff]
    %v3187 = vld [vmem:[#allocation3 + $0x10] sm:$0xff]
    %v3188 = vld [vmem:[#allocation3 + $0x18] sm:$0xff]
    %v3189 = vld [vmem:[#allocation3 + $0x20] sm:$0xff]
    %v3190 = vld [vmem:[#allocation3 + $0x28] sm:$0xff]
    %v3191 = vld [vmem:[#allocation3 + $0x30] sm:$0xff]
    %v3192 = vld [vmem:[#allocation3 + $0x38] sm:$0xff]
    %v3193 = vld [vmem:[#allocation3 + $0x40] sm:$0xff]
    %v3194 = vld [vmem:[#allocation3 + $0x48] sm:$0xff]
    %v3195 = vld [vmem:[#allocation3 + $0x50] sm:$0xff]
    %v3196 = vld [vmem:[#allocation3 + $0x58] sm:$0xff]
    %v3197 = vld [vmem:[#allocation3 + $0x60] sm:$0xff]
    %v3198 = vld [vmem:[#allocation3 + $0x68] sm:$0xff]
    %v3199 = vld [vmem:[#allocation3 + $0x70] sm:$0xff]
    %v3200 = vld [vmem:[#allocation3 + $0x78] sm:$0xff]
    %v3201 = vld [vmem:[#allocation3 + $0x80] sm:$0xff]
    %v3202 = vld [vmem:[#allocation3 + $0x88] sm:$0xff]
    %v3203 = vld [vmem:[#allocation3 + $0x90] sm:$0xff]
    %v3204 = vld [vmem:[#allocation3 + $0x98] sm:$0xff]
    %v3205 = vld [vmem:[#allocation3 + $0xa0] sm:$0xff]
    %v3206 = vld [vmem:[#allocation3 + $0xa8] sm:$0xff]
    %v3207 = vld [vmem:[#allocation3 + $0xb0] sm:$0xff]
    %v3208 = vld [vmem:[#allocation3 + $0xb8] sm:$0xff]
    %v3209 = vld [vmem:[#allocation3 + $0xc0] sm:$0xff]
    %v3210 = vld [vmem:[#allocation3 + $0xc8] sm:$0xff]
    %v3211 = vld [vmem:[#allocation3 + $0xd0] sm:$0xff]
    %v3212 = vld [vmem:[#allocation3 + $0xd8] sm:$0xff]
    %v3213 = vld [vmem:[#allocation3 + $0xe0] sm:$0xff]
    %v3214 = vld [vmem:[#allocation3 + $0xe8] sm:$0xff]
    %v3215 = vld [vmem:[#allocation3 + $0xf0] sm:$0xff]
    %v3216 = vld [vmem:[#allocation3 + $0xf8] sm:$0xff]
    %v3217 = vld [vmem:[#allocation3 + $0x100] sm:$0xff]
    %v3218 = vld [vmem:[#allocation3 + $0x108] sm:$0xff]
    %v3219 = vld [vmem:[#allocation3 + $0x110] sm:$0xff]
    %v3220 = vld [vmem:[#allocation3 + $0x118] sm:$0xff]
    %v3221 = vld [vmem:[#allocation3 + $0x120] sm:$0xff]
    %v3222 = vld [vmem:[#allocation3 + $0x128] sm:$0xff]
    %v3223 = vld [vmem:[#allocation3 + $0x130] sm:$0xff]
    %v3224 = vld [vmem:[#allocation3 + $0x138] sm:$0xff]
    %v3225 = vld [vmem:[#allocation3 + $0x140] sm:$0xff]
    %v3226 = vld [vmem:[#allocation3 + $0x148] sm:$0xff]
    %v3227 = vld [vmem:[#allocation3 + $0x150] sm:$0xff]
    %v3228 = vld [vmem:[#allocation3 + $0x158] sm:$0xff]
    %v3229 = vld [vmem:[#allocation3 + $0x160] sm:$0xff]
    %v3230 = vld [vmem:[#allocation3 + $0x168] sm:$0xff]
    %v3231 = vld [vmem:[#allocation3 + $0x170] sm:$0xff]
    %v3232 = vld [vmem:[#allocation3 + $0x178] sm:$0xff]
    %v3233 = vld [vmem:[#allocation3 + $0x180] sm:$0xff]
    %v3234 = vld [vmem:[#allocation3 + $0x188] sm:$0xff]
    %v3235 = vld [vmem:[#allocation3 + $0x190] sm:$0xff]
    %v3236 = vld [vmem:[#allocation3 + $0x198] sm:$0xff]
    %v3237 = vld [vmem:[#allocation3 + $0x1a0] sm:$0xff]
    %v3238 = vld [vmem:[#allocation3 + $0x1a8] sm:$0xff]
    %v3239 = vld [vmem:[#allocation3 + $0x1b0] sm:$0xff]
    %v3240 = vld [vmem:[#allocation3 + $0x1b8] sm:$0xff]
    %v3241 = vld [vmem:[#allocation3 + $0x1c0] sm:$0xff]
    %v3242 = vld [vmem:[#allocation3 + $0x1c8] sm:$0xff]
    %v3243 = vld [vmem:[#allocation3 + $0x1d0] sm:$0xff]
    %v3244 = vld [vmem:[#allocation3 + $0x1d8] sm:$0xff]
    %v3245 = vld [vmem:[#allocation3 + $0x1e0] sm:$0xff]
    %v3246 = vld [vmem:[#allocation3 + $0x1e8] sm:$0xff]
    %v3247 = vld [vmem:[#allocation3 + $0x1f0] sm:$0xff]
    %v3248 = vld [vmem:[#allocation3 + $0x1f8] sm:$0xff]
    %v3249 = vadd.f32 %v3185, %v2994
    %v3250 = vadd.f32 %v3186, %v2997
    %v3251 = vadd.f32 %v3187, %v3000
    %v3252 = vadd.f32 %v3188, %v3003
    %v3253 = vadd.f32 %v3189, %v3006
    %v3254 = vadd.f32 %v3190, %v3009
    %v3255 = vadd.f32 %v3191, %v3012
    %v3256 = vadd.f32 %v3192, %v3015
    %v3257 = vadd.f32 %v3193, %v3018
    %v3258 = vadd.f32 %v3194, %v3021
    %v3259 = vadd.f32 %v3195, %v3024
    %v3260 = vadd.f32 %v3196, %v3027
    %v3261 = vadd.f32 %v3197, %v3030
    %v3262 = vadd.f32 %v3198, %v3033
    %v3263 = vadd.f32 %v3199, %v3036
    %v3264 = vadd.f32 %v3200, %v3039
    %v3265 = vadd.f32 %v3201, %v3042
    %v3266 = vadd.f32 %v3202, %v3045
    %v3267 = vadd.f32 %v3203, %v3048
    %v3268 = vadd.f32 %v3204, %v3051
    %v3269 = vadd.f32 %v3205, %v3054
    %v3270 = vadd.f32 %v3206, %v3057
    %v3271 = vadd.f32 %v3207, %v3060
    %v3272 = vadd.f32 %v3208, %v3063
    %v3273 = vadd.f32 %v3209, %v3066
    %v3274 = vadd.f32 %v3210, %v3069
    %v3275 = vadd.f32 %v3211, %v3072
    %v3276 = vadd.f32 %v3212, %v3075
    %v3277 = vadd.f32 %v3213, %v3078
    %v3278 = vadd.f32 %v3214, %v3081
    %v3279 = vadd.f32 %v3215, %v3084
    %v3280 = vadd.f32 %v3216, %v3087
    %v3281 = vadd.f32 %v3217, %v3090
    %v3282 = vadd.f32 %v3218, %v3093
    %v3283 = vadd.f32 %v3219, %v3096
    %v3284 = vadd.f32 %v3220, %v3099
    %v3285 = vadd.f32 %v3221, %v3102
    %v3286 = vadd.f32 %v3222, %v3105
    %v3287 = vadd.f32 %v3223, %v3108
    %v3288 = vadd.f32 %v3224, %v3111
    %v3289 = vadd.f32 %v3225, %v3114
    %v3290 = vadd.f32 %v3226, %v3117
    %v3291 = vadd.f32 %v3227, %v3120
    %v3292 = vadd.f32 %v3228, %v3123
    %v3293 = vadd.f32 %v3229, %v3126
    %v3294 = vadd.f32 %v3230, %v3129
    %v3295 = vadd.f32 %v3231, %v3132
    %v3296 = vadd.f32 %v3232, %v3135
    %v3297 = vadd.f32 %v3233, %v3138
    %v3298 = vadd.f32 %v3234, %v3141
    %v3299 = vadd.f32 %v3235, %v3144
    %v3300 = vadd.f32 %v3236, %v3147
    %v3301 = vadd.f32 %v3237, %v3150
    %v3302 = vadd.f32 %v3238, %v3153
    %v3303 = vadd.f32 %v3239, %v3156
    %v3304 = vadd.f32 %v3240, %v3159
    %v3305 = vadd.f32 %v3241, %v3162
    %v3306 = vadd.f32 %v3242, %v3165
    %v3307 = vadd.f32 %v3243, %v3168
    %v3308 = vadd.f32 %v3244, %v3171
    %v3309 = vadd.f32 %v3245, %v3174
    %v3310 = vadd.f32 %v3246, %v3177
    %v3311 = vadd.f32 %v3247, %v3180
    %v3312 = vadd.f32 %v3248, %v3183
    %3313 = vst [vmem:[#allocation3] sm:$0xff] %v3249
    %3314 = vst [vmem:[#allocation3 + $0x8] sm:$0xff] %v3250
    %3315 = vst [vmem:[#allocation3 + $0x10] sm:$0xff] %v3251
    %3316 = vst [vmem:[#allocation3 + $0x18] sm:$0xff] %v3252
    %3317 = vst [vmem:[#allocation3 + $0x20] sm:$0xff] %v3253
    %3318 = vst [vmem:[#allocation3 + $0x28] sm:$0xff] %v3254
    %3319 = vst [vmem:[#allocation3 + $0x30] sm:$0xff] %v3255
    %3320 = vst [vmem:[#allocation3 + $0x38] sm:$0xff] %v3256
    %3321 = vst [vmem:[#allocation3 + $0x40] sm:$0xff] %v3257
    %3322 = vst [vmem:[#allocation3 + $0x48] sm:$0xff] %v3258
    %3323 = vst [vmem:[#allocation3 + $0x50] sm:$0xff] %v3259
    %3324 = vst [vmem:[#allocation3 + $0x58] sm:$0xff] %v3260
    %3325 = vst [vmem:[#allocation3 + $0x60] sm:$0xff] %v3261
    %3326 = vst [vmem:[#allocation3 + $0x68] sm:$0xff] %v3262
    %3327 = vst [vmem:[#allocation3 + $0x70] sm:$0xff] %v3263
    %3328 = vst [vmem:[#allocation3 + $0x78] sm:$0xff] %v3264
    %3329 = vst [vmem:[#allocation3 + $0x80] sm:$0xff] %v3265
    %3330 = vst [vmem:[#allocation3 + $0x88] sm:$0xff] %v3266
    %3331 = vst [vmem:[#allocation3 + $0x90] sm:$0xff] %v3267
    %3332 = vst [vmem:[#allocation3 + $0x98] sm:$0xff] %v3268
    %3333 = vst [vmem:[#allocation3 + $0xa0] sm:$0xff] %v3269
    %3334 = vst [vmem:[#allocation3 + $0xa8] sm:$0xff] %v3270
    %3335 = vst [vmem:[#allocation3 + $0xb0] sm:$0xff] %v3271
    %3336 = vst [vmem:[#allocation3 + $0xb8] sm:$0xff] %v3272
    %3337 = vst [vmem:[#allocation3 + $0xc0] sm:$0xff] %v3273
    %3338 = vst [vmem:[#allocation3 + $0xc8] sm:$0xff] %v3274
    %3339 = vst [vmem:[#allocation3 + $0xd0] sm:$0xff] %v3275
    %3340 = vst [vmem:[#allocation3 + $0xd8] sm:$0xff] %v3276
    %3341 = vst [vmem:[#allocation3 + $0xe0] sm:$0xff] %v3277
    %3342 = vst [vmem:[#allocation3 + $0xe8] sm:$0xff] %v3278
    %3343 = vst [vmem:[#allocation3 + $0xf0] sm:$0xff] %v3279
    %3344 = vst [vmem:[#allocation3 + $0xf8] sm:$0xff] %v3280
    %3345 = vst [vmem:[#allocation3 + $0x100] sm:$0xff] %v3281
    %3346 = vst [vmem:[#allocation3 + $0x108] sm:$0xff] %v3282
    %3347 = vst [vmem:[#allocation3 + $0x110] sm:$0xff] %v3283
    %3348 = vst [vmem:[#allocation3 + $0x118] sm:$0xff] %v3284
    %3349 = vst [vmem:[#allocation3 + $0x120] sm:$0xff] %v3285
    %3350 = vst [vmem:[#allocation3 + $0x128] sm:$0xff] %v3286
    %3351 = vst [vmem:[#allocation3 + $0x130] sm:$0xff] %v3287
    %3352 = vst [vmem:[#allocation3 + $0x138] sm:$0xff] %v3288
    %3353 = vst [vmem:[#allocation3 + $0x140] sm:$0xff] %v3289
    %3354 = vst [vmem:[#allocation3 + $0x148] sm:$0xff] %v3290
    %3355 = vst [vmem:[#allocation3 + $0x150] sm:$0xff] %v3291
    %3356 = vst [vmem:[#allocation3 + $0x158] sm:$0xff] %v3292
    %3357 = vst [vmem:[#allocation3 + $0x160] sm:$0xff] %v3293
    %3358 = vst [vmem:[#allocation3 + $0x168] sm:$0xff] %v3294
    %3359 = vst [vmem:[#allocation3 + $0x170] sm:$0xff] %v3295
    %3360 = vst [vmem:[#allocation3 + $0x178] sm:$0xff] %v3296
    %3361 = vst [vmem:[#allocation3 + $0x180] sm:$0xff] %v3297
    %3362 = vst [vmem:[#allocation3 + $0x188] sm:$0xff] %v3298
    %3363 = vst [vmem:[#allocation3 + $0x190] sm:$0xff] %v3299
    %3364 = vst [vmem:[#allocation3 + $0x198] sm:$0xff] %v3300
    %3365 = vst [vmem:[#allocation3 + $0x1a0] sm:$0xff] %v3301
    %3366 = vst [vmem:[#allocation3 + $0x1a8] sm:$0xff] %v3302
    %3367 = vst [vmem:[#allocation3 + $0x1b0] sm:$0xff] %v3303
    %3368 = vst [vmem:[#allocation3 + $0x1b8] sm:$0xff] %v3304
    %3369 = vst [vmem:[#allocation3 + $0x1c0] sm:$0xff] %v3305
    %3370 = vst [vmem:[#allocation3 + $0x1c8] sm:$0xff] %v3306
    %3371 = vst [vmem:[#allocation3 + $0x1d0] sm:$0xff] %v3307
    %3372 = vst [vmem:[#allocation3 + $0x1d8] sm:$0xff] %v3308
    %3373 = vst [vmem:[#allocation3 + $0x1e0] sm:$0xff] %v3309
    %3374 = vst [vmem:[#allocation3 + $0x1e8] sm:$0xff] %v3310
    %3375 = vst [vmem:[#allocation3 + $0x1f0] sm:$0xff] %v3311
    %3376 = vst [vmem:[#allocation3 + $0x1f8] sm:$0xff] %v3312
    %v3377 = vld [vmem:[%s2894 + $0x1] sm:$0xff]
    %v3378 = vld [vmem:[%s2894 + $0x9] sm:$0xff]
    %v3379 = vld [vmem:[%s2894 + $0x19] sm:$0xff]
    %v3380 = vld [vmem:[%s2894 + $0x21] sm:$0xff]
    %v3381 = vld [vmem:[%s2894 + $0x31] sm:$0xff]
    %v3382 = vld [vmem:[%s2894 + $0x39] sm:$0xff]
    %v3383 = vld [vmem:[%s2894 + $0x49] sm:$0xff]
    %v3384 = vld [vmem:[%s2894 + $0x51] sm:$0xff]
    %v3385 = vld [vmem:[%s2894 + $0x61] sm:$0xff]
    %v3386 = vld [vmem:[%s2894 + $0x69] sm:$0xff]
    %v3387 = vld [vmem:[%s2894 + $0x79] sm:$0xff]
    %v3388 = vld [vmem:[%s2894 + $0x81] sm:$0xff]
    %v3389 = vld [vmem:[%s2894 + $0x91] sm:$0xff]
    %v3390 = vld [vmem:[%s2894 + $0x99] sm:$0xff]
    %v3391 = vld [vmem:[%s2894 + $0xa9] sm:$0xff]
    %v3392 = vld [vmem:[%s2894 + $0xb1] sm:$0xff]
    %v3393 = vld [vmem:[%s2894 + $0xc1] sm:$0xff]
    %v3394 = vld [vmem:[%s2894 + $0xc9] sm:$0xff]
    %v3395 = vld [vmem:[%s2894 + $0xd9] sm:$0xff]
    %v3396 = vld [vmem:[%s2894 + $0xe1] sm:$0xff]
    %v3397 = vld [vmem:[%s2894 + $0xf1] sm:$0xff]
    %v3398 = vld [vmem:[%s2894 + $0xf9] sm:$0xff]
    %v3399 = vld [vmem:[%s2894 + $0x109] sm:$0xff]
    %v3400 = vld [vmem:[%s2894 + $0x111] sm:$0xff]
    %v3401 = vld [vmem:[%s2894 + $0x121] sm:$0xff]
    %v3402 = vld [vmem:[%s2894 + $0x129] sm:$0xff]
    %v3403 = vld [vmem:[%s2894 + $0x139] sm:$0xff]
    %v3404 = vld [vmem:[%s2894 + $0x141] sm:$0xff]
    %v3405 = vld [vmem:[%s2894 + $0x151] sm:$0xff]
    %v3406 = vld [vmem:[%s2894 + $0x159] sm:$0xff]
    %v3407 = vld [vmem:[%s2894 + $0x169] sm:$0xff]
    %v3408 = vld [vmem:[%s2894 + $0x171] sm:$0xff]
    %v3409 = vld [vmem:[%s2894 + $0x1b1] sm:$0xff]
    %v3410 = vld [vmem:[%s2894 + $0x1b9] sm:$0xff]
    %v3411 = vld [vmem:[%s2894 + $0x1c9] sm:$0xff]
    %v3412 = vld [vmem:[%s2894 + $0x1d1] sm:$0xff]
    %v3413 = vld [vmem:[%s2894 + $0x1e1] sm:$0xff]
    %v3414 = vld [vmem:[%s2894 + $0x1e9] sm:$0xff]
    %v3415 = vld [vmem:[%s2894 + $0x1f9] sm:$0xff]
    %v3416 = vld [vmem:[%s2894 + $0x201] sm:$0xff]
    %v3417 = vld [vmem:[%s2894 + $0x211] sm:$0xff]
    %v3418 = vld [vmem:[%s2894 + $0x219] sm:$0xff]
    %v3419 = vld [vmem:[%s2894 + $0x229] sm:$0xff]
    %v3420 = vld [vmem:[%s2894 + $0x231] sm:$0xff]
    %v3421 = vld [vmem:[%s2894 + $0x241] sm:$0xff]
    %v3422 = vld [vmem:[%s2894 + $0x249] sm:$0xff]
    %v3423 = vld [vmem:[%s2894 + $0x259] sm:$0xff]
    %v3424 = vld [vmem:[%s2894 + $0x261] sm:$0xff]
    %v3425 = vld [vmem:[%s2894 + $0x271] sm:$0xff]
    %v3426 = vld [vmem:[%s2894 + $0x279] sm:$0xff]
    %v3427 = vld [vmem:[%s2894 + $0x289] sm:$0xff]
    %v3428 = vld [vmem:[%s2894 + $0x291] sm:$0xff]
    %v3429 = vld [vmem:[%s2894 + $0x2a1] sm:$0xff]
    %v3430 = vld [vmem:[%s2894 + $0x2a9] sm:$0xff]
    %v3431 = vld [vmem:[%s2894 + $0x2b9] sm:$0xff]
    %v3432 = vld [vmem:[%s2894 + $0x2c1] sm:$0xff]
    %v3433 = vld [vmem:[%s2894 + $0x2d1] sm:$0xff]
    %v3434 = vld [vmem:[%s2894 + $0x2d9] sm:$0xff]
    %v3435 = vld [vmem:[%s2894 + $0x2e9] sm:$0xff]
    %v3436 = vld [vmem:[%s2894 + $0x2f1] sm:$0xff]
    %v3437 = vld [vmem:[%s2894 + $0x301] sm:$0xff]
    %v3438 = vld [vmem:[%s2894 + $0x309] sm:$0xff]
    %v3439 = vld [vmem:[%s2894 + $0x319] sm:$0xff]
    %v3440 = vld [vmem:[%s2894 + $0x321] sm:$0xff]
    %s3441 = scalar_lea.vmem %s1, 896
    %v3442 = vld [vmem:[%s3441] sm:$0xff]
    %v3443 = vld [vmem:[%s3441 + $0x8] sm:$0xff]
    %v3444 = vld [vmem:[%s3441 + $0x10] sm:$0xff]
    %v3445 = vld [vmem:[%s3441 + $0x18] sm:$0xff]
    %v3446 = vld [vmem:[%s3441 + $0x20] sm:$0xff]
    %v3447 = vld [vmem:[%s3441 + $0x28] sm:$0xff]
    %v3448 = vld [vmem:[%s3441 + $0x30] sm:$0xff]
    %v3449 = vld [vmem:[%s3441 + $0x38] sm:$0xff]
    %v3450 = vld [vmem:[%s3441 + $0x40] sm:$0xff]
    %v3451 = vld [vmem:[%s3441 + $0x48] sm:$0xff]
    %v3452 = vld [vmem:[%s3441 + $0x50] sm:$0xff]
    %v3453 = vld [vmem:[%s3441 + $0x58] sm:$0xff]
    %v3454 = vld [vmem:[%s3441 + $0x60] sm:$0xff]
    %v3455 = vld [vmem:[%s3441 + $0x68] sm:$0xff]
    %v3456 = vld [vmem:[%s3441 + $0x70] sm:$0xff]
    %v3457 = vld [vmem:[%s3441 + $0x78] sm:$0xff]
    %3458 = vmatpush.msra.mxu0 %v3457
    %3459 = vmatpush.msra.mxu0 %v3456
    %3460 = vmatpush.msra.mxu0 %v3455
    %3461 = vmatpush.msra.mxu0 %v3454
    %3462 = vmatpush.msra.mxu0 %v3453
    %3463 = vmatpush.msra.mxu0 %v3452
    %3464 = vmatpush.msra.mxu0 %v3451
    %3465 = vmatpush.msra.mxu0 %v3450
    %3466 = vmatpush.msra.mxu0 %v3449
    %3467 = vmatpush.msra.mxu0 %v3448
    %3468 = vmatpush.msra.mxu0 %v3447
    %3469 = vmatpush.msra.mxu0 %v3446
    %3470 = vmatpush.msra.mxu0 %v3445
    %3471 = vmatpush.msra.mxu0 %v3444
    %3472 = vmatpush.msra.mxu0 %v3443
    %3473 = vmatpush.msra.mxu0 %v3442
    %3474 = vmatmul.f32.gmra.mxu0 %v3377
    %v3475 = vpop.f32.mrf.mxu0
    %v3476 = vadd.f32 0.0, %v3475
    %3477 = vmatmul.f32.gmra.mxu0 %v3378
    %v3478 = vpop.f32.mrf.mxu0
    %v3479 = vadd.f32 0.0, %v3478
    %3480 = vmatmul.f32.gmra.mxu0 %v3379
    %v3481 = vpop.f32.mrf.mxu0
    %v3482 = vadd.f32 0.0, %v3481
    %3483 = vmatmul.f32.gmra.mxu0 %v3380
    %v3484 = vpop.f32.mrf.mxu0
    %v3485 = vadd.f32 0.0, %v3484
    %3486 = vmatmul.f32.gmra.mxu0 %v3381
    %v3487 = vpop.f32.mrf.mxu0
    %v3488 = vadd.f32 0.0, %v3487
    %3489 = vmatmul.f32.gmra.mxu0 %v3382
    %v3490 = vpop.f32.mrf.mxu0
    %v3491 = vadd.f32 0.0, %v3490
    %3492 = vmatmul.f32.gmra.mxu0 %v3383
    %v3493 = vpop.f32.mrf.mxu0
    %v3494 = vadd.f32 0.0, %v3493
    %3495 = vmatmul.f32.gmra.mxu0 %v3384
    %v3496 = vpop.f32.mrf.mxu0
    %v3497 = vadd.f32 0.0, %v3496
    %3498 = vmatmul.f32.gmra.mxu0 %v3385
    %v3499 = vpop.f32.mrf.mxu0
    %v3500 = vadd.f32 0.0, %v3499
    %3501 = vmatmul.f32.gmra.mxu0 %v3386
    %v3502 = vpop.f32.mrf.mxu0
    %v3503 = vadd.f32 0.0, %v3502
    %3504 = vmatmul.f32.gmra.mxu0 %v3387
    %v3505 = vpop.f32.mrf.mxu0
    %v3506 = vadd.f32 0.0, %v3505
    %3507 = vmatmul.f32.gmra.mxu0 %v3388
    %v3508 = vpop.f32.mrf.mxu0
    %v3509 = vadd.f32 0.0, %v3508
    %3510 = vmatmul.f32.gmra.mxu0 %v3389
    %v3511 = vpop.f32.mrf.mxu0
    %v3512 = vadd.f32 0.0, %v3511
    %3513 = vmatmul.f32.gmra.mxu0 %v3390
    %v3514 = vpop.f32.mrf.mxu0
    %v3515 = vadd.f32 0.0, %v3514
    %3516 = vmatmul.f32.gmra.mxu0 %v3391
    %v3517 = vpop.f32.mrf.mxu0
    %v3518 = vadd.f32 0.0, %v3517
    %3519 = vmatmul.f32.gmra.mxu0 %v3392
    %v3520 = vpop.f32.mrf.mxu0
    %v3521 = vadd.f32 0.0, %v3520
    %3522 = vmatmul.f32.gmra.mxu0 %v3393
    %v3523 = vpop.f32.mrf.mxu0
    %v3524 = vadd.f32 0.0, %v3523
    %3525 = vmatmul.f32.gmra.mxu0 %v3394
    %v3526 = vpop.f32.mrf.mxu0
    %v3527 = vadd.f32 0.0, %v3526
    %3528 = vmatmul.f32.gmra.mxu0 %v3395
    %v3529 = vpop.f32.mrf.mxu0
    %v3530 = vadd.f32 0.0, %v3529
    %3531 = vmatmul.f32.gmra.mxu0 %v3396
    %v3532 = vpop.f32.mrf.mxu0
    %v3533 = vadd.f32 0.0, %v3532
    %3534 = vmatmul.f32.gmra.mxu0 %v3397
    %v3535 = vpop.f32.mrf.mxu0
    %v3536 = vadd.f32 0.0, %v3535
    %3537 = vmatmul.f32.gmra.mxu0 %v3398
    %v3538 = vpop.f32.mrf.mxu0
    %v3539 = vadd.f32 0.0, %v3538
    %3540 = vmatmul.f32.gmra.mxu0 %v3399
    %v3541 = vpop.f32.mrf.mxu0
    %v3542 = vadd.f32 0.0, %v3541
    %3543 = vmatmul.f32.gmra.mxu0 %v3400
    %v3544 = vpop.f32.mrf.mxu0
    %v3545 = vadd.f32 0.0, %v3544
    %3546 = vmatmul.f32.gmra.mxu0 %v3401
    %v3547 = vpop.f32.mrf.mxu0
    %v3548 = vadd.f32 0.0, %v3547
    %3549 = vmatmul.f32.gmra.mxu0 %v3402
    %v3550 = vpop.f32.mrf.mxu0
    %v3551 = vadd.f32 0.0, %v3550
    %3552 = vmatmul.f32.gmra.mxu0 %v3403
    %v3553 = vpop.f32.mrf.mxu0
    %v3554 = vadd.f32 0.0, %v3553
    %3555 = vmatmul.f32.gmra.mxu0 %v3404
    %v3556 = vpop.f32.mrf.mxu0
    %v3557 = vadd.f32 0.0, %v3556
    %3558 = vmatmul.f32.gmra.mxu0 %v3405
    %v3559 = vpop.f32.mrf.mxu0
    %v3560 = vadd.f32 0.0, %v3559
    %3561 = vmatmul.f32.gmra.mxu0 %v3406
    %v3562 = vpop.f32.mrf.mxu0
    %v3563 = vadd.f32 0.0, %v3562
    %3564 = vmatmul.f32.gmra.mxu0 %v3407
    %v3565 = vpop.f32.mrf.mxu0
    %v3566 = vadd.f32 0.0, %v3565
    %3567 = vmatmul.f32.gmra.mxu0 %v3408
    %v3568 = vpop.f32.mrf.mxu0
    %v3569 = vadd.f32 0.0, %v3568
    %3570 = vmatmul.f32.gmra.mxu0 %v3409
    %v3571 = vpop.f32.mrf.mxu0
    %v3572 = vadd.f32 0.0, %v3571
    %3573 = vmatmul.f32.gmra.mxu0 %v3410
    %v3574 = vpop.f32.mrf.mxu0
    %v3575 = vadd.f32 0.0, %v3574
    %3576 = vmatmul.f32.gmra.mxu0 %v3411
    %v3577 = vpop.f32.mrf.mxu0
    %v3578 = vadd.f32 0.0, %v3577
    %3579 = vmatmul.f32.gmra.mxu0 %v3412
    %v3580 = vpop.f32.mrf.mxu0
    %v3581 = vadd.f32 0.0, %v3580
    %3582 = vmatmul.f32.gmra.mxu0 %v3413
    %v3583 = vpop.f32.mrf.mxu0
    %v3584 = vadd.f32 0.0, %v3583
    %3585 = vmatmul.f32.gmra.mxu0 %v3414
    %v3586 = vpop.f32.mrf.mxu0
    %v3587 = vadd.f32 0.0, %v3586
    %3588 = vmatmul.f32.gmra.mxu0 %v3415
    %v3589 = vpop.f32.mrf.mxu0
    %v3590 = vadd.f32 0.0, %v3589
    %3591 = vmatmul.f32.gmra.mxu0 %v3416
    %v3592 = vpop.f32.mrf.mxu0
    %v3593 = vadd.f32 0.0, %v3592
    %3594 = vmatmul.f32.gmra.mxu0 %v3417
    %v3595 = vpop.f32.mrf.mxu0
    %v3596 = vadd.f32 0.0, %v3595
    %3597 = vmatmul.f32.gmra.mxu0 %v3418
    %v3598 = vpop.f32.mrf.mxu0
    %v3599 = vadd.f32 0.0, %v3598
    %3600 = vmatmul.f32.gmra.mxu0 %v3419
    %v3601 = vpop.f32.mrf.mxu0
    %v3602 = vadd.f32 0.0, %v3601
    %3603 = vmatmul.f32.gmra.mxu0 %v3420
    %v3604 = vpop.f32.mrf.mxu0
    %v3605 = vadd.f32 0.0, %v3604
    %3606 = vmatmul.f32.gmra.mxu0 %v3421
    %v3607 = vpop.f32.mrf.mxu0
    %v3608 = vadd.f32 0.0, %v3607
    %3609 = vmatmul.f32.gmra.mxu0 %v3422
    %v3610 = vpop.f32.mrf.mxu0
    %v3611 = vadd.f32 0.0, %v3610
    %3612 = vmatmul.f32.gmra.mxu0 %v3423
    %v3613 = vpop.f32.mrf.mxu0
    %v3614 = vadd.f32 0.0, %v3613
    %3615 = vmatmul.f32.gmra.mxu0 %v3424
    %v3616 = vpop.f32.mrf.mxu0
    %v3617 = vadd.f32 0.0, %v3616
    %3618 = vmatmul.f32.gmra.mxu0 %v3425
    %v3619 = vpop.f32.mrf.mxu0
    %v3620 = vadd.f32 0.0, %v3619
    %3621 = vmatmul.f32.gmra.mxu0 %v3426
    %v3622 = vpop.f32.mrf.mxu0
    %v3623 = vadd.f32 0.0, %v3622
    %3624 = vmatmul.f32.gmra.mxu0 %v3427
    %v3625 = vpop.f32.mrf.mxu0
    %v3626 = vadd.f32 0.0, %v3625
    %3627 = vmatmul.f32.gmra.mxu0 %v3428
    %v3628 = vpop.f32.mrf.mxu0
    %v3629 = vadd.f32 0.0, %v3628
    %3630 = vmatmul.f32.gmra.mxu0 %v3429
    %v3631 = vpop.f32.mrf.mxu0
    %v3632 = vadd.f32 0.0, %v3631
    %3633 = vmatmul.f32.gmra.mxu0 %v3430
    %v3634 = vpop.f32.mrf.mxu0
    %v3635 = vadd.f32 0.0, %v3634
    %3636 = vmatmul.f32.gmra.mxu0 %v3431
    %v3637 = vpop.f32.mrf.mxu0
    %v3638 = vadd.f32 0.0, %v3637
    %3639 = vmatmul.f32.gmra.mxu0 %v3432
    %v3640 = vpop.f32.mrf.mxu0
    %v3641 = vadd.f32 0.0, %v3640
    %3642 = vmatmul.f32.gmra.mxu0 %v3433
    %v3643 = vpop.f32.mrf.mxu0
    %v3644 = vadd.f32 0.0, %v3643
    %3645 = vmatmul.f32.gmra.mxu0 %v3434
    %v3646 = vpop.f32.mrf.mxu0
    %v3647 = vadd.f32 0.0, %v3646
    %3648 = vmatmul.f32.gmra.mxu0 %v3435
    %v3649 = vpop.f32.mrf.mxu0
    %v3650 = vadd.f32 0.0, %v3649
    %3651 = vmatmul.f32.gmra.mxu0 %v3436
    %v3652 = vpop.f32.mrf.mxu0
    %v3653 = vadd.f32 0.0, %v3652
    %3654 = vmatmul.f32.gmra.mxu0 %v3437
    %v3655 = vpop.f32.mrf.mxu0
    %v3656 = vadd.f32 0.0, %v3655
    %3657 = vmatmul.f32.gmra.mxu0 %v3438
    %v3658 = vpop.f32.mrf.mxu0
    %v3659 = vadd.f32 0.0, %v3658
    %3660 = vmatmul.f32.gmra.mxu0 %v3439
    %v3661 = vpop.f32.mrf.mxu0
    %v3662 = vadd.f32 0.0, %v3661
    %3663 = vmatmul.f32.gmra.mxu0 %v3440
    %v3664 = vpop.f32.mrf.mxu0
    %v3665 = vadd.f32 0.0, %v3664
    %3666 = vdwg.mxu0
    %v3667 = vld [vmem:[#allocation3] sm:$0xff]
    %v3668 = vld [vmem:[#allocation3 + $0x8] sm:$0xff]
    %v3669 = vld [vmem:[#allocation3 + $0x10] sm:$0xff]
    %v3670 = vld [vmem:[#allocation3 + $0x18] sm:$0xff]
    %v3671 = vld [vmem:[#allocation3 + $0x20] sm:$0xff]
    %v3672 = vld [vmem:[#allocation3 + $0x28] sm:$0xff]
    %v3673 = vld [vmem:[#allocation3 + $0x30] sm:$0xff]
    %v3674 = vld [vmem:[#allocation3 + $0x38] sm:$0xff]
    %v3675 = vld [vmem:[#allocation3 + $0x40] sm:$0xff]
    %v3676 = vld [vmem:[#allocation3 + $0x48] sm:$0xff]
    %v3677 = vld [vmem:[#allocation3 + $0x50] sm:$0xff]
    %v3678 = vld [vmem:[#allocation3 + $0x58] sm:$0xff]
    %v3679 = vld [vmem:[#allocation3 + $0x60] sm:$0xff]
    %v3680 = vld [vmem:[#allocation3 + $0x68] sm:$0xff]
    %v3681 = vld [vmem:[#allocation3 + $0x70] sm:$0xff]
    %v3682 = vld [vmem:[#allocation3 + $0x78] sm:$0xff]
    %v3683 = vld [vmem:[#allocation3 + $0x80] sm:$0xff]
    %v3684 = vld [vmem:[#allocation3 + $0x88] sm:$0xff]
    %v3685 = vld [vmem:[#allocation3 + $0x90] sm:$0xff]
    %v3686 = vld [vmem:[#allocation3 + $0x98] sm:$0xff]
    %v3687 = vld [vmem:[#allocation3 + $0xa0] sm:$0xff]
    %v3688 = vld [vmem:[#allocation3 + $0xa8] sm:$0xff]
    %v3689 = vld [vmem:[#allocation3 + $0xb0] sm:$0xff]
    %v3690 = vld [vmem:[#allocation3 + $0xb8] sm:$0xff]
    %v3691 = vld [vmem:[#allocation3 + $0xc0] sm:$0xff]
    %v3692 = vld [vmem:[#allocation3 + $0xc8] sm:$0xff]
    %v3693 = vld [vmem:[#allocation3 + $0xd0] sm:$0xff]
    %v3694 = vld [vmem:[#allocation3 + $0xd8] sm:$0xff]
    %v3695 = vld [vmem:[#allocation3 + $0xe0] sm:$0xff]
    %v3696 = vld [vmem:[#allocation3 + $0xe8] sm:$0xff]
    %v3697 = vld [vmem:[#allocation3 + $0xf0] sm:$0xff]
    %v3698 = vld [vmem:[#allocation3 + $0xf8] sm:$0xff]
    %v3699 = vld [vmem:[#allocation3 + $0x100] sm:$0xff]
    %v3700 = vld [vmem:[#allocation3 + $0x108] sm:$0xff]
    %v3701 = vld [vmem:[#allocation3 + $0x110] sm:$0xff]
    %v3702 = vld [vmem:[#allocation3 + $0x118] sm:$0xff]
    %v3703 = vld [vmem:[#allocation3 + $0x120] sm:$0xff]
    %v3704 = vld [vmem:[#allocation3 + $0x128] sm:$0xff]
    %v3705 = vld [vmem:[#allocation3 + $0x130] sm:$0xff]
    %v3706 = vld [vmem:[#allocation3 + $0x138] sm:$0xff]
    %v3707 = vld [vmem:[#allocation3 + $0x140] sm:$0xff]
    %v3708 = vld [vmem:[#allocation3 + $0x148] sm:$0xff]
    %v3709 = vld [vmem:[#allocation3 + $0x150] sm:$0xff]
    %v3710 = vld [vmem:[#allocation3 + $0x158] sm:$0xff]
    %v3711 = vld [vmem:[#allocation3 + $0x160] sm:$0xff]
    %v3712 = vld [vmem:[#allocation3 + $0x168] sm:$0xff]
    %v3713 = vld [vmem:[#allocation3 + $0x170] sm:$0xff]
    %v3714 = vld [vmem:[#allocation3 + $0x178] sm:$0xff]
    %v3715 = vld [vmem:[#allocation3 + $0x180] sm:$0xff]
    %v3716 = vld [vmem:[#allocation3 + $0x188] sm:$0xff]
    %v3717 = vld [vmem:[#allocation3 + $0x190] sm:$0xff]
    %v3718 = vld [vmem:[#allocation3 + $0x198] sm:$0xff]
    %v3719 = vld [vmem:[#allocation3 + $0x1a0] sm:$0xff]
    %v3720 = vld [vmem:[#allocation3 + $0x1a8] sm:$0xff]
    %v3721 = vld [vmem:[#allocation3 + $0x1b0] sm:$0xff]
    %v3722 = vld [vmem:[#allocation3 + $0x1b8] sm:$0xff]
    %v3723 = vld [vmem:[#allocation3 + $0x1c0] sm:$0xff]
    %v3724 = vld [vmem:[#allocation3 + $0x1c8] sm:$0xff]
    %v3725 = vld [vmem:[#allocation3 + $0x1d0] sm:$0xff]
    %v3726 = vld [vmem:[#allocation3 + $0x1d8] sm:$0xff]
    %v3727 = vld [vmem:[#allocation3 + $0x1e0] sm:$0xff]
    %v3728 = vld [vmem:[#allocation3 + $0x1e8] sm:$0xff]
    %v3729 = vld [vmem:[#allocation3 + $0x1f0] sm:$0xff]
    %v3730 = vld [vmem:[#allocation3 + $0x1f8] sm:$0xff]
    %v3731 = vadd.f32 %v3667, %v3476
    %v3732 = vadd.f32 %v3668, %v3479
    %v3733 = vadd.f32 %v3669, %v3482
    %v3734 = vadd.f32 %v3670, %v3485
    %v3735 = vadd.f32 %v3671, %v3488
    %v3736 = vadd.f32 %v3672, %v3491
    %v3737 = vadd.f32 %v3673, %v3494
    %v3738 = vadd.f32 %v3674, %v3497
    %v3739 = vadd.f32 %v3675, %v3500
    %v3740 = vadd.f32 %v3676, %v3503
    %v3741 = vadd.f32 %v3677, %v3506
    %v3742 = vadd.f32 %v3678, %v3509
    %v3743 = vadd.f32 %v3679, %v3512
    %v3744 = vadd.f32 %v3680, %v3515
    %v3745 = vadd.f32 %v3681, %v3518
    %v3746 = vadd.f32 %v3682, %v3521
    %v3747 = vadd.f32 %v3683, %v3524
    %v3748 = vadd.f32 %v3684, %v3527
    %v3749 = vadd.f32 %v3685, %v3530
    %v3750 = vadd.f32 %v3686, %v3533
    %v3751 = vadd.f32 %v3687, %v3536
    %v3752 = vadd.f32 %v3688, %v3539
    %v3753 = vadd.f32 %v3689, %v3542
    %v3754 = vadd.f32 %v3690, %v3545
    %v3755 = vadd.f32 %v3691, %v3548
    %v3756 = vadd.f32 %v3692, %v3551
    %v3757 = vadd.f32 %v3693, %v3554
    %v3758 = vadd.f32 %v3694, %v3557
    %v3759 = vadd.f32 %v3695, %v3560
    %v3760 = vadd.f32 %v3696, %v3563
    %v3761 = vadd.f32 %v3697, %v3566
    %v3762 = vadd.f32 %v3698, %v3569
    %v3763 = vadd.f32 %v3699, %v3572
    %v3764 = vadd.f32 %v3700, %v3575
    %v3765 = vadd.f32 %v3701, %v3578
    %v3766 = vadd.f32 %v3702, %v3581
    %v3767 = vadd.f32 %v3703, %v3584
    %v3768 = vadd.f32 %v3704, %v3587
    %v3769 = vadd.f32 %v3705, %v3590
    %v3770 = vadd.f32 %v3706, %v3593
    %v3771 = vadd.f32 %v3707, %v3596
    %v3772 = vadd.f32 %v3708, %v3599
    %v3773 = vadd.f32 %v3709, %v3602
    %v3774 = vadd.f32 %v3710, %v3605
    %v3775 = vadd.f32 %v3711, %v3608
    %v3776 = vadd.f32 %v3712, %v3611
    %v3777 = vadd.f32 %v3713, %v3614
    %v3778 = vadd.f32 %v3714, %v3617
    %v3779 = vadd.f32 %v3715, %v3620
    %v3780 = vadd.f32 %v3716, %v3623
    %v3781 = vadd.f32 %v3717, %v3626
    %v3782 = vadd.f32 %v3718, %v3629
    %v3783 = vadd.f32 %v3719, %v3632
    %v3784 = vadd.f32 %v3720, %v3635
    %v3785 = vadd.f32 %v3721, %v3638
    %v3786 = vadd.f32 %v3722, %v3641
    %v3787 = vadd.f32 %v3723, %v3644
    %v3788 = vadd.f32 %v3724, %v3647
    %v3789 = vadd.f32 %v3725, %v3650
    %v3790 = vadd.f32 %v3726, %v3653
    %v3791 = vadd.f32 %v3727, %v3656
    %v3792 = vadd.f32 %v3728, %v3659
    %v3793 = vadd.f32 %v3729, %v3662
    %v3794 = vadd.f32 %v3730, %v3665
    %3795 = vst [vmem:[#allocation3] sm:$0xff] %v3731
    %3796 = vst [vmem:[#allocation3 + $0x8] sm:$0xff] %v3732
    %3797 = vst [vmem:[#allocation3 + $0x10] sm:$0xff] %v3733
    %3798 = vst [vmem:[#allocation3 + $0x18] sm:$0xff] %v3734
    %3799 = vst [vmem:[#allocation3 + $0x20] sm:$0xff] %v3735
    %3800 = vst [vmem:[#allocation3 + $0x28] sm:$0xff] %v3736
    %3801 = vst [vmem:[#allocation3 + $0x30] sm:$0xff] %v3737
    %3802 = vst [vmem:[#allocation3 + $0x38] sm:$0xff] %v3738
    %3803 = vst [vmem:[#allocation3 + $0x40] sm:$0xff] %v3739
    %3804 = vst [vmem:[#allocation3 + $0x48] sm:$0xff] %v3740
    %3805 = vst [vmem:[#allocation3 + $0x50] sm:$0xff] %v3741
    %3806 = vst [vmem:[#allocation3 + $0x58] sm:$0xff] %v3742
    %3807 = vst [vmem:[#allocation3 + $0x60] sm:$0xff] %v3743
    %3808 = vst [vmem:[#allocation3 + $0x68] sm:$0xff] %v3744
    %3809 = vst [vmem:[#allocation3 + $0x70] sm:$0xff] %v3745
    %3810 = vst [vmem:[#allocation3 + $0x78] sm:$0xff] %v3746
    %3811 = vst [vmem:[#allocation3 + $0x80] sm:$0xff] %v3747
    %3812 = vst [vmem:[#allocation3 + $0x88] sm:$0xff] %v3748
    %3813 = vst [vmem:[#allocation3 + $0x90] sm:$0xff] %v3749
    %3814 = vst [vmem:[#allocation3 + $0x98] sm:$0xff] %v3750
    %3815 = vst [vmem:[#allocation3 + $0xa0] sm:$0xff] %v3751
    %3816 = vst [vmem:[#allocation3 + $0xa8] sm:$0xff] %v3752
    %3817 = vst [vmem:[#allocation3 + $0xb0] sm:$0xff] %v3753
    %3818 = vst [vmem:[#allocation3 + $0xb8] sm:$0xff] %v3754
    %3819 = vst [vmem:[#allocation3 + $0xc0] sm:$0xff] %v3755
    %3820 = vst [vmem:[#allocation3 + $0xc8] sm:$0xff] %v3756
    %3821 = vst [vmem:[#allocation3 + $0xd0] sm:$0xff] %v3757
    %3822 = vst [vmem:[#allocation3 + $0xd8] sm:$0xff] %v3758
    %3823 = vst [vmem:[#allocation3 + $0xe0] sm:$0xff] %v3759
    %3824 = vst [vmem:[#allocation3 + $0xe8] sm:$0xff] %v3760
    %3825 = vst [vmem:[#allocation3 + $0xf0] sm:$0xff] %v3761
    %3826 = vst [vmem:[#allocation3 + $0xf8] sm:$0xff] %v3762
    %3827 = vst [vmem:[#allocation3 + $0x100] sm:$0xff] %v3763
    %3828 = vst [vmem:[#allocation3 + $0x108] sm:$0xff] %v3764
    %3829 = vst [vmem:[#allocation3 + $0x110] sm:$0xff] %v3765
    %3830 = vst [vmem:[#allocation3 + $0x118] sm:$0xff] %v3766
    %3831 = vst [vmem:[#allocation3 + $0x120] sm:$0xff] %v3767
    %3832 = vst [vmem:[#allocation3 + $0x128] sm:$0xff] %v3768
    %3833 = vst [vmem:[#allocation3 + $0x130] sm:$0xff] %v3769
    %3834 = vst [vmem:[#allocation3 + $0x138] sm:$0xff] %v3770
    %3835 = vst [vmem:[#allocation3 + $0x140] sm:$0xff] %v3771
    %3836 = vst [vmem:[#allocation3 + $0x148] sm:$0xff] %v3772
    %3837 = vst [vmem:[#allocation3 + $0x150] sm:$0xff] %v3773
    %3838 = vst [vmem:[#allocation3 + $0x158] sm:$0xff] %v3774
    %3839 = vst [vmem:[#allocation3 + $0x160] sm:$0xff] %v3775
    %3840 = vst [vmem:[#allocation3 + $0x168] sm:$0xff] %v3776
    %3841 = vst [vmem:[#allocation3 + $0x170] sm:$0xff] %v3777
    %3842 = vst [vmem:[#allocation3 + $0x178] sm:$0xff] %v3778
    %3843 = vst [vmem:[#allocation3 + $0x180] sm:$0xff] %v3779
    %3844 = vst [vmem:[#allocation3 + $0x188] sm:$0xff] %v3780
    %3845 = vst [vmem:[#allocation3 + $0x190] sm:$0xff] %v3781
    %3846 = vst [vmem:[#allocation3 + $0x198] sm:$0xff] %v3782
    %3847 = vst [vmem:[#allocation3 + $0x1a0] sm:$0xff] %v3783
    %3848 = vst [vmem:[#allocation3 + $0x1a8] sm:$0xff] %v3784
    %3849 = vst [vmem:[#allocation3 + $0x1b0] sm:$0xff] %v3785
    %3850 = vst [vmem:[#allocation3 + $0x1b8] sm:$0xff] %v3786
    %3851 = vst [vmem:[#allocation3 + $0x1c0] sm:$0xff] %v3787
    %3852 = vst [vmem:[#allocation3 + $0x1c8] sm:$0xff] %v3788
    %3853 = vst [vmem:[#allocation3 + $0x1d0] sm:$0xff] %v3789
    %3854 = vst [vmem:[#allocation3 + $0x1d8] sm:$0xff] %v3790
    %3855 = vst [vmem:[#allocation3 + $0x1e0] sm:$0xff] %v3791
    %3856 = vst [vmem:[#allocation3 + $0x1e8] sm:$0xff] %v3792
    %3857 = vst [vmem:[#allocation3 + $0x1f0] sm:$0xff] %v3793
    %3858 = vst [vmem:[#allocation3 + $0x1f8] sm:$0xff] %v3794
    %v3859 = vld [vmem:[%s2894 + $0x2] sm:$0xff]
    %v3860 = vld [vmem:[%s2894 + $0xa] sm:$0xff]
    %v3861 = vld [vmem:[%s2894 + $0x1a] sm:$0xff]
    %v3862 = vld [vmem:[%s2894 + $0x22] sm:$0xff]
    %v3863 = vld [vmem:[%s2894 + $0x32] sm:$0xff]
    %v3864 = vld [vmem:[%s2894 + $0x3a] sm:$0xff]
    %v3865 = vld [vmem:[%s2894 + $0x4a] sm:$0xff]
    %v3866 = vld [vmem:[%s2894 + $0x52] sm:$0xff]
    %v3867 = vld [vmem:[%s2894 + $0x62] sm:$0xff]
    %v3868 = vld [vmem:[%s2894 + $0x6a] sm:$0xff]
    %v3869 = vld [vmem:[%s2894 + $0x7a] sm:$0xff]
    %v3870 = vld [vmem:[%s2894 + $0x82] sm:$0xff]
    %v3871 = vld [vmem:[%s2894 + $0x92] sm:$0xff]
    %v3872 = vld [vmem:[%s2894 + $0x9a] sm:$0xff]
    %v3873 = vld [vmem:[%s2894 + $0xaa] sm:$0xff]
    %v3874 = vld [vmem:[%s2894 + $0xb2] sm:$0xff]
    %v3875 = vld [vmem:[%s2894 + $0xc2] sm:$0xff]
    %v3876 = vld [vmem:[%s2894 + $0xca] sm:$0xff]
    %v3877 = vld [vmem:[%s2894 + $0xda] sm:$0xff]
    %v3878 = vld [vmem:[%s2894 + $0xe2] sm:$0xff]
    %v3879 = vld [vmem:[%s2894 + $0xf2] sm:$0xff]
    %v3880 = vld [vmem:[%s2894 + $0xfa] sm:$0xff]
    %v3881 = vld [vmem:[%s2894 + $0x10a] sm:$0xff]
    %v3882 = vld [vmem:[%s2894 + $0x112] sm:$0xff]
    %v3883 = vld [vmem:[%s2894 + $0x122] sm:$0xff]
    %v3884 = vld [vmem:[%s2894 + $0x12a] sm:$0xff]
    %v3885 = vld [vmem:[%s2894 + $0x13a] sm:$0xff]
    %v3886 = vld [vmem:[%s2894 + $0x142] sm:$0xff]
    %v3887 = vld [vmem:[%s2894 + $0x152] sm:$0xff]
    %v3888 = vld [vmem:[%s2894 + $0x15a] sm:$0xff]
    %v3889 = vld [vmem:[%s2894 + $0x16a] sm:$0xff]
    %v3890 = vld [vmem:[%s2894 + $0x172] sm:$0xff]
    %v3891 = vld [vmem:[%s2894 + $0x1b2] sm:$0xff]
    %v3892 = vld [vmem:[%s2894 + $0x1ba] sm:$0xff]
    %v3893 = vld [vmem:[%s2894 + $0x1ca] sm:$0xff]
    %v3894 = vld [vmem:[%s2894 + $0x1d2] sm:$0xff]
    %v3895 = vld [vmem:[%s2894 + $0x1e2] sm:$0xff]
    %v3896 = vld [vmem:[%s2894 + $0x1ea] sm:$0xff]
    %v3897 = vld [vmem:[%s2894 + $0x1fa] sm:$0xff]
    %v3898 = vld [vmem:[%s2894 + $0x202] sm:$0xff]
    %v3899 = vld [vmem:[%s2894 + $0x212] sm:$0xff]
    %v3900 = vld [vmem:[%s2894 + $0x21a] sm:$0xff]
    %v3901 = vld [vmem:[%s2894 + $0x22a] sm:$0xff]
    %v3902 = vld [vmem:[%s2894 + $0x232] sm:$0xff]
    %v3903 = vld [vmem:[%s2894 + $0x242] sm:$0xff]
    %v3904 = vld [vmem:[%s2894 + $0x24a] sm:$0xff]
    %v3905 = vld [vmem:[%s2894 + $0x25a] sm:$0xff]
    %v3906 = vld [vmem:[%s2894 + $0x262] sm:$0xff]
    %v3907 = vld [vmem:[%s2894 + $0x272] sm:$0xff]
    %v3908 = vld [vmem:[%s2894 + $0x27a] sm:$0xff]
    %v3909 = vld [vmem:[%s2894 + $0x28a] sm:$0xff]
    %v3910 = vld [vmem:[%s2894 + $0x292] sm:$0xff]
    %v3911 = vld [vmem:[%s2894 + $0x2a2] sm:$0xff]
    %v3912 = vld [vmem:[%s2894 + $0x2aa] sm:$0xff]
    %v3913 = vld [vmem:[%s2894 + $0x2ba] sm:$0xff]
    %v3914 = vld [vmem:[%s2894 + $0x2c2] sm:$0xff]
    %v3915 = vld [vmem:[%s2894 + $0x2d2] sm:$0xff]
    %v3916 = vld [vmem:[%s2894 + $0x2da] sm:$0xff]
    %v3917 = vld [vmem:[%s2894 + $0x2ea] sm:$0xff]
    %v3918 = vld [vmem:[%s2894 + $0x2f2] sm:$0xff]
    %v3919 = vld [vmem:[%s2894 + $0x302] sm:$0xff]
    %v3920 = vld [vmem:[%s2894 + $0x30a] sm:$0xff]
    %v3921 = vld [vmem:[%s2894 + $0x31a] sm:$0xff]
    %v3922 = vld [vmem:[%s2894 + $0x322] sm:$0xff]
    %s3923 = scalar_lea.vmem %s1, 1024
    %v3924 = vld [vmem:[%s3923] sm:$0xff]
    %v3925 = vld [vmem:[%s3923 + $0x8] sm:$0xff]
    %v3926 = vld [vmem:[%s3923 + $0x10] sm:$0xff]
    %v3927 = vld [vmem:[%s3923 + $0x18] sm:$0xff]
    %v3928 = vld [vmem:[%s3923 + $0x20] sm:$0xff]
    %v3929 = vld [vmem:[%s3923 + $0x28] sm:$0xff]
    %v3930 = vld [vmem:[%s3923 + $0x30] sm:$0xff]
    %v3931 = vld [vmem:[%s3923 + $0x38] sm:$0xff]
    %v3932 = vld [vmem:[%s3923 + $0x40] sm:$0xff]
    %v3933 = vld [vmem:[%s3923 + $0x48] sm:$0xff]
    %v3934 = vld [vmem:[%s3923 + $0x50] sm:$0xff]
    %v3935 = vld [vmem:[%s3923 + $0x58] sm:$0xff]
    %v3936 = vld [vmem:[%s3923 + $0x60] sm:$0xff]
    %v3937 = vld [vmem:[%s3923 + $0x68] sm:$0xff]
    %v3938 = vld [vmem:[%s3923 + $0x70] sm:$0xff]
    %v3939 = vld [vmem:[%s3923 + $0x78] sm:$0xff]
    %3940 = vmatpush.msra.mxu0 %v3939
    %3941 = vmatpush.msra.mxu0 %v3938
    %3942 = vmatpush.msra.mxu0 %v3937
    %3943 = vmatpush.msra.mxu0 %v3936
    %3944 = vmatpush.msra.mxu0 %v3935
    %3945 = vmatpush.msra.mxu0 %v3934
    %3946 = vmatpush.msra.mxu0 %v3933
    %3947 = vmatpush.msra.mxu0 %v3932
    %3948 = vmatpush.msra.mxu0 %v3931
    %3949 = vmatpush.msra.mxu0 %v3930
    %3950 = vmatpush.msra.mxu0 %v3929
    %3951 = vmatpush.msra.mxu0 %v3928
    %3952 = vmatpush.msra.mxu0 %v3927
    %3953 = vmatpush.msra.mxu0 %v3926
    %3954 = vmatpush.msra.mxu0 %v3925
    %3955 = vmatpush.msra.mxu0 %v3924
    %3956 = vmatmul.f32.gmra.mxu0 %v3859
    %v3957 = vpop.f32.mrf.mxu0
    %v3958 = vadd.f32 0.0, %v3957
    %3959 = vmatmul.f32.gmra.mxu0 %v3860
    %v3960 = vpop.f32.mrf.mxu0
    %v3961 = vadd.f32 0.0, %v3960
    %3962 = vmatmul.f32.gmra.mxu0 %v3861
    %v3963 = vpop.f32.mrf.mxu0
    %v3964 = vadd.f32 0.0, %v3963
    %3965 = vmatmul.f32.gmra.mxu0 %v3862
    %v3966 = vpop.f32.mrf.mxu0
    %v3967 = vadd.f32 0.0, %v3966
    %3968 = vmatmul.f32.gmra.mxu0 %v3863
    %v3969 = vpop.f32.mrf.mxu0
    %v3970 = vadd.f32 0.0, %v3969
    %3971 = vmatmul.f32.gmra.mxu0 %v3864
    %v3972 = vpop.f32.mrf.mxu0
    %v3973 = vadd.f32 0.0, %v3972
    %3974 = vmatmul.f32.gmra.mxu0 %v3865
    %v3975 = vpop.f32.mrf.mxu0
    %v3976 = vadd.f32 0.0, %v3975
    %3977 = vmatmul.f32.gmra.mxu0 %v3866
    %v3978 = vpop.f32.mrf.mxu0
    %v3979 = vadd.f32 0.0, %v3978
    %3980 = vmatmul.f32.gmra.mxu0 %v3867
    %v3981 = vpop.f32.mrf.mxu0
    %v3982 = vadd.f32 0.0, %v3981
    %3983 = vmatmul.f32.gmra.mxu0 %v3868
    %v3984 = vpop.f32.mrf.mxu0
    %v3985 = vadd.f32 0.0, %v3984
    %3986 = vmatmul.f32.gmra.mxu0 %v3869
    %v3987 = vpop.f32.mrf.mxu0
    %v3988 = vadd.f32 0.0, %v3987
    %3989 = vmatmul.f32.gmra.mxu0 %v3870
    %v3990 = vpop.f32.mrf.mxu0
    %v3991 = vadd.f32 0.0, %v3990
    %3992 = vmatmul.f32.gmra.mxu0 %v3871
    %v3993 = vpop.f32.mrf.mxu0
    %v3994 = vadd.f32 0.0, %v3993
    %3995 = vmatmul.f32.gmra.mxu0 %v3872
    %v3996 = vpop.f32.mrf.mxu0
    %v3997 = vadd.f32 0.0, %v3996
    %3998 = vmatmul.f32.gmra.mxu0 %v3873
    %v3999 = vpop.f32.mrf.mxu0
    %v4000 = vadd.f32 0.0, %v3999
    %4001 = vmatmul.f32.gmra.mxu0 %v3874
    %v4002 = vpop.f32.mrf.mxu0
    %v4003 = vadd.f32 0.0, %v4002
    %4004 = vmatmul.f32.gmra.mxu0 %v3875
    %v4005 = vpop.f32.mrf.mxu0
    %v4006 = vadd.f32 0.0, %v4005
    %4007 = vmatmul.f32.gmra.mxu0 %v3876
    %v4008 = vpop.f32.mrf.mxu0
    %v4009 = vadd.f32 0.0, %v4008
    %4010 = vmatmul.f32.gmra.mxu0 %v3877
    %v4011 = vpop.f32.mrf.mxu0
    %v4012 = vadd.f32 0.0, %v4011
    %4013 = vmatmul.f32.gmra.mxu0 %v3878
    %v4014 = vpop.f32.mrf.mxu0
    %v4015 = vadd.f32 0.0, %v4014
    %4016 = vmatmul.f32.gmra.mxu0 %v3879
    %v4017 = vpop.f32.mrf.mxu0
    %v4018 = vadd.f32 0.0, %v4017
    %4019 = vmatmul.f32.gmra.mxu0 %v3880
    %v4020 = vpop.f32.mrf.mxu0
    %v4021 = vadd.f32 0.0, %v4020
    %4022 = vmatmul.f32.gmra.mxu0 %v3881
    %v4023 = vpop.f32.mrf.mxu0
    %v4024 = vadd.f32 0.0, %v4023
    %4025 = vmatmul.f32.gmra.mxu0 %v3882
    %v4026 = vpop.f32.mrf.mxu0
    %v4027 = vadd.f32 0.0, %v4026
    %4028 = vmatmul.f32.gmra.mxu0 %v3883
    %v4029 = vpop.f32.mrf.mxu0
    %v4030 = vadd.f32 0.0, %v4029
    %4031 = vmatmul.f32.gmra.mxu0 %v3884
    %v4032 = vpop.f32.mrf.mxu0
    %v4033 = vadd.f32 0.0, %v4032
    %4034 = vmatmul.f32.gmra.mxu0 %v3885
    %v4035 = vpop.f32.mrf.mxu0
    %v4036 = vadd.f32 0.0, %v4035
    %4037 = vmatmul.f32.gmra.mxu0 %v3886
    %v4038 = vpop.f32.mrf.mxu0
    %v4039 = vadd.f32 0.0, %v4038
    %4040 = vmatmul.f32.gmra.mxu0 %v3887
    %v4041 = vpop.f32.mrf.mxu0
    %v4042 = vadd.f32 0.0, %v4041
    %4043 = vmatmul.f32.gmra.mxu0 %v3888
    %v4044 = vpop.f32.mrf.mxu0
    %v4045 = vadd.f32 0.0, %v4044
    %4046 = vmatmul.f32.gmra.mxu0 %v3889
    %v4047 = vpop.f32.mrf.mxu0
    %v4048 = vadd.f32 0.0, %v4047
    %4049 = vmatmul.f32.gmra.mxu0 %v3890
    %v4050 = vpop.f32.mrf.mxu0
    %v4051 = vadd.f32 0.0, %v4050
    %4052 = vmatmul.f32.gmra.mxu0 %v3891
    %v4053 = vpop.f32.mrf.mxu0
    %v4054 = vadd.f32 0.0, %v4053
    %4055 = vmatmul.f32.gmra.mxu0 %v3892
    %v4056 = vpop.f32.mrf.mxu0
    %v4057 = vadd.f32 0.0, %v4056
    %4058 = vmatmul.f32.gmra.mxu0 %v3893
    %v4059 = vpop.f32.mrf.mxu0
    %v4060 = vadd.f32 0.0, %v4059
    %4061 = vmatmul.f32.gmra.mxu0 %v3894
    %v4062 = vpop.f32.mrf.mxu0
    %v4063 = vadd.f32 0.0, %v4062
    %4064 = vmatmul.f32.gmra.mxu0 %v3895
    %v4065 = vpop.f32.mrf.mxu0
    %v4066 = vadd.f32 0.0, %v4065
    %4067 = vmatmul.f32.gmra.mxu0 %v3896
    %v4068 = vpop.f32.mrf.mxu0
    %v4069 = vadd.f32 0.0, %v4068
    %4070 = vmatmul.f32.gmra.mxu0 %v3897
    %v4071 = vpop.f32.mrf.mxu0
    %v4072 = vadd.f32 0.0, %v4071
    %4073 = vmatmul.f32.gmra.mxu0 %v3898
    %v4074 = vpop.f32.mrf.mxu0
    %v4075 = vadd.f32 0.0, %v4074
    %4076 = vmatmul.f32.gmra.mxu0 %v3899
    %v4077 = vpop.f32.mrf.mxu0
    %v4078 = vadd.f32 0.0, %v4077
    %4079 = vmatmul.f32.gmra.mxu0 %v3900
    %v4080 = vpop.f32.mrf.mxu0
    %v4081 = vadd.f32 0.0, %v4080
    %4082 = vmatmul.f32.gmra.mxu0 %v3901
    %v4083 = vpop.f32.mrf.mxu0
    %v4084 = vadd.f32 0.0, %v4083
    %4085 = vmatmul.f32.gmra.mxu0 %v3902
    %v4086 = vpop.f32.mrf.mxu0
    %v4087 = vadd.f32 0.0, %v4086
    %4088 = vmatmul.f32.gmra.mxu0 %v3903
    %v4089 = vpop.f32.mrf.mxu0
    %v4090 = vadd.f32 0.0, %v4089
    %4091 = vmatmul.f32.gmra.mxu0 %v3904
    %v4092 = vpop.f32.mrf.mxu0
    %v4093 = vadd.f32 0.0, %v4092
    %4094 = vmatmul.f32.gmra.mxu0 %v3905
    %v4095 = vpop.f32.mrf.mxu0
    %v4096 = vadd.f32 0.0, %v4095
    %4097 = vmatmul.f32.gmra.mxu0 %v3906
    %v4098 = vpop.f32.mrf.mxu0
    %v4099 = vadd.f32 0.0, %v4098
    %4100 = vmatmul.f32.gmra.mxu0 %v3907
    %v4101 = vpop.f32.mrf.mxu0
    %v4102 = vadd.f32 0.0, %v4101
    %4103 = vmatmul.f32.gmra.mxu0 %v3908
    %v4104 = vpop.f32.mrf.mxu0
    %v4105 = vadd.f32 0.0, %v4104
    %4106 = vmatmul.f32.gmra.mxu0 %v3909
    %v4107 = vpop.f32.mrf.mxu0
    %v4108 = vadd.f32 0.0, %v4107
    %4109 = vmatmul.f32.gmra.mxu0 %v3910
    %v4110 = vpop.f32.mrf.mxu0
    %v4111 = vadd.f32 0.0, %v4110
    %4112 = vmatmul.f32.gmra.mxu0 %v3911
    %v4113 = vpop.f32.mrf.mxu0
    %v4114 = vadd.f32 0.0, %v4113
    %4115 = vmatmul.f32.gmra.mxu0 %v3912
    %v4116 = vpop.f32.mrf.mxu0
    %v4117 = vadd.f32 0.0, %v4116
    %4118 = vmatmul.f32.gmra.mxu0 %v3913
    %v4119 = vpop.f32.mrf.mxu0
    %v4120 = vadd.f32 0.0, %v4119
    %4121 = vmatmul.f32.gmra.mxu0 %v3914
    %v4122 = vpop.f32.mrf.mxu0
    %v4123 = vadd.f32 0.0, %v4122
    %4124 = vmatmul.f32.gmra.mxu0 %v3915
    %v4125 = vpop.f32.mrf.mxu0
    %v4126 = vadd.f32 0.0, %v4125
    %4127 = vmatmul.f32.gmra.mxu0 %v3916
    %v4128 = vpop.f32.mrf.mxu0
    %v4129 = vadd.f32 0.0, %v4128
    %4130 = vmatmul.f32.gmra.mxu0 %v3917
    %v4131 = vpop.f32.mrf.mxu0
    %v4132 = vadd.f32 0.0, %v4131
    %4133 = vmatmul.f32.gmra.mxu0 %v3918
    %v4134 = vpop.f32.mrf.mxu0
    %v4135 = vadd.f32 0.0, %v4134
    %4136 = vmatmul.f32.gmra.mxu0 %v3919
    %v4137 = vpop.f32.mrf.mxu0
    %v4138 = vadd.f32 0.0, %v4137
    %4139 = vmatmul.f32.gmra.mxu0 %v3920
    %v4140 = vpop.f32.mrf.mxu0
    %v4141 = vadd.f32 0.0, %v4140
    %4142 = vmatmul.f32.gmra.mxu0 %v3921
    %v4143 = vpop.f32.mrf.mxu0
    %v4144 = vadd.f32 0.0, %v4143
    %4145 = vmatmul.f32.gmra.mxu0 %v3922
    %v4146 = vpop.f32.mrf.mxu0
    %v4147 = vadd.f32 0.0, %v4146
    %4148 = vdwg.mxu0
    %v4149 = vld [vmem:[#allocation3] sm:$0xff]
    %v4150 = vld [vmem:[#allocation3 + $0x8] sm:$0xff]
    %v4151 = vld [vmem:[#allocation3 + $0x10] sm:$0xff]
    %v4152 = vld [vmem:[#allocation3 + $0x18] sm:$0xff]
    %v4153 = vld [vmem:[#allocation3 + $0x20] sm:$0xff]
    %v4154 = vld [vmem:[#allocation3 + $0x28] sm:$0xff]
    %v4155 = vld [vmem:[#allocation3 + $0x30] sm:$0xff]
    %v4156 = vld [vmem:[#allocation3 + $0x38] sm:$0xff]
    %v4157 = vld [vmem:[#allocation3 + $0x40] sm:$0xff]
    %v4158 = vld [vmem:[#allocation3 + $0x48] sm:$0xff]
    %v4159 = vld [vmem:[#allocation3 + $0x50] sm:$0xff]
    %v4160 = vld [vmem:[#allocation3 + $0x58] sm:$0xff]
    %v4161 = vld [vmem:[#allocation3 + $0x60] sm:$0xff]
    %v4162 = vld [vmem:[#allocation3 + $0x68] sm:$0xff]
    %v4163 = vld [vmem:[#allocation3 + $0x70] sm:$0xff]
    %v4164 = vld [vmem:[#allocation3 + $0x78] sm:$0xff]
    %v4165 = vld [vmem:[#allocation3 + $0x80] sm:$0xff]
    %v4166 = vld [vmem:[#allocation3 + $0x88] sm:$0xff]
    %v4167 = vld [vmem:[#allocation3 + $0x90] sm:$0xff]
    %v4168 = vld [vmem:[#allocation3 + $0x98] sm:$0xff]
    %v4169 = vld [vmem:[#allocation3 + $0xa0] sm:$0xff]
    %v4170 = vld [vmem:[#allocation3 + $0xa8] sm:$0xff]
    %v4171 = vld [vmem:[#allocation3 + $0xb0] sm:$0xff]
    %v4172 = vld [vmem:[#allocation3 + $0xb8] sm:$0xff]
    %v4173 = vld [vmem:[#allocation3 + $0xc0] sm:$0xff]
    %v4174 = vld [vmem:[#allocation3 + $0xc8] sm:$0xff]
    %v4175 = vld [vmem:[#allocation3 + $0xd0] sm:$0xff]
    %v4176 = vld [vmem:[#allocation3 + $0xd8] sm:$0xff]
    %v4177 = vld [vmem:[#allocation3 + $0xe0] sm:$0xff]
    %v4178 = vld [vmem:[#allocation3 + $0xe8] sm:$0xff]
    %v4179 = vld [vmem:[#allocation3 + $0xf0] sm:$0xff]
    %v4180 = vld [vmem:[#allocation3 + $0xf8] sm:$0xff]
    %v4181 = vld [vmem:[#allocation3 + $0x100] sm:$0xff]
    %v4182 = vld [vmem:[#allocation3 + $0x108] sm:$0xff]
    %v4183 = vld [vmem:[#allocation3 + $0x110] sm:$0xff]
    %v4184 = vld [vmem:[#allocation3 + $0x118] sm:$0xff]
    %v4185 = vld [vmem:[#allocation3 + $0x120] sm:$0xff]
    %v4186 = vld [vmem:[#allocation3 + $0x128] sm:$0xff]
    %v4187 = vld [vmem:[#allocation3 + $0x130] sm:$0xff]
    %v4188 = vld [vmem:[#allocation3 + $0x138] sm:$0xff]
    %v4189 = vld [vmem:[#allocation3 + $0x140] sm:$0xff]
    %v4190 = vld [vmem:[#allocation3 + $0x148] sm:$0xff]
    %v4191 = vld [vmem:[#allocation3 + $0x150] sm:$0xff]
    %v4192 = vld [vmem:[#allocation3 + $0x158] sm:$0xff]
    %v4193 = vld [vmem:[#allocation3 + $0x160] sm:$0xff]
    %v4194 = vld [vmem:[#allocation3 + $0x168] sm:$0xff]
    %v4195 = vld [vmem:[#allocation3 + $0x170] sm:$0xff]
    %v4196 = vld [vmem:[#allocation3 + $0x178] sm:$0xff]
    %v4197 = vld [vmem:[#allocation3 + $0x180] sm:$0xff]
    %v4198 = vld [vmem:[#allocation3 + $0x188] sm:$0xff]
    %v4199 = vld [vmem:[#allocation3 + $0x190] sm:$0xff]
    %v4200 = vld [vmem:[#allocation3 + $0x198] sm:$0xff]
    %v4201 = vld [vmem:[#allocation3 + $0x1a0] sm:$0xff]
    %v4202 = vld [vmem:[#allocation3 + $0x1a8] sm:$0xff]
    %v4203 = vld [vmem:[#allocation3 + $0x1b0] sm:$0xff]
    %v4204 = vld [vmem:[#allocation3 + $0x1b8] sm:$0xff]
    %v4205 = vld [vmem:[#allocation3 + $0x1c0] sm:$0xff]
    %v4206 = vld [vmem:[#allocation3 + $0x1c8] sm:$0xff]
    %v4207 = vld [vmem:[#allocation3 + $0x1d0] sm:$0xff]
    %v4208 = vld [vmem:[#allocation3 + $0x1d8] sm:$0xff]
    %v4209 = vld [vmem:[#allocation3 + $0x1e0] sm:$0xff]
    %v4210 = vld [vmem:[#allocation3 + $0x1e8] sm:$0xff]
    %v4211 = vld [vmem:[#allocation3 + $0x1f0] sm:$0xff]
    %v4212 = vld [vmem:[#allocation3 + $0x1f8] sm:$0xff]
    %v4213 = vadd.f32 %v4149, %v3958
    %v4214 = vadd.f32 %v4150, %v3961
    %v4215 = vadd.f32 %v4151, %v3964
    %v4216 = vadd.f32 %v4152, %v3967
    %v4217 = vadd.f32 %v4153, %v3970
    %v4218 = vadd.f32 %v4154, %v3973
    %v4219 = vadd.f32 %v4155, %v3976
    %v4220 = vadd.f32 %v4156, %v3979
    %v4221 = vadd.f32 %v4157, %v3982
    %v4222 = vadd.f32 %v4158, %v3985
    %v4223 = vadd.f32 %v4159, %v3988
    %v4224 = vadd.f32 %v4160, %v3991
    %v4225 = vadd.f32 %v4161, %v3994
    %v4226 = vadd.f32 %v4162, %v3997
    %v4227 = vadd.f32 %v4163, %v4000
    %v4228 = vadd.f32 %v4164, %v4003
    %v4229 = vadd.f32 %v4165, %v4006
    %v4230 = vadd.f32 %v4166, %v4009
    %v4231 = vadd.f32 %v4167, %v4012
    %v4232 = vadd.f32 %v4168, %v4015
    %v4233 = vadd.f32 %v4169, %v4018
    %v4234 = vadd.f32 %v4170, %v4021
    %v4235 = vadd.f32 %v4171, %v4024
    %v4236 = vadd.f32 %v4172, %v4027
    %v4237 = vadd.f32 %v4173, %v4030
    %v4238 = vadd.f32 %v4174, %v4033
    %v4239 = vadd.f32 %v4175, %v4036
    %v4240 = vadd.f32 %v4176, %v4039
    %v4241 = vadd.f32 %v4177, %v4042
    %v4242 = vadd.f32 %v4178, %v4045
    %v4243 = vadd.f32 %v4179, %v4048
    %v4244 = vadd.f32 %v4180, %v4051
    %v4245 = vadd.f32 %v4181, %v4054
    %v4246 = vadd.f32 %v4182, %v4057
    %v4247 = vadd.f32 %v4183, %v4060
    %v4248 = vadd.f32 %v4184, %v4063
    %v4249 = vadd.f32 %v4185, %v4066
    %v4250 = vadd.f32 %v4186, %v4069
    %v4251 = vadd.f32 %v4187, %v4072
    %v4252 = vadd.f32 %v4188, %v4075
    %v4253 = vadd.f32 %v4189, %v4078
    %v4254 = vadd.f32 %v4190, %v4081
    %v4255 = vadd.f32 %v4191, %v4084
    %v4256 = vadd.f32 %v4192, %v4087
    %v4257 = vadd.f32 %v4193, %v4090
    %v4258 = vadd.f32 %v4194, %v4093
    %v4259 = vadd.f32 %v4195, %v4096
    %v4260 = vadd.f32 %v4196, %v4099
    %v4261 = vadd.f32 %v4197, %v4102
    %v4262 = vadd.f32 %v4198, %v4105
    %v4263 = vadd.f32 %v4199, %v4108
    %v4264 = vadd.f32 %v4200, %v4111
    %v4265 = vadd.f32 %v4201, %v4114
    %v4266 = vadd.f32 %v4202, %v4117
    %v4267 = vadd.f32 %v4203, %v4120
    %v4268 = vadd.f32 %v4204, %v4123
    %v4269 = vadd.f32 %v4205, %v4126
    %v4270 = vadd.f32 %v4206, %v4129
    %v4271 = vadd.f32 %v4207, %v4132
    %v4272 = vadd.f32 %v4208, %v4135
    %v4273 = vadd.f32 %v4209, %v4138
    %v4274 = vadd.f32 %v4210, %v4141
    %v4275 = vadd.f32 %v4211, %v4144
    %v4276 = vadd.f32 %v4212, %v4147
    %4277 = vst [vmem:[#allocation3] sm:$0xff] %v4213
    %4278 = vst [vmem:[#allocation3 + $0x8] sm:$0xff] %v4214
    %4279 = vst [vmem:[#allocation3 + $0x10] sm:$0xff] %v4215
    %4280 = vst [vmem:[#allocation3 + $0x18] sm:$0xff] %v4216
    %4281 = vst [vmem:[#allocation3 + $0x20] sm:$0xff] %v4217
    %4282 = vst [vmem:[#allocation3 + $0x28] sm:$0xff] %v4218
    %4283 = vst [vmem:[#allocation3 + $0x30] sm:$0xff] %v4219
    %4284 = vst [vmem:[#allocation3 + $0x38] sm:$0xff] %v4220
    %4285 = vst [vmem:[#allocation3 + $0x40] sm:$0xff] %v4221
    %4286 = vst [vmem:[#allocation3 + $0x48] sm:$0xff] %v4222
    %4287 = vst [vmem:[#allocation3 + $0x50] sm:$0xff] %v4223
    %4288 = vst [vmem:[#allocation3 + $0x58] sm:$0xff] %v4224
    %4289 = vst [vmem:[#allocation3 + $0x60] sm:$0xff] %v4225
    %4290 = vst [vmem:[#allocation3 + $0x68] sm:$0xff] %v4226
    %4291 = vst [vmem:[#allocation3 + $0x70] sm:$0xff] %v4227
    %4292 = vst [vmem:[#allocation3 + $0x78] sm:$0xff] %v4228
    %4293 = vst [vmem:[#allocation3 + $0x80] sm:$0xff] %v4229
    %4294 = vst [vmem:[#allocation3 + $0x88] sm:$0xff] %v4230
    %4295 = vst [vmem:[#allocation3 + $0x90] sm:$0xff] %v4231
    %4296 = vst [vmem:[#allocation3 + $0x98] sm:$0xff] %v4232
    %4297 = vst [vmem:[#allocation3 + $0xa0] sm:$0xff] %v4233
    %4298 = vst [vmem:[#allocation3 + $0xa8] sm:$0xff] %v4234
    %4299 = vst [vmem:[#allocation3 + $0xb0] sm:$0xff] %v4235
    %4300 = vst [vmem:[#allocation3 + $0xb8] sm:$0xff] %v4236
    %4301 = vst [vmem:[#allocation3 + $0xc0] sm:$0xff] %v4237
    %4302 = vst [vmem:[#allocation3 + $0xc8] sm:$0xff] %v4238
    %4303 = vst [vmem:[#allocation3 + $0xd0] sm:$0xff] %v4239
    %4304 = vst [vmem:[#allocation3 + $0xd8] sm:$0xff] %v4240
    %4305 = vst [vmem:[#allocation3 + $0xe0] sm:$0xff] %v4241
    %4306 = vst [vmem:[#allocation3 + $0xe8] sm:$0xff] %v4242
    %4307 = vst [vmem:[#allocation3 + $0xf0] sm:$0xff] %v4243
    %4308 = vst [vmem:[#allocation3 + $0xf8] sm:$0xff] %v4244
    %4309 = vst [vmem:[#allocation3 + $0x100] sm:$0xff] %v4245
    %4310 = vst [vmem:[#allocation3 + $0x108] sm:$0xff] %v4246
    %4311 = vst [vmem:[#allocation3 + $0x110] sm:$0xff] %v4247
    %4312 = vst [vmem:[#allocation3 + $0x118] sm:$0xff] %v4248
    %4313 = vst [vmem:[#allocation3 + $0x120] sm:$0xff] %v4249
    %4314 = vst [vmem:[#allocation3 + $0x128] sm:$0xff] %v4250
    %4315 = vst [vmem:[#allocation3 + $0x130] sm:$0xff] %v4251
    %4316 = vst [vmem:[#allocation3 + $0x138] sm:$0xff] %v4252
    %4317 = vst [vmem:[#allocation3 + $0x140] sm:$0xff] %v4253
    %4318 = vst [vmem:[#allocation3 + $0x148] sm:$0xff] %v4254
    %4319 = vst [vmem:[#allocation3 + $0x150] sm:$0xff] %v4255
    %4320 = vst [vmem:[#allocation3 + $0x158] sm:$0xff] %v4256
    %4321 = vst [vmem:[#allocation3 + $0x160] sm:$0xff] %v4257
    %4322 = vst [vmem:[#allocation3 + $0x168] sm:$0xff] %v4258
    %4323 = vst [vmem:[#allocation3 + $0x170] sm:$0xff] %v4259
    %4324 = vst [vmem:[#allocation3 + $0x178] sm:$0xff] %v4260
    %4325 = vst [vmem:[#allocation3 + $0x180] sm:$0xff] %v4261
    %4326 = vst [vmem:[#allocation3 + $0x188] sm:$0xff] %v4262
    %4327 = vst [vmem:[#allocation3 + $0x190] sm:$0xff] %v4263
    %4328 = vst [vmem:[#allocation3 + $0x198] sm:$0xff] %v4264
    %4329 = vst [vmem:[#allocation3 + $0x1a0] sm:$0xff] %v4265
    %4330 = vst [vmem:[#allocation3 + $0x1a8] sm:$0xff] %v4266
    %4331 = vst [vmem:[#allocation3 + $0x1b0] sm:$0xff] %v4267
    %4332 = vst [vmem:[#allocation3 + $0x1b8] sm:$0xff] %v4268
    %4333 = vst [vmem:[#allocation3 + $0x1c0] sm:$0xff] %v4269
    %4334 = vst [vmem:[#allocation3 + $0x1c8] sm:$0xff] %v4270
    %4335 = vst [vmem:[#allocation3 + $0x1d0] sm:$0xff] %v4271
    %4336 = vst [vmem:[#allocation3 + $0x1d8] sm:$0xff] %v4272
    %4337 = vst [vmem:[#allocation3 + $0x1e0] sm:$0xff] %v4273
    %4338 = vst [vmem:[#allocation3 + $0x1e8] sm:$0xff] %v4274
    %4339 = vst [vmem:[#allocation3 + $0x1f0] sm:$0xff] %v4275
    %4340 = vst [vmem:[#allocation3 + $0x1f8] sm:$0xff] %v4276
    %v4341 = vld [vmem:[#allocation3] sm:$0xff]
    %v4342 = vld [vmem:[#allocation3 + $0x8] sm:$0xff]
    %v4343 = vld [vmem:[#allocation3 + $0x10] sm:$0xff]
    %v4344 = vld [vmem:[#allocation3 + $0x18] sm:$0xff]
    %v4345 = vld [vmem:[#allocation3 + $0x20] sm:$0xff]
    %v4346 = vld [vmem:[#allocation3 + $0x28] sm:$0xff]
    %v4347 = vld [vmem:[#allocation3 + $0x30] sm:$0xff]
    %v4348 = vld [vmem:[#allocation3 + $0x38] sm:$0xff]
    %v4349 = vld [vmem:[#allocation3 + $0x40] sm:$0xff]
    %v4350 = vld [vmem:[#allocation3 + $0x48] sm:$0xff]
    %v4351 = vld [vmem:[#allocation3 + $0x50] sm:$0xff]
    %v4352 = vld [vmem:[#allocation3 + $0x58] sm:$0xff]
    %v4353 = vld [vmem:[#allocation3 + $0x60] sm:$0xff]
    %v4354 = vld [vmem:[#allocation3 + $0x68] sm:$0xff]
    %v4355 = vld [vmem:[#allocation3 + $0x70] sm:$0xff]
    %v4356 = vld [vmem:[#allocation3 + $0x78] sm:$0xff]
    %v4357 = vld [vmem:[#allocation3 + $0x80] sm:$0xff]
    %v4358 = vld [vmem:[#allocation3 + $0x88] sm:$0xff]
    %v4359 = vld [vmem:[#allocation3 + $0x90] sm:$0xff]
    %v4360 = vld [vmem:[#allocation3 + $0x98] sm:$0xff]
    %v4361 = vld [vmem:[#allocation3 + $0xa0] sm:$0xff]
    %v4362 = vld [vmem:[#allocation3 + $0xa8] sm:$0xff]
    %v4363 = vld [vmem:[#allocation3 + $0xb0] sm:$0xff]
    %v4364 = vld [vmem:[#allocation3 + $0xb8] sm:$0xff]
    %v4365 = vld [vmem:[#allocation3 + $0xc0] sm:$0xff]
    %v4366 = vld [vmem:[#allocation3 + $0xc8] sm:$0xff]
    %v4367 = vld [vmem:[#allocation3 + $0xd0] sm:$0xff]
    %v4368 = vld [vmem:[#allocation3 + $0xd8] sm:$0xff]
    %v4369 = vld [vmem:[#allocation3 + $0xe0] sm:$0xff]
    %v4370 = vld [vmem:[#allocation3 + $0xe8] sm:$0xff]
    %v4371 = vld [vmem:[#allocation3 + $0xf0] sm:$0xff]
    %v4372 = vld [vmem:[#allocation3 + $0xf8] sm:$0xff]
    %v4373 = vld [vmem:[#allocation3 + $0x100] sm:$0xff]
    %v4374 = vld [vmem:[#allocation3 + $0x108] sm:$0xff]
    %v4375 = vld [vmem:[#allocation3 + $0x110] sm:$0xff]
    %v4376 = vld [vmem:[#allocation3 + $0x118] sm:$0xff]
    %v4377 = vld [vmem:[#allocation3 + $0x120] sm:$0xff]
    %v4378 = vld [vmem:[#allocation3 + $0x128] sm:$0xff]
    %v4379 = vld [vmem:[#allocation3 + $0x130] sm:$0xff]
    %v4380 = vld [vmem:[#allocation3 + $0x138] sm:$0xff]
    %v4381 = vld [vmem:[#allocation3 + $0x140] sm:$0xff]
    %v4382 = vld [vmem:[#allocation3 + $0x148] sm:$0xff]
    %v4383 = vld [vmem:[#allocation3 + $0x150] sm:$0xff]
    %v4384 = vld [vmem:[#allocation3 + $0x158] sm:$0xff]
    %v4385 = vld [vmem:[#allocation3 + $0x160] sm:$0xff]
    %v4386 = vld [vmem:[#allocation3 + $0x168] sm:$0xff]
    %v4387 = vld [vmem:[#allocation3 + $0x170] sm:$0xff]
    %v4388 = vld [vmem:[#allocation3 + $0x178] sm:$0xff]
    %v4389 = vld [vmem:[#allocation3 + $0x180] sm:$0xff]
    %v4390 = vld [vmem:[#allocation3 + $0x188] sm:$0xff]
    %v4391 = vld [vmem:[#allocation3 + $0x190] sm:$0xff]
    %v4392 = vld [vmem:[#allocation3 + $0x198] sm:$0xff]
    %v4393 = vld [vmem:[#allocation3 + $0x1a0] sm:$0xff]
    %v4394 = vld [vmem:[#allocation3 + $0x1a8] sm:$0xff]
    %v4395 = vld [vmem:[#allocation3 + $0x1b0] sm:$0xff]
    %v4396 = vld [vmem:[#allocation3 + $0x1b8] sm:$0xff]
    %v4397 = vld [vmem:[#allocation3 + $0x1c0] sm:$0xff]
    %v4398 = vld [vmem:[#allocation3 + $0x1c8] sm:$0xff]
    %v4399 = vld [vmem:[#allocation3 + $0x1d0] sm:$0xff]
    %v4400 = vld [vmem:[#allocation3 + $0x1d8] sm:$0xff]
    %v4401 = vld [vmem:[#allocation3 + $0x1e0] sm:$0xff]
    %v4402 = vld [vmem:[#allocation3 + $0x1e8] sm:$0xff]
    %v4403 = vld [vmem:[#allocation3 + $0x1f0] sm:$0xff]
    %v4404 = vld [vmem:[#allocation3 + $0x1f8] sm:$0xff]
    %v4405 = vld [vmem:[%s2] sm:$0x1]
    %v4407 = vperm.slane %v4405, 0
    %v4409 = vmul.f32 %v4341, %v4407
    %v4410 = vmul.f32 %v4342, %v4407
    %v4411 = vmul.f32 %v4343, %v4407
    %v4412 = vmul.f32 %v4344, %v4407
    %v4413 = vmul.f32 %v4345, %v4407
    %v4414 = vmul.f32 %v4346, %v4407
    %v4415 = vmul.f32 %v4347, %v4407
    %v4416 = vmul.f32 %v4348, %v4407
    %v4417 = vmul.f32 %v4349, %v4407
    %v4418 = vmul.f32 %v4350, %v4407
    %v4419 = vmul.f32 %v4351, %v4407
    %v4420 = vmul.f32 %v4352, %v4407
    %v4421 = vmul.f32 %v4353, %v4407
    %v4422 = vmul.f32 %v4354, %v4407
    %v4423 = vmul.f32 %v4355, %v4407
    %v4424 = vmul.f32 %v4356, %v4407
    %v4425 = vmul.f32 %v4357, %v4407
    %v4426 = vmul.f32 %v4358, %v4407
    %v4427 = vmul.f32 %v4359, %v4407
    %v4428 = vmul.f32 %v4360, %v4407
    %v4429 = vmul.f32 %v4361, %v4407
    %v4430 = vmul.f32 %v4362, %v4407
    %v4431 = vmul.f32 %v4363, %v4407
    %v4432 = vmul.f32 %v4364, %v4407
    %v4433 = vmul.f32 %v4365, %v4407
    %v4434 = vmul.f32 %v4366, %v4407
    %v4435 = vmul.f32 %v4367, %v4407
    %v4436 = vmul.f32 %v4368, %v4407
    %v4437 = vmul.f32 %v4369, %v4407
    %v4438 = vmul.f32 %v4370, %v4407
    %v4439 = vmul.f32 %v4371, %v4407
    %v4440 = vmul.f32 %v4372, %v4407
    %v4441 = vmul.f32 %v4373, %v4407
    %v4442 = vmul.f32 %v4374, %v4407
    %v4443 = vmul.f32 %v4375, %v4407
    %v4444 = vmul.f32 %v4376, %v4407
    %v4445 = vmul.f32 %v4377, %v4407
    %v4446 = vmul.f32 %v4378, %v4407
    %v4447 = vmul.f32 %v4379, %v4407
    %v4448 = vmul.f32 %v4380, %v4407
    %v4449 = vmul.f32 %v4381, %v4407
    %v4450 = vmul.f32 %v4382, %v4407
    %v4451 = vmul.f32 %v4383, %v4407
    %v4452 = vmul.f32 %v4384, %v4407
    %v4453 = vmul.f32 %v4385, %v4407
    %v4454 = vmul.f32 %v4386, %v4407
    %v4455 = vmul.f32 %v4387, %v4407
    %v4456 = vmul.f32 %v4388, %v4407
    %v4457 = vmul.f32 %v4389, %v4407
    %v4458 = vmul.f32 %v4390, %v4407
    %v4459 = vmul.f32 %v4391, %v4407
    %v4460 = vmul.f32 %v4392, %v4407
    %v4461 = vmul.f32 %v4393, %v4407
    %v4462 = vmul.f32 %v4394, %v4407
    %v4463 = vmul.f32 %v4395, %v4407
    %v4464 = vmul.f32 %v4396, %v4407
    %v4465 = vmul.f32 %v4397, %v4407
    %v4466 = vmul.f32 %v4398, %v4407
    %v4467 = vmul.f32 %v4399, %v4407
    %v4468 = vmul.f32 %v4400, %v4407
    %v4469 = vmul.f32 %v4401, %v4407
    %v4470 = vmul.f32 %v4402, %v4407
    %v4471 = vmul.f32 %v4403, %v4407
    %v4472 = vmul.f32 %v4404, %v4407
    %v4473 = vld [vmem:[%s3] sm:$0x1]
    %v4475 = vperm.slane %v4473, 0
    %v4477 = vadd.f32 %v4409, %v4475
    %v4478 = vadd.f32 %v4410, %v4475
    %v4479 = vadd.f32 %v4411, %v4475
    %v4480 = vadd.f32 %v4412, %v4475
    %v4481 = vadd.f32 %v4413, %v4475
    %v4482 = vadd.f32 %v4414, %v4475
    %v4483 = vadd.f32 %v4415, %v4475
    %v4484 = vadd.f32 %v4416, %v4475
    %v4485 = vadd.f32 %v4417, %v4475
    %v4486 = vadd.f32 %v4418, %v4475
    %v4487 = vadd.f32 %v4419, %v4475
    %v4488 = vadd.f32 %v4420, %v4475
    %v4489 = vadd.f32 %v4421, %v4475
    %v4490 = vadd.f32 %v4422, %v4475
    %v4491 = vadd.f32 %v4423, %v4475
    %v4492 = vadd.f32 %v4424, %v4475
    %v4493 = vadd.f32 %v4425, %v4475
    %v4494 = vadd.f32 %v4426, %v4475
    %v4495 = vadd.f32 %v4427, %v4475
    %v4496 = vadd.f32 %v4428, %v4475
    %v4497 = vadd.f32 %v4429, %v4475
    %v4498 = vadd.f32 %v4430, %v4475
    %v4499 = vadd.f32 %v4431, %v4475
    %v4500 = vadd.f32 %v4432, %v4475
    %v4501 = vadd.f32 %v4433, %v4475
    %v4502 = vadd.f32 %v4434, %v4475
    %v4503 = vadd.f32 %v4435, %v4475
    %v4504 = vadd.f32 %v4436, %v4475
    %v4505 = vadd.f32 %v4437, %v4475
    %v4506 = vadd.f32 %v4438, %v4475
    %v4507 = vadd.f32 %v4439, %v4475
    %v4508 = vadd.f32 %v4440, %v4475
    %v4509 = vadd.f32 %v4441, %v4475
    %v4510 = vadd.f32 %v4442, %v4475
    %v4511 = vadd.f32 %v4443, %v4475
    %v4512 = vadd.f32 %v4444, %v4475
    %v4513 = vadd.f32 %v4445, %v4475
    %v4514 = vadd.f32 %v4446, %v4475
    %v4515 = vadd.f32 %v4447, %v4475
    %v4516 = vadd.f32 %v4448, %v4475
    %v4517 = vadd.f32 %v4449, %v4475
    %v4518 = vadd.f32 %v4450, %v4475
    %v4519 = vadd.f32 %v4451, %v4475
    %v4520 = vadd.f32 %v4452, %v4475
    %v4521 = vadd.f32 %v4453, %v4475
    %v4522 = vadd.f32 %v4454, %v4475
    %v4523 = vadd.f32 %v4455, %v4475
    %v4524 = vadd.f32 %v4456, %v4475
    %v4525 = vadd.f32 %v4457, %v4475
    %v4526 = vadd.f32 %v4458, %v4475
    %v4527 = vadd.f32 %v4459, %v4475
    %v4528 = vadd.f32 %v4460, %v4475
    %v4529 = vadd.f32 %v4461, %v4475
    %v4530 = vadd.f32 %v4462, %v4475
    %v4531 = vadd.f32 %v4463, %v4475
    %v4532 = vadd.f32 %v4464, %v4475
    %v4533 = vadd.f32 %v4465, %v4475
    %v4534 = vadd.f32 %v4466, %v4475
    %v4535 = vadd.f32 %v4467, %v4475
    %v4536 = vadd.f32 %v4468, %v4475
    %v4537 = vadd.f32 %v4469, %v4475
    %v4538 = vadd.f32 %v4470, %v4475
    %v4539 = vadd.f32 %v4471, %v4475
    %v4540 = vadd.f32 %v4472, %v4475
    %v4541 = vmax.f32 %v4477, 0.0
    %v4542 = vmax.f32 %v4478, 0.0
    %v4543 = vmax.f32 %v4479, 0.0
    %v4544 = vmax.f32 %v4480, 0.0
    %v4545 = vmax.f32 %v4481, 0.0
    %v4546 = vmax.f32 %v4482, 0.0
    %v4547 = vmax.f32 %v4483, 0.0
    %v4548 = vmax.f32 %v4484, 0.0
    %v4549 = vmax.f32 %v4485, 0.0
    %v4550 = vmax.f32 %v4486, 0.0
    %v4551 = vmax.f32 %v4487, 0.0
    %v4552 = vmax.f32 %v4488, 0.0
    %v4553 = vmax.f32 %v4489, 0.0
    %v4554 = vmax.f32 %v4490, 0.0
    %v4555 = vmax.f32 %v4491, 0.0
    %v4556 = vmax.f32 %v4492, 0.0
    %v4557 = vmax.f32 %v4493, 0.0
    %v4558 = vmax.f32 %v4494, 0.0
    %v4559 = vmax.f32 %v4495, 0.0
    %v4560 = vmax.f32 %v4496, 0.0
    %v4561 = vmax.f32 %v4497, 0.0
    %v4562 = vmax.f32 %v4498, 0.0
    %v4563 = vmax.f32 %v4499, 0.0
    %v4564 = vmax.f32 %v4500, 0.0
    %v4565 = vmax.f32 %v4501, 0.0
    %v4566 = vmax.f32 %v4502, 0.0
    %v4567 = vmax.f32 %v4503, 0.0
    %v4568 = vmax.f32 %v4504, 0.0
    %v4569 = vmax.f32 %v4505, 0.0
    %v4570 = vmax.f32 %v4506, 0.0
    %v4571 = vmax.f32 %v4507, 0.0
    %v4572 = vmax.f32 %v4508, 0.0
    %v4573 = vmax.f32 %v4509, 0.0
    %v4574 = vmax.f32 %v4510, 0.0
    %v4575 = vmax.f32 %v4511, 0.0
    %v4576 = vmax.f32 %v4512, 0.0
    %v4577 = vmax.f32 %v4513, 0.0
    %v4578 = vmax.f32 %v4514, 0.0
    %v4579 = vmax.f32 %v4515, 0.0
    %v4580 = vmax.f32 %v4516, 0.0
    %v4581 = vmax.f32 %v4517, 0.0
    %v4582 = vmax.f32 %v4518, 0.0
    %v4583 = vmax.f32 %v4519, 0.0
    %v4584 = vmax.f32 %v4520, 0.0
    %v4585 = vmax.f32 %v4521, 0.0
    %v4586 = vmax.f32 %v4522, 0.0
    %v4587 = vmax.f32 %v4523, 0.0
    %v4588 = vmax.f32 %v4524, 0.0
    %v4589 = vmax.f32 %v4525, 0.0
    %v4590 = vmax.f32 %v4526, 0.0
    %v4591 = vmax.f32 %v4527, 0.0
    %v4592 = vmax.f32 %v4528, 0.0
    %v4593 = vmax.f32 %v4529, 0.0
    %v4594 = vmax.f32 %v4530, 0.0
    %v4595 = vmax.f32 %v4531, 0.0
    %v4596 = vmax.f32 %v4532, 0.0
    %v4597 = vmax.f32 %v4533, 0.0
    %v4598 = vmax.f32 %v4534, 0.0
    %v4599 = vmax.f32 %v4535, 0.0
    %v4600 = vmax.f32 %v4536, 0.0
    %v4601 = vmax.f32 %v4537, 0.0
    %v4602 = vmax.f32 %v4538, 0.0
    %v4603 = vmax.f32 %v4539, 0.0
    %v4604 = vmax.f32 %v4540, 0.0
    %4605 = vst [vmem:[%s65 + $0x1] sm:$0xff] %v4541
    %4606 = vst [vmem:[%s65 + $0x9] sm:$0xff] %v4542
    %4607 = vst [vmem:[%s65 + $0x19] sm:$0xff] %v4543
    %4608 = vst [vmem:[%s65 + $0x21] sm:$0xff] %v4544
    %4609 = vst [vmem:[%s65 + $0x31] sm:$0xff] %v4545
    %4610 = vst [vmem:[%s65 + $0x39] sm:$0xff] %v4546
    %4611 = vst [vmem:[%s65 + $0x49] sm:$0xff] %v4547
    %4612 = vst [vmem:[%s65 + $0x51] sm:$0xff] %v4548
    %4613 = vst [vmem:[%s65 + $0x61] sm:$0xff] %v4549
    %4614 = vst [vmem:[%s65 + $0x69] sm:$0xff] %v4550
    %4615 = vst [vmem:[%s65 + $0x79] sm:$0xff] %v4551
    %4616 = vst [vmem:[%s65 + $0x81] sm:$0xff] %v4552
    %4617 = vst [vmem:[%s65 + $0x91] sm:$0xff] %v4553
    %4618 = vst [vmem:[%s65 + $0x99] sm:$0xff] %v4554
    %4619 = vst [vmem:[%s65 + $0xa9] sm:$0xff] %v4555
    %4620 = vst [vmem:[%s65 + $0xb1] sm:$0xff] %v4556
    %4621 = vst [vmem:[%s65 + $0xc1] sm:$0xff] %v4557
    %4622 = vst [vmem:[%s65 + $0xc9] sm:$0xff] %v4558
    %4623 = vst [vmem:[%s65 + $0xd9] sm:$0xff] %v4559
    %4624 = vst [vmem:[%s65 + $0xe1] sm:$0xff] %v4560
    %4625 = vst [vmem:[%s65 + $0xf1] sm:$0xff] %v4561
    %4626 = vst [vmem:[%s65 + $0xf9] sm:$0xff] %v4562
    %4627 = vst [vmem:[%s65 + $0x109] sm:$0xff] %v4563
    %4628 = vst [vmem:[%s65 + $0x111] sm:$0xff] %v4564
    %4629 = vst [vmem:[%s65 + $0x121] sm:$0xff] %v4565
    %4630 = vst [vmem:[%s65 + $0x129] sm:$0xff] %v4566
    %4631 = vst [vmem:[%s65 + $0x139] sm:$0xff] %v4567
    %4632 = vst [vmem:[%s65 + $0x141] sm:$0xff] %v4568
    %4633 = vst [vmem:[%s65 + $0x151] sm:$0xff] %v4569
    %4634 = vst [vmem:[%s65 + $0x159] sm:$0xff] %v4570
    %4635 = vst [vmem:[%s65 + $0x169] sm:$0xff] %v4571
    %4636 = vst [vmem:[%s65 + $0x171] sm:$0xff] %v4572
    %4637 = vst [vmem:[%s65 + $0x1b1] sm:$0xff] %v4573
    %4638 = vst [vmem:[%s65 + $0x1b9] sm:$0xff] %v4574
    %4639 = vst [vmem:[%s65 + $0x1c9] sm:$0xff] %v4575
    %4640 = vst [vmem:[%s65 + $0x1d1] sm:$0xff] %v4576
    %4641 = vst [vmem:[%s65 + $0x1e1] sm:$0xff] %v4577
    %4642 = vst [vmem:[%s65 + $0x1e9] sm:$0xff] %v4578
    %4643 = vst [vmem:[%s65 + $0x1f9] sm:$0xff] %v4579
    %4644 = vst [vmem:[%s65 + $0x201] sm:$0xff] %v4580
    %4645 = vst [vmem:[%s65 + $0x211] sm:$0xff] %v4581
    %4646 = vst [vmem:[%s65 + $0x219] sm:$0xff] %v4582
    %4647 = vst [vmem:[%s65 + $0x229] sm:$0xff] %v4583
    %4648 = vst [vmem:[%s65 + $0x231] sm:$0xff] %v4584
    %4649 = vst [vmem:[%s65 + $0x241] sm:$0xff] %v4585
    %4650 = vst [vmem:[%s65 + $0x249] sm:$0xff] %v4586
    %4651 = vst [vmem:[%s65 + $0x259] sm:$0xff] %v4587
    %4652 = vst [vmem:[%s65 + $0x261] sm:$0xff] %v4588
    %4653 = vst [vmem:[%s65 + $0x271] sm:$0xff] %v4589
    %4654 = vst [vmem:[%s65 + $0x279] sm:$0xff] %v4590
    %4655 = vst [vmem:[%s65 + $0x289] sm:$0xff] %v4591
    %4656 = vst [vmem:[%s65 + $0x291] sm:$0xff] %v4592
    %4657 = vst [vmem:[%s65 + $0x2a1] sm:$0xff] %v4593
    %4658 = vst [vmem:[%s65 + $0x2a9] sm:$0xff] %v4594
    %4659 = vst [vmem:[%s65 + $0x2b9] sm:$0xff] %v4595
    %4660 = vst [vmem:[%s65 + $0x2c1] sm:$0xff] %v4596
    %4661 = vst [vmem:[%s65 + $0x2d1] sm:$0xff] %v4597
    %4662 = vst [vmem:[%s65 + $0x2d9] sm:$0xff] %v4598
    %4663 = vst [vmem:[%s65 + $0x2e9] sm:$0xff] %v4599
    %4664 = vst [vmem:[%s65 + $0x2f1] sm:$0xff] %v4600
    %4665 = vst [vmem:[%s65 + $0x301] sm:$0xff] %v4601
    %4666 = vst [vmem:[%s65 + $0x309] sm:$0xff] %v4602
    %4667 = vst [vmem:[%s65 + $0x319] sm:$0xff] %v4603
    %4668 = vst [vmem:[%s65 + $0x321] sm:$0xff] %v4604
    %v4669 = vld [vmem:[#allocation2] sm:$0xff]
    %v4670 = vld [vmem:[#allocation2 + $0x8] sm:$0xff]
    %v4671 = vld [vmem:[#allocation2 + $0x18] sm:$0xff]
    %v4672 = vld [vmem:[#allocation2 + $0x20] sm:$0xff]
    %v4673 = vld [vmem:[#allocation2 + $0x30] sm:$0xff]
    %v4674 = vld [vmem:[#allocation2 + $0x38] sm:$0xff]
    %v4675 = vld [vmem:[#allocation2 + $0x48] sm:$0xff]
    %v4676 = vld [vmem:[#allocation2 + $0x50] sm:$0xff]
    %v4677 = vld [vmem:[#allocation2 + $0x60] sm:$0xff]
    %v4678 = vld [vmem:[#allocation2 + $0x68] sm:$0xff]
    %v4679 = vld [vmem:[#allocation2 + $0x78] sm:$0xff]
    %v4680 = vld [vmem:[#allocation2 + $0x80] sm:$0xff]
    %v4681 = vld [vmem:[#allocation2 + $0x90] sm:$0xff]
    %v4682 = vld [vmem:[#allocation2 + $0x98] sm:$0xff]
    %v4683 = vld [vmem:[#allocation2 + $0xa8] sm:$0xff]
    %v4684 = vld [vmem:[#allocation2 + $0xb0] sm:$0xff]
    %v4685 = vld [vmem:[#allocation2 + $0xc0] sm:$0xff]
    %v4686 = vld [vmem:[#allocation2 + $0xc8] sm:$0xff]
    %v4687 = vld [vmem:[#allocation2 + $0xd8] sm:$0xff]
    %v4688 = vld [vmem:[#allocation2 + $0xe0] sm:$0xff]
    %v4689 = vld [vmem:[#allocation2 + $0xf0] sm:$0xff]
    %v4690 = vld [vmem:[#allocation2 + $0xf8] sm:$0xff]
    %v4691 = vld [vmem:[#allocation2 + $0x108] sm:$0xff]
    %v4692 = vld [vmem:[#allocation2 + $0x110] sm:$0xff]
    %v4693 = vld [vmem:[#allocation2 + $0x120] sm:$0xff]
    %v4694 = vld [vmem:[#allocation2 + $0x128] sm:$0xff]
    %v4695 = vld [vmem:[#allocation2 + $0x138] sm:$0xff]
    %v4696 = vld [vmem:[#allocation2 + $0x140] sm:$0xff]
    %v4697 = vld [vmem:[#allocation2 + $0x150] sm:$0xff]
    %v4698 = vld [vmem:[#allocation2 + $0x158] sm:$0xff]
    %v4699 = vld [vmem:[#allocation2 + $0x168] sm:$0xff]
    %v4700 = vld [vmem:[#allocation2 + $0x170] sm:$0xff]
    %v4701 = vld [vmem:[#allocation2 + $0x1b0] sm:$0xff]
    %v4702 = vld [vmem:[#allocation2 + $0x1b8] sm:$0xff]
    %v4703 = vld [vmem:[#allocation2 + $0x1c8] sm:$0xff]
    %v4704 = vld [vmem:[#allocation2 + $0x1d0] sm:$0xff]
    %v4705 = vld [vmem:[#allocation2 + $0x1e0] sm:$0xff]
    %v4706 = vld [vmem:[#allocation2 + $0x1e8] sm:$0xff]
    %v4707 = vld [vmem:[#allocation2 + $0x1f8] sm:$0xff]
    %v4708 = vld [vmem:[#allocation2 + $0x200] sm:$0xff]
    %v4709 = vld [vmem:[#allocation2 + $0x210] sm:$0xff]
    %v4710 = vld [vmem:[#allocation2 + $0x218] sm:$0xff]
    %v4711 = vld [vmem:[#allocation2 + $0x228] sm:$0xff]
    %v4712 = vld [vmem:[#allocation2 + $0x230] sm:$0xff]
    %v4713 = vld [vmem:[#allocation2 + $0x240] sm:$0xff]
    %v4714 = vld [vmem:[#allocation2 + $0x248] sm:$0xff]
    %v4715 = vld [vmem:[#allocation2 + $0x258] sm:$0xff]
    %v4716 = vld [vmem:[#allocation2 + $0x260] sm:$0xff]
    %v4717 = vld [vmem:[#allocation2 + $0x270] sm:$0xff]
    %v4718 = vld [vmem:[#allocation2 + $0x278] sm:$0xff]
    %v4719 = vld [vmem:[#allocation2 + $0x288] sm:$0xff]
    %v4720 = vld [vmem:[#allocation2 + $0x290] sm:$0xff]
    %v4721 = vld [vmem:[#allocation2 + $0x2a0] sm:$0xff]
    %v4722 = vld [vmem:[#allocation2 + $0x2a8] sm:$0xff]
    %v4723 = vld [vmem:[#allocation2 + $0x2b8] sm:$0xff]
    %v4724 = vld [vmem:[#allocation2 + $0x2c0] sm:$0xff]
    %v4725 = vld [vmem:[#allocation2 + $0x2d0] sm:$0xff]
    %v4726 = vld [vmem:[#allocation2 + $0x2d8] sm:$0xff]
    %v4727 = vld [vmem:[#allocation2 + $0x2e8] sm:$0xff]
    %v4728 = vld [vmem:[#allocation2 + $0x2f0] sm:$0xff]
    %v4729 = vld [vmem:[#allocation2 + $0x300] sm:$0xff]
    %v4730 = vld [vmem:[#allocation2 + $0x308] sm:$0xff]
    %v4731 = vld [vmem:[#allocation2 + $0x318] sm:$0xff]
    %v4732 = vld [vmem:[#allocation2 + $0x320] sm:$0xff]
    %v4733 = vld [vmem:[#allocation4] sm:$0xff]
    %v4734 = vld [vmem:[#allocation4 + $0x8] sm:$0xff]
    %v4735 = vld [vmem:[#allocation4 + $0x10] sm:$0xff]
    %v4736 = vld [vmem:[#allocation4 + $0x18] sm:$0xff]
    %v4737 = vld [vmem:[#allocation4 + $0x20] sm:$0xff]
    %v4738 = vld [vmem:[#allocation4 + $0x28] sm:$0xff]
    %v4739 = vld [vmem:[#allocation4 + $0x30] sm:$0xff]
    %v4740 = vld [vmem:[#allocation4 + $0x38] sm:$0xff]
    %v4741 = vld [vmem:[#allocation4 + $0x40] sm:$0xff]
    %v4742 = vld [vmem:[#allocation4 + $0x48] sm:$0xff]
    %v4743 = vld [vmem:[#allocation4 + $0x50] sm:$0xff]
    %v4744 = vld [vmem:[#allocation4 + $0x58] sm:$0xff]
    %v4745 = vld [vmem:[#allocation4 + $0x60] sm:$0xff]
    %v4746 = vld [vmem:[#allocation4 + $0x68] sm:$0xff]
    %v4747 = vld [vmem:[#allocation4 + $0x70] sm:$0xff]
    %v4748 = vld [vmem:[#allocation4 + $0x78] sm:$0xff]
    %4749 = vmatpush.msra.mxu0 %v4748
    %4750 = vmatpush.msra.mxu0 %v4747
    %4751 = vmatpush.msra.mxu0 %v4746
    %4752 = vmatpush.msra.mxu0 %v4745
    %4753 = vmatpush.msra.mxu0 %v4744
    %4754 = vmatpush.msra.mxu0 %v4743
    %4755 = vmatpush.msra.mxu0 %v4742
    %4756 = vmatpush.msra.mxu0 %v4741
    %4757 = vmatpush.msra.mxu0 %v4740
    %4758 = vmatpush.msra.mxu0 %v4739
    %4759 = vmatpush.msra.mxu0 %v4738
    %4760 = vmatpush.msra.mxu0 %v4737
    %4761 = vmatpush.msra.mxu0 %v4736
    %4762 = vmatpush.msra.mxu0 %v4735
    %4763 = vmatpush.msra.mxu0 %v4734
    %4764 = vmatpush.msra.mxu0 %v4733
    %4765 = vmatmul.f32.gmra.mxu0 %v4669
    %v4766 = vpop.f32.mrf.mxu0
    %v4767 = vadd.f32 0.0, %v4766
    %4768 = vmatmul.f32.gmra.mxu0 %v4670
    %v4769 = vpop.f32.mrf.mxu0
    %v4770 = vadd.f32 0.0, %v4769
    %4771 = vmatmul.f32.gmra.mxu0 %v4671
    %v4772 = vpop.f32.mrf.mxu0
    %v4773 = vadd.f32 0.0, %v4772
    %4774 = vmatmul.f32.gmra.mxu0 %v4672
    %v4775 = vpop.f32.mrf.mxu0
    %v4776 = vadd.f32 0.0, %v4775
    %4777 = vmatmul.f32.gmra.mxu0 %v4673
    %v4778 = vpop.f32.mrf.mxu0
    %v4779 = vadd.f32 0.0, %v4778
    %4780 = vmatmul.f32.gmra.mxu0 %v4674
    %v4781 = vpop.f32.mrf.mxu0
    %v4782 = vadd.f32 0.0, %v4781
    %4783 = vmatmul.f32.gmra.mxu0 %v4675
    %v4784 = vpop.f32.mrf.mxu0
    %v4785 = vadd.f32 0.0, %v4784
    %4786 = vmatmul.f32.gmra.mxu0 %v4676
    %v4787 = vpop.f32.mrf.mxu0
    %v4788 = vadd.f32 0.0, %v4787
    %4789 = vmatmul.f32.gmra.mxu0 %v4677
    %v4790 = vpop.f32.mrf.mxu0
    %v4791 = vadd.f32 0.0, %v4790
    %4792 = vmatmul.f32.gmra.mxu0 %v4678
    %v4793 = vpop.f32.mrf.mxu0
    %v4794 = vadd.f32 0.0, %v4793
    %4795 = vmatmul.f32.gmra.mxu0 %v4679
    %v4796 = vpop.f32.mrf.mxu0
    %v4797 = vadd.f32 0.0, %v4796
    %4798 = vmatmul.f32.gmra.mxu0 %v4680
    %v4799 = vpop.f32.mrf.mxu0
    %v4800 = vadd.f32 0.0, %v4799
    %4801 = vmatmul.f32.gmra.mxu0 %v4681
    %v4802 = vpop.f32.mrf.mxu0
    %v4803 = vadd.f32 0.0, %v4802
    %4804 = vmatmul.f32.gmra.mxu0 %v4682
    %v4805 = vpop.f32.mrf.mxu0
    %v4806 = vadd.f32 0.0, %v4805
    %4807 = vmatmul.f32.gmra.mxu0 %v4683
    %v4808 = vpop.f32.mrf.mxu0
    %v4809 = vadd.f32 0.0, %v4808
    %4810 = vmatmul.f32.gmra.mxu0 %v4684
    %v4811 = vpop.f32.mrf.mxu0
    %v4812 = vadd.f32 0.0, %v4811
    %4813 = vmatmul.f32.gmra.mxu0 %v4685
    %v4814 = vpop.f32.mrf.mxu0
    %v4815 = vadd.f32 0.0, %v4814
    %4816 = vmatmul.f32.gmra.mxu0 %v4686
    %v4817 = vpop.f32.mrf.mxu0
    %v4818 = vadd.f32 0.0, %v4817
    %4819 = vmatmul.f32.gmra.mxu0 %v4687
    %v4820 = vpop.f32.mrf.mxu0
    %v4821 = vadd.f32 0.0, %v4820
    %4822 = vmatmul.f32.gmra.mxu0 %v4688
    %v4823 = vpop.f32.mrf.mxu0
    %v4824 = vadd.f32 0.0, %v4823
    %4825 = vmatmul.f32.gmra.mxu0 %v4689
    %v4826 = vpop.f32.mrf.mxu0
    %v4827 = vadd.f32 0.0, %v4826
    %4828 = vmatmul.f32.gmra.mxu0 %v4690
    %v4829 = vpop.f32.mrf.mxu0
    %v4830 = vadd.f32 0.0, %v4829
    %4831 = vmatmul.f32.gmra.mxu0 %v4691
    %v4832 = vpop.f32.mrf.mxu0
    %v4833 = vadd.f32 0.0, %v4832
    %4834 = vmatmul.f32.gmra.mxu0 %v4692
    %v4835 = vpop.f32.mrf.mxu0
    %v4836 = vadd.f32 0.0, %v4835
    %4837 = vmatmul.f32.gmra.mxu0 %v4693
    %v4838 = vpop.f32.mrf.mxu0
    %v4839 = vadd.f32 0.0, %v4838
    %4840 = vmatmul.f32.gmra.mxu0 %v4694
    %v4841 = vpop.f32.mrf.mxu0
    %v4842 = vadd.f32 0.0, %v4841
    %4843 = vmatmul.f32.gmra.mxu0 %v4695
    %v4844 = vpop.f32.mrf.mxu0
    %v4845 = vadd.f32 0.0, %v4844
    %4846 = vmatmul.f32.gmra.mxu0 %v4696
    %v4847 = vpop.f32.mrf.mxu0
    %v4848 = vadd.f32 0.0, %v4847
    %4849 = vmatmul.f32.gmra.mxu0 %v4697
    %v4850 = vpop.f32.mrf.mxu0
    %v4851 = vadd.f32 0.0, %v4850
    %4852 = vmatmul.f32.gmra.mxu0 %v4698
    %v4853 = vpop.f32.mrf.mxu0
    %v4854 = vadd.f32 0.0, %v4853
    %4855 = vmatmul.f32.gmra.mxu0 %v4699
    %v4856 = vpop.f32.mrf.mxu0
    %v4857 = vadd.f32 0.0, %v4856
    %4858 = vmatmul.f32.gmra.mxu0 %v4700
    %v4859 = vpop.f32.mrf.mxu0
    %v4860 = vadd.f32 0.0, %v4859
    %4861 = vmatmul.f32.gmra.mxu0 %v4701
    %v4862 = vpop.f32.mrf.mxu0
    %v4863 = vadd.f32 0.0, %v4862
    %4864 = vmatmul.f32.gmra.mxu0 %v4702
    %v4865 = vpop.f32.mrf.mxu0
    %v4866 = vadd.f32 0.0, %v4865
    %4867 = vmatmul.f32.gmra.mxu0 %v4703
    %v4868 = vpop.f32.mrf.mxu0
    %v4869 = vadd.f32 0.0, %v4868
    %4870 = vmatmul.f32.gmra.mxu0 %v4704
    %v4871 = vpop.f32.mrf.mxu0
    %v4872 = vadd.f32 0.0, %v4871
    %4873 = vmatmul.f32.gmra.mxu0 %v4705
    %v4874 = vpop.f32.mrf.mxu0
    %v4875 = vadd.f32 0.0, %v4874
    %4876 = vmatmul.f32.gmra.mxu0 %v4706
    %v4877 = vpop.f32.mrf.mxu0
    %v4878 = vadd.f32 0.0, %v4877
    %4879 = vmatmul.f32.gmra.mxu0 %v4707
    %v4880 = vpop.f32.mrf.mxu0
    %v4881 = vadd.f32 0.0, %v4880
    %4882 = vmatmul.f32.gmra.mxu0 %v4708
    %v4883 = vpop.f32.mrf.mxu0
    %v4884 = vadd.f32 0.0, %v4883
    %4885 = vmatmul.f32.gmra.mxu0 %v4709
    %v4886 = vpop.f32.mrf.mxu0
    %v4887 = vadd.f32 0.0, %v4886
    %4888 = vmatmul.f32.gmra.mxu0 %v4710
    %v4889 = vpop.f32.mrf.mxu0
    %v4890 = vadd.f32 0.0, %v4889
    %4891 = vmatmul.f32.gmra.mxu0 %v4711
    %v4892 = vpop.f32.mrf.mxu0
    %v4893 = vadd.f32 0.0, %v4892
    %4894 = vmatmul.f32.gmra.mxu0 %v4712
    %v4895 = vpop.f32.mrf.mxu0
    %v4896 = vadd.f32 0.0, %v4895
    %4897 = vmatmul.f32.gmra.mxu0 %v4713
    %v4898 = vpop.f32.mrf.mxu0
    %v4899 = vadd.f32 0.0, %v4898
    %4900 = vmatmul.f32.gmra.mxu0 %v4714
    %v4901 = vpop.f32.mrf.mxu0
    %v4902 = vadd.f32 0.0, %v4901
    %4903 = vmatmul.f32.gmra.mxu0 %v4715
    %v4904 = vpop.f32.mrf.mxu0
    %v4905 = vadd.f32 0.0, %v4904
    %4906 = vmatmul.f32.gmra.mxu0 %v4716
    %v4907 = vpop.f32.mrf.mxu0
    %v4908 = vadd.f32 0.0, %v4907
    %4909 = vmatmul.f32.gmra.mxu0 %v4717
    %v4910 = vpop.f32.mrf.mxu0
    %v4911 = vadd.f32 0.0, %v4910
    %4912 = vmatmul.f32.gmra.mxu0 %v4718
    %v4913 = vpop.f32.mrf.mxu0
    %v4914 = vadd.f32 0.0, %v4913
    %4915 = vmatmul.f32.gmra.mxu0 %v4719
    %v4916 = vpop.f32.mrf.mxu0
    %v4917 = vadd.f32 0.0, %v4916
    %4918 = vmatmul.f32.gmra.mxu0 %v4720
    %v4919 = vpop.f32.mrf.mxu0
    %v4920 = vadd.f32 0.0, %v4919
    %4921 = vmatmul.f32.gmra.mxu0 %v4721
    %v4922 = vpop.f32.mrf.mxu0
    %v4923 = vadd.f32 0.0, %v4922
    %4924 = vmatmul.f32.gmra.mxu0 %v4722
    %v4925 = vpop.f32.mrf.mxu0
    %v4926 = vadd.f32 0.0, %v4925
    %4927 = vmatmul.f32.gmra.mxu0 %v4723
    %v4928 = vpop.f32.mrf.mxu0
    %v4929 = vadd.f32 0.0, %v4928
    %4930 = vmatmul.f32.gmra.mxu0 %v4724
    %v4931 = vpop.f32.mrf.mxu0
    %v4932 = vadd.f32 0.0, %v4931
    %4933 = vmatmul.f32.gmra.mxu0 %v4725
    %v4934 = vpop.f32.mrf.mxu0
    %v4935 = vadd.f32 0.0, %v4934
    %4936 = vmatmul.f32.gmra.mxu0 %v4726
    %v4937 = vpop.f32.mrf.mxu0
    %v4938 = vadd.f32 0.0, %v4937
    %4939 = vmatmul.f32.gmra.mxu0 %v4727
    %v4940 = vpop.f32.mrf.mxu0
    %v4941 = vadd.f32 0.0, %v4940
    %4942 = vmatmul.f32.gmra.mxu0 %v4728
    %v4943 = vpop.f32.mrf.mxu0
    %v4944 = vadd.f32 0.0, %v4943
    %4945 = vmatmul.f32.gmra.mxu0 %v4729
    %v4946 = vpop.f32.mrf.mxu0
    %v4947 = vadd.f32 0.0, %v4946
    %4948 = vmatmul.f32.gmra.mxu0 %v4730
    %v4949 = vpop.f32.mrf.mxu0
    %v4950 = vadd.f32 0.0, %v4949
    %4951 = vmatmul.f32.gmra.mxu0 %v4731
    %v4952 = vpop.f32.mrf.mxu0
    %v4953 = vadd.f32 0.0, %v4952
    %4954 = vmatmul.f32.gmra.mxu0 %v4732
    %v4955 = vpop.f32.mrf.mxu0
    %v4956 = vadd.f32 0.0, %v4955
    %4957 = vdwg.mxu0
    %4958 = vst [vmem:[#allocation3] sm:$0xff] %v4767
    %4959 = vst [vmem:[#allocation3 + $0x8] sm:$0xff] %v4770
    %4960 = vst [vmem:[#allocation3 + $0x10] sm:$0xff] %v4773
    %4961 = vst [vmem:[#allocation3 + $0x18] sm:$0xff] %v4776
    %4962 = vst [vmem:[#allocation3 + $0x20] sm:$0xff] %v4779
    %4963 = vst [vmem:[#allocation3 + $0x28] sm:$0xff] %v4782
    %4964 = vst [vmem:[#allocation3 + $0x30] sm:$0xff] %v4785
    %4965 = vst [vmem:[#allocation3 + $0x38] sm:$0xff] %v4788
    %4966 = vst [vmem:[#allocation3 + $0x40] sm:$0xff] %v4791
    %4967 = vst [vmem:[#allocation3 + $0x48] sm:$0xff] %v4794
    %4968 = vst [vmem:[#allocation3 + $0x50] sm:$0xff] %v4797
    %4969 = vst [vmem:[#allocation3 + $0x58] sm:$0xff] %v4800
    %4970 = vst [vmem:[#allocation3 + $0x60] sm:$0xff] %v4803
    %4971 = vst [vmem:[#allocation3 + $0x68] sm:$0xff] %v4806
    %4972 = vst [vmem:[#allocation3 + $0x70] sm:$0xff] %v4809
    %4973 = vst [vmem:[#allocation3 + $0x78] sm:$0xff] %v4812
    %4974 = vst [vmem:[#allocation3 + $0x80] sm:$0xff] %v4815
    %4975 = vst [vmem:[#allocation3 + $0x88] sm:$0xff] %v4818
    %4976 = vst [vmem:[#allocation3 + $0x90] sm:$0xff] %v4821
    %4977 = vst [vmem:[#allocation3 + $0x98] sm:$0xff] %v4824
    %4978 = vst [vmem:[#allocation3 + $0xa0] sm:$0xff] %v4827
    %4979 = vst [vmem:[#allocation3 + $0xa8] sm:$0xff] %v4830
    %4980 = vst [vmem:[#allocation3 + $0xb0] sm:$0xff] %v4833
    %4981 = vst [vmem:[#allocation3 + $0xb8] sm:$0xff] %v4836
    %4982 = vst [vmem:[#allocation3 + $0xc0] sm:$0xff] %v4839
    %4983 = vst [vmem:[#allocation3 + $0xc8] sm:$0xff] %v4842
    %4984 = vst [vmem:[#allocation3 + $0xd0] sm:$0xff] %v4845
    %4985 = vst [vmem:[#allocation3 + $0xd8] sm:$0xff] %v4848
    %4986 = vst [vmem:[#allocation3 + $0xe0] sm:$0xff] %v4851
    %4987 = vst [vmem:[#allocation3 + $0xe8] sm:$0xff] %v4854
    %4988 = vst [vmem:[#allocation3 + $0xf0] sm:$0xff] %v4857
    %4989 = vst [vmem:[#allocation3 + $0xf8] sm:$0xff] %v4860
    %4990 = vst [vmem:[#allocation3 + $0x100] sm:$0xff] %v4863
    %4991 = vst [vmem:[#allocation3 + $0x108] sm:$0xff] %v4866
    %4992 = vst [vmem:[#allocation3 + $0x110] sm:$0xff] %v4869
    %4993 = vst [vmem:[#allocation3 + $0x118] sm:$0xff] %v4872
    %4994 = vst [vmem:[#allocation3 + $0x120] sm:$0xff] %v4875
    %4995 = vst [vmem:[#allocation3 + $0x128] sm:$0xff] %v4878
    %4996 = vst [vmem:[#allocation3 + $0x130] sm:$0xff] %v4881
    %4997 = vst [vmem:[#allocation3 + $0x138] sm:$0xff] %v4884
    %4998 = vst [vmem:[#allocation3 + $0x140] sm:$0xff] %v4887
    %4999 = vst [vmem:[#allocation3 + $0x148] sm:$0xff] %v4890
    %5000 = vst [vmem:[#allocation3 + $0x150] sm:$0xff] %v4893
    %5001 = vst [vmem:[#allocation3 + $0x158] sm:$0xff] %v4896
    %5002 = vst [vmem:[#allocation3 + $0x160] sm:$0xff] %v4899
    %5003 = vst [vmem:[#allocation3 + $0x168] sm:$0xff] %v4902
    %5004 = vst [vmem:[#allocation3 + $0x170] sm:$0xff] %v4905
    %5005 = vst [vmem:[#allocation3 + $0x178] sm:$0xff] %v4908
    %5006 = vst [vmem:[#allocation3 + $0x180] sm:$0xff] %v4911
    %5007 = vst [vmem:[#allocation3 + $0x188] sm:$0xff] %v4914
    %5008 = vst [vmem:[#allocation3 + $0x190] sm:$0xff] %v4917
    %5009 = vst [vmem:[#allocation3 + $0x198] sm:$0xff] %v4920
    %5010 = vst [vmem:[#allocation3 + $0x1a0] sm:$0xff] %v4923
    %5011 = vst [vmem:[#allocation3 + $0x1a8] sm:$0xff] %v4926
    %5012 = vst [vmem:[#allocation3 + $0x1b0] sm:$0xff] %v4929
    %5013 = vst [vmem:[#allocation3 + $0x1b8] sm:$0xff] %v4932
    %5014 = vst [vmem:[#allocation3 + $0x1c0] sm:$0xff] %v4935
    %5015 = vst [vmem:[#allocation3 + $0x1c8] sm:$0xff] %v4938
    %5016 = vst [vmem:[#allocation3 + $0x1d0] sm:$0xff] %v4941
    %5017 = vst [vmem:[#allocation3 + $0x1d8] sm:$0xff] %v4944
    %5018 = vst [vmem:[#allocation3 + $0x1e0] sm:$0xff] %v4947
    %5019 = vst [vmem:[#allocation3 + $0x1e8] sm:$0xff] %v4950
    %5020 = vst [vmem:[#allocation3 + $0x1f0] sm:$0xff] %v4953
    %5021 = vst [vmem:[#allocation3 + $0x1f8] sm:$0xff] %v4956
    %v5022 = vld [vmem:[#allocation2 + $0x1] sm:$0xff]
    %v5023 = vld [vmem:[#allocation2 + $0x9] sm:$0xff]
    %v5024 = vld [vmem:[#allocation2 + $0x19] sm:$0xff]
    %v5025 = vld [vmem:[#allocation2 + $0x21] sm:$0xff]
    %v5026 = vld [vmem:[#allocation2 + $0x31] sm:$0xff]
    %v5027 = vld [vmem:[#allocation2 + $0x39] sm:$0xff]
    %v5028 = vld [vmem:[#allocation2 + $0x49] sm:$0xff]
    %v5029 = vld [vmem:[#allocation2 + $0x51] sm:$0xff]
    %v5030 = vld [vmem:[#allocation2 + $0x61] sm:$0xff]
    %v5031 = vld [vmem:[#allocation2 + $0x69] sm:$0xff]
    %v5032 = vld [vmem:[#allocation2 + $0x79] sm:$0xff]
    %v5033 = vld [vmem:[#allocation2 + $0x81] sm:$0xff]
    %v5034 = vld [vmem:[#allocation2 + $0x91] sm:$0xff]
    %v5035 = vld [vmem:[#allocation2 + $0x99] sm:$0xff]
    %v5036 = vld [vmem:[#allocation2 + $0xa9] sm:$0xff]
    %v5037 = vld [vmem:[#allocation2 + $0xb1] sm:$0xff]
    %v5038 = vld [vmem:[#allocation2 + $0xc1] sm:$0xff]
    %v5039 = vld [vmem:[#allocation2 + $0xc9] sm:$0xff]
    %v5040 = vld [vmem:[#allocation2 + $0xd9] sm:$0xff]
    %v5041 = vld [vmem:[#allocation2 + $0xe1] sm:$0xff]
    %v5042 = vld [vmem:[#allocation2 + $0xf1] sm:$0xff]
    %v5043 = vld [vmem:[#allocation2 + $0xf9] sm:$0xff]
    %v5044 = vld [vmem:[#allocation2 + $0x109] sm:$0xff]
    %v5045 = vld [vmem:[#allocation2 + $0x111] sm:$0xff]
    %v5046 = vld [vmem:[#allocation2 + $0x121] sm:$0xff]
    %v5047 = vld [vmem:[#allocation2 + $0x129] sm:$0xff]
    %v5048 = vld [vmem:[#allocation2 + $0x139] sm:$0xff]
    %v5049 = vld [vmem:[#allocation2 + $0x141] sm:$0xff]
    %v5050 = vld [vmem:[#allocation2 + $0x151] sm:$0xff]
    %v5051 = vld [vmem:[#allocation2 + $0x159] sm:$0xff]
    %v5052 = vld [vmem:[#allocation2 + $0x169] sm:$0xff]
    %v5053 = vld [vmem:[#allocation2 + $0x171] sm:$0xff]
    %v5054 = vld [vmem:[#allocation2 + $0x1b1] sm:$0xff]
    %v5055 = vld [vmem:[#allocation2 + $0x1b9] sm:$0xff]
    %v5056 = vld [vmem:[#allocation2 + $0x1c9] sm:$0xff]
    %v5057 = vld [vmem:[#allocation2 + $0x1d1] sm:$0xff]
    %v5058 = vld [vmem:[#allocation2 + $0x1e1] sm:$0xff]
    %v5059 = vld [vmem:[#allocation2 + $0x1e9] sm:$0xff]
    %v5060 = vld [vmem:[#allocation2 + $0x1f9] sm:$0xff]
    %v5061 = vld [vmem:[#allocation2 + $0x201] sm:$0xff]
    %v5062 = vld [vmem:[#allocation2 + $0x211] sm:$0xff]
    %v5063 = vld [vmem:[#allocation2 + $0x219] sm:$0xff]
    %v5064 = vld [vmem:[#allocation2 + $0x229] sm:$0xff]
    %v5065 = vld [vmem:[#allocation2 + $0x231] sm:$0xff]
    %v5066 = vld [vmem:[#allocation2 + $0x241] sm:$0xff]
    %v5067 = vld [vmem:[#allocation2 + $0x249] sm:$0xff]
    %v5068 = vld [vmem:[#allocation2 + $0x259] sm:$0xff]
    %v5069 = vld [vmem:[#allocation2 + $0x261] sm:$0xff]
    %v5070 = vld [vmem:[#allocation2 + $0x271] sm:$0xff]
    %v5071 = vld [vmem:[#allocation2 + $0x279] sm:$0xff]
    %v5072 = vld [vmem:[#allocation2 + $0x289] sm:$0xff]
    %v5073 = vld [vmem:[#allocation2 + $0x291] sm:$0xff]
    %v5074 = vld [vmem:[#allocation2 + $0x2a1] sm:$0xff]
    %v5075 = vld [vmem:[#allocation2 + $0x2a9] sm:$0xff]
    %v5076 = vld [vmem:[#allocation2 + $0x2b9] sm:$0xff]
    %v5077 = vld [vmem:[#allocation2 + $0x2c1] sm:$0xff]
    %v5078 = vld [vmem:[#allocation2 + $0x2d1] sm:$0xff]
    %v5079 = vld [vmem:[#allocation2 + $0x2d9] sm:$0xff]
    %v5080 = vld [vmem:[#allocation2 + $0x2e9] sm:$0xff]
    %v5081 = vld [vmem:[#allocation2 + $0x2f1] sm:$0xff]
    %v5082 = vld [vmem:[#allocation2 + $0x301] sm:$0xff]
    %v5083 = vld [vmem:[#allocation2 + $0x309] sm:$0xff]
    %v5084 = vld [vmem:[#allocation2 + $0x319] sm:$0xff]
    %v5085 = vld [vmem:[#allocation2 + $0x321] sm:$0xff]
    %s5086 = scalar_lea.vmem [#allocation4], 128
    %v5087 = vld [vmem:[%s5086] sm:$0xff]
    %v5088 = vld [vmem:[%s5086 + $0x8] sm:$0xff]
    %v5089 = vld [vmem:[%s5086 + $0x10] sm:$0xff]
    %v5090 = vld [vmem:[%s5086 + $0x18] sm:$0xff]
    %v5091 = vld [vmem:[%s5086 + $0x20] sm:$0xff]
    %v5092 = vld [vmem:[%s5086 + $0x28] sm:$0xff]
    %v5093 = vld [vmem:[%s5086 + $0x30] sm:$0xff]
    %v5094 = vld [vmem:[%s5086 + $0x38] sm:$0xff]
    %v5095 = vld [vmem:[%s5086 + $0x40] sm:$0xff]
    %v5096 = vld [vmem:[%s5086 + $0x48] sm:$0xff]
    %v5097 = vld [vmem:[%s5086 + $0x50] sm:$0xff]
    %v5098 = vld [vmem:[%s5086 + $0x58] sm:$0xff]
    %v5099 = vld [vmem:[%s5086 + $0x60] sm:$0xff]
    %v5100 = vld [vmem:[%s5086 + $0x68] sm:$0xff]
    %v5101 = vld [vmem:[%s5086 + $0x70] sm:$0xff]
    %v5102 = vld [vmem:[%s5086 + $0x78] sm:$0xff]
    %5103 = vmatpush.msra.mxu0 %v5102
    %5104 = vmatpush.msra.mxu0 %v5101
    %5105 = vmatpush.msra.mxu0 %v5100
    %5106 = vmatpush.msra.mxu0 %v5099
    %5107 = vmatpush.msra.mxu0 %v5098
    %5108 = vmatpush.msra.mxu0 %v5097
    %5109 = vmatpush.msra.mxu0 %v5096
    %5110 = vmatpush.msra.mxu0 %v5095
    %5111 = vmatpush.msra.mxu0 %v5094
    %5112 = vmatpush.msra.mxu0 %v5093
    %5113 = vmatpush.msra.mxu0 %v5092
    %5114 = vmatpush.msra.mxu0 %v5091
    %5115 = vmatpush.msra.mxu0 %v5090
    %5116 = vmatpush.msra.mxu0 %v5089
    %5117 = vmatpush.msra.mxu0 %v5088
    %5118 = vmatpush.msra.mxu0 %v5087
    %5119 = vmatmul.f32.gmra.mxu0 %v5022
    %v5120 = vpop.f32.mrf.mxu0
    %v5121 = vadd.f32 0.0, %v5120
    %5122 = vmatmul.f32.gmra.mxu0 %v5023
    %v5123 = vpop.f32.mrf.mxu0
    %v5124 = vadd.f32 0.0, %v5123
    %5125 = vmatmul.f32.gmra.mxu0 %v5024
    %v5126 = vpop.f32.mrf.mxu0
    %v5127 = vadd.f32 0.0, %v5126
    %5128 = vmatmul.f32.gmra.mxu0 %v5025
    %v5129 = vpop.f32.mrf.mxu0
    %v5130 = vadd.f32 0.0, %v5129
    %5131 = vmatmul.f32.gmra.mxu0 %v5026
    %v5132 = vpop.f32.mrf.mxu0
    %v5133 = vadd.f32 0.0, %v5132
    %5134 = vmatmul.f32.gmra.mxu0 %v5027
    %v5135 = vpop.f32.mrf.mxu0
    %v5136 = vadd.f32 0.0, %v5135
    %5137 = vmatmul.f32.gmra.mxu0 %v5028
    %v5138 = vpop.f32.mrf.mxu0
    %v5139 = vadd.f32 0.0, %v5138
    %5140 = vmatmul.f32.gmra.mxu0 %v5029
    %v5141 = vpop.f32.mrf.mxu0
    %v5142 = vadd.f32 0.0, %v5141
    %5143 = vmatmul.f32.gmra.mxu0 %v5030
    %v5144 = vpop.f32.mrf.mxu0
    %v5145 = vadd.f32 0.0, %v5144
    %5146 = vmatmul.f32.gmra.mxu0 %v5031
    %v5147 = vpop.f32.mrf.mxu0
    %v5148 = vadd.f32 0.0, %v5147
    %5149 = vmatmul.f32.gmra.mxu0 %v5032
    %v5150 = vpop.f32.mrf.mxu0
    %v5151 = vadd.f32 0.0, %v5150
    %5152 = vmatmul.f32.gmra.mxu0 %v5033
    %v5153 = vpop.f32.mrf.mxu0
    %v5154 = vadd.f32 0.0, %v5153
    %5155 = vmatmul.f32.gmra.mxu0 %v5034
    %v5156 = vpop.f32.mrf.mxu0
    %v5157 = vadd.f32 0.0, %v5156
    %5158 = vmatmul.f32.gmra.mxu0 %v5035
    %v5159 = vpop.f32.mrf.mxu0
    %v5160 = vadd.f32 0.0, %v5159
    %5161 = vmatmul.f32.gmra.mxu0 %v5036
    %v5162 = vpop.f32.mrf.mxu0
    %v5163 = vadd.f32 0.0, %v5162
    %5164 = vmatmul.f32.gmra.mxu0 %v5037
    %v5165 = vpop.f32.mrf.mxu0
    %v5166 = vadd.f32 0.0, %v5165
    %5167 = vmatmul.f32.gmra.mxu0 %v5038
    %v5168 = vpop.f32.mrf.mxu0
    %v5169 = vadd.f32 0.0, %v5168
    %5170 = vmatmul.f32.gmra.mxu0 %v5039
    %v5171 = vpop.f32.mrf.mxu0
    %v5172 = vadd.f32 0.0, %v5171
    %5173 = vmatmul.f32.gmra.mxu0 %v5040
    %v5174 = vpop.f32.mrf.mxu0
    %v5175 = vadd.f32 0.0, %v5174
    %5176 = vmatmul.f32.gmra.mxu0 %v5041
    %v5177 = vpop.f32.mrf.mxu0
    %v5178 = vadd.f32 0.0, %v5177
    %5179 = vmatmul.f32.gmra.mxu0 %v5042
    %v5180 = vpop.f32.mrf.mxu0
    %v5181 = vadd.f32 0.0, %v5180
    %5182 = vmatmul.f32.gmra.mxu0 %v5043
    %v5183 = vpop.f32.mrf.mxu0
    %v5184 = vadd.f32 0.0, %v5183
    %5185 = vmatmul.f32.gmra.mxu0 %v5044
    %v5186 = vpop.f32.mrf.mxu0
    %v5187 = vadd.f32 0.0, %v5186
    %5188 = vmatmul.f32.gmra.mxu0 %v5045
    %v5189 = vpop.f32.mrf.mxu0
    %v5190 = vadd.f32 0.0, %v5189
    %5191 = vmatmul.f32.gmra.mxu0 %v5046
    %v5192 = vpop.f32.mrf.mxu0
    %v5193 = vadd.f32 0.0, %v5192
    %5194 = vmatmul.f32.gmra.mxu0 %v5047
    %v5195 = vpop.f32.mrf.mxu0
    %v5196 = vadd.f32 0.0, %v5195
    %5197 = vmatmul.f32.gmra.mxu0 %v5048
    %v5198 = vpop.f32.mrf.mxu0
    %v5199 = vadd.f32 0.0, %v5198
    %5200 = vmatmul.f32.gmra.mxu0 %v5049
    %v5201 = vpop.f32.mrf.mxu0
    %v5202 = vadd.f32 0.0, %v5201
    %5203 = vmatmul.f32.gmra.mxu0 %v5050
    %v5204 = vpop.f32.mrf.mxu0
    %v5205 = vadd.f32 0.0, %v5204
    %5206 = vmatmul.f32.gmra.mxu0 %v5051
    %v5207 = vpop.f32.mrf.mxu0
    %v5208 = vadd.f32 0.0, %v5207
    %5209 = vmatmul.f32.gmra.mxu0 %v5052
    %v5210 = vpop.f32.mrf.mxu0
    %v5211 = vadd.f32 0.0, %v5210
    %5212 = vmatmul.f32.gmra.mxu0 %v5053
    %v5213 = vpop.f32.mrf.mxu0
    %v5214 = vadd.f32 0.0, %v5213
    %5215 = vmatmul.f32.gmra.mxu0 %v5054
    %v5216 = vpop.f32.mrf.mxu0
    %v5217 = vadd.f32 0.0, %v5216
    %5218 = vmatmul.f32.gmra.mxu0 %v5055
    %v5219 = vpop.f32.mrf.mxu0
    %v5220 = vadd.f32 0.0, %v5219
    %5221 = vmatmul.f32.gmra.mxu0 %v5056
    %v5222 = vpop.f32.mrf.mxu0
    %v5223 = vadd.f32 0.0, %v5222
    %5224 = vmatmul.f32.gmra.mxu0 %v5057
    %v5225 = vpop.f32.mrf.mxu0
    %v5226 = vadd.f32 0.0, %v5225
    %5227 = vmatmul.f32.gmra.mxu0 %v5058
    %v5228 = vpop.f32.mrf.mxu0
    %v5229 = vadd.f32 0.0, %v5228
    %5230 = vmatmul.f32.gmra.mxu0 %v5059
    %v5231 = vpop.f32.mrf.mxu0
    %v5232 = vadd.f32 0.0, %v5231
    %5233 = vmatmul.f32.gmra.mxu0 %v5060
    %v5234 = vpop.f32.mrf.mxu0
    %v5235 = vadd.f32 0.0, %v5234
    %5236 = vmatmul.f32.gmra.mxu0 %v5061
    %v5237 = vpop.f32.mrf.mxu0
    %v5238 = vadd.f32 0.0, %v5237
    %5239 = vmatmul.f32.gmra.mxu0 %v5062
    %v5240 = vpop.f32.mrf.mxu0
    %v5241 = vadd.f32 0.0, %v5240
    %5242 = vmatmul.f32.gmra.mxu0 %v5063
    %v5243 = vpop.f32.mrf.mxu0
    %v5244 = vadd.f32 0.0, %v5243
    %5245 = vmatmul.f32.gmra.mxu0 %v5064
    %v5246 = vpop.f32.mrf.mxu0
    %v5247 = vadd.f32 0.0, %v5246
    %5248 = vmatmul.f32.gmra.mxu0 %v5065
    %v5249 = vpop.f32.mrf.mxu0
    %v5250 = vadd.f32 0.0, %v5249
    %5251 = vmatmul.f32.gmra.mxu0 %v5066
    %v5252 = vpop.f32.mrf.mxu0
    %v5253 = vadd.f32 0.0, %v5252
    %5254 = vmatmul.f32.gmra.mxu0 %v5067
    %v5255 = vpop.f32.mrf.mxu0
    %v5256 = vadd.f32 0.0, %v5255
    %5257 = vmatmul.f32.gmra.mxu0 %v5068
    %v5258 = vpop.f32.mrf.mxu0
    %v5259 = vadd.f32 0.0, %v5258
    %5260 = vmatmul.f32.gmra.mxu0 %v5069
    %v5261 = vpop.f32.mrf.mxu0
    %v5262 = vadd.f32 0.0, %v5261
    %5263 = vmatmul.f32.gmra.mxu0 %v5070
    %v5264 = vpop.f32.mrf.mxu0
    %v5265 = vadd.f32 0.0, %v5264
    %5266 = vmatmul.f32.gmra.mxu0 %v5071
    %v5267 = vpop.f32.mrf.mxu0
    %v5268 = vadd.f32 0.0, %v5267
    %5269 = vmatmul.f32.gmra.mxu0 %v5072
    %v5270 = vpop.f32.mrf.mxu0
    %v5271 = vadd.f32 0.0, %v5270
    %5272 = vmatmul.f32.gmra.mxu0 %v5073
    %v5273 = vpop.f32.mrf.mxu0
    %v5274 = vadd.f32 0.0, %v5273
    %5275 = vmatmul.f32.gmra.mxu0 %v5074
    %v5276 = vpop.f32.mrf.mxu0
    %v5277 = vadd.f32 0.0, %v5276
    %5278 = vmatmul.f32.gmra.mxu0 %v5075
    %v5279 = vpop.f32.mrf.mxu0
    %v5280 = vadd.f32 0.0, %v5279
    %5281 = vmatmul.f32.gmra.mxu0 %v5076
    %v5282 = vpop.f32.mrf.mxu0
    %v5283 = vadd.f32 0.0, %v5282
    %5284 = vmatmul.f32.gmra.mxu0 %v5077
    %v5285 = vpop.f32.mrf.mxu0
    %v5286 = vadd.f32 0.0, %v5285
    %5287 = vmatmul.f32.gmra.mxu0 %v5078
    %v5288 = vpop.f32.mrf.mxu0
    %v5289 = vadd.f32 0.0, %v5288
    %5290 = vmatmul.f32.gmra.mxu0 %v5079
    %v5291 = vpop.f32.mrf.mxu0
    %v5292 = vadd.f32 0.0, %v5291
    %5293 = vmatmul.f32.gmra.mxu0 %v5080
    %v5294 = vpop.f32.mrf.mxu0
    %v5295 = vadd.f32 0.0, %v5294
    %5296 = vmatmul.f32.gmra.mxu0 %v5081
    %v5297 = vpop.f32.mrf.mxu0
    %v5298 = vadd.f32 0.0, %v5297
    %5299 = vmatmul.f32.gmra.mxu0 %v5082
    %v5300 = vpop.f32.mrf.mxu0
    %v5301 = vadd.f32 0.0, %v5300
    %5302 = vmatmul.f32.gmra.mxu0 %v5083
    %v5303 = vpop.f32.mrf.mxu0
    %v5304 = vadd.f32 0.0, %v5303
    %5305 = vmatmul.f32.gmra.mxu0 %v5084
    %v5306 = vpop.f32.mrf.mxu0
    %v5307 = vadd.f32 0.0, %v5306
    %5308 = vmatmul.f32.gmra.mxu0 %v5085
    %v5309 = vpop.f32.mrf.mxu0
    %v5310 = vadd.f32 0.0, %v5309
    %5311 = vdwg.mxu0
    %v5312 = vld [vmem:[#allocation3] sm:$0xff]
    %v5313 = vld [vmem:[#allocation3 + $0x8] sm:$0xff]
    %v5314 = vld [vmem:[#allocation3 + $0x10] sm:$0xff]
    %v5315 = vld [vmem:[#allocation3 + $0x18] sm:$0xff]
    %v5316 = vld [vmem:[#allocation3 + $0x20] sm:$0xff]
    %v5317 = vld [vmem:[#allocation3 + $0x28] sm:$0xff]
    %v5318 = vld [vmem:[#allocation3 + $0x30] sm:$0xff]
    %v5319 = vld [vmem:[#allocation3 + $0x38] sm:$0xff]
    %v5320 = vld [vmem:[#allocation3 + $0x40] sm:$0xff]
    %v5321 = vld [vmem:[#allocation3 + $0x48] sm:$0xff]
    %v5322 = vld [vmem:[#allocation3 + $0x50] sm:$0xff]
    %v5323 = vld [vmem:[#allocation3 + $0x58] sm:$0xff]
    %v5324 = vld [vmem:[#allocation3 + $0x60] sm:$0xff]
    %v5325 = vld [vmem:[#allocation3 + $0x68] sm:$0xff]
    %v5326 = vld [vmem:[#allocation3 + $0x70] sm:$0xff]
    %v5327 = vld [vmem:[#allocation3 + $0x78] sm:$0xff]
    %v5328 = vld [vmem:[#allocation3 + $0x80] sm:$0xff]
    %v5329 = vld [vmem:[#allocation3 + $0x88] sm:$0xff]
    %v5330 = vld [vmem:[#allocation3 + $0x90] sm:$0xff]
    %v5331 = vld [vmem:[#allocation3 + $0x98] sm:$0xff]
    %v5332 = vld [vmem:[#allocation3 + $0xa0] sm:$0xff]
    %v5333 = vld [vmem:[#allocation3 + $0xa8] sm:$0xff]
    %v5334 = vld [vmem:[#allocation3 + $0xb0] sm:$0xff]
    %v5335 = vld [vmem:[#allocation3 + $0xb8] sm:$0xff]
    %v5336 = vld [vmem:[#allocation3 + $0xc0] sm:$0xff]
    %v5337 = vld [vmem:[#allocation3 + $0xc8] sm:$0xff]
    %v5338 = vld [vmem:[#allocation3 + $0xd0] sm:$0xff]
    %v5339 = vld [vmem:[#allocation3 + $0xd8] sm:$0xff]
    %v5340 = vld [vmem:[#allocation3 + $0xe0] sm:$0xff]
    %v5341 = vld [vmem:[#allocation3 + $0xe8] sm:$0xff]
    %v5342 = vld [vmem:[#allocation3 + $0xf0] sm:$0xff]
    %v5343 = vld [vmem:[#allocation3 + $0xf8] sm:$0xff]
    %v5344 = vld [vmem:[#allocation3 + $0x100] sm:$0xff]
    %v5345 = vld [vmem:[#allocation3 + $0x108] sm:$0xff]
    %v5346 = vld [vmem:[#allocation3 + $0x110] sm:$0xff]
    %v5347 = vld [vmem:[#allocation3 + $0x118] sm:$0xff]
    %v5348 = vld [vmem:[#allocation3 + $0x120] sm:$0xff]
    %v5349 = vld [vmem:[#allocation3 + $0x128] sm:$0xff]
    %v5350 = vld [vmem:[#allocation3 + $0x130] sm:$0xff]
    %v5351 = vld [vmem:[#allocation3 + $0x138] sm:$0xff]
    %v5352 = vld [vmem:[#allocation3 + $0x140] sm:$0xff]
    %v5353 = vld [vmem:[#allocation3 + $0x148] sm:$0xff]
    %v5354 = vld [vmem:[#allocation3 + $0x150] sm:$0xff]
    %v5355 = vld [vmem:[#allocation3 + $0x158] sm:$0xff]
    %v5356 = vld [vmem:[#allocation3 + $0x160] sm:$0xff]
    %v5357 = vld [vmem:[#allocation3 + $0x168] sm:$0xff]
    %v5358 = vld [vmem:[#allocation3 + $0x170] sm:$0xff]
    %v5359 = vld [vmem:[#allocation3 + $0x178] sm:$0xff]
    %v5360 = vld [vmem:[#allocation3 + $0x180] sm:$0xff]
    %v5361 = vld [vmem:[#allocation3 + $0x188] sm:$0xff]
    %v5362 = vld [vmem:[#allocation3 + $0x190] sm:$0xff]
    %v5363 = vld [vmem:[#allocation3 + $0x198] sm:$0xff]
    %v5364 = vld [vmem:[#allocation3 + $0x1a0] sm:$0xff]
    %v5365 = vld [vmem:[#allocation3 + $0x1a8] sm:$0xff]
    %v5366 = vld [vmem:[#allocation3 + $0x1b0] sm:$0xff]
    %v5367 = vld [vmem:[#allocation3 + $0x1b8] sm:$0xff]
    %v5368 = vld [vmem:[#allocation3 + $0x1c0] sm:$0xff]
    %v5369 = vld [vmem:[#allocation3 + $0x1c8] sm:$0xff]
    %v5370 = vld [vmem:[#allocation3 + $0x1d0] sm:$0xff]
    %v5371 = vld [vmem:[#allocation3 + $0x1d8] sm:$0xff]
    %v5372 = vld [vmem:[#allocation3 + $0x1e0] sm:$0xff]
    %v5373 = vld [vmem:[#allocation3 + $0x1e8] sm:$0xff]
    %v5374 = vld [vmem:[#allocation3 + $0x1f0] sm:$0xff]
    %v5375 = vld [vmem:[#allocation3 + $0x1f8] sm:$0xff]
    %v5376 = vadd.f32 %v5312, %v5121
    %v5377 = vadd.f32 %v5313, %v5124
    %v5378 = vadd.f32 %v5314, %v5127
    %v5379 = vadd.f32 %v5315, %v5130
    %v5380 = vadd.f32 %v5316, %v5133
    %v5381 = vadd.f32 %v5317, %v5136
    %v5382 = vadd.f32 %v5318, %v5139
    %v5383 = vadd.f32 %v5319, %v5142
    %v5384 = vadd.f32 %v5320, %v5145
    %v5385 = vadd.f32 %v5321, %v5148
    %v5386 = vadd.f32 %v5322, %v5151
    %v5387 = vadd.f32 %v5323, %v5154
    %v5388 = vadd.f32 %v5324, %v5157
    %v5389 = vadd.f32 %v5325, %v5160
    %v5390 = vadd.f32 %v5326, %v5163
    %v5391 = vadd.f32 %v5327, %v5166
    %v5392 = vadd.f32 %v5328, %v5169
    %v5393 = vadd.f32 %v5329, %v5172
    %v5394 = vadd.f32 %v5330, %v5175
    %v5395 = vadd.f32 %v5331, %v5178
    %v5396 = vadd.f32 %v5332, %v5181
    %v5397 = vadd.f32 %v5333, %v5184
    %v5398 = vadd.f32 %v5334, %v5187
    %v5399 = vadd.f32 %v5335, %v5190
    %v5400 = vadd.f32 %v5336, %v5193
    %v5401 = vadd.f32 %v5337, %v5196
    %v5402 = vadd.f32 %v5338, %v5199
    %v5403 = vadd.f32 %v5339, %v5202
    %v5404 = vadd.f32 %v5340, %v5205
    %v5405 = vadd.f32 %v5341, %v5208
    %v5406 = vadd.f32 %v5342, %v5211
    %v5407 = vadd.f32 %v5343, %v5214
    %v5408 = vadd.f32 %v5344, %v5217
    %v5409 = vadd.f32 %v5345, %v5220
    %v5410 = vadd.f32 %v5346, %v5223
    %v5411 = vadd.f32 %v5347, %v5226
    %v5412 = vadd.f32 %v5348, %v5229
    %v5413 = vadd.f32 %v5349, %v5232
    %v5414 = vadd.f32 %v5350, %v5235
    %v5415 = vadd.f32 %v5351, %v5238
    %v5416 = vadd.f32 %v5352, %v5241
    %v5417 = vadd.f32 %v5353, %v5244
    %v5418 = vadd.f32 %v5354, %v5247
    %v5419 = vadd.f32 %v5355, %v5250
    %v5420 = vadd.f32 %v5356, %v5253
    %v5421 = vadd.f32 %v5357, %v5256
    %v5422 = vadd.f32 %v5358, %v5259
    %v5423 = vadd.f32 %v5359, %v5262
    %v5424 = vadd.f32 %v5360, %v5265
    %v5425 = vadd.f32 %v5361, %v5268
    %v5426 = vadd.f32 %v5362, %v5271
    %v5427 = vadd.f32 %v5363, %v5274
    %v5428 = vadd.f32 %v5364, %v5277
    %v5429 = vadd.f32 %v5365, %v5280
    %v5430 = vadd.f32 %v5366, %v5283
    %v5431 = vadd.f32 %v5367, %v5286
    %v5432 = vadd.f32 %v5368, %v5289
    %v5433 = vadd.f32 %v5369, %v5292
    %v5434 = vadd.f32 %v5370, %v5295
    %v5435 = vadd.f32 %v5371, %v5298
    %v5436 = vadd.f32 %v5372, %v5301
    %v5437 = vadd.f32 %v5373, %v5304
    %v5438 = vadd.f32 %v5374, %v5307
    %v5439 = vadd.f32 %v5375, %v5310
    %5440 = vst [vmem:[#allocation3] sm:$0xff] %v5376
    %5441 = vst [vmem:[#allocation3 + $0x8] sm:$0xff] %v5377
    %5442 = vst [vmem:[#allocation3 + $0x10] sm:$0xff] %v5378
    %5443 = vst [vmem:[#allocation3 + $0x18] sm:$0xff] %v5379
    %5444 = vst [vmem:[#allocation3 + $0x20] sm:$0xff] %v5380
    %5445 = vst [vmem:[#allocation3 + $0x28] sm:$0xff] %v5381
    %5446 = vst [vmem:[#allocation3 + $0x30] sm:$0xff] %v5382
    %5447 = vst [vmem:[#allocation3 + $0x38] sm:$0xff] %v5383
    %5448 = vst [vmem:[#allocation3 + $0x40] sm:$0xff] %v5384
    %5449 = vst [vmem:[#allocation3 + $0x48] sm:$0xff] %v5385
    %5450 = vst [vmem:[#allocation3 + $0x50] sm:$0xff] %v5386
    %5451 = vst [vmem:[#allocation3 + $0x58] sm:$0xff] %v5387
    %5452 = vst [vmem:[#allocation3 + $0x60] sm:$0xff] %v5388
    %5453 = vst [vmem:[#allocation3 + $0x68] sm:$0xff] %v5389
    %5454 = vst [vmem:[#allocation3 + $0x70] sm:$0xff] %v5390
    %5455 = vst [vmem:[#allocation3 + $0x78] sm:$0xff] %v5391
    %5456 = vst [vmem:[#allocation3 + $0x80] sm:$0xff] %v5392
    %5457 = vst [vmem:[#allocation3 + $0x88] sm:$0xff] %v5393
    %5458 = vst [vmem:[#allocation3 + $0x90] sm:$0xff] %v5394
    %5459 = vst [vmem:[#allocation3 + $0x98] sm:$0xff] %v5395
    %5460 = vst [vmem:[#allocation3 + $0xa0] sm:$0xff] %v5396
    %5461 = vst [vmem:[#allocation3 + $0xa8] sm:$0xff] %v5397
    %5462 = vst [vmem:[#allocation3 + $0xb0] sm:$0xff] %v5398
    %5463 = vst [vmem:[#allocation3 + $0xb8] sm:$0xff] %v5399
    %5464 = vst [vmem:[#allocation3 + $0xc0] sm:$0xff] %v5400
    %5465 = vst [vmem:[#allocation3 + $0xc8] sm:$0xff] %v5401
    %5466 = vst [vmem:[#allocation3 + $0xd0] sm:$0xff] %v5402
    %5467 = vst [vmem:[#allocation3 + $0xd8] sm:$0xff] %v5403
    %5468 = vst [vmem:[#allocation3 + $0xe0] sm:$0xff] %v5404
    %5469 = vst [vmem:[#allocation3 + $0xe8] sm:$0xff] %v5405
    %5470 = vst [vmem:[#allocation3 + $0xf0] sm:$0xff] %v5406
    %5471 = vst [vmem:[#allocation3 + $0xf8] sm:$0xff] %v5407
    %5472 = vst [vmem:[#allocation3 + $0x100] sm:$0xff] %v5408
    %5473 = vst [vmem:[#allocation3 + $0x108] sm:$0xff] %v5409
    %5474 = vst [vmem:[#allocation3 + $0x110] sm:$0xff] %v5410
    %5475 = vst [vmem:[#allocation3 + $0x118] sm:$0xff] %v5411
    %5476 = vst [vmem:[#allocation3 + $0x120] sm:$0xff] %v5412
    %5477 = vst [vmem:[#allocation3 + $0x128] sm:$0xff] %v5413
    %5478 = vst [vmem:[#allocation3 + $0x130] sm:$0xff] %v5414
    %5479 = vst [vmem:[#allocation3 + $0x138] sm:$0xff] %v5415
    %5480 = vst [vmem:[#allocation3 + $0x140] sm:$0xff] %v5416
    %5481 = vst [vmem:[#allocation3 + $0x148] sm:$0xff] %v5417
    %5482 = vst [vmem:[#allocation3 + $0x150] sm:$0xff] %v5418
    %5483 = vst [vmem:[#allocation3 + $0x158] sm:$0xff] %v5419
    %5484 = vst [vmem:[#allocation3 + $0x160] sm:$0xff] %v5420
    %5485 = vst [vmem:[#allocation3 + $0x168] sm:$0xff] %v5421
    %5486 = vst [vmem:[#allocation3 + $0x170] sm:$0xff] %v5422
    %5487 = vst [vmem:[#allocation3 + $0x178] sm:$0xff] %v5423
    %5488 = vst [vmem:[#allocation3 + $0x180] sm:$0xff] %v5424
    %5489 = vst [vmem:[#allocation3 + $0x188] sm:$0xff] %v5425
    %5490 = vst [vmem:[#allocation3 + $0x190] sm:$0xff] %v5426
    %5491 = vst [vmem:[#allocation3 + $0x198] sm:$0xff] %v5427
    %5492 = vst [vmem:[#allocation3 + $0x1a0] sm:$0xff] %v5428
    %5493 = vst [vmem:[#allocation3 + $0x1a8] sm:$0xff] %v5429
    %5494 = vst [vmem:[#allocation3 + $0x1b0] sm:$0xff] %v5430
    %5495 = vst [vmem:[#allocation3 + $0x1b8] sm:$0xff] %v5431
    %5496 = vst [vmem:[#allocation3 + $0x1c0] sm:$0xff] %v5432
    %5497 = vst [vmem:[#allocation3 + $0x1c8] sm:$0xff] %v5433
    %5498 = vst [vmem:[#allocation3 + $0x1d0] sm:$0xff] %v5434
    %5499 = vst [vmem:[#allocation3 + $0x1d8] sm:$0xff] %v5435
    %5500 = vst [vmem:[#allocation3 + $0x1e0] sm:$0xff] %v5436
    %5501 = vst [vmem:[#allocation3 + $0x1e8] sm:$0xff] %v5437
    %5502 = vst [vmem:[#allocation3 + $0x1f0] sm:$0xff] %v5438
    %5503 = vst [vmem:[#allocation3 + $0x1f8] sm:$0xff] %v5439
    %v5504 = vld [vmem:[#allocation2 + $0x2] sm:$0xff]
    %v5505 = vld [vmem:[#allocation2 + $0xa] sm:$0xff]
    %v5506 = vld [vmem:[#allocation2 + $0x1a] sm:$0xff]
    %v5507 = vld [vmem:[#allocation2 + $0x22] sm:$0xff]
    %v5508 = vld [vmem:[#allocation2 + $0x32] sm:$0xff]
    %v5509 = vld [vmem:[#allocation2 + $0x3a] sm:$0xff]
    %v5510 = vld [vmem:[#allocation2 + $0x4a] sm:$0xff]
    %v5511 = vld [vmem:[#allocation2 + $0x52] sm:$0xff]
    %v5512 = vld [vmem:[#allocation2 + $0x62] sm:$0xff]
    %v5513 = vld [vmem:[#allocation2 + $0x6a] sm:$0xff]
    %v5514 = vld [vmem:[#allocation2 + $0x7a] sm:$0xff]
    %v5515 = vld [vmem:[#allocation2 + $0x82] sm:$0xff]
    %v5516 = vld [vmem:[#allocation2 + $0x92] sm:$0xff]
    %v5517 = vld [vmem:[#allocation2 + $0x9a] sm:$0xff]
    %v5518 = vld [vmem:[#allocation2 + $0xaa] sm:$0xff]
    %v5519 = vld [vmem:[#allocation2 + $0xb2] sm:$0xff]
    %v5520 = vld [vmem:[#allocation2 + $0xc2] sm:$0xff]
    %v5521 = vld [vmem:[#allocation2 + $0xca] sm:$0xff]
    %v5522 = vld [vmem:[#allocation2 + $0xda] sm:$0xff]
    %v5523 = vld [vmem:[#allocation2 + $0xe2] sm:$0xff]
    %v5524 = vld [vmem:[#allocation2 + $0xf2] sm:$0xff]
    %v5525 = vld [vmem:[#allocation2 + $0xfa] sm:$0xff]
    %v5526 = vld [vmem:[#allocation2 + $0x10a] sm:$0xff]
    %v5527 = vld [vmem:[#allocation2 + $0x112] sm:$0xff]
    %v5528 = vld [vmem:[#allocation2 + $0x122] sm:$0xff]
    %v5529 = vld [vmem:[#allocation2 + $0x12a] sm:$0xff]
    %v5530 = vld [vmem:[#allocation2 + $0x13a] sm:$0xff]
    %v5531 = vld [vmem:[#allocation2 + $0x142] sm:$0xff]
    %v5532 = vld [vmem:[#allocation2 + $0x152] sm:$0xff]
    %v5533 = vld [vmem:[#allocation2 + $0x15a] sm:$0xff]
    %v5534 = vld [vmem:[#allocation2 + $0x16a] sm:$0xff]
    %v5535 = vld [vmem:[#allocation2 + $0x172] sm:$0xff]
    %v5536 = vld [vmem:[#allocation2 + $0x1b2] sm:$0xff]
    %v5537 = vld [vmem:[#allocation2 + $0x1ba] sm:$0xff]
    %v5538 = vld [vmem:[#allocation2 + $0x1ca] sm:$0xff]
    %v5539 = vld [vmem:[#allocation2 + $0x1d2] sm:$0xff]
    %v5540 = vld [vmem:[#allocation2 + $0x1e2] sm:$0xff]
    %v5541 = vld [vmem:[#allocation2 + $0x1ea] sm:$0xff]
    %v5542 = vld [vmem:[#allocation2 + $0x1fa] sm:$0xff]
    %v5543 = vld [vmem:[#allocation2 + $0x202] sm:$0xff]
    %v5544 = vld [vmem:[#allocation2 + $0x212] sm:$0xff]
    %v5545 = vld [vmem:[#allocation2 + $0x21a] sm:$0xff]
    %v5546 = vld [vmem:[#allocation2 + $0x22a] sm:$0xff]
    %v5547 = vld [vmem:[#allocation2 + $0x232] sm:$0xff]
    %v5548 = vld [vmem:[#allocation2 + $0x242] sm:$0xff]
    %v5549 = vld [vmem:[#allocation2 + $0x24a] sm:$0xff]
    %v5550 = vld [vmem:[#allocation2 + $0x25a] sm:$0xff]
    %v5551 = vld [vmem:[#allocation2 + $0x262] sm:$0xff]
    %v5552 = vld [vmem:[#allocation2 + $0x272] sm:$0xff]
    %v5553 = vld [vmem:[#allocation2 + $0x27a] sm:$0xff]
    %v5554 = vld [vmem:[#allocation2 + $0x28a] sm:$0xff]
    %v5555 = vld [vmem:[#allocation2 + $0x292] sm:$0xff]
    %v5556 = vld [vmem:[#allocation2 + $0x2a2] sm:$0xff]
    %v5557 = vld [vmem:[#allocation2 + $0x2aa] sm:$0xff]
    %v5558 = vld [vmem:[#allocation2 + $0x2ba] sm:$0xff]
    %v5559 = vld [vmem:[#allocation2 + $0x2c2] sm:$0xff]
    %v5560 = vld [vmem:[#allocation2 + $0x2d2] sm:$0xff]
    %v5561 = vld [vmem:[#allocation2 + $0x2da] sm:$0xff]
    %v5562 = vld [vmem:[#allocation2 + $0x2ea] sm:$0xff]
    %v5563 = vld [vmem:[#allocation2 + $0x2f2] sm:$0xff]
    %v5564 = vld [vmem:[#allocation2 + $0x302] sm:$0xff]
    %v5565 = vld [vmem:[#allocation2 + $0x30a] sm:$0xff]
    %v5566 = vld [vmem:[#allocation2 + $0x31a] sm:$0xff]
    %v5567 = vld [vmem:[#allocation2 + $0x322] sm:$0xff]
    %s5568 = scalar_lea.vmem [#allocation4], 256
    %v5569 = vld [vmem:[%s5568] sm:$0xff]
    %v5570 = vld [vmem:[%s5568 + $0x8] sm:$0xff]
    %v5571 = vld [vmem:[%s5568 + $0x10] sm:$0xff]
    %v5572 = vld [vmem:[%s5568 + $0x18] sm:$0xff]
    %v5573 = vld [vmem:[%s5568 + $0x20] sm:$0xff]
    %v5574 = vld [vmem:[%s5568 + $0x28] sm:$0xff]
    %v5575 = vld [vmem:[%s5568 + $0x30] sm:$0xff]
    %v5576 = vld [vmem:[%s5568 + $0x38] sm:$0xff]
    %v5577 = vld [vmem:[%s5568 + $0x40] sm:$0xff]
    %v5578 = vld [vmem:[%s5568 + $0x48] sm:$0xff]
    %v5579 = vld [vmem:[%s5568 + $0x50] sm:$0xff]
    %v5580 = vld [vmem:[%s5568 + $0x58] sm:$0xff]
    %v5581 = vld [vmem:[%s5568 + $0x60] sm:$0xff]
    %v5582 = vld [vmem:[%s5568 + $0x68] sm:$0xff]
    %v5583 = vld [vmem:[%s5568 + $0x70] sm:$0xff]
    %v5584 = vld [vmem:[%s5568 + $0x78] sm:$0xff]
    %5585 = vmatpush.msra.mxu0 %v5584
    %5586 = vmatpush.msra.mxu0 %v5583
    %5587 = vmatpush.msra.mxu0 %v5582
    %5588 = vmatpush.msra.mxu0 %v5581
    %5589 = vmatpush.msra.mxu0 %v5580
    %5590 = vmatpush.msra.mxu0 %v5579
    %5591 = vmatpush.msra.mxu0 %v5578
    %5592 = vmatpush.msra.mxu0 %v5577
    %5593 = vmatpush.msra.mxu0 %v5576
    %5594 = vmatpush.msra.mxu0 %v5575
    %5595 = vmatpush.msra.mxu0 %v5574
    %5596 = vmatpush.msra.mxu0 %v5573
    %5597 = vmatpush.msra.mxu0 %v5572
    %5598 = vmatpush.msra.mxu0 %v5571
    %5599 = vmatpush.msra.mxu0 %v5570
    %5600 = vmatpush.msra.mxu0 %v5569
    %5601 = vmatmul.f32.gmra.mxu0 %v5504
    %v5602 = vpop.f32.mrf.mxu0
    %v5603 = vadd.f32 0.0, %v5602
    %5604 = vmatmul.f32.gmra.mxu0 %v5505
    %v5605 = vpop.f32.mrf.mxu0
    %v5606 = vadd.f32 0.0, %v5605
    %5607 = vmatmul.f32.gmra.mxu0 %v5506
    %v5608 = vpop.f32.mrf.mxu0
    %v5609 = vadd.f32 0.0, %v5608
    %5610 = vmatmul.f32.gmra.mxu0 %v5507
    %v5611 = vpop.f32.mrf.mxu0
    %v5612 = vadd.f32 0.0, %v5611
    %5613 = vmatmul.f32.gmra.mxu0 %v5508
    %v5614 = vpop.f32.mrf.mxu0
    %v5615 = vadd.f32 0.0, %v5614
    %5616 = vmatmul.f32.gmra.mxu0 %v5509
    %v5617 = vpop.f32.mrf.mxu0
    %v5618 = vadd.f32 0.0, %v5617
    %5619 = vmatmul.f32.gmra.mxu0 %v5510
    %v5620 = vpop.f32.mrf.mxu0
    %v5621 = vadd.f32 0.0, %v5620
    %5622 = vmatmul.f32.gmra.mxu0 %v5511
    %v5623 = vpop.f32.mrf.mxu0
    %v5624 = vadd.f32 0.0, %v5623
    %5625 = vmatmul.f32.gmra.mxu0 %v5512
    %v5626 = vpop.f32.mrf.mxu0
    %v5627 = vadd.f32 0.0, %v5626
    %5628 = vmatmul.f32.gmra.mxu0 %v5513
    %v5629 = vpop.f32.mrf.mxu0
    %v5630 = vadd.f32 0.0, %v5629
    %5631 = vmatmul.f32.gmra.mxu0 %v5514
    %v5632 = vpop.f32.mrf.mxu0
    %v5633 = vadd.f32 0.0, %v5632
    %5634 = vmatmul.f32.gmra.mxu0 %v5515
    %v5635 = vpop.f32.mrf.mxu0
    %v5636 = vadd.f32 0.0, %v5635
    %5637 = vmatmul.f32.gmra.mxu0 %v5516
    %v5638 = vpop.f32.mrf.mxu0
    %v5639 = vadd.f32 0.0, %v5638
    %5640 = vmatmul.f32.gmra.mxu0 %v5517
    %v5641 = vpop.f32.mrf.mxu0
    %v5642 = vadd.f32 0.0, %v5641
    %5643 = vmatmul.f32.gmra.mxu0 %v5518
    %v5644 = vpop.f32.mrf.mxu0
    %v5645 = vadd.f32 0.0, %v5644
    %5646 = vmatmul.f32.gmra.mxu0 %v5519
    %v5647 = vpop.f32.mrf.mxu0
    %v5648 = vadd.f32 0.0, %v5647
    %5649 = vmatmul.f32.gmra.mxu0 %v5520
    %v5650 = vpop.f32.mrf.mxu0
    %v5651 = vadd.f32 0.0, %v5650
    %5652 = vmatmul.f32.gmra.mxu0 %v5521
    %v5653 = vpop.f32.mrf.mxu0
    %v5654 = vadd.f32 0.0, %v5653
    %5655 = vmatmul.f32.gmra.mxu0 %v5522
    %v5656 = vpop.f32.mrf.mxu0
    %v5657 = vadd.f32 0.0, %v5656
    %5658 = vmatmul.f32.gmra.mxu0 %v5523
    %v5659 = vpop.f32.mrf.mxu0
    %v5660 = vadd.f32 0.0, %v5659
    %5661 = vmatmul.f32.gmra.mxu0 %v5524
    %v5662 = vpop.f32.mrf.mxu0
    %v5663 = vadd.f32 0.0, %v5662
    %5664 = vmatmul.f32.gmra.mxu0 %v5525
    %v5665 = vpop.f32.mrf.mxu0
    %v5666 = vadd.f32 0.0, %v5665
    %5667 = vmatmul.f32.gmra.mxu0 %v5526
    %v5668 = vpop.f32.mrf.mxu0
    %v5669 = vadd.f32 0.0, %v5668
    %5670 = vmatmul.f32.gmra.mxu0 %v5527
    %v5671 = vpop.f32.mrf.mxu0
    %v5672 = vadd.f32 0.0, %v5671
    %5673 = vmatmul.f32.gmra.mxu0 %v5528
    %v5674 = vpop.f32.mrf.mxu0
    %v5675 = vadd.f32 0.0, %v5674
    %5676 = vmatmul.f32.gmra.mxu0 %v5529
    %v5677 = vpop.f32.mrf.mxu0
    %v5678 = vadd.f32 0.0, %v5677
    %5679 = vmatmul.f32.gmra.mxu0 %v5530
    %v5680 = vpop.f32.mrf.mxu0
    %v5681 = vadd.f32 0.0, %v5680
    %5682 = vmatmul.f32.gmra.mxu0 %v5531
    %v5683 = vpop.f32.mrf.mxu0
    %v5684 = vadd.f32 0.0, %v5683
    %5685 = vmatmul.f32.gmra.mxu0 %v5532
    %v5686 = vpop.f32.mrf.mxu0
    %v5687 = vadd.f32 0.0, %v5686
    %5688 = vmatmul.f32.gmra.mxu0 %v5533
    %v5689 = vpop.f32.mrf.mxu0
    %v5690 = vadd.f32 0.0, %v5689
    %5691 = vmatmul.f32.gmra.mxu0 %v5534
    %v5692 = vpop.f32.mrf.mxu0
    %v5693 = vadd.f32 0.0, %v5692
    %5694 = vmatmul.f32.gmra.mxu0 %v5535
    %v5695 = vpop.f32.mrf.mxu0
    %v5696 = vadd.f32 0.0, %v5695
    %5697 = vmatmul.f32.gmra.mxu0 %v5536
    %v5698 = vpop.f32.mrf.mxu0
    %v5699 = vadd.f32 0.0, %v5698
    %5700 = vmatmul.f32.gmra.mxu0 %v5537
    %v5701 = vpop.f32.mrf.mxu0
    %v5702 = vadd.f32 0.0, %v5701
    %5703 = vmatmul.f32.gmra.mxu0 %v5538
    %v5704 = vpop.f32.mrf.mxu0
    %v5705 = vadd.f32 0.0, %v5704
    %5706 = vmatmul.f32.gmra.mxu0 %v5539
    %v5707 = vpop.f32.mrf.mxu0
    %v5708 = vadd.f32 0.0, %v5707
    %5709 = vmatmul.f32.gmra.mxu0 %v5540
    %v5710 = vpop.f32.mrf.mxu0
    %v5711 = vadd.f32 0.0, %v5710
    %5712 = vmatmul.f32.gmra.mxu0 %v5541
    %v5713 = vpop.f32.mrf.mxu0
    %v5714 = vadd.f32 0.0, %v5713
    %5715 = vmatmul.f32.gmra.mxu0 %v5542
    %v5716 = vpop.f32.mrf.mxu0
    %v5717 = vadd.f32 0.0, %v5716
    %5718 = vmatmul.f32.gmra.mxu0 %v5543
    %v5719 = vpop.f32.mrf.mxu0
    %v5720 = vadd.f32 0.0, %v5719
    %5721 = vmatmul.f32.gmra.mxu0 %v5544
    %v5722 = vpop.f32.mrf.mxu0
    %v5723 = vadd.f32 0.0, %v5722
    %5724 = vmatmul.f32.gmra.mxu0 %v5545
    %v5725 = vpop.f32.mrf.mxu0
    %v5726 = vadd.f32 0.0, %v5725
    %5727 = vmatmul.f32.gmra.mxu0 %v5546
    %v5728 = vpop.f32.mrf.mxu0
    %v5729 = vadd.f32 0.0, %v5728
    %5730 = vmatmul.f32.gmra.mxu0 %v5547
    %v5731 = vpop.f32.mrf.mxu0
    %v5732 = vadd.f32 0.0, %v5731
    %5733 = vmatmul.f32.gmra.mxu0 %v5548
    %v5734 = vpop.f32.mrf.mxu0
    %v5735 = vadd.f32 0.0, %v5734
    %5736 = vmatmul.f32.gmra.mxu0 %v5549
    %v5737 = vpop.f32.mrf.mxu0
    %v5738 = vadd.f32 0.0, %v5737
    %5739 = vmatmul.f32.gmra.mxu0 %v5550
    %v5740 = vpop.f32.mrf.mxu0
    %v5741 = vadd.f32 0.0, %v5740
    %5742 = vmatmul.f32.gmra.mxu0 %v5551
    %v5743 = vpop.f32.mrf.mxu0
    %v5744 = vadd.f32 0.0, %v5743
    %5745 = vmatmul.f32.gmra.mxu0 %v5552
    %v5746 = vpop.f32.mrf.mxu0
    %v5747 = vadd.f32 0.0, %v5746
    %5748 = vmatmul.f32.gmra.mxu0 %v5553
    %v5749 = vpop.f32.mrf.mxu0
    %v5750 = vadd.f32 0.0, %v5749
    %5751 = vmatmul.f32.gmra.mxu0 %v5554
    %v5752 = vpop.f32.mrf.mxu0
    %v5753 = vadd.f32 0.0, %v5752
    %5754 = vmatmul.f32.gmra.mxu0 %v5555
    %v5755 = vpop.f32.mrf.mxu0
    %v5756 = vadd.f32 0.0, %v5755
    %5757 = vmatmul.f32.gmra.mxu0 %v5556
    %v5758 = vpop.f32.mrf.mxu0
    %v5759 = vadd.f32 0.0, %v5758
    %5760 = vmatmul.f32.gmra.mxu0 %v5557
    %v5761 = vpop.f32.mrf.mxu0
    %v5762 = vadd.f32 0.0, %v5761
    %5763 = vmatmul.f32.gmra.mxu0 %v5558
    %v5764 = vpop.f32.mrf.mxu0
    %v5765 = vadd.f32 0.0, %v5764
    %5766 = vmatmul.f32.gmra.mxu0 %v5559
    %v5767 = vpop.f32.mrf.mxu0
    %v5768 = vadd.f32 0.0, %v5767
    %5769 = vmatmul.f32.gmra.mxu0 %v5560
    %v5770 = vpop.f32.mrf.mxu0
    %v5771 = vadd.f32 0.0, %v5770
    %5772 = vmatmul.f32.gmra.mxu0 %v5561
    %v5773 = vpop.f32.mrf.mxu0
    %v5774 = vadd.f32 0.0, %v5773
    %5775 = vmatmul.f32.gmra.mxu0 %v5562
    %v5776 = vpop.f32.mrf.mxu0
    %v5777 = vadd.f32 0.0, %v5776
    %5778 = vmatmul.f32.gmra.mxu0 %v5563
    %v5779 = vpop.f32.mrf.mxu0
    %v5780 = vadd.f32 0.0, %v5779
    %5781 = vmatmul.f32.gmra.mxu0 %v5564
    %v5782 = vpop.f32.mrf.mxu0
    %v5783 = vadd.f32 0.0, %v5782
    %5784 = vmatmul.f32.gmra.mxu0 %v5565
    %v5785 = vpop.f32.mrf.mxu0
    %v5786 = vadd.f32 0.0, %v5785
    %5787 = vmatmul.f32.gmra.mxu0 %v5566
    %v5788 = vpop.f32.mrf.mxu0
    %v5789 = vadd.f32 0.0, %v5788
    %5790 = vmatmul.f32.gmra.mxu0 %v5567
    %v5791 = vpop.f32.mrf.mxu0
    %v5792 = vadd.f32 0.0, %v5791
    %5793 = vdwg.mxu0
    %v5794 = vld [vmem:[#allocation3] sm:$0xff]
    %v5795 = vld [vmem:[#allocation3 + $0x8] sm:$0xff]
    %v5796 = vld [vmem:[#allocation3 + $0x10] sm:$0xff]
    %v5797 = vld [vmem:[#allocation3 + $0x18] sm:$0xff]
    %v5798 = vld [vmem:[#allocation3 + $0x20] sm:$0xff]
    %v5799 = vld [vmem:[#allocation3 + $0x28] sm:$0xff]
    %v5800 = vld [vmem:[#allocation3 + $0x30] sm:$0xff]
    %v5801 = vld [vmem:[#allocation3 + $0x38] sm:$0xff]
    %v5802 = vld [vmem:[#allocation3 + $0x40] sm:$0xff]
    %v5803 = vld [vmem:[#allocation3 + $0x48] sm:$0xff]
    %v5804 = vld [vmem:[#allocation3 + $0x50] sm:$0xff]
    %v5805 = vld [vmem:[#allocation3 + $0x58] sm:$0xff]
    %v5806 = vld [vmem:[#allocation3 + $0x60] sm:$0xff]
    %v5807 = vld [vmem:[#allocation3 + $0x68] sm:$0xff]
    %v5808 = vld [vmem:[#allocation3 + $0x70] sm:$0xff]
    %v5809 = vld [vmem:[#allocation3 + $0x78] sm:$0xff]
    %v5810 = vld [vmem:[#allocation3 + $0x80] sm:$0xff]
    %v5811 = vld [vmem:[#allocation3 + $0x88] sm:$0xff]
    %v5812 = vld [vmem:[#allocation3 + $0x90] sm:$0xff]
    %v5813 = vld [vmem:[#allocation3 + $0x98] sm:$0xff]
    %v5814 = vld [vmem:[#allocation3 + $0xa0] sm:$0xff]
    %v5815 = vld [vmem:[#allocation3 + $0xa8] sm:$0xff]
    %v5816 = vld [vmem:[#allocation3 + $0xb0] sm:$0xff]
    %v5817 = vld [vmem:[#allocation3 + $0xb8] sm:$0xff]
    %v5818 = vld [vmem:[#allocation3 + $0xc0] sm:$0xff]
    %v5819 = vld [vmem:[#allocation3 + $0xc8] sm:$0xff]
    %v5820 = vld [vmem:[#allocation3 + $0xd0] sm:$0xff]
    %v5821 = vld [vmem:[#allocation3 + $0xd8] sm:$0xff]
    %v5822 = vld [vmem:[#allocation3 + $0xe0] sm:$0xff]
    %v5823 = vld [vmem:[#allocation3 + $0xe8] sm:$0xff]
    %v5824 = vld [vmem:[#allocation3 + $0xf0] sm:$0xff]
    %v5825 = vld [vmem:[#allocation3 + $0xf8] sm:$0xff]
    %v5826 = vld [vmem:[#allocation3 + $0x100] sm:$0xff]
    %v5827 = vld [vmem:[#allocation3 + $0x108] sm:$0xff]
    %v5828 = vld [vmem:[#allocation3 + $0x110] sm:$0xff]
    %v5829 = vld [vmem:[#allocation3 + $0x118] sm:$0xff]
    %v5830 = vld [vmem:[#allocation3 + $0x120] sm:$0xff]
    %v5831 = vld [vmem:[#allocation3 + $0x128] sm:$0xff]
    %v5832 = vld [vmem:[#allocation3 + $0x130] sm:$0xff]
    %v5833 = vld [vmem:[#allocation3 + $0x138] sm:$0xff]
    %v5834 = vld [vmem:[#allocation3 + $0x140] sm:$0xff]
    %v5835 = vld [vmem:[#allocation3 + $0x148] sm:$0xff]
    %v5836 = vld [vmem:[#allocation3 + $0x150] sm:$0xff]
    %v5837 = vld [vmem:[#allocation3 + $0x158] sm:$0xff]
    %v5838 = vld [vmem:[#allocation3 + $0x160] sm:$0xff]
    %v5839 = vld [vmem:[#allocation3 + $0x168] sm:$0xff]
    %v5840 = vld [vmem:[#allocation3 + $0x170] sm:$0xff]
    %v5841 = vld [vmem:[#allocation3 + $0x178] sm:$0xff]
    %v5842 = vld [vmem:[#allocation3 + $0x180] sm:$0xff]
    %v5843 = vld [vmem:[#allocation3 + $0x188] sm:$0xff]
    %v5844 = vld [vmem:[#allocation3 + $0x190] sm:$0xff]
    %v5845 = vld [vmem:[#allocation3 + $0x198] sm:$0xff]
    %v5846 = vld [vmem:[#allocation3 + $0x1a0] sm:$0xff]
    %v5847 = vld [vmem:[#allocation3 + $0x1a8] sm:$0xff]
    %v5848 = vld [vmem:[#allocation3 + $0x1b0] sm:$0xff]
    %v5849 = vld [vmem:[#allocation3 + $0x1b8] sm:$0xff]
    %v5850 = vld [vmem:[#allocation3 + $0x1c0] sm:$0xff]
    %v5851 = vld [vmem:[#allocation3 + $0x1c8] sm:$0xff]
    %v5852 = vld [vmem:[#allocation3 + $0x1d0] sm:$0xff]
    %v5853 = vld [vmem:[#allocation3 + $0x1d8] sm:$0xff]
    %v5854 = vld [vmem:[#allocation3 + $0x1e0] sm:$0xff]
    %v5855 = vld [vmem:[#allocation3 + $0x1e8] sm:$0xff]
    %v5856 = vld [vmem:[#allocation3 + $0x1f0] sm:$0xff]
    %v5857 = vld [vmem:[#allocation3 + $0x1f8] sm:$0xff]
    %v5858 = vadd.f32 %v5794, %v5603
    %v5859 = vadd.f32 %v5795, %v5606
    %v5860 = vadd.f32 %v5796, %v5609
    %v5861 = vadd.f32 %v5797, %v5612
    %v5862 = vadd.f32 %v5798, %v5615
    %v5863 = vadd.f32 %v5799, %v5618
    %v5864 = vadd.f32 %v5800, %v5621
    %v5865 = vadd.f32 %v5801, %v5624
    %v5866 = vadd.f32 %v5802, %v5627
    %v5867 = vadd.f32 %v5803, %v5630
    %v5868 = vadd.f32 %v5804, %v5633
    %v5869 = vadd.f32 %v5805, %v5636
    %v5870 = vadd.f32 %v5806, %v5639
    %v5871 = vadd.f32 %v5807, %v5642
    %v5872 = vadd.f32 %v5808, %v5645
    %v5873 = vadd.f32 %v5809, %v5648
    %v5874 = vadd.f32 %v5810, %v5651
    %v5875 = vadd.f32 %v5811, %v5654
    %v5876 = vadd.f32 %v5812, %v5657
    %v5877 = vadd.f32 %v5813, %v5660
    %v5878 = vadd.f32 %v5814, %v5663
    %v5879 = vadd.f32 %v5815, %v5666
    %v5880 = vadd.f32 %v5816, %v5669
    %v5881 = vadd.f32 %v5817, %v5672
    %v5882 = vadd.f32 %v5818, %v5675
    %v5883 = vadd.f32 %v5819, %v5678
    %v5884 = vadd.f32 %v5820, %v5681
    %v5885 = vadd.f32 %v5821, %v5684
    %v5886 = vadd.f32 %v5822, %v5687
    %v5887 = vadd.f32 %v5823, %v5690
    %v5888 = vadd.f32 %v5824, %v5693
    %v5889 = vadd.f32 %v5825, %v5696
    %v5890 = vadd.f32 %v5826, %v5699
    %v5891 = vadd.f32 %v5827, %v5702
    %v5892 = vadd.f32 %v5828, %v5705
    %v5893 = vadd.f32 %v5829, %v5708
    %v5894 = vadd.f32 %v5830, %v5711
    %v5895 = vadd.f32 %v5831, %v5714
    %v5896 = vadd.f32 %v5832, %v5717
    %v5897 = vadd.f32 %v5833, %v5720
    %v5898 = vadd.f32 %v5834, %v5723
    %v5899 = vadd.f32 %v5835, %v5726
    %v5900 = vadd.f32 %v5836, %v5729
    %v5901 = vadd.f32 %v5837, %v5732
    %v5902 = vadd.f32 %v5838, %v5735
    %v5903 = vadd.f32 %v5839, %v5738
    %v5904 = vadd.f32 %v5840, %v5741
    %v5905 = vadd.f32 %v5841, %v5744
    %v5906 = vadd.f32 %v5842, %v5747
    %v5907 = vadd.f32 %v5843, %v5750
    %v5908 = vadd.f32 %v5844, %v5753
    %v5909 = vadd.f32 %v5845, %v5756
    %v5910 = vadd.f32 %v5846, %v5759
    %v5911 = vadd.f32 %v5847, %v5762
    %v5912 = vadd.f32 %v5848, %v5765
    %v5913 = vadd.f32 %v5849, %v5768
    %v5914 = vadd.f32 %v5850, %v5771
    %v5915 = vadd.f32 %v5851, %v5774
    %v5916 = vadd.f32 %v5852, %v5777
    %v5917 = vadd.f32 %v5853, %v5780
    %v5918 = vadd.f32 %v5854, %v5783
    %v5919 = vadd.f32 %v5855, %v5786
    %v5920 = vadd.f32 %v5856, %v5789
    %v5921 = vadd.f32 %v5857, %v5792
    %5922 = vst [vmem:[#allocation3] sm:$0xff] %v5858
    %5923 = vst [vmem:[#allocation3 + $0x8] sm:$0xff] %v5859
    %5924 = vst [vmem:[#allocation3 + $0x10] sm:$0xff] %v5860
    %5925 = vst [vmem:[#allocation3 + $0x18] sm:$0xff] %v5861
    %5926 = vst [vmem:[#allocation3 + $0x20] sm:$0xff] %v5862
    %5927 = vst [vmem:[#allocation3 + $0x28] sm:$0xff] %v5863
    %5928 = vst [vmem:[#allocation3 + $0x30] sm:$0xff] %v5864
    %5929 = vst [vmem:[#allocation3 + $0x38] sm:$0xff] %v5865
    %5930 = vst [vmem:[#allocation3 + $0x40] sm:$0xff] %v5866
    %5931 = vst [vmem:[#allocation3 + $0x48] sm:$0xff] %v5867
    %5932 = vst [vmem:[#allocation3 + $0x50] sm:$0xff] %v5868
    %5933 = vst [vmem:[#allocation3 + $0x58] sm:$0xff] %v5869
    %5934 = vst [vmem:[#allocation3 + $0x60] sm:$0xff] %v5870
    %5935 = vst [vmem:[#allocation3 + $0x68] sm:$0xff] %v5871
    %5936 = vst [vmem:[#allocation3 + $0x70] sm:$0xff] %v5872
    %5937 = vst [vmem:[#allocation3 + $0x78] sm:$0xff] %v5873
    %5938 = vst [vmem:[#allocation3 + $0x80] sm:$0xff] %v5874
    %5939 = vst [vmem:[#allocation3 + $0x88] sm:$0xff] %v5875
    %5940 = vst [vmem:[#allocation3 + $0x90] sm:$0xff] %v5876
    %5941 = vst [vmem:[#allocation3 + $0x98] sm:$0xff] %v5877
    %5942 = vst [vmem:[#allocation3 + $0xa0] sm:$0xff] %v5878
    %5943 = vst [vmem:[#allocation3 + $0xa8] sm:$0xff] %v5879
    %5944 = vst [vmem:[#allocation3 + $0xb0] sm:$0xff] %v5880
    %5945 = vst [vmem:[#allocation3 + $0xb8] sm:$0xff] %v5881
    %5946 = vst [vmem:[#allocation3 + $0xc0] sm:$0xff] %v5882
    %5947 = vst [vmem:[#allocation3 + $0xc8] sm:$0xff] %v5883
    %5948 = vst [vmem:[#allocation3 + $0xd0] sm:$0xff] %v5884
    %5949 = vst [vmem:[#allocation3 + $0xd8] sm:$0xff] %v5885
    %5950 = vst [vmem:[#allocation3 + $0xe0] sm:$0xff] %v5886
    %5951 = vst [vmem:[#allocation3 + $0xe8] sm:$0xff] %v5887
    %5952 = vst [vmem:[#allocation3 + $0xf0] sm:$0xff] %v5888
    %5953 = vst [vmem:[#allocation3 + $0xf8] sm:$0xff] %v5889
    %5954 = vst [vmem:[#allocation3 + $0x100] sm:$0xff] %v5890
    %5955 = vst [vmem:[#allocation3 + $0x108] sm:$0xff] %v5891
    %5956 = vst [vmem:[#allocation3 + $0x110] sm:$0xff] %v5892
    %5957 = vst [vmem:[#allocation3 + $0x118] sm:$0xff] %v5893
    %5958 = vst [vmem:[#allocation3 + $0x120] sm:$0xff] %v5894
    %5959 = vst [vmem:[#allocation3 + $0x128] sm:$0xff] %v5895
    %5960 = vst [vmem:[#allocation3 + $0x130] sm:$0xff] %v5896
    %5961 = vst [vmem:[#allocation3 + $0x138] sm:$0xff] %v5897
    %5962 = vst [vmem:[#allocation3 + $0x140] sm:$0xff] %v5898
    %5963 = vst [vmem:[#allocation3 + $0x148] sm:$0xff] %v5899
    %5964 = vst [vmem:[#allocation3 + $0x150] sm:$0xff] %v5900
    %5965 = vst [vmem:[#allocation3 + $0x158] sm:$0xff] %v5901
    %5966 = vst [vmem:[#allocation3 + $0x160] sm:$0xff] %v5902
    %5967 = vst [vmem:[#allocation3 + $0x168] sm:$0xff] %v5903
    %5968 = vst [vmem:[#allocation3 + $0x170] sm:$0xff] %v5904
    %5969 = vst [vmem:[#allocation3 + $0x178] sm:$0xff] %v5905
    %5970 = vst [vmem:[#allocation3 + $0x180] sm:$0xff] %v5906
    %5971 = vst [vmem:[#allocation3 + $0x188] sm:$0xff] %v5907
    %5972 = vst [vmem:[#allocation3 + $0x190] sm:$0xff] %v5908
    %5973 = vst [vmem:[#allocation3 + $0x198] sm:$0xff] %v5909
    %5974 = vst [vmem:[#allocation3 + $0x1a0] sm:$0xff] %v5910
    %5975 = vst [vmem:[#allocation3 + $0x1a8] sm:$0xff] %v5911
    %5976 = vst [vmem:[#allocation3 + $0x1b0] sm:$0xff] %v5912
    %5977 = vst [vmem:[#allocation3 + $0x1b8] sm:$0xff] %v5913
    %5978 = vst [vmem:[#allocation3 + $0x1c0] sm:$0xff] %v5914
    %5979 = vst [vmem:[#allocation3 + $0x1c8] sm:$0xff] %v5915
    %5980 = vst [vmem:[#allocation3 + $0x1d0] sm:$0xff] %v5916
    %5981 = vst [vmem:[#allocation3 + $0x1d8] sm:$0xff] %v5917
    %5982 = vst [vmem:[#allocation3 + $0x1e0] sm:$0xff] %v5918
    %5983 = vst [vmem:[#allocation3 + $0x1e8] sm:$0xff] %v5919
    %5984 = vst [vmem:[#allocation3 + $0x1f0] sm:$0xff] %v5920
    %5985 = vst [vmem:[#allocation3 + $0x1f8] sm:$0xff] %v5921
    %v5986 = vld [vmem:[%s65] sm:$0xff]
    %v5987 = vld [vmem:[%s65 + $0x8] sm:$0xff]
    %v5988 = vld [vmem:[%s65 + $0x18] sm:$0xff]
    %v5989 = vld [vmem:[%s65 + $0x20] sm:$0xff]
    %v5990 = vld [vmem:[%s65 + $0x30] sm:$0xff]
    %v5991 = vld [vmem:[%s65 + $0x38] sm:$0xff]
    %v5992 = vld [vmem:[%s65 + $0x48] sm:$0xff]
    %v5993 = vld [vmem:[%s65 + $0x50] sm:$0xff]
    %v5994 = vld [vmem:[%s65 + $0x60] sm:$0xff]
    %v5995 = vld [vmem:[%s65 + $0x68] sm:$0xff]
    %v5996 = vld [vmem:[%s65 + $0x78] sm:$0xff]
    %v5997 = vld [vmem:[%s65 + $0x80] sm:$0xff]
    %v5998 = vld [vmem:[%s65 + $0x90] sm:$0xff]
    %v5999 = vld [vmem:[%s65 + $0x98] sm:$0xff]
    %v6000 = vld [vmem:[%s65 + $0xa8] sm:$0xff]
    %v6001 = vld [vmem:[%s65 + $0xb0] sm:$0xff]
    %v6002 = vld [vmem:[%s65 + $0xc0] sm:$0xff]
    %v6003 = vld [vmem:[%s65 + $0xc8] sm:$0xff]
    %v6004 = vld [vmem:[%s65 + $0xd8] sm:$0xff]
    %v6005 = vld [vmem:[%s65 + $0xe0] sm:$0xff]
    %v6006 = vld [vmem:[%s65 + $0xf0] sm:$0xff]
    %v6007 = vld [vmem:[%s65 + $0xf8] sm:$0xff]
    %v6008 = vld [vmem:[%s65 + $0x108] sm:$0xff]
    %v6009 = vld [vmem:[%s65 + $0x110] sm:$0xff]
    %v6010 = vld [vmem:[%s65 + $0x120] sm:$0xff]
    %v6011 = vld [vmem:[%s65 + $0x128] sm:$0xff]
    %v6012 = vld [vmem:[%s65 + $0x138] sm:$0xff]
    %v6013 = vld [vmem:[%s65 + $0x140] sm:$0xff]
    %v6014 = vld [vmem:[%s65 + $0x150] sm:$0xff]
    %v6015 = vld [vmem:[%s65 + $0x158] sm:$0xff]
    %v6016 = vld [vmem:[%s65 + $0x168] sm:$0xff]
    %v6017 = vld [vmem:[%s65 + $0x170] sm:$0xff]
    %v6018 = vld [vmem:[%s65 + $0x1b0] sm:$0xff]
    %v6019 = vld [vmem:[%s65 + $0x1b8] sm:$0xff]
    %v6020 = vld [vmem:[%s65 + $0x1c8] sm:$0xff]
    %v6021 = vld [vmem:[%s65 + $0x1d0] sm:$0xff]
    %v6022 = vld [vmem:[%s65 + $0x1e0] sm:$0xff]
    %v6023 = vld [vmem:[%s65 + $0x1e8] sm:$0xff]
    %v6024 = vld [vmem:[%s65 + $0x1f8] sm:$0xff]
    %v6025 = vld [vmem:[%s65 + $0x200] sm:$0xff]
    %v6026 = vld [vmem:[%s65 + $0x210] sm:$0xff]
    %v6027 = vld [vmem:[%s65 + $0x218] sm:$0xff]
    %v6028 = vld [vmem:[%s65 + $0x228] sm:$0xff]
    %v6029 = vld [vmem:[%s65 + $0x230] sm:$0xff]
    %v6030 = vld [vmem:[%s65 + $0x240] sm:$0xff]
    %v6031 = vld [vmem:[%s65 + $0x248] sm:$0xff]
    %v6032 = vld [vmem:[%s65 + $0x258] sm:$0xff]
    %v6033 = vld [vmem:[%s65 + $0x260] sm:$0xff]
    %v6034 = vld [vmem:[%s65 + $0x270] sm:$0xff]
    %v6035 = vld [vmem:[%s65 + $0x278] sm:$0xff]
    %v6036 = vld [vmem:[%s65 + $0x288] sm:$0xff]
    %v6037 = vld [vmem:[%s65 + $0x290] sm:$0xff]
    %v6038 = vld [vmem:[%s65 + $0x2a0] sm:$0xff]
    %v6039 = vld [vmem:[%s65 + $0x2a8] sm:$0xff]
    %v6040 = vld [vmem:[%s65 + $0x2b8] sm:$0xff]
    %v6041 = vld [vmem:[%s65 + $0x2c0] sm:$0xff]
    %v6042 = vld [vmem:[%s65 + $0x2d0] sm:$0xff]
    %v6043 = vld [vmem:[%s65 + $0x2d8] sm:$0xff]
    %v6044 = vld [vmem:[%s65 + $0x2e8] sm:$0xff]
    %v6045 = vld [vmem:[%s65 + $0x2f0] sm:$0xff]
    %v6046 = vld [vmem:[%s65 + $0x300] sm:$0xff]
    %v6047 = vld [vmem:[%s65 + $0x308] sm:$0xff]
    %v6048 = vld [vmem:[%s65 + $0x318] sm:$0xff]
    %v6049 = vld [vmem:[%s65 + $0x320] sm:$0xff]
    %s6050 = scalar_lea.vmem [#allocation4], 384
    %v6051 = vld [vmem:[%s6050] sm:$0xff]
    %v6052 = vld [vmem:[%s6050 + $0x8] sm:$0xff]
    %v6053 = vld [vmem:[%s6050 + $0x10] sm:$0xff]
    %v6054 = vld [vmem:[%s6050 + $0x18] sm:$0xff]
    %v6055 = vld [vmem:[%s6050 + $0x20] sm:$0xff]
    %v6056 = vld [vmem:[%s6050 + $0x28] sm:$0xff]
    %v6057 = vld [vmem:[%s6050 + $0x30] sm:$0xff]
    %v6058 = vld [vmem:[%s6050 + $0x38] sm:$0xff]
    %v6059 = vld [vmem:[%s6050 + $0x40] sm:$0xff]
    %v6060 = vld [vmem:[%s6050 + $0x48] sm:$0xff]
    %v6061 = vld [vmem:[%s6050 + $0x50] sm:$0xff]
    %v6062 = vld [vmem:[%s6050 + $0x58] sm:$0xff]
    %v6063 = vld [vmem:[%s6050 + $0x60] sm:$0xff]
    %v6064 = vld [vmem:[%s6050 + $0x68] sm:$0xff]
    %v6065 = vld [vmem:[%s6050 + $0x70] sm:$0xff]
    %v6066 = vld [vmem:[%s6050 + $0x78] sm:$0xff]
    %6067 = vmatpush.msra.mxu0 %v6066
    %6068 = vmatpush.msra.mxu0 %v6065
    %6069 = vmatpush.msra.mxu0 %v6064
    %6070 = vmatpush.msra.mxu0 %v6063
    %6071 = vmatpush.msra.mxu0 %v6062
    %6072 = vmatpush.msra.mxu0 %v6061
    %6073 = vmatpush.msra.mxu0 %v6060
    %6074 = vmatpush.msra.mxu0 %v6059
    %6075 = vmatpush.msra.mxu0 %v6058
    %6076 = vmatpush.msra.mxu0 %v6057
    %6077 = vmatpush.msra.mxu0 %v6056
    %6078 = vmatpush.msra.mxu0 %v6055
    %6079 = vmatpush.msra.mxu0 %v6054
    %6080 = vmatpush.msra.mxu0 %v6053
    %6081 = vmatpush.msra.mxu0 %v6052
    %6082 = vmatpush.msra.mxu0 %v6051
    %6083 = vmatmul.f32.gmra.mxu0 %v5986
    %v6084 = vpop.f32.mrf.mxu0
    %v6085 = vadd.f32 0.0, %v6084
    %6086 = vmatmul.f32.gmra.mxu0 %v5987
    %v6087 = vpop.f32.mrf.mxu0
    %v6088 = vadd.f32 0.0, %v6087
    %6089 = vmatmul.f32.gmra.mxu0 %v5988
    %v6090 = vpop.f32.mrf.mxu0
    %v6091 = vadd.f32 0.0, %v6090
    %6092 = vmatmul.f32.gmra.mxu0 %v5989
    %v6093 = vpop.f32.mrf.mxu0
    %v6094 = vadd.f32 0.0, %v6093
    %6095 = vmatmul.f32.gmra.mxu0 %v5990
    %v6096 = vpop.f32.mrf.mxu0
    %v6097 = vadd.f32 0.0, %v6096
    %6098 = vmatmul.f32.gmra.mxu0 %v5991
    %v6099 = vpop.f32.mrf.mxu0
    %v6100 = vadd.f32 0.0, %v6099
    %6101 = vmatmul.f32.gmra.mxu0 %v5992
    %v6102 = vpop.f32.mrf.mxu0
    %v6103 = vadd.f32 0.0, %v6102
    %6104 = vmatmul.f32.gmra.mxu0 %v5993
    %v6105 = vpop.f32.mrf.mxu0
    %v6106 = vadd.f32 0.0, %v6105
    %6107 = vmatmul.f32.gmra.mxu0 %v5994
    %v6108 = vpop.f32.mrf.mxu0
    %v6109 = vadd.f32 0.0, %v6108
    %6110 = vmatmul.f32.gmra.mxu0 %v5995
    %v6111 = vpop.f32.mrf.mxu0
    %v6112 = vadd.f32 0.0, %v6111
    %6113 = vmatmul.f32.gmra.mxu0 %v5996
    %v6114 = vpop.f32.mrf.mxu0
    %v6115 = vadd.f32 0.0, %v6114
    %6116 = vmatmul.f32.gmra.mxu0 %v5997
    %v6117 = vpop.f32.mrf.mxu0
    %v6118 = vadd.f32 0.0, %v6117
    %6119 = vmatmul.f32.gmra.mxu0 %v5998
    %v6120 = vpop.f32.mrf.mxu0
    %v6121 = vadd.f32 0.0, %v6120
    %6122 = vmatmul.f32.gmra.mxu0 %v5999
    %v6123 = vpop.f32.mrf.mxu0
    %v6124 = vadd.f32 0.0, %v6123
    %6125 = vmatmul.f32.gmra.mxu0 %v6000
    %v6126 = vpop.f32.mrf.mxu0
    %v6127 = vadd.f32 0.0, %v6126
    %6128 = vmatmul.f32.gmra.mxu0 %v6001
    %v6129 = vpop.f32.mrf.mxu0
    %v6130 = vadd.f32 0.0, %v6129
    %6131 = vmatmul.f32.gmra.mxu0 %v6002
    %v6132 = vpop.f32.mrf.mxu0
    %v6133 = vadd.f32 0.0, %v6132
    %6134 = vmatmul.f32.gmra.mxu0 %v6003
    %v6135 = vpop.f32.mrf.mxu0
    %v6136 = vadd.f32 0.0, %v6135
    %6137 = vmatmul.f32.gmra.mxu0 %v6004
    %v6138 = vpop.f32.mrf.mxu0
    %v6139 = vadd.f32 0.0, %v6138
    %6140 = vmatmul.f32.gmra.mxu0 %v6005
    %v6141 = vpop.f32.mrf.mxu0
    %v6142 = vadd.f32 0.0, %v6141
    %6143 = vmatmul.f32.gmra.mxu0 %v6006
    %v6144 = vpop.f32.mrf.mxu0
    %v6145 = vadd.f32 0.0, %v6144
    %6146 = vmatmul.f32.gmra.mxu0 %v6007
    %v6147 = vpop.f32.mrf.mxu0
    %v6148 = vadd.f32 0.0, %v6147
    %6149 = vmatmul.f32.gmra.mxu0 %v6008
    %v6150 = vpop.f32.mrf.mxu0
    %v6151 = vadd.f32 0.0, %v6150
    %6152 = vmatmul.f32.gmra.mxu0 %v6009
    %v6153 = vpop.f32.mrf.mxu0
    %v6154 = vadd.f32 0.0, %v6153
    %6155 = vmatmul.f32.gmra.mxu0 %v6010
    %v6156 = vpop.f32.mrf.mxu0
    %v6157 = vadd.f32 0.0, %v6156
    %6158 = vmatmul.f32.gmra.mxu0 %v6011
    %v6159 = vpop.f32.mrf.mxu0
    %v6160 = vadd.f32 0.0, %v6159
    %6161 = vmatmul.f32.gmra.mxu0 %v6012
    %v6162 = vpop.f32.mrf.mxu0
    %v6163 = vadd.f32 0.0, %v6162
    %6164 = vmatmul.f32.gmra.mxu0 %v6013
    %v6165 = vpop.f32.mrf.mxu0
    %v6166 = vadd.f32 0.0, %v6165
    %6167 = vmatmul.f32.gmra.mxu0 %v6014
    %v6168 = vpop.f32.mrf.mxu0
    %v6169 = vadd.f32 0.0, %v6168
    %6170 = vmatmul.f32.gmra.mxu0 %v6015
    %v6171 = vpop.f32.mrf.mxu0
    %v6172 = vadd.f32 0.0, %v6171
    %6173 = vmatmul.f32.gmra.mxu0 %v6016
    %v6174 = vpop.f32.mrf.mxu0
    %v6175 = vadd.f32 0.0, %v6174
    %6176 = vmatmul.f32.gmra.mxu0 %v6017
    %v6177 = vpop.f32.mrf.mxu0
    %v6178 = vadd.f32 0.0, %v6177
    %6179 = vmatmul.f32.gmra.mxu0 %v6018
    %v6180 = vpop.f32.mrf.mxu0
    %v6181 = vadd.f32 0.0, %v6180
    %6182 = vmatmul.f32.gmra.mxu0 %v6019
    %v6183 = vpop.f32.mrf.mxu0
    %v6184 = vadd.f32 0.0, %v6183
    %6185 = vmatmul.f32.gmra.mxu0 %v6020
    %v6186 = vpop.f32.mrf.mxu0
    %v6187 = vadd.f32 0.0, %v6186
    %6188 = vmatmul.f32.gmra.mxu0 %v6021
    %v6189 = vpop.f32.mrf.mxu0
    %v6190 = vadd.f32 0.0, %v6189
    %6191 = vmatmul.f32.gmra.mxu0 %v6022
    %v6192 = vpop.f32.mrf.mxu0
    %v6193 = vadd.f32 0.0, %v6192
    %6194 = vmatmul.f32.gmra.mxu0 %v6023
    %v6195 = vpop.f32.mrf.mxu0
    %v6196 = vadd.f32 0.0, %v6195
    %6197 = vmatmul.f32.gmra.mxu0 %v6024
    %v6198 = vpop.f32.mrf.mxu0
    %v6199 = vadd.f32 0.0, %v6198
    %6200 = vmatmul.f32.gmra.mxu0 %v6025
    %v6201 = vpop.f32.mrf.mxu0
    %v6202 = vadd.f32 0.0, %v6201
    %6203 = vmatmul.f32.gmra.mxu0 %v6026
    %v6204 = vpop.f32.mrf.mxu0
    %v6205 = vadd.f32 0.0, %v6204
    %6206 = vmatmul.f32.gmra.mxu0 %v6027
    %v6207 = vpop.f32.mrf.mxu0
    %v6208 = vadd.f32 0.0, %v6207
    %6209 = vmatmul.f32.gmra.mxu0 %v6028
    %v6210 = vpop.f32.mrf.mxu0
    %v6211 = vadd.f32 0.0, %v6210
    %6212 = vmatmul.f32.gmra.mxu0 %v6029
    %v6213 = vpop.f32.mrf.mxu0
    %v6214 = vadd.f32 0.0, %v6213
    %6215 = vmatmul.f32.gmra.mxu0 %v6030
    %v6216 = vpop.f32.mrf.mxu0
    %v6217 = vadd.f32 0.0, %v6216
    %6218 = vmatmul.f32.gmra.mxu0 %v6031
    %v6219 = vpop.f32.mrf.mxu0
    %v6220 = vadd.f32 0.0, %v6219
    %6221 = vmatmul.f32.gmra.mxu0 %v6032
    %v6222 = vpop.f32.mrf.mxu0
    %v6223 = vadd.f32 0.0, %v6222
    %6224 = vmatmul.f32.gmra.mxu0 %v6033
    %v6225 = vpop.f32.mrf.mxu0
    %v6226 = vadd.f32 0.0, %v6225
    %6227 = vmatmul.f32.gmra.mxu0 %v6034
    %v6228 = vpop.f32.mrf.mxu0
    %v6229 = vadd.f32 0.0, %v6228
    %6230 = vmatmul.f32.gmra.mxu0 %v6035
    %v6231 = vpop.f32.mrf.mxu0
    %v6232 = vadd.f32 0.0, %v6231
    %6233 = vmatmul.f32.gmra.mxu0 %v6036
    %v6234 = vpop.f32.mrf.mxu0
    %v6235 = vadd.f32 0.0, %v6234
    %6236 = vmatmul.f32.gmra.mxu0 %v6037
    %v6237 = vpop.f32.mrf.mxu0
    %v6238 = vadd.f32 0.0, %v6237
    %6239 = vmatmul.f32.gmra.mxu0 %v6038
    %v6240 = vpop.f32.mrf.mxu0
    %v6241 = vadd.f32 0.0, %v6240
    %6242 = vmatmul.f32.gmra.mxu0 %v6039
    %v6243 = vpop.f32.mrf.mxu0
    %v6244 = vadd.f32 0.0, %v6243
    %6245 = vmatmul.f32.gmra.mxu0 %v6040
    %v6246 = vpop.f32.mrf.mxu0
    %v6247 = vadd.f32 0.0, %v6246
    %6248 = vmatmul.f32.gmra.mxu0 %v6041
    %v6249 = vpop.f32.mrf.mxu0
    %v6250 = vadd.f32 0.0, %v6249
    %6251 = vmatmul.f32.gmra.mxu0 %v6042
    %v6252 = vpop.f32.mrf.mxu0
    %v6253 = vadd.f32 0.0, %v6252
    %6254 = vmatmul.f32.gmra.mxu0 %v6043
    %v6255 = vpop.f32.mrf.mxu0
    %v6256 = vadd.f32 0.0, %v6255
    %6257 = vmatmul.f32.gmra.mxu0 %v6044
    %v6258 = vpop.f32.mrf.mxu0
    %v6259 = vadd.f32 0.0, %v6258
    %6260 = vmatmul.f32.gmra.mxu0 %v6045
    %v6261 = vpop.f32.mrf.mxu0
    %v6262 = vadd.f32 0.0, %v6261
    %6263 = vmatmul.f32.gmra.mxu0 %v6046
    %v6264 = vpop.f32.mrf.mxu0
    %v6265 = vadd.f32 0.0, %v6264
    %6266 = vmatmul.f32.gmra.mxu0 %v6047
    %v6267 = vpop.f32.mrf.mxu0
    %v6268 = vadd.f32 0.0, %v6267
    %6269 = vmatmul.f32.gmra.mxu0 %v6048
    %v6270 = vpop.f32.mrf.mxu0
    %v6271 = vadd.f32 0.0, %v6270
    %6272 = vmatmul.f32.gmra.mxu0 %v6049
    %v6273 = vpop.f32.mrf.mxu0
    %v6274 = vadd.f32 0.0, %v6273
    %6275 = vdwg.mxu0
    %v6276 = vld [vmem:[#allocation3] sm:$0xff]
    %v6277 = vld [vmem:[#allocation3 + $0x8] sm:$0xff]
    %v6278 = vld [vmem:[#allocation3 + $0x10] sm:$0xff]
    %v6279 = vld [vmem:[#allocation3 + $0x18] sm:$0xff]
    %v6280 = vld [vmem:[#allocation3 + $0x20] sm:$0xff]
    %v6281 = vld [vmem:[#allocation3 + $0x28] sm:$0xff]
    %v6282 = vld [vmem:[#allocation3 + $0x30] sm:$0xff]
    %v6283 = vld [vmem:[#allocation3 + $0x38] sm:$0xff]
    %v6284 = vld [vmem:[#allocation3 + $0x40] sm:$0xff]
    %v6285 = vld [vmem:[#allocation3 + $0x48] sm:$0xff]
    %v6286 = vld [vmem:[#allocation3 + $0x50] sm:$0xff]
    %v6287 = vld [vmem:[#allocation3 + $0x58] sm:$0xff]
    %v6288 = vld [vmem:[#allocation3 + $0x60] sm:$0xff]
    %v6289 = vld [vmem:[#allocation3 + $0x68] sm:$0xff]
    %v6290 = vld [vmem:[#allocation3 + $0x70] sm:$0xff]
    %v6291 = vld [vmem:[#allocation3 + $0x78] sm:$0xff]
    %v6292 = vld [vmem:[#allocation3 + $0x80] sm:$0xff]
    %v6293 = vld [vmem:[#allocation3 + $0x88] sm:$0xff]
    %v6294 = vld [vmem:[#allocation3 + $0x90] sm:$0xff]
    %v6295 = vld [vmem:[#allocation3 + $0x98] sm:$0xff]
    %v6296 = vld [vmem:[#allocation3 + $0xa0] sm:$0xff]
    %v6297 = vld [vmem:[#allocation3 + $0xa8] sm:$0xff]
    %v6298 = vld [vmem:[#allocation3 + $0xb0] sm:$0xff]
    %v6299 = vld [vmem:[#allocation3 + $0xb8] sm:$0xff]
    %v6300 = vld [vmem:[#allocation3 + $0xc0] sm:$0xff]
    %v6301 = vld [vmem:[#allocation3 + $0xc8] sm:$0xff]
    %v6302 = vld [vmem:[#allocation3 + $0xd0] sm:$0xff]
    %v6303 = vld [vmem:[#allocation3 + $0xd8] sm:$0xff]
    %v6304 = vld [vmem:[#allocation3 + $0xe0] sm:$0xff]
    %v6305 = vld [vmem:[#allocation3 + $0xe8] sm:$0xff]
    %v6306 = vld [vmem:[#allocation3 + $0xf0] sm:$0xff]
    %v6307 = vld [vmem:[#allocation3 + $0xf8] sm:$0xff]
    %v6308 = vld [vmem:[#allocation3 + $0x100] sm:$0xff]
    %v6309 = vld [vmem:[#allocation3 + $0x108] sm:$0xff]
    %v6310 = vld [vmem:[#allocation3 + $0x110] sm:$0xff]
    %v6311 = vld [vmem:[#allocation3 + $0x118] sm:$0xff]
    %v6312 = vld [vmem:[#allocation3 + $0x120] sm:$0xff]
    %v6313 = vld [vmem:[#allocation3 + $0x128] sm:$0xff]
    %v6314 = vld [vmem:[#allocation3 + $0x130] sm:$0xff]
    %v6315 = vld [vmem:[#allocation3 + $0x138] sm:$0xff]
    %v6316 = vld [vmem:[#allocation3 + $0x140] sm:$0xff]
    %v6317 = vld [vmem:[#allocation3 + $0x148] sm:$0xff]
    %v6318 = vld [vmem:[#allocation3 + $0x150] sm:$0xff]
    %v6319 = vld [vmem:[#allocation3 + $0x158] sm:$0xff]
    %v6320 = vld [vmem:[#allocation3 + $0x160] sm:$0xff]
    %v6321 = vld [vmem:[#allocation3 + $0x168] sm:$0xff]
    %v6322 = vld [vmem:[#allocation3 + $0x170] sm:$0xff]
    %v6323 = vld [vmem:[#allocation3 + $0x178] sm:$0xff]
    %v6324 = vld [vmem:[#allocation3 + $0x180] sm:$0xff]
    %v6325 = vld [vmem:[#allocation3 + $0x188] sm:$0xff]
    %v6326 = vld [vmem:[#allocation3 + $0x190] sm:$0xff]
    %v6327 = vld [vmem:[#allocation3 + $0x198] sm:$0xff]
    %v6328 = vld [vmem:[#allocation3 + $0x1a0] sm:$0xff]
    %v6329 = vld [vmem:[#allocation3 + $0x1a8] sm:$0xff]
    %v6330 = vld [vmem:[#allocation3 + $0x1b0] sm:$0xff]
    %v6331 = vld [vmem:[#allocation3 + $0x1b8] sm:$0xff]
    %v6332 = vld [vmem:[#allocation3 + $0x1c0] sm:$0xff]
    %v6333 = vld [vmem:[#allocation3 + $0x1c8] sm:$0xff]
    %v6334 = vld [vmem:[#allocation3 + $0x1d0] sm:$0xff]
    %v6335 = vld [vmem:[#allocation3 + $0x1d8] sm:$0xff]
    %v6336 = vld [vmem:[#allocation3 + $0x1e0] sm:$0xff]
    %v6337 = vld [vmem:[#allocation3 + $0x1e8] sm:$0xff]
    %v6338 = vld [vmem:[#allocation3 + $0x1f0] sm:$0xff]
    %v6339 = vld [vmem:[#allocation3 + $0x1f8] sm:$0xff]
    %v6340 = vadd.f32 %v6276, %v6085
    %v6341 = vadd.f32 %v6277, %v6088
    %v6342 = vadd.f32 %v6278, %v6091
    %v6343 = vadd.f32 %v6279, %v6094
    %v6344 = vadd.f32 %v6280, %v6097
    %v6345 = vadd.f32 %v6281, %v6100
    %v6346 = vadd.f32 %v6282, %v6103
    %v6347 = vadd.f32 %v6283, %v6106
    %v6348 = vadd.f32 %v6284, %v6109
    %v6349 = vadd.f32 %v6285, %v6112
    %v6350 = vadd.f32 %v6286, %v6115
    %v6351 = vadd.f32 %v6287, %v6118
    %v6352 = vadd.f32 %v6288, %v6121
    %v6353 = vadd.f32 %v6289, %v6124
    %v6354 = vadd.f32 %v6290, %v6127
    %v6355 = vadd.f32 %v6291, %v6130
    %v6356 = vadd.f32 %v6292, %v6133
    %v6357 = vadd.f32 %v6293, %v6136
    %v6358 = vadd.f32 %v6294, %v6139
    %v6359 = vadd.f32 %v6295, %v6142
    %v6360 = vadd.f32 %v6296, %v6145
    %v6361 = vadd.f32 %v6297, %v6148
    %v6362 = vadd.f32 %v6298, %v6151
    %v6363 = vadd.f32 %v6299, %v6154
    %v6364 = vadd.f32 %v6300, %v6157
    %v6365 = vadd.f32 %v6301, %v6160
    %v6366 = vadd.f32 %v6302, %v6163
    %v6367 = vadd.f32 %v6303, %v6166
    %v6368 = vadd.f32 %v6304, %v6169
    %v6369 = vadd.f32 %v6305, %v6172
    %v6370 = vadd.f32 %v6306, %v6175
    %v6371 = vadd.f32 %v6307, %v6178
    %v6372 = vadd.f32 %v6308, %v6181
    %v6373 = vadd.f32 %v6309, %v6184
    %v6374 = vadd.f32 %v6310, %v6187
    %v6375 = vadd.f32 %v6311, %v6190
    %v6376 = vadd.f32 %v6312, %v6193
    %v6377 = vadd.f32 %v6313, %v6196
    %v6378 = vadd.f32 %v6314, %v6199
    %v6379 = vadd.f32 %v6315, %v6202
    %v6380 = vadd.f32 %v6316, %v6205
    %v6381 = vadd.f32 %v6317, %v6208
    %v6382 = vadd.f32 %v6318, %v6211
    %v6383 = vadd.f32 %v6319, %v6214
    %v6384 = vadd.f32 %v6320, %v6217
    %v6385 = vadd.f32 %v6321, %v6220
    %v6386 = vadd.f32 %v6322, %v6223
    %v6387 = vadd.f32 %v6323, %v6226
    %v6388 = vadd.f32 %v6324, %v6229
    %v6389 = vadd.f32 %v6325, %v6232
    %v6390 = vadd.f32 %v6326, %v6235
    %v6391 = vadd.f32 %v6327, %v6238
    %v6392 = vadd.f32 %v6328, %v6241
    %v6393 = vadd.f32 %v6329, %v6244
    %v6394 = vadd.f32 %v6330, %v6247
    %v6395 = vadd.f32 %v6331, %v6250
    %v6396 = vadd.f32 %v6332, %v6253
    %v6397 = vadd.f32 %v6333, %v6256
    %v6398 = vadd.f32 %v6334, %v6259
    %v6399 = vadd.f32 %v6335, %v6262
    %v6400 = vadd.f32 %v6336, %v6265
    %v6401 = vadd.f32 %v6337, %v6268
    %v6402 = vadd.f32 %v6338, %v6271
    %v6403 = vadd.f32 %v6339, %v6274
    %6404 = vst [vmem:[#allocation3] sm:$0xff] %v6340
    %6405 = vst [vmem:[#allocation3 + $0x8] sm:$0xff] %v6341
    %6406 = vst [vmem:[#allocation3 + $0x10] sm:$0xff] %v6342
    %6407 = vst [vmem:[#allocation3 + $0x18] sm:$0xff] %v6343
    %6408 = vst [vmem:[#allocation3 + $0x20] sm:$0xff] %v6344
    %6409 = vst [vmem:[#allocation3 + $0x28] sm:$0xff] %v6345
    %6410 = vst [vmem:[#allocation3 + $0x30] sm:$0xff] %v6346
    %6411 = vst [vmem:[#allocation3 + $0x38] sm:$0xff] %v6347
    %6412 = vst [vmem:[#allocation3 + $0x40] sm:$0xff] %v6348
    %6413 = vst [vmem:[#allocation3 + $0x48] sm:$0xff] %v6349
    %6414 = vst [vmem:[#allocation3 + $0x50] sm:$0xff] %v6350
    %6415 = vst [vmem:[#allocation3 + $0x58] sm:$0xff] %v6351
    %6416 = vst [vmem:[#allocation3 + $0x60] sm:$0xff] %v6352
    %6417 = vst [vmem:[#allocation3 + $0x68] sm:$0xff] %v6353
    %6418 = vst [vmem:[#allocation3 + $0x70] sm:$0xff] %v6354
    %6419 = vst [vmem:[#allocation3 + $0x78] sm:$0xff] %v6355
    %6420 = vst [vmem:[#allocation3 + $0x80] sm:$0xff] %v6356
    %6421 = vst [vmem:[#allocation3 + $0x88] sm:$0xff] %v6357
    %6422 = vst [vmem:[#allocation3 + $0x90] sm:$0xff] %v6358
    %6423 = vst [vmem:[#allocation3 + $0x98] sm:$0xff] %v6359
    %6424 = vst [vmem:[#allocation3 + $0xa0] sm:$0xff] %v6360
    %6425 = vst [vmem:[#allocation3 + $0xa8] sm:$0xff] %v6361
    %6426 = vst [vmem:[#allocation3 + $0xb0] sm:$0xff] %v6362
    %6427 = vst [vmem:[#allocation3 + $0xb8] sm:$0xff] %v6363
    %6428 = vst [vmem:[#allocation3 + $0xc0] sm:$0xff] %v6364
    %6429 = vst [vmem:[#allocation3 + $0xc8] sm:$0xff] %v6365
    %6430 = vst [vmem:[#allocation3 + $0xd0] sm:$0xff] %v6366
    %6431 = vst [vmem:[#allocation3 + $0xd8] sm:$0xff] %v6367
    %6432 = vst [vmem:[#allocation3 + $0xe0] sm:$0xff] %v6368
    %6433 = vst [vmem:[#allocation3 + $0xe8] sm:$0xff] %v6369
    %6434 = vst [vmem:[#allocation3 + $0xf0] sm:$0xff] %v6370
    %6435 = vst [vmem:[#allocation3 + $0xf8] sm:$0xff] %v6371
    %6436 = vst [vmem:[#allocation3 + $0x100] sm:$0xff] %v6372
    %6437 = vst [vmem:[#allocation3 + $0x108] sm:$0xff] %v6373
    %6438 = vst [vmem:[#allocation3 + $0x110] sm:$0xff] %v6374
    %6439 = vst [vmem:[#allocation3 + $0x118] sm:$0xff] %v6375
    %6440 = vst [vmem:[#allocation3 + $0x120] sm:$0xff] %v6376
    %6441 = vst [vmem:[#allocation3 + $0x128] sm:$0xff] %v6377
    %6442 = vst [vmem:[#allocation3 + $0x130] sm:$0xff] %v6378
    %6443 = vst [vmem:[#allocation3 + $0x138] sm:$0xff] %v6379
    %6444 = vst [vmem:[#allocation3 + $0x140] sm:$0xff] %v6380
    %6445 = vst [vmem:[#allocation3 + $0x148] sm:$0xff] %v6381
    %6446 = vst [vmem:[#allocation3 + $0x150] sm:$0xff] %v6382
    %6447 = vst [vmem:[#allocation3 + $0x158] sm:$0xff] %v6383
    %6448 = vst [vmem:[#allocation3 + $0x160] sm:$0xff] %v6384
    %6449 = vst [vmem:[#allocation3 + $0x168] sm:$0xff] %v6385
    %6450 = vst [vmem:[#allocation3 + $0x170] sm:$0xff] %v6386
    %6451 = vst [vmem:[#allocation3 + $0x178] sm:$0xff] %v6387
    %6452 = vst [vmem:[#allocation3 + $0x180] sm:$0xff] %v6388
    %6453 = vst [vmem:[#allocation3 + $0x188] sm:$0xff] %v6389
    %6454 = vst [vmem:[#allocation3 + $0x190] sm:$0xff] %v6390
    %6455 = vst [vmem:[#allocation3 + $0x198] sm:$0xff] %v6391
    %6456 = vst [vmem:[#allocation3 + $0x1a0] sm:$0xff] %v6392
    %6457 = vst [vmem:[#allocation3 + $0x1a8] sm:$0xff] %v6393
    %6458 = vst [vmem:[#allocation3 + $0x1b0] sm:$0xff] %v6394
    %6459 = vst [vmem:[#allocation3 + $0x1b8] sm:$0xff] %v6395
    %6460 = vst [vmem:[#allocation3 + $0x1c0] sm:$0xff] %v6396
    %6461 = vst [vmem:[#allocation3 + $0x1c8] sm:$0xff] %v6397
    %6462 = vst [vmem:[#allocation3 + $0x1d0] sm:$0xff] %v6398
    %6463 = vst [vmem:[#allocation3 + $0x1d8] sm:$0xff] %v6399
    %6464 = vst [vmem:[#allocation3 + $0x1e0] sm:$0xff] %v6400
    %6465 = vst [vmem:[#allocation3 + $0x1e8] sm:$0xff] %v6401
    %6466 = vst [vmem:[#allocation3 + $0x1f0] sm:$0xff] %v6402
    %6467 = vst [vmem:[#allocation3 + $0x1f8] sm:$0xff] %v6403
    %v6468 = vld [vmem:[%s65 + $0x1] sm:$0xff]
    %v6469 = vld [vmem:[%s65 + $0x9] sm:$0xff]
    %v6470 = vld [vmem:[%s65 + $0x19] sm:$0xff]
    %v6471 = vld [vmem:[%s65 + $0x21] sm:$0xff]
    %v6472 = vld [vmem:[%s65 + $0x31] sm:$0xff]
    %v6473 = vld [vmem:[%s65 + $0x39] sm:$0xff]
    %v6474 = vld [vmem:[%s65 + $0x49] sm:$0xff]
    %v6475 = vld [vmem:[%s65 + $0x51] sm:$0xff]
    %v6476 = vld [vmem:[%s65 + $0x61] sm:$0xff]
    %v6477 = vld [vmem:[%s65 + $0x69] sm:$0xff]
    %v6478 = vld [vmem:[%s65 + $0x79] sm:$0xff]
    %v6479 = vld [vmem:[%s65 + $0x81] sm:$0xff]
    %v6480 = vld [vmem:[%s65 + $0x91] sm:$0xff]
    %v6481 = vld [vmem:[%s65 + $0x99] sm:$0xff]
    %v6482 = vld [vmem:[%s65 + $0xa9] sm:$0xff]
    %v6483 = vld [vmem:[%s65 + $0xb1] sm:$0xff]
    %v6484 = vld [vmem:[%s65 + $0xc1] sm:$0xff]
    %v6485 = vld [vmem:[%s65 + $0xc9] sm:$0xff]
    %v6486 = vld [vmem:[%s65 + $0xd9] sm:$0xff]
    %v6487 = vld [vmem:[%s65 + $0xe1] sm:$0xff]
    %v6488 = vld [vmem:[%s65 + $0xf1] sm:$0xff]
    %v6489 = vld [vmem:[%s65 + $0xf9] sm:$0xff]
    %v6490 = vld [vmem:[%s65 + $0x109] sm:$0xff]
    %v6491 = vld [vmem:[%s65 + $0x111] sm:$0xff]
    %v6492 = vld [vmem:[%s65 + $0x121] sm:$0xff]
    %v6493 = vld [vmem:[%s65 + $0x129] sm:$0xff]
    %v6494 = vld [vmem:[%s65 + $0x139] sm:$0xff]
    %v6495 = vld [vmem:[%s65 + $0x141] sm:$0xff]
    %v6496 = vld [vmem:[%s65 + $0x151] sm:$0xff]
    %v6497 = vld [vmem:[%s65 + $0x159] sm:$0xff]
    %v6498 = vld [vmem:[%s65 + $0x169] sm:$0xff]
    %v6499 = vld [vmem:[%s65 + $0x171] sm:$0xff]
    %v6500 = vld [vmem:[%s65 + $0x1b1] sm:$0xff]
    %v6501 = vld [vmem:[%s65 + $0x1b9] sm:$0xff]
    %v6502 = vld [vmem:[%s65 + $0x1c9] sm:$0xff]
    %v6503 = vld [vmem:[%s65 + $0x1d1] sm:$0xff]
    %v6504 = vld [vmem:[%s65 + $0x1e1] sm:$0xff]
    %v6505 = vld [vmem:[%s65 + $0x1e9] sm:$0xff]
    %v6506 = vld [vmem:[%s65 + $0x1f9] sm:$0xff]
    %v6507 = vld [vmem:[%s65 + $0x201] sm:$0xff]
    %v6508 = vld [vmem:[%s65 + $0x211] sm:$0xff]
    %v6509 = vld [vmem:[%s65 + $0x219] sm:$0xff]
    %v6510 = vld [vmem:[%s65 + $0x229] sm:$0xff]
    %v6511 = vld [vmem:[%s65 + $0x231] sm:$0xff]
    %v6512 = vld [vmem:[%s65 + $0x241] sm:$0xff]
    %v6513 = vld [vmem:[%s65 + $0x249] sm:$0xff]
    %v6514 = vld [vmem:[%s65 + $0x259] sm:$0xff]
    %v6515 = vld [vmem:[%s65 + $0x261] sm:$0xff]
    %v6516 = vld [vmem:[%s65 + $0x271] sm:$0xff]
    %v6517 = vld [vmem:[%s65 + $0x279] sm:$0xff]
    %v6518 = vld [vmem:[%s65 + $0x289] sm:$0xff]
    %v6519 = vld [vmem:[%s65 + $0x291] sm:$0xff]
    %v6520 = vld [vmem:[%s65 + $0x2a1] sm:$0xff]
    %v6521 = vld [vmem:[%s65 + $0x2a9] sm:$0xff]
    %v6522 = vld [vmem:[%s65 + $0x2b9] sm:$0xff]
    %v6523 = vld [vmem:[%s65 + $0x2c1] sm:$0xff]
    %v6524 = vld [vmem:[%s65 + $0x2d1] sm:$0xff]
    %v6525 = vld [vmem:[%s65 + $0x2d9] sm:$0xff]
    %v6526 = vld [vmem:[%s65 + $0x2e9] sm:$0xff]
    %v6527 = vld [vmem:[%s65 + $0x2f1] sm:$0xff]
    %v6528 = vld [vmem:[%s65 + $0x301] sm:$0xff]
    %v6529 = vld [vmem:[%s65 + $0x309] sm:$0xff]
    %v6530 = vld [vmem:[%s65 + $0x319] sm:$0xff]
    %v6531 = vld [vmem:[%s65 + $0x321] sm:$0xff]
    %s6532 = scalar_lea.vmem [#allocation4], 512
    %v6533 = vld [vmem:[%s6532] sm:$0xff]
    %v6534 = vld [vmem:[%s6532 + $0x8] sm:$0xff]
    %v6535 = vld [vmem:[%s6532 + $0x10] sm:$0xff]
    %v6536 = vld [vmem:[%s6532 + $0x18] sm:$0xff]
    %v6537 = vld [vmem:[%s6532 + $0x20] sm:$0xff]
    %v6538 = vld [vmem:[%s6532 + $0x28] sm:$0xff]
    %v6539 = vld [vmem:[%s6532 + $0x30] sm:$0xff]
    %v6540 = vld [vmem:[%s6532 + $0x38] sm:$0xff]
    %v6541 = vld [vmem:[%s6532 + $0x40] sm:$0xff]
    %v6542 = vld [vmem:[%s6532 + $0x48] sm:$0xff]
    %v6543 = vld [vmem:[%s6532 + $0x50] sm:$0xff]
    %v6544 = vld [vmem:[%s6532 + $0x58] sm:$0xff]
    %v6545 = vld [vmem:[%s6532 + $0x60] sm:$0xff]
    %v6546 = vld [vmem:[%s6532 + $0x68] sm:$0xff]
    %v6547 = vld [vmem:[%s6532 + $0x70] sm:$0xff]
    %v6548 = vld [vmem:[%s6532 + $0x78] sm:$0xff]
    %6549 = vmatpush.msra.mxu0 %v6548
    %6550 = vmatpush.msra.mxu0 %v6547
    %6551 = vmatpush.msra.mxu0 %v6546
    %6552 = vmatpush.msra.mxu0 %v6545
    %6553 = vmatpush.msra.mxu0 %v6544
    %6554 = vmatpush.msra.mxu0 %v6543
    %6555 = vmatpush.msra.mxu0 %v6542
    %6556 = vmatpush.msra.mxu0 %v6541
    %6557 = vmatpush.msra.mxu0 %v6540
    %6558 = vmatpush.msra.mxu0 %v6539
    %6559 = vmatpush.msra.mxu0 %v6538
    %6560 = vmatpush.msra.mxu0 %v6537
    %6561 = vmatpush.msra.mxu0 %v6536
    %6562 = vmatpush.msra.mxu0 %v6535
    %6563 = vmatpush.msra.mxu0 %v6534
    %6564 = vmatpush.msra.mxu0 %v6533
    %6565 = vmatmul.f32.gmra.mxu0 %v6468
    %v6566 = vpop.f32.mrf.mxu0
    %v6567 = vadd.f32 0.0, %v6566
    %6568 = vmatmul.f32.gmra.mxu0 %v6469
    %v6569 = vpop.f32.mrf.mxu0
    %v6570 = vadd.f32 0.0, %v6569
    %6571 = vmatmul.f32.gmra.mxu0 %v6470
    %v6572 = vpop.f32.mrf.mxu0
    %v6573 = vadd.f32 0.0, %v6572
    %6574 = vmatmul.f32.gmra.mxu0 %v6471
    %v6575 = vpop.f32.mrf.mxu0
    %v6576 = vadd.f32 0.0, %v6575
    %6577 = vmatmul.f32.gmra.mxu0 %v6472
    %v6578 = vpop.f32.mrf.mxu0
    %v6579 = vadd.f32 0.0, %v6578
    %6580 = vmatmul.f32.gmra.mxu0 %v6473
    %v6581 = vpop.f32.mrf.mxu0
    %v6582 = vadd.f32 0.0, %v6581
    %6583 = vmatmul.f32.gmra.mxu0 %v6474
    %v6584 = vpop.f32.mrf.mxu0
    %v6585 = vadd.f32 0.0, %v6584
    %6586 = vmatmul.f32.gmra.mxu0 %v6475
    %v6587 = vpop.f32.mrf.mxu0
    %v6588 = vadd.f32 0.0, %v6587
    %6589 = vmatmul.f32.gmra.mxu0 %v6476
    %v6590 = vpop.f32.mrf.mxu0
    %v6591 = vadd.f32 0.0, %v6590
    %6592 = vmatmul.f32.gmra.mxu0 %v6477
    %v6593 = vpop.f32.mrf.mxu0
    %v6594 = vadd.f32 0.0, %v6593
    %6595 = vmatmul.f32.gmra.mxu0 %v6478
    %v6596 = vpop.f32.mrf.mxu0
    %v6597 = vadd.f32 0.0, %v6596
    %6598 = vmatmul.f32.gmra.mxu0 %v6479
    %v6599 = vpop.f32.mrf.mxu0
    %v6600 = vadd.f32 0.0, %v6599
    %6601 = vmatmul.f32.gmra.mxu0 %v6480
    %v6602 = vpop.f32.mrf.mxu0
    %v6603 = vadd.f32 0.0, %v6602
    %6604 = vmatmul.f32.gmra.mxu0 %v6481
    %v6605 = vpop.f32.mrf.mxu0
    %v6606 = vadd.f32 0.0, %v6605
    %6607 = vmatmul.f32.gmra.mxu0 %v6482
    %v6608 = vpop.f32.mrf.mxu0
    %v6609 = vadd.f32 0.0, %v6608
    %6610 = vmatmul.f32.gmra.mxu0 %v6483
    %v6611 = vpop.f32.mrf.mxu0
    %v6612 = vadd.f32 0.0, %v6611
    %6613 = vmatmul.f32.gmra.mxu0 %v6484
    %v6614 = vpop.f32.mrf.mxu0
    %v6615 = vadd.f32 0.0, %v6614
    %6616 = vmatmul.f32.gmra.mxu0 %v6485
    %v6617 = vpop.f32.mrf.mxu0
    %v6618 = vadd.f32 0.0, %v6617
    %6619 = vmatmul.f32.gmra.mxu0 %v6486
    %v6620 = vpop.f32.mrf.mxu0
    %v6621 = vadd.f32 0.0, %v6620
    %6622 = vmatmul.f32.gmra.mxu0 %v6487
    %v6623 = vpop.f32.mrf.mxu0
    %v6624 = vadd.f32 0.0, %v6623
    %6625 = vmatmul.f32.gmra.mxu0 %v6488
    %v6626 = vpop.f32.mrf.mxu0
    %v6627 = vadd.f32 0.0, %v6626
    %6628 = vmatmul.f32.gmra.mxu0 %v6489
    %v6629 = vpop.f32.mrf.mxu0
    %v6630 = vadd.f32 0.0, %v6629
    %6631 = vmatmul.f32.gmra.mxu0 %v6490
    %v6632 = vpop.f32.mrf.mxu0
    %v6633 = vadd.f32 0.0, %v6632
    %6634 = vmatmul.f32.gmra.mxu0 %v6491
    %v6635 = vpop.f32.mrf.mxu0
    %v6636 = vadd.f32 0.0, %v6635
    %6637 = vmatmul.f32.gmra.mxu0 %v6492
    %v6638 = vpop.f32.mrf.mxu0
    %v6639 = vadd.f32 0.0, %v6638
    %6640 = vmatmul.f32.gmra.mxu0 %v6493
    %v6641 = vpop.f32.mrf.mxu0
    %v6642 = vadd.f32 0.0, %v6641
    %6643 = vmatmul.f32.gmra.mxu0 %v6494
    %v6644 = vpop.f32.mrf.mxu0
    %v6645 = vadd.f32 0.0, %v6644
    %6646 = vmatmul.f32.gmra.mxu0 %v6495
    %v6647 = vpop.f32.mrf.mxu0
    %v6648 = vadd.f32 0.0, %v6647
    %6649 = vmatmul.f32.gmra.mxu0 %v6496
    %v6650 = vpop.f32.mrf.mxu0
    %v6651 = vadd.f32 0.0, %v6650
    %6652 = vmatmul.f32.gmra.mxu0 %v6497
    %v6653 = vpop.f32.mrf.mxu0
    %v6654 = vadd.f32 0.0, %v6653
    %6655 = vmatmul.f32.gmra.mxu0 %v6498
    %v6656 = vpop.f32.mrf.mxu0
    %v6657 = vadd.f32 0.0, %v6656
    %6658 = vmatmul.f32.gmra.mxu0 %v6499
    %v6659 = vpop.f32.mrf.mxu0
    %v6660 = vadd.f32 0.0, %v6659
    %6661 = vmatmul.f32.gmra.mxu0 %v6500
    %v6662 = vpop.f32.mrf.mxu0
    %v6663 = vadd.f32 0.0, %v6662
    %6664 = vmatmul.f32.gmra.mxu0 %v6501
    %v6665 = vpop.f32.mrf.mxu0
    %v6666 = vadd.f32 0.0, %v6665
    %6667 = vmatmul.f32.gmra.mxu0 %v6502
    %v6668 = vpop.f32.mrf.mxu0
    %v6669 = vadd.f32 0.0, %v6668
    %6670 = vmatmul.f32.gmra.mxu0 %v6503
    %v6671 = vpop.f32.mrf.mxu0
    %v6672 = vadd.f32 0.0, %v6671
    %6673 = vmatmul.f32.gmra.mxu0 %v6504
    %v6674 = vpop.f32.mrf.mxu0
    %v6675 = vadd.f32 0.0, %v6674
    %6676 = vmatmul.f32.gmra.mxu0 %v6505
    %v6677 = vpop.f32.mrf.mxu0
    %v6678 = vadd.f32 0.0, %v6677
    %6679 = vmatmul.f32.gmra.mxu0 %v6506
    %v6680 = vpop.f32.mrf.mxu0
    %v6681 = vadd.f32 0.0, %v6680
    %6682 = vmatmul.f32.gmra.mxu0 %v6507
    %v6683 = vpop.f32.mrf.mxu0
    %v6684 = vadd.f32 0.0, %v6683
    %6685 = vmatmul.f32.gmra.mxu0 %v6508
    %v6686 = vpop.f32.mrf.mxu0
    %v6687 = vadd.f32 0.0, %v6686
    %6688 = vmatmul.f32.gmra.mxu0 %v6509
    %v6689 = vpop.f32.mrf.mxu0
    %v6690 = vadd.f32 0.0, %v6689
    %6691 = vmatmul.f32.gmra.mxu0 %v6510
    %v6692 = vpop.f32.mrf.mxu0
    %v6693 = vadd.f32 0.0, %v6692
    %6694 = vmatmul.f32.gmra.mxu0 %v6511
    %v6695 = vpop.f32.mrf.mxu0
    %v6696 = vadd.f32 0.0, %v6695
    %6697 = vmatmul.f32.gmra.mxu0 %v6512
    %v6698 = vpop.f32.mrf.mxu0
    %v6699 = vadd.f32 0.0, %v6698
    %6700 = vmatmul.f32.gmra.mxu0 %v6513
    %v6701 = vpop.f32.mrf.mxu0
    %v6702 = vadd.f32 0.0, %v6701
    %6703 = vmatmul.f32.gmra.mxu0 %v6514
    %v6704 = vpop.f32.mrf.mxu0
    %v6705 = vadd.f32 0.0, %v6704
    %6706 = vmatmul.f32.gmra.mxu0 %v6515
    %v6707 = vpop.f32.mrf.mxu0
    %v6708 = vadd.f32 0.0, %v6707
    %6709 = vmatmul.f32.gmra.mxu0 %v6516
    %v6710 = vpop.f32.mrf.mxu0
    %v6711 = vadd.f32 0.0, %v6710
    %6712 = vmatmul.f32.gmra.mxu0 %v6517
    %v6713 = vpop.f32.mrf.mxu0
    %v6714 = vadd.f32 0.0, %v6713
    %6715 = vmatmul.f32.gmra.mxu0 %v6518
    %v6716 = vpop.f32.mrf.mxu0
    %v6717 = vadd.f32 0.0, %v6716
    %6718 = vmatmul.f32.gmra.mxu0 %v6519
    %v6719 = vpop.f32.mrf.mxu0
    %v6720 = vadd.f32 0.0, %v6719
    %6721 = vmatmul.f32.gmra.mxu0 %v6520
    %v6722 = vpop.f32.mrf.mxu0
    %v6723 = vadd.f32 0.0, %v6722
    %6724 = vmatmul.f32.gmra.mxu0 %v6521
    %v6725 = vpop.f32.mrf.mxu0
    %v6726 = vadd.f32 0.0, %v6725
    %6727 = vmatmul.f32.gmra.mxu0 %v6522
    %v6728 = vpop.f32.mrf.mxu0
    %v6729 = vadd.f32 0.0, %v6728
    %6730 = vmatmul.f32.gmra.mxu0 %v6523
    %v6731 = vpop.f32.mrf.mxu0
    %v6732 = vadd.f32 0.0, %v6731
    %6733 = vmatmul.f32.gmra.mxu0 %v6524
    %v6734 = vpop.f32.mrf.mxu0
    %v6735 = vadd.f32 0.0, %v6734
    %6736 = vmatmul.f32.gmra.mxu0 %v6525
    %v6737 = vpop.f32.mrf.mxu0
    %v6738 = vadd.f32 0.0, %v6737
    %6739 = vmatmul.f32.gmra.mxu0 %v6526
    %v6740 = vpop.f32.mrf.mxu0
    %v6741 = vadd.f32 0.0, %v6740
    %6742 = vmatmul.f32.gmra.mxu0 %v6527
    %v6743 = vpop.f32.mrf.mxu0
    %v6744 = vadd.f32 0.0, %v6743
    %6745 = vmatmul.f32.gmra.mxu0 %v6528
    %v6746 = vpop.f32.mrf.mxu0
    %v6747 = vadd.f32 0.0, %v6746
    %6748 = vmatmul.f32.gmra.mxu0 %v6529
    %v6749 = vpop.f32.mrf.mxu0
    %v6750 = vadd.f32 0.0, %v6749
    %6751 = vmatmul.f32.gmra.mxu0 %v6530
    %v6752 = vpop.f32.mrf.mxu0
    %v6753 = vadd.f32 0.0, %v6752
    %6754 = vmatmul.f32.gmra.mxu0 %v6531
    %v6755 = vpop.f32.mrf.mxu0
    %v6756 = vadd.f32 0.0, %v6755
    %6757 = vdwg.mxu0
    %v6758 = vld [vmem:[#allocation3] sm:$0xff]
    %v6759 = vld [vmem:[#allocation3 + $0x8] sm:$0xff]
    %v6760 = vld [vmem:[#allocation3 + $0x10] sm:$0xff]
    %v6761 = vld [vmem:[#allocation3 + $0x18] sm:$0xff]
    %v6762 = vld [vmem:[#allocation3 + $0x20] sm:$0xff]
    %v6763 = vld [vmem:[#allocation3 + $0x28] sm:$0xff]
    %v6764 = vld [vmem:[#allocation3 + $0x30] sm:$0xff]
    %v6765 = vld [vmem:[#allocation3 + $0x38] sm:$0xff]
    %v6766 = vld [vmem:[#allocation3 + $0x40] sm:$0xff]
    %v6767 = vld [vmem:[#allocation3 + $0x48] sm:$0xff]
    %v6768 = vld [vmem:[#allocation3 + $0x50] sm:$0xff]
    %v6769 = vld [vmem:[#allocation3 + $0x58] sm:$0xff]
    %v6770 = vld [vmem:[#allocation3 + $0x60] sm:$0xff]
    %v6771 = vld [vmem:[#allocation3 + $0x68] sm:$0xff]
    %v6772 = vld [vmem:[#allocation3 + $0x70] sm:$0xff]
    %v6773 = vld [vmem:[#allocation3 + $0x78] sm:$0xff]
    %v6774 = vld [vmem:[#allocation3 + $0x80] sm:$0xff]
    %v6775 = vld [vmem:[#allocation3 + $0x88] sm:$0xff]
    %v6776 = vld [vmem:[#allocation3 + $0x90] sm:$0xff]
    %v6777 = vld [vmem:[#allocation3 + $0x98] sm:$0xff]
    %v6778 = vld [vmem:[#allocation3 + $0xa0] sm:$0xff]
    %v6779 = vld [vmem:[#allocation3 + $0xa8] sm:$0xff]
    %v6780 = vld [vmem:[#allocation3 + $0xb0] sm:$0xff]
    %v6781 = vld [vmem:[#allocation3 + $0xb8] sm:$0xff]
    %v6782 = vld [vmem:[#allocation3 + $0xc0] sm:$0xff]
    %v6783 = vld [vmem:[#allocation3 + $0xc8] sm:$0xff]
    %v6784 = vld [vmem:[#allocation3 + $0xd0] sm:$0xff]
    %v6785 = vld [vmem:[#allocation3 + $0xd8] sm:$0xff]
    %v6786 = vld [vmem:[#allocation3 + $0xe0] sm:$0xff]
    %v6787 = vld [vmem:[#allocation3 + $0xe8] sm:$0xff]
    %v6788 = vld [vmem:[#allocation3 + $0xf0] sm:$0xff]
    %v6789 = vld [vmem:[#allocation3 + $0xf8] sm:$0xff]
    %v6790 = vld [vmem:[#allocation3 + $0x100] sm:$0xff]
    %v6791 = vld [vmem:[#allocation3 + $0x108] sm:$0xff]
    %v6792 = vld [vmem:[#allocation3 + $0x110] sm:$0xff]
    %v6793 = vld [vmem:[#allocation3 + $0x118] sm:$0xff]
    %v6794 = vld [vmem:[#allocation3 + $0x120] sm:$0xff]
    %v6795 = vld [vmem:[#allocation3 + $0x128] sm:$0xff]
    %v6796 = vld [vmem:[#allocation3 + $0x130] sm:$0xff]
    %v6797 = vld [vmem:[#allocation3 + $0x138] sm:$0xff]
    %v6798 = vld [vmem:[#allocation3 + $0x140] sm:$0xff]
    %v6799 = vld [vmem:[#allocation3 + $0x148] sm:$0xff]
    %v6800 = vld [vmem:[#allocation3 + $0x150] sm:$0xff]
    %v6801 = vld [vmem:[#allocation3 + $0x158] sm:$0xff]
    %v6802 = vld [vmem:[#allocation3 + $0x160] sm:$0xff]
    %v6803 = vld [vmem:[#allocation3 + $0x168] sm:$0xff]
    %v6804 = vld [vmem:[#allocation3 + $0x170] sm:$0xff]
    %v6805 = vld [vmem:[#allocation3 + $0x178] sm:$0xff]
    %v6806 = vld [vmem:[#allocation3 + $0x180] sm:$0xff]
    %v6807 = vld [vmem:[#allocation3 + $0x188] sm:$0xff]
    %v6808 = vld [vmem:[#allocation3 + $0x190] sm:$0xff]
    %v6809 = vld [vmem:[#allocation3 + $0x198] sm:$0xff]
    %v6810 = vld [vmem:[#allocation3 + $0x1a0] sm:$0xff]
    %v6811 = vld [vmem:[#allocation3 + $0x1a8] sm:$0xff]
    %v6812 = vld [vmem:[#allocation3 + $0x1b0] sm:$0xff]
    %v6813 = vld [vmem:[#allocation3 + $0x1b8] sm:$0xff]
    %v6814 = vld [vmem:[#allocation3 + $0x1c0] sm:$0xff]
    %v6815 = vld [vmem:[#allocation3 + $0x1c8] sm:$0xff]
    %v6816 = vld [vmem:[#allocation3 + $0x1d0] sm:$0xff]
    %v6817 = vld [vmem:[#allocation3 + $0x1d8] sm:$0xff]
    %v6818 = vld [vmem:[#allocation3 + $0x1e0] sm:$0xff]
    %v6819 = vld [vmem:[#allocation3 + $0x1e8] sm:$0xff]
    %v6820 = vld [vmem:[#allocation3 + $0x1f0] sm:$0xff]
    %v6821 = vld [vmem:[#allocation3 + $0x1f8] sm:$0xff]
    %v6822 = vadd.f32 %v6758, %v6567
    %v6823 = vadd.f32 %v6759, %v6570
    %v6824 = vadd.f32 %v6760, %v6573
    %v6825 = vadd.f32 %v6761, %v6576
    %v6826 = vadd.f32 %v6762, %v6579
    %v6827 = vadd.f32 %v6763, %v6582
    %v6828 = vadd.f32 %v6764, %v6585
    %v6829 = vadd.f32 %v6765, %v6588
    %v6830 = vadd.f32 %v6766, %v6591
    %v6831 = vadd.f32 %v6767, %v6594
    %v6832 = vadd.f32 %v6768, %v6597
    %v6833 = vadd.f32 %v6769, %v6600
    %v6834 = vadd.f32 %v6770, %v6603
    %v6835 = vadd.f32 %v6771, %v6606
    %v6836 = vadd.f32 %v6772, %v6609
    %v6837 = vadd.f32 %v6773, %v6612
    %v6838 = vadd.f32 %v6774, %v6615
    %v6839 = vadd.f32 %v6775, %v6618
    %v6840 = vadd.f32 %v6776, %v6621
    %v6841 = vadd.f32 %v6777, %v6624
    %v6842 = vadd.f32 %v6778, %v6627
    %v6843 = vadd.f32 %v6779, %v6630
    %v6844 = vadd.f32 %v6780, %v6633
    %v6845 = vadd.f32 %v6781, %v6636
    %v6846 = vadd.f32 %v6782, %v6639
    %v6847 = vadd.f32 %v6783, %v6642
    %v6848 = vadd.f32 %v6784, %v6645
    %v6849 = vadd.f32 %v6785, %v6648
    %v6850 = vadd.f32 %v6786, %v6651
    %v6851 = vadd.f32 %v6787, %v6654
    %v6852 = vadd.f32 %v6788, %v6657
    %v6853 = vadd.f32 %v6789, %v6660
    %v6854 = vadd.f32 %v6790, %v6663
    %v6855 = vadd.f32 %v6791, %v6666
    %v6856 = vadd.f32 %v6792, %v6669
    %v6857 = vadd.f32 %v6793, %v6672
    %v6858 = vadd.f32 %v6794, %v6675
    %v6859 = vadd.f32 %v6795, %v6678
    %v6860 = vadd.f32 %v6796, %v6681
    %v6861 = vadd.f32 %v6797, %v6684
    %v6862 = vadd.f32 %v6798, %v6687
    %v6863 = vadd.f32 %v6799, %v6690
    %v6864 = vadd.f32 %v6800, %v6693
    %v6865 = vadd.f32 %v6801, %v6696
    %v6866 = vadd.f32 %v6802, %v6699
    %v6867 = vadd.f32 %v6803, %v6702
    %v6868 = vadd.f32 %v6804, %v6705
    %v6869 = vadd.f32 %v6805, %v6708
    %v6870 = vadd.f32 %v6806, %v6711
    %v6871 = vadd.f32 %v6807, %v6714
    %v6872 = vadd.f32 %v6808, %v6717
    %v6873 = vadd.f32 %v6809, %v6720
    %v6874 = vadd.f32 %v6810, %v6723
    %v6875 = vadd.f32 %v6811, %v6726
    %v6876 = vadd.f32 %v6812, %v6729
    %v6877 = vadd.f32 %v6813, %v6732
    %v6878 = vadd.f32 %v6814, %v6735
    %v6879 = vadd.f32 %v6815, %v6738
    %v6880 = vadd.f32 %v6816, %v6741
    %v6881 = vadd.f32 %v6817, %v6744
    %v6882 = vadd.f32 %v6818, %v6747
    %v6883 = vadd.f32 %v6819, %v6750
    %v6884 = vadd.f32 %v6820, %v6753
    %v6885 = vadd.f32 %v6821, %v6756
    %6886 = vst [vmem:[#allocation3] sm:$0xff] %v6822
    %6887 = vst [vmem:[#allocation3 + $0x8] sm:$0xff] %v6823
    %6888 = vst [vmem:[#allocation3 + $0x10] sm:$0xff] %v6824
    %6889 = vst [vmem:[#allocation3 + $0x18] sm:$0xff] %v6825
    %6890 = vst [vmem:[#allocation3 + $0x20] sm:$0xff] %v6826
    %6891 = vst [vmem:[#allocation3 + $0x28] sm:$0xff] %v6827
    %6892 = vst [vmem:[#allocation3 + $0x30] sm:$0xff] %v6828
    %6893 = vst [vmem:[#allocation3 + $0x38] sm:$0xff] %v6829
    %6894 = vst [vmem:[#allocation3 + $0x40] sm:$0xff] %v6830
    %6895 = vst [vmem:[#allocation3 + $0x48] sm:$0xff] %v6831
    %6896 = vst [vmem:[#allocation3 + $0x50] sm:$0xff] %v6832
    %6897 = vst [vmem:[#allocation3 + $0x58] sm:$0xff] %v6833
    %6898 = vst [vmem:[#allocation3 + $0x60] sm:$0xff] %v6834
    %6899 = vst [vmem:[#allocation3 + $0x68] sm:$0xff] %v6835
    %6900 = vst [vmem:[#allocation3 + $0x70] sm:$0xff] %v6836
    %6901 = vst [vmem:[#allocation3 + $0x78] sm:$0xff] %v6837
    %6902 = vst [vmem:[#allocation3 + $0x80] sm:$0xff] %v6838
    %6903 = vst [vmem:[#allocation3 + $0x88] sm:$0xff] %v6839
    %6904 = vst [vmem:[#allocation3 + $0x90] sm:$0xff] %v6840
    %6905 = vst [vmem:[#allocation3 + $0x98] sm:$0xff] %v6841
    %6906 = vst [vmem:[#allocation3 + $0xa0] sm:$0xff] %v6842
    %6907 = vst [vmem:[#allocation3 + $0xa8] sm:$0xff] %v6843
    %6908 = vst [vmem:[#allocation3 + $0xb0] sm:$0xff] %v6844
    %6909 = vst [vmem:[#allocation3 + $0xb8] sm:$0xff] %v6845
    %6910 = vst [vmem:[#allocation3 + $0xc0] sm:$0xff] %v6846
    %6911 = vst [vmem:[#allocation3 + $0xc8] sm:$0xff] %v6847
    %6912 = vst [vmem:[#allocation3 + $0xd0] sm:$0xff] %v6848
    %6913 = vst [vmem:[#allocation3 + $0xd8] sm:$0xff] %v6849
    %6914 = vst [vmem:[#allocation3 + $0xe0] sm:$0xff] %v6850
    %6915 = vst [vmem:[#allocation3 + $0xe8] sm:$0xff] %v6851
    %6916 = vst [vmem:[#allocation3 + $0xf0] sm:$0xff] %v6852
    %6917 = vst [vmem:[#allocation3 + $0xf8] sm:$0xff] %v6853
    %6918 = vst [vmem:[#allocation3 + $0x100] sm:$0xff] %v6854
    %6919 = vst [vmem:[#allocation3 + $0x108] sm:$0xff] %v6855
    %6920 = vst [vmem:[#allocation3 + $0x110] sm:$0xff] %v6856
    %6921 = vst [vmem:[#allocation3 + $0x118] sm:$0xff] %v6857
    %6922 = vst [vmem:[#allocation3 + $0x120] sm:$0xff] %v6858
    %6923 = vst [vmem:[#allocation3 + $0x128] sm:$0xff] %v6859
    %6924 = vst [vmem:[#allocation3 + $0x130] sm:$0xff] %v6860
    %6925 = vst [vmem:[#allocation3 + $0x138] sm:$0xff] %v6861
    %6926 = vst [vmem:[#allocation3 + $0x140] sm:$0xff] %v6862
    %6927 = vst [vmem:[#allocation3 + $0x148] sm:$0xff] %v6863
    %6928 = vst [vmem:[#allocation3 + $0x150] sm:$0xff] %v6864
    %6929 = vst [vmem:[#allocation3 + $0x158] sm:$0xff] %v6865
    %6930 = vst [vmem:[#allocation3 + $0x160] sm:$0xff] %v6866
    %6931 = vst [vmem:[#allocation3 + $0x168] sm:$0xff] %v6867
    %6932 = vst [vmem:[#allocation3 + $0x170] sm:$0xff] %v6868
    %6933 = vst [vmem:[#allocation3 + $0x178] sm:$0xff] %v6869
    %6934 = vst [vmem:[#allocation3 + $0x180] sm:$0xff] %v6870
    %6935 = vst [vmem:[#allocation3 + $0x188] sm:$0xff] %v6871
    %6936 = vst [vmem:[#allocation3 + $0x190] sm:$0xff] %v6872
    %6937 = vst [vmem:[#allocation3 + $0x198] sm:$0xff] %v6873
    %6938 = vst [vmem:[#allocation3 + $0x1a0] sm:$0xff] %v6874
    %6939 = vst [vmem:[#allocation3 + $0x1a8] sm:$0xff] %v6875
    %6940 = vst [vmem:[#allocation3 + $0x1b0] sm:$0xff] %v6876
    %6941 = vst [vmem:[#allocation3 + $0x1b8] sm:$0xff] %v6877
    %6942 = vst [vmem:[#allocation3 + $0x1c0] sm:$0xff] %v6878
    %6943 = vst [vmem:[#allocation3 + $0x1c8] sm:$0xff] %v6879
    %6944 = vst [vmem:[#allocation3 + $0x1d0] sm:$0xff] %v6880
    %6945 = vst [vmem:[#allocation3 + $0x1d8] sm:$0xff] %v6881
    %6946 = vst [vmem:[#allocation3 + $0x1e0] sm:$0xff] %v6882
    %6947 = vst [vmem:[#allocation3 + $0x1e8] sm:$0xff] %v6883
    %6948 = vst [vmem:[#allocation3 + $0x1f0] sm:$0xff] %v6884
    %6949 = vst [vmem:[#allocation3 + $0x1f8] sm:$0xff] %v6885
    %v6950 = vld [vmem:[%s65 + $0x2] sm:$0xff]
    %v6951 = vld [vmem:[%s65 + $0xa] sm:$0xff]
    %v6952 = vld [vmem:[%s65 + $0x1a] sm:$0xff]
    %v6953 = vld [vmem:[%s65 + $0x22] sm:$0xff]
    %v6954 = vld [vmem:[%s65 + $0x32] sm:$0xff]
    %v6955 = vld [vmem:[%s65 + $0x3a] sm:$0xff]
    %v6956 = vld [vmem:[%s65 + $0x4a] sm:$0xff]
    %v6957 = vld [vmem:[%s65 + $0x52] sm:$0xff]
    %v6958 = vld [vmem:[%s65 + $0x62] sm:$0xff]
    %v6959 = vld [vmem:[%s65 + $0x6a] sm:$0xff]
    %v6960 = vld [vmem:[%s65 + $0x7a] sm:$0xff]
    %v6961 = vld [vmem:[%s65 + $0x82] sm:$0xff]
    %v6962 = vld [vmem:[%s65 + $0x92] sm:$0xff]
    %v6963 = vld [vmem:[%s65 + $0x9a] sm:$0xff]
    %v6964 = vld [vmem:[%s65 + $0xaa] sm:$0xff]
    %v6965 = vld [vmem:[%s65 + $0xb2] sm:$0xff]
    %v6966 = vld [vmem:[%s65 + $0xc2] sm:$0xff]
    %v6967 = vld [vmem:[%s65 + $0xca] sm:$0xff]
    %v6968 = vld [vmem:[%s65 + $0xda] sm:$0xff]
    %v6969 = vld [vmem:[%s65 + $0xe2] sm:$0xff]
    %v6970 = vld [vmem:[%s65 + $0xf2] sm:$0xff]
    %v6971 = vld [vmem:[%s65 + $0xfa] sm:$0xff]
    %v6972 = vld [vmem:[%s65 + $0x10a] sm:$0xff]
    %v6973 = vld [vmem:[%s65 + $0x112] sm:$0xff]
    %v6974 = vld [vmem:[%s65 + $0x122] sm:$0xff]
    %v6975 = vld [vmem:[%s65 + $0x12a] sm:$0xff]
    %v6976 = vld [vmem:[%s65 + $0x13a] sm:$0xff]
    %v6977 = vld [vmem:[%s65 + $0x142] sm:$0xff]
    %v6978 = vld [vmem:[%s65 + $0x152] sm:$0xff]
    %v6979 = vld [vmem:[%s65 + $0x15a] sm:$0xff]
    %v6980 = vld [vmem:[%s65 + $0x16a] sm:$0xff]
    %v6981 = vld [vmem:[%s65 + $0x172] sm:$0xff]
    %v6982 = vld [vmem:[%s65 + $0x1b2] sm:$0xff]
    %v6983 = vld [vmem:[%s65 + $0x1ba] sm:$0xff]
    %v6984 = vld [vmem:[%s65 + $0x1ca] sm:$0xff]
    %v6985 = vld [vmem:[%s65 + $0x1d2] sm:$0xff]
    %v6986 = vld [vmem:[%s65 + $0x1e2] sm:$0xff]
    %v6987 = vld [vmem:[%s65 + $0x1ea] sm:$0xff]
    %v6988 = vld [vmem:[%s65 + $0x1fa] sm:$0xff]
    %v6989 = vld [vmem:[%s65 + $0x202] sm:$0xff]
    %v6990 = vld [vmem:[%s65 + $0x212] sm:$0xff]
    %v6991 = vld [vmem:[%s65 + $0x21a] sm:$0xff]
    %v6992 = vld [vmem:[%s65 + $0x22a] sm:$0xff]
    %v6993 = vld [vmem:[%s65 + $0x232] sm:$0xff]
    %v6994 = vld [vmem:[%s65 + $0x242] sm:$0xff]
    %v6995 = vld [vmem:[%s65 + $0x24a] sm:$0xff]
    %v6996 = vld [vmem:[%s65 + $0x25a] sm:$0xff]
    %v6997 = vld [vmem:[%s65 + $0x262] sm:$0xff]
    %v6998 = vld [vmem:[%s65 + $0x272] sm:$0xff]
    %v6999 = vld [vmem:[%s65 + $0x27a] sm:$0xff]
    %v7000 = vld [vmem:[%s65 + $0x28a] sm:$0xff]
    %v7001 = vld [vmem:[%s65 + $0x292] sm:$0xff]
    %v7002 = vld [vmem:[%s65 + $0x2a2] sm:$0xff]
    %v7003 = vld [vmem:[%s65 + $0x2aa] sm:$0xff]
    %v7004 = vld [vmem:[%s65 + $0x2ba] sm:$0xff]
    %v7005 = vld [vmem:[%s65 + $0x2c2] sm:$0xff]
    %v7006 = vld [vmem:[%s65 + $0x2d2] sm:$0xff]
    %v7007 = vld [vmem:[%s65 + $0x2da] sm:$0xff]
    %v7008 = vld [vmem:[%s65 + $0x2ea] sm:$0xff]
    %v7009 = vld [vmem:[%s65 + $0x2f2] sm:$0xff]
    %v7010 = vld [vmem:[%s65 + $0x302] sm:$0xff]
    %v7011 = vld [vmem:[%s65 + $0x30a] sm:$0xff]
    %v7012 = vld [vmem:[%s65 + $0x31a] sm:$0xff]
    %v7013 = vld [vmem:[%s65 + $0x322] sm:$0xff]
    %s7014 = scalar_lea.vmem [#allocation4], 640
    %v7015 = vld [vmem:[%s7014] sm:$0xff]
    %v7016 = vld [vmem:[%s7014 + $0x8] sm:$0xff]
    %v7017 = vld [vmem:[%s7014 + $0x10] sm:$0xff]
    %v7018 = vld [vmem:[%s7014 + $0x18] sm:$0xff]
    %v7019 = vld [vmem:[%s7014 + $0x20] sm:$0xff]
    %v7020 = vld [vmem:[%s7014 + $0x28] sm:$0xff]
    %v7021 = vld [vmem:[%s7014 + $0x30] sm:$0xff]
    %v7022 = vld [vmem:[%s7014 + $0x38] sm:$0xff]
    %v7023 = vld [vmem:[%s7014 + $0x40] sm:$0xff]
    %v7024 = vld [vmem:[%s7014 + $0x48] sm:$0xff]
    %v7025 = vld [vmem:[%s7014 + $0x50] sm:$0xff]
    %v7026 = vld [vmem:[%s7014 + $0x58] sm:$0xff]
    %v7027 = vld [vmem:[%s7014 + $0x60] sm:$0xff]
    %v7028 = vld [vmem:[%s7014 + $0x68] sm:$0xff]
    %v7029 = vld [vmem:[%s7014 + $0x70] sm:$0xff]
    %v7030 = vld [vmem:[%s7014 + $0x78] sm:$0xff]
    %7031 = vmatpush.msra.mxu0 %v7030
    %7032 = vmatpush.msra.mxu0 %v7029
    %7033 = vmatpush.msra.mxu0 %v7028
    %7034 = vmatpush.msra.mxu0 %v7027
    %7035 = vmatpush.msra.mxu0 %v7026
    %7036 = vmatpush.msra.mxu0 %v7025
    %7037 = vmatpush.msra.mxu0 %v7024
    %7038 = vmatpush.msra.mxu0 %v7023
    %7039 = vmatpush.msra.mxu0 %v7022
    %7040 = vmatpush.msra.mxu0 %v7021
    %7041 = vmatpush.msra.mxu0 %v7020
    %7042 = vmatpush.msra.mxu0 %v7019
    %7043 = vmatpush.msra.mxu0 %v7018
    %7044 = vmatpush.msra.mxu0 %v7017
    %7045 = vmatpush.msra.mxu0 %v7016
    %7046 = vmatpush.msra.mxu0 %v7015
    %7047 = vmatmul.f32.gmra.mxu0 %v6950
    %v7048 = vpop.f32.mrf.mxu0
    %v7049 = vadd.f32 0.0, %v7048
    %7050 = vmatmul.f32.gmra.mxu0 %v6951
    %v7051 = vpop.f32.mrf.mxu0
    %v7052 = vadd.f32 0.0, %v7051
    %7053 = vmatmul.f32.gmra.mxu0 %v6952
    %v7054 = vpop.f32.mrf.mxu0
    %v7055 = vadd.f32 0.0, %v7054
    %7056 = vmatmul.f32.gmra.mxu0 %v6953
    %v7057 = vpop.f32.mrf.mxu0
    %v7058 = vadd.f32 0.0, %v7057
    %7059 = vmatmul.f32.gmra.mxu0 %v6954
    %v7060 = vpop.f32.mrf.mxu0
    %v7061 = vadd.f32 0.0, %v7060
    %7062 = vmatmul.f32.gmra.mxu0 %v6955
    %v7063 = vpop.f32.mrf.mxu0
    %v7064 = vadd.f32 0.0, %v7063
    %7065 = vmatmul.f32.gmra.mxu0 %v6956
    %v7066 = vpop.f32.mrf.mxu0
    %v7067 = vadd.f32 0.0, %v7066
    %7068 = vmatmul.f32.gmra.mxu0 %v6957
    %v7069 = vpop.f32.mrf.mxu0
    %v7070 = vadd.f32 0.0, %v7069
    %7071 = vmatmul.f32.gmra.mxu0 %v6958
    %v7072 = vpop.f32.mrf.mxu0
    %v7073 = vadd.f32 0.0, %v7072
    %7074 = vmatmul.f32.gmra.mxu0 %v6959
    %v7075 = vpop.f32.mrf.mxu0
    %v7076 = vadd.f32 0.0, %v7075
    %7077 = vmatmul.f32.gmra.mxu0 %v6960
    %v7078 = vpop.f32.mrf.mxu0
    %v7079 = vadd.f32 0.0, %v7078
    %7080 = vmatmul.f32.gmra.mxu0 %v6961
    %v7081 = vpop.f32.mrf.mxu0
    %v7082 = vadd.f32 0.0, %v7081
    %7083 = vmatmul.f32.gmra.mxu0 %v6962
    %v7084 = vpop.f32.mrf.mxu0
    %v7085 = vadd.f32 0.0, %v7084
    %7086 = vmatmul.f32.gmra.mxu0 %v6963
    %v7087 = vpop.f32.mrf.mxu0
    %v7088 = vadd.f32 0.0, %v7087
    %7089 = vmatmul.f32.gmra.mxu0 %v6964
    %v7090 = vpop.f32.mrf.mxu0
    %v7091 = vadd.f32 0.0, %v7090
    %7092 = vmatmul.f32.gmra.mxu0 %v6965
    %v7093 = vpop.f32.mrf.mxu0
    %v7094 = vadd.f32 0.0, %v7093
    %7095 = vmatmul.f32.gmra.mxu0 %v6966
    %v7096 = vpop.f32.mrf.mxu0
    %v7097 = vadd.f32 0.0, %v7096
    %7098 = vmatmul.f32.gmra.mxu0 %v6967
    %v7099 = vpop.f32.mrf.mxu0
    %v7100 = vadd.f32 0.0, %v7099
    %7101 = vmatmul.f32.gmra.mxu0 %v6968
    %v7102 = vpop.f32.mrf.mxu0
    %v7103 = vadd.f32 0.0, %v7102
    %7104 = vmatmul.f32.gmra.mxu0 %v6969
    %v7105 = vpop.f32.mrf.mxu0
    %v7106 = vadd.f32 0.0, %v7105
    %7107 = vmatmul.f32.gmra.mxu0 %v6970
    %v7108 = vpop.f32.mrf.mxu0
    %v7109 = vadd.f32 0.0, %v7108
    %7110 = vmatmul.f32.gmra.mxu0 %v6971
    %v7111 = vpop.f32.mrf.mxu0
    %v7112 = vadd.f32 0.0, %v7111
    %7113 = vmatmul.f32.gmra.mxu0 %v6972
    %v7114 = vpop.f32.mrf.mxu0
    %v7115 = vadd.f32 0.0, %v7114
    %7116 = vmatmul.f32.gmra.mxu0 %v6973
    %v7117 = vpop.f32.mrf.mxu0
    %v7118 = vadd.f32 0.0, %v7117
    %7119 = vmatmul.f32.gmra.mxu0 %v6974
    %v7120 = vpop.f32.mrf.mxu0
    %v7121 = vadd.f32 0.0, %v7120
    %7122 = vmatmul.f32.gmra.mxu0 %v6975
    %v7123 = vpop.f32.mrf.mxu0
    %v7124 = vadd.f32 0.0, %v7123
    %7125 = vmatmul.f32.gmra.mxu0 %v6976
    %v7126 = vpop.f32.mrf.mxu0
    %v7127 = vadd.f32 0.0, %v7126
    %7128 = vmatmul.f32.gmra.mxu0 %v6977
    %v7129 = vpop.f32.mrf.mxu0
    %v7130 = vadd.f32 0.0, %v7129
    %7131 = vmatmul.f32.gmra.mxu0 %v6978
    %v7132 = vpop.f32.mrf.mxu0
    %v7133 = vadd.f32 0.0, %v7132
    %7134 = vmatmul.f32.gmra.mxu0 %v6979
    %v7135 = vpop.f32.mrf.mxu0
    %v7136 = vadd.f32 0.0, %v7135
    %7137 = vmatmul.f32.gmra.mxu0 %v6980
    %v7138 = vpop.f32.mrf.mxu0
    %v7139 = vadd.f32 0.0, %v7138
    %7140 = vmatmul.f32.gmra.mxu0 %v6981
    %v7141 = vpop.f32.mrf.mxu0
    %v7142 = vadd.f32 0.0, %v7141
    %7143 = vmatmul.f32.gmra.mxu0 %v6982
    %v7144 = vpop.f32.mrf.mxu0
    %v7145 = vadd.f32 0.0, %v7144
    %7146 = vmatmul.f32.gmra.mxu0 %v6983
    %v7147 = vpop.f32.mrf.mxu0
    %v7148 = vadd.f32 0.0, %v7147
    %7149 = vmatmul.f32.gmra.mxu0 %v6984
    %v7150 = vpop.f32.mrf.mxu0
    %v7151 = vadd.f32 0.0, %v7150
    %7152 = vmatmul.f32.gmra.mxu0 %v6985
    %v7153 = vpop.f32.mrf.mxu0
    %v7154 = vadd.f32 0.0, %v7153
    %7155 = vmatmul.f32.gmra.mxu0 %v6986
    %v7156 = vpop.f32.mrf.mxu0
    %v7157 = vadd.f32 0.0, %v7156
    %7158 = vmatmul.f32.gmra.mxu0 %v6987
    %v7159 = vpop.f32.mrf.mxu0
    %v7160 = vadd.f32 0.0, %v7159
    %7161 = vmatmul.f32.gmra.mxu0 %v6988
    %v7162 = vpop.f32.mrf.mxu0
    %v7163 = vadd.f32 0.0, %v7162
    %7164 = vmatmul.f32.gmra.mxu0 %v6989
    %v7165 = vpop.f32.mrf.mxu0
    %v7166 = vadd.f32 0.0, %v7165
    %7167 = vmatmul.f32.gmra.mxu0 %v6990
    %v7168 = vpop.f32.mrf.mxu0
    %v7169 = vadd.f32 0.0, %v7168
    %7170 = vmatmul.f32.gmra.mxu0 %v6991
    %v7171 = vpop.f32.mrf.mxu0
    %v7172 = vadd.f32 0.0, %v7171
    %7173 = vmatmul.f32.gmra.mxu0 %v6992
    %v7174 = vpop.f32.mrf.mxu0
    %v7175 = vadd.f32 0.0, %v7174
    %7176 = vmatmul.f32.gmra.mxu0 %v6993
    %v7177 = vpop.f32.mrf.mxu0
    %v7178 = vadd.f32 0.0, %v7177
    %7179 = vmatmul.f32.gmra.mxu0 %v6994
    %v7180 = vpop.f32.mrf.mxu0
    %v7181 = vadd.f32 0.0, %v7180
    %7182 = vmatmul.f32.gmra.mxu0 %v6995
    %v7183 = vpop.f32.mrf.mxu0
    %v7184 = vadd.f32 0.0, %v7183
    %7185 = vmatmul.f32.gmra.mxu0 %v6996
    %v7186 = vpop.f32.mrf.mxu0
    %v7187 = vadd.f32 0.0, %v7186
    %7188 = vmatmul.f32.gmra.mxu0 %v6997
    %v7189 = vpop.f32.mrf.mxu0
    %v7190 = vadd.f32 0.0, %v7189
    %7191 = vmatmul.f32.gmra.mxu0 %v6998
    %v7192 = vpop.f32.mrf.mxu0
    %v7193 = vadd.f32 0.0, %v7192
    %7194 = vmatmul.f32.gmra.mxu0 %v6999
    %v7195 = vpop.f32.mrf.mxu0
    %v7196 = vadd.f32 0.0, %v7195
    %7197 = vmatmul.f32.gmra.mxu0 %v7000
    %v7198 = vpop.f32.mrf.mxu0
    %v7199 = vadd.f32 0.0, %v7198
    %7200 = vmatmul.f32.gmra.mxu0 %v7001
    %v7201 = vpop.f32.mrf.mxu0
    %v7202 = vadd.f32 0.0, %v7201
    %7203 = vmatmul.f32.gmra.mxu0 %v7002
    %v7204 = vpop.f32.mrf.mxu0
    %v7205 = vadd.f32 0.0, %v7204
    %7206 = vmatmul.f32.gmra.mxu0 %v7003
    %v7207 = vpop.f32.mrf.mxu0
    %v7208 = vadd.f32 0.0, %v7207
    %7209 = vmatmul.f32.gmra.mxu0 %v7004
    %v7210 = vpop.f32.mrf.mxu0
    %v7211 = vadd.f32 0.0, %v7210
    %7212 = vmatmul.f32.gmra.mxu0 %v7005
    %v7213 = vpop.f32.mrf.mxu0
    %v7214 = vadd.f32 0.0, %v7213
    %7215 = vmatmul.f32.gmra.mxu0 %v7006
    %v7216 = vpop.f32.mrf.mxu0
    %v7217 = vadd.f32 0.0, %v7216
    %7218 = vmatmul.f32.gmra.mxu0 %v7007
    %v7219 = vpop.f32.mrf.mxu0
    %v7220 = vadd.f32 0.0, %v7219
    %7221 = vmatmul.f32.gmra.mxu0 %v7008
    %v7222 = vpop.f32.mrf.mxu0
    %v7223 = vadd.f32 0.0, %v7222
    %7224 = vmatmul.f32.gmra.mxu0 %v7009
    %v7225 = vpop.f32.mrf.mxu0
    %v7226 = vadd.f32 0.0, %v7225
    %7227 = vmatmul.f32.gmra.mxu0 %v7010
    %v7228 = vpop.f32.mrf.mxu0
    %v7229 = vadd.f32 0.0, %v7228
    %7230 = vmatmul.f32.gmra.mxu0 %v7011
    %v7231 = vpop.f32.mrf.mxu0
    %v7232 = vadd.f32 0.0, %v7231
    %7233 = vmatmul.f32.gmra.mxu0 %v7012
    %v7234 = vpop.f32.mrf.mxu0
    %v7235 = vadd.f32 0.0, %v7234
    %7236 = vmatmul.f32.gmra.mxu0 %v7013
    %v7237 = vpop.f32.mrf.mxu0
    %v7238 = vadd.f32 0.0, %v7237
    %7239 = vdwg.mxu0
    %v7240 = vld [vmem:[#allocation3] sm:$0xff]
    %v7241 = vld [vmem:[#allocation3 + $0x8] sm:$0xff]
    %v7242 = vld [vmem:[#allocation3 + $0x10] sm:$0xff]
    %v7243 = vld [vmem:[#allocation3 + $0x18] sm:$0xff]
    %v7244 = vld [vmem:[#allocation3 + $0x20] sm:$0xff]
    %v7245 = vld [vmem:[#allocation3 + $0x28] sm:$0xff]
    %v7246 = vld [vmem:[#allocation3 + $0x30] sm:$0xff]
    %v7247 = vld [vmem:[#allocation3 + $0x38] sm:$0xff]
    %v7248 = vld [vmem:[#allocation3 + $0x40] sm:$0xff]
    %v7249 = vld [vmem:[#allocation3 + $0x48] sm:$0xff]
    %v7250 = vld [vmem:[#allocation3 + $0x50] sm:$0xff]
    %v7251 = vld [vmem:[#allocation3 + $0x58] sm:$0xff]
    %v7252 = vld [vmem:[#allocation3 + $0x60] sm:$0xff]
    %v7253 = vld [vmem:[#allocation3 + $0x68] sm:$0xff]
    %v7254 = vld [vmem:[#allocation3 + $0x70] sm:$0xff]
    %v7255 = vld [vmem:[#allocation3 + $0x78] sm:$0xff]
    %v7256 = vld [vmem:[#allocation3 + $0x80] sm:$0xff]
    %v7257 = vld [vmem:[#allocation3 + $0x88] sm:$0xff]
    %v7258 = vld [vmem:[#allocation3 + $0x90] sm:$0xff]
    %v7259 = vld [vmem:[#allocation3 + $0x98] sm:$0xff]
    %v7260 = vld [vmem:[#allocation3 + $0xa0] sm:$0xff]
    %v7261 = vld [vmem:[#allocation3 + $0xa8] sm:$0xff]
    %v7262 = vld [vmem:[#allocation3 + $0xb0] sm:$0xff]
    %v7263 = vld [vmem:[#allocation3 + $0xb8] sm:$0xff]
    %v7264 = vld [vmem:[#allocation3 + $0xc0] sm:$0xff]
    %v7265 = vld [vmem:[#allocation3 + $0xc8] sm:$0xff]
    %v7266 = vld [vmem:[#allocation3 + $0xd0] sm:$0xff]
    %v7267 = vld [vmem:[#allocation3 + $0xd8] sm:$0xff]
    %v7268 = vld [vmem:[#allocation3 + $0xe0] sm:$0xff]
    %v7269 = vld [vmem:[#allocation3 + $0xe8] sm:$0xff]
    %v7270 = vld [vmem:[#allocation3 + $0xf0] sm:$0xff]
    %v7271 = vld [vmem:[#allocation3 + $0xf8] sm:$0xff]
    %v7272 = vld [vmem:[#allocation3 + $0x100] sm:$0xff]
    %v7273 = vld [vmem:[#allocation3 + $0x108] sm:$0xff]
    %v7274 = vld [vmem:[#allocation3 + $0x110] sm:$0xff]
    %v7275 = vld [vmem:[#allocation3 + $0x118] sm:$0xff]
    %v7276 = vld [vmem:[#allocation3 + $0x120] sm:$0xff]
    %v7277 = vld [vmem:[#allocation3 + $0x128] sm:$0xff]
    %v7278 = vld [vmem:[#allocation3 + $0x130] sm:$0xff]
    %v7279 = vld [vmem:[#allocation3 + $0x138] sm:$0xff]
    %v7280 = vld [vmem:[#allocation3 + $0x140] sm:$0xff]
    %v7281 = vld [vmem:[#allocation3 + $0x148] sm:$0xff]
    %v7282 = vld [vmem:[#allocation3 + $0x150] sm:$0xff]
    %v7283 = vld [vmem:[#allocation3 + $0x158] sm:$0xff]
    %v7284 = vld [vmem:[#allocation3 + $0x160] sm:$0xff]
    %v7285 = vld [vmem:[#allocation3 + $0x168] sm:$0xff]
    %v7286 = vld [vmem:[#allocation3 + $0x170] sm:$0xff]
    %v7287 = vld [vmem:[#allocation3 + $0x178] sm:$0xff]
    %v7288 = vld [vmem:[#allocation3 + $0x180] sm:$0xff]
    %v7289 = vld [vmem:[#allocation3 + $0x188] sm:$0xff]
    %v7290 = vld [vmem:[#allocation3 + $0x190] sm:$0xff]
    %v7291 = vld [vmem:[#allocation3 + $0x198] sm:$0xff]
    %v7292 = vld [vmem:[#allocation3 + $0x1a0] sm:$0xff]
    %v7293 = vld [vmem:[#allocation3 + $0x1a8] sm:$0xff]
    %v7294 = vld [vmem:[#allocation3 + $0x1b0] sm:$0xff]
    %v7295 = vld [vmem:[#allocation3 + $0x1b8] sm:$0xff]
    %v7296 = vld [vmem:[#allocation3 + $0x1c0] sm:$0xff]
    %v7297 = vld [vmem:[#allocation3 + $0x1c8] sm:$0xff]
    %v7298 = vld [vmem:[#allocation3 + $0x1d0] sm:$0xff]
    %v7299 = vld [vmem:[#allocation3 + $0x1d8] sm:$0xff]
    %v7300 = vld [vmem:[#allocation3 + $0x1e0] sm:$0xff]
    %v7301 = vld [vmem:[#allocation3 + $0x1e8] sm:$0xff]
    %v7302 = vld [vmem:[#allocation3 + $0x1f0] sm:$0xff]
    %v7303 = vld [vmem:[#allocation3 + $0x1f8] sm:$0xff]
    %v7304 = vadd.f32 %v7240, %v7049
    %v7305 = vadd.f32 %v7241, %v7052
    %v7306 = vadd.f32 %v7242, %v7055
    %v7307 = vadd.f32 %v7243, %v7058
    %v7308 = vadd.f32 %v7244, %v7061
    %v7309 = vadd.f32 %v7245, %v7064
    %v7310 = vadd.f32 %v7246, %v7067
    %v7311 = vadd.f32 %v7247, %v7070
    %v7312 = vadd.f32 %v7248, %v7073
    %v7313 = vadd.f32 %v7249, %v7076
    %v7314 = vadd.f32 %v7250, %v7079
    %v7315 = vadd.f32 %v7251, %v7082
    %v7316 = vadd.f32 %v7252, %v7085
    %v7317 = vadd.f32 %v7253, %v7088
    %v7318 = vadd.f32 %v7254, %v7091
    %v7319 = vadd.f32 %v7255, %v7094
    %v7320 = vadd.f32 %v7256, %v7097
    %v7321 = vadd.f32 %v7257, %v7100
    %v7322 = vadd.f32 %v7258, %v7103
    %v7323 = vadd.f32 %v7259, %v7106
    %v7324 = vadd.f32 %v7260, %v7109
    %v7325 = vadd.f32 %v7261, %v7112
    %v7326 = vadd.f32 %v7262, %v7115
    %v7327 = vadd.f32 %v7263, %v7118
    %v7328 = vadd.f32 %v7264, %v7121
    %v7329 = vadd.f32 %v7265, %v7124
    %v7330 = vadd.f32 %v7266, %v7127
    %v7331 = vadd.f32 %v7267, %v7130
    %v7332 = vadd.f32 %v7268, %v7133
    %v7333 = vadd.f32 %v7269, %v7136
    %v7334 = vadd.f32 %v7270, %v7139
    %v7335 = vadd.f32 %v7271, %v7142
    %v7336 = vadd.f32 %v7272, %v7145
    %v7337 = vadd.f32 %v7273, %v7148
    %v7338 = vadd.f32 %v7274, %v7151
    %v7339 = vadd.f32 %v7275, %v7154
    %v7340 = vadd.f32 %v7276, %v7157
    %v7341 = vadd.f32 %v7277, %v7160
    %v7342 = vadd.f32 %v7278, %v7163
    %v7343 = vadd.f32 %v7279, %v7166
    %v7344 = vadd.f32 %v7280, %v7169
    %v7345 = vadd.f32 %v7281, %v7172
    %v7346 = vadd.f32 %v7282, %v7175
    %v7347 = vadd.f32 %v7283, %v7178
    %v7348 = vadd.f32 %v7284, %v7181
    %v7349 = vadd.f32 %v7285, %v7184
    %v7350 = vadd.f32 %v7286, %v7187
    %v7351 = vadd.f32 %v7287, %v7190
    %v7352 = vadd.f32 %v7288, %v7193
    %v7353 = vadd.f32 %v7289, %v7196
    %v7354 = vadd.f32 %v7290, %v7199
    %v7355 = vadd.f32 %v7291, %v7202
    %v7356 = vadd.f32 %v7292, %v7205
    %v7357 = vadd.f32 %v7293, %v7208
    %v7358 = vadd.f32 %v7294, %v7211
    %v7359 = vadd.f32 %v7295, %v7214
    %v7360 = vadd.f32 %v7296, %v7217
    %v7361 = vadd.f32 %v7297, %v7220
    %v7362 = vadd.f32 %v7298, %v7223
    %v7363 = vadd.f32 %v7299, %v7226
    %v7364 = vadd.f32 %v7300, %v7229
    %v7365 = vadd.f32 %v7301, %v7232
    %v7366 = vadd.f32 %v7302, %v7235
    %v7367 = vadd.f32 %v7303, %v7238
    %7368 = vst [vmem:[#allocation3] sm:$0xff] %v7304
    %7369 = vst [vmem:[#allocation3 + $0x8] sm:$0xff] %v7305
    %7370 = vst [vmem:[#allocation3 + $0x10] sm:$0xff] %v7306
    %7371 = vst [vmem:[#allocation3 + $0x18] sm:$0xff] %v7307
    %7372 = vst [vmem:[#allocation3 + $0x20] sm:$0xff] %v7308
    %7373 = vst [vmem:[#allocation3 + $0x28] sm:$0xff] %v7309
    %7374 = vst [vmem:[#allocation3 + $0x30] sm:$0xff] %v7310
    %7375 = vst [vmem:[#allocation3 + $0x38] sm:$0xff] %v7311
    %7376 = vst [vmem:[#allocation3 + $0x40] sm:$0xff] %v7312
    %7377 = vst [vmem:[#allocation3 + $0x48] sm:$0xff] %v7313
    %7378 = vst [vmem:[#allocation3 + $0x50] sm:$0xff] %v7314
    %7379 = vst [vmem:[#allocation3 + $0x58] sm:$0xff] %v7315
    %7380 = vst [vmem:[#allocation3 + $0x60] sm:$0xff] %v7316
    %7381 = vst [vmem:[#allocation3 + $0x68] sm:$0xff] %v7317
    %7382 = vst [vmem:[#allocation3 + $0x70] sm:$0xff] %v7318
    %7383 = vst [vmem:[#allocation3 + $0x78] sm:$0xff] %v7319
    %7384 = vst [vmem:[#allocation3 + $0x80] sm:$0xff] %v7320
    %7385 = vst [vmem:[#allocation3 + $0x88] sm:$0xff] %v7321
    %7386 = vst [vmem:[#allocation3 + $0x90] sm:$0xff] %v7322
    %7387 = vst [vmem:[#allocation3 + $0x98] sm:$0xff] %v7323
    %7388 = vst [vmem:[#allocation3 + $0xa0] sm:$0xff] %v7324
    %7389 = vst [vmem:[#allocation3 + $0xa8] sm:$0xff] %v7325
    %7390 = vst [vmem:[#allocation3 + $0xb0] sm:$0xff] %v7326
    %7391 = vst [vmem:[#allocation3 + $0xb8] sm:$0xff] %v7327
    %7392 = vst [vmem:[#allocation3 + $0xc0] sm:$0xff] %v7328
    %7393 = vst [vmem:[#allocation3 + $0xc8] sm:$0xff] %v7329
    %7394 = vst [vmem:[#allocation3 + $0xd0] sm:$0xff] %v7330
    %7395 = vst [vmem:[#allocation3 + $0xd8] sm:$0xff] %v7331
    %7396 = vst [vmem:[#allocation3 + $0xe0] sm:$0xff] %v7332
    %7397 = vst [vmem:[#allocation3 + $0xe8] sm:$0xff] %v7333
    %7398 = vst [vmem:[#allocation3 + $0xf0] sm:$0xff] %v7334
    %7399 = vst [vmem:[#allocation3 + $0xf8] sm:$0xff] %v7335
    %7400 = vst [vmem:[#allocation3 + $0x100] sm:$0xff] %v7336
    %7401 = vst [vmem:[#allocation3 + $0x108] sm:$0xff] %v7337
    %7402 = vst [vmem:[#allocation3 + $0x110] sm:$0xff] %v7338
    %7403 = vst [vmem:[#allocation3 + $0x118] sm:$0xff] %v7339
    %7404 = vst [vmem:[#allocation3 + $0x120] sm:$0xff] %v7340
    %7405 = vst [vmem:[#allocation3 + $0x128] sm:$0xff] %v7341
    %7406 = vst [vmem:[#allocation3 + $0x130] sm:$0xff] %v7342
    %7407 = vst [vmem:[#allocation3 + $0x138] sm:$0xff] %v7343
    %7408 = vst [vmem:[#allocation3 + $0x140] sm:$0xff] %v7344
    %7409 = vst [vmem:[#allocation3 + $0x148] sm:$0xff] %v7345
    %7410 = vst [vmem:[#allocation3 + $0x150] sm:$0xff] %v7346
    %7411 = vst [vmem:[#allocation3 + $0x158] sm:$0xff] %v7347
    %7412 = vst [vmem:[#allocation3 + $0x160] sm:$0xff] %v7348
    %7413 = vst [vmem:[#allocation3 + $0x168] sm:$0xff] %v7349
    %7414 = vst [vmem:[#allocation3 + $0x170] sm:$0xff] %v7350
    %7415 = vst [vmem:[#allocation3 + $0x178] sm:$0xff] %v7351
    %7416 = vst [vmem:[#allocation3 + $0x180] sm:$0xff] %v7352
    %7417 = vst [vmem:[#allocation3 + $0x188] sm:$0xff] %v7353
    %7418 = vst [vmem:[#allocation3 + $0x190] sm:$0xff] %v7354
    %7419 = vst [vmem:[#allocation3 + $0x198] sm:$0xff] %v7355
    %7420 = vst [vmem:[#allocation3 + $0x1a0] sm:$0xff] %v7356
    %7421 = vst [vmem:[#allocation3 + $0x1a8] sm:$0xff] %v7357
    %7422 = vst [vmem:[#allocation3 + $0x1b0] sm:$0xff] %v7358
    %7423 = vst [vmem:[#allocation3 + $0x1b8] sm:$0xff] %v7359
    %7424 = vst [vmem:[#allocation3 + $0x1c0] sm:$0xff] %v7360
    %7425 = vst [vmem:[#allocation3 + $0x1c8] sm:$0xff] %v7361
    %7426 = vst [vmem:[#allocation3 + $0x1d0] sm:$0xff] %v7362
    %7427 = vst [vmem:[#allocation3 + $0x1d8] sm:$0xff] %v7363
    %7428 = vst [vmem:[#allocation3 + $0x1e0] sm:$0xff] %v7364
    %7429 = vst [vmem:[#allocation3 + $0x1e8] sm:$0xff] %v7365
    %7430 = vst [vmem:[#allocation3 + $0x1f0] sm:$0xff] %v7366
    %7431 = vst [vmem:[#allocation3 + $0x1f8] sm:$0xff] %v7367
    %s7432 = scalar_lea.vmem [#allocation2], 48
    %v7433 = vld [vmem:[%s7432] sm:$0xff]
    %v7434 = vld [vmem:[%s7432 + $0x8] sm:$0xff]
    %v7435 = vld [vmem:[%s7432 + $0x18] sm:$0xff]
    %v7436 = vld [vmem:[%s7432 + $0x20] sm:$0xff]
    %v7437 = vld [vmem:[%s7432 + $0x30] sm:$0xff]
    %v7438 = vld [vmem:[%s7432 + $0x38] sm:$0xff]
    %v7439 = vld [vmem:[%s7432 + $0x48] sm:$0xff]
    %v7440 = vld [vmem:[%s7432 + $0x50] sm:$0xff]
    %v7441 = vld [vmem:[%s7432 + $0x60] sm:$0xff]
    %v7442 = vld [vmem:[%s7432 + $0x68] sm:$0xff]
    %v7443 = vld [vmem:[%s7432 + $0x78] sm:$0xff]
    %v7444 = vld [vmem:[%s7432 + $0x80] sm:$0xff]
    %v7445 = vld [vmem:[%s7432 + $0x90] sm:$0xff]
    %v7446 = vld [vmem:[%s7432 + $0x98] sm:$0xff]
    %v7447 = vld [vmem:[%s7432 + $0xa8] sm:$0xff]
    %v7448 = vld [vmem:[%s7432 + $0xb0] sm:$0xff]
    %v7449 = vld [vmem:[%s7432 + $0xc0] sm:$0xff]
    %v7450 = vld [vmem:[%s7432 + $0xc8] sm:$0xff]
    %v7451 = vld [vmem:[%s7432 + $0xd8] sm:$0xff]
    %v7452 = vld [vmem:[%s7432 + $0xe0] sm:$0xff]
    %v7453 = vld [vmem:[%s7432 + $0xf0] sm:$0xff]
    %v7454 = vld [vmem:[%s7432 + $0xf8] sm:$0xff]
    %v7455 = vld [vmem:[%s7432 + $0x108] sm:$0xff]
    %v7456 = vld [vmem:[%s7432 + $0x110] sm:$0xff]
    %v7457 = vld [vmem:[%s7432 + $0x120] sm:$0xff]
    %v7458 = vld [vmem:[%s7432 + $0x128] sm:$0xff]
    %v7459 = vld [vmem:[%s7432 + $0x138] sm:$0xff]
    %v7460 = vld [vmem:[%s7432 + $0x140] sm:$0xff]
    %v7461 = vld [vmem:[%s7432 + $0x150] sm:$0xff]
    %v7462 = vld [vmem:[%s7432 + $0x158] sm:$0xff]
    %v7463 = vld [vmem:[%s7432 + $0x168] sm:$0xff]
    %v7464 = vld [vmem:[%s7432 + $0x170] sm:$0xff]
    %v7465 = vld [vmem:[%s7432 + $0x1b0] sm:$0xff]
    %v7466 = vld [vmem:[%s7432 + $0x1b8] sm:$0xff]
    %v7467 = vld [vmem:[%s7432 + $0x1c8] sm:$0xff]
    %v7468 = vld [vmem:[%s7432 + $0x1d0] sm:$0xff]
    %v7469 = vld [vmem:[%s7432 + $0x1e0] sm:$0xff]
    %v7470 = vld [vmem:[%s7432 + $0x1e8] sm:$0xff]
    %v7471 = vld [vmem:[%s7432 + $0x1f8] sm:$0xff]
    %v7472 = vld [vmem:[%s7432 + $0x200] sm:$0xff]
    %v7473 = vld [vmem:[%s7432 + $0x210] sm:$0xff]
    %v7474 = vld [vmem:[%s7432 + $0x218] sm:$0xff]
    %v7475 = vld [vmem:[%s7432 + $0x228] sm:$0xff]
    %v7476 = vld [vmem:[%s7432 + $0x230] sm:$0xff]
    %v7477 = vld [vmem:[%s7432 + $0x240] sm:$0xff]
    %v7478 = vld [vmem:[%s7432 + $0x248] sm:$0xff]
    %v7479 = vld [vmem:[%s7432 + $0x258] sm:$0xff]
    %v7480 = vld [vmem:[%s7432 + $0x260] sm:$0xff]
    %v7481 = vld [vmem:[%s7432 + $0x270] sm:$0xff]
    %v7482 = vld [vmem:[%s7432 + $0x278] sm:$0xff]
    %v7483 = vld [vmem:[%s7432 + $0x288] sm:$0xff]
    %v7484 = vld [vmem:[%s7432 + $0x290] sm:$0xff]
    %v7485 = vld [vmem:[%s7432 + $0x2a0] sm:$0xff]
    %v7486 = vld [vmem:[%s7432 + $0x2a8] sm:$0xff]
    %v7487 = vld [vmem:[%s7432 + $0x2b8] sm:$0xff]
    %v7488 = vld [vmem:[%s7432 + $0x2c0] sm:$0xff]
    %v7489 = vld [vmem:[%s7432 + $0x2d0] sm:$0xff]
    %v7490 = vld [vmem:[%s7432 + $0x2d8] sm:$0xff]
    %v7491 = vld [vmem:[%s7432 + $0x2e8] sm:$0xff]
    %v7492 = vld [vmem:[%s7432 + $0x2f0] sm:$0xff]
    %v7493 = vld [vmem:[%s7432 + $0x300] sm:$0xff]
    %v7494 = vld [vmem:[%s7432 + $0x308] sm:$0xff]
    %v7495 = vld [vmem:[%s7432 + $0x318] sm:$0xff]
    %v7496 = vld [vmem:[%s7432 + $0x320] sm:$0xff]
    %s7497 = scalar_lea.vmem [#allocation4], 768
    %v7498 = vld [vmem:[%s7497] sm:$0xff]
    %v7499 = vld [vmem:[%s7497 + $0x8] sm:$0xff]
    %v7500 = vld [vmem:[%s7497 + $0x10] sm:$0xff]
    %v7501 = vld [vmem:[%s7497 + $0x18] sm:$0xff]
    %v7502 = vld [vmem:[%s7497 + $0x20] sm:$0xff]
    %v7503 = vld [vmem:[%s7497 + $0x28] sm:$0xff]
    %v7504 = vld [vmem:[%s7497 + $0x30] sm:$0xff]
    %v7505 = vld [vmem:[%s7497 + $0x38] sm:$0xff]
    %v7506 = vld [vmem:[%s7497 + $0x40] sm:$0xff]
    %v7507 = vld [vmem:[%s7497 + $0x48] sm:$0xff]
    %v7508 = vld [vmem:[%s7497 + $0x50] sm:$0xff]
    %v7509 = vld [vmem:[%s7497 + $0x58] sm:$0xff]
    %v7510 = vld [vmem:[%s7497 + $0x60] sm:$0xff]
    %v7511 = vld [vmem:[%s7497 + $0x68] sm:$0xff]
    %v7512 = vld [vmem:[%s7497 + $0x70] sm:$0xff]
    %v7513 = vld [vmem:[%s7497 + $0x78] sm:$0xff]
    %7514 = vmatpush.msra.mxu0 %v7513
    %7515 = vmatpush.msra.mxu0 %v7512
    %7516 = vmatpush.msra.mxu0 %v7511
    %7517 = vmatpush.msra.mxu0 %v7510
    %7518 = vmatpush.msra.mxu0 %v7509
    %7519 = vmatpush.msra.mxu0 %v7508
    %7520 = vmatpush.msra.mxu0 %v7507
    %7521 = vmatpush.msra.mxu0 %v7506
    %7522 = vmatpush.msra.mxu0 %v7505
    %7523 = vmatpush.msra.mxu0 %v7504
    %7524 = vmatpush.msra.mxu0 %v7503
    %7525 = vmatpush.msra.mxu0 %v7502
    %7526 = vmatpush.msra.mxu0 %v7501
    %7527 = vmatpush.msra.mxu0 %v7500
    %7528 = vmatpush.msra.mxu0 %v7499
    %7529 = vmatpush.msra.mxu0 %v7498
    %7530 = vmatmul.f32.gmra.mxu0 %v7433
    %v7531 = vpop.f32.mrf.mxu0
    %v7532 = vadd.f32 0.0, %v7531
    %7533 = vmatmul.f32.gmra.mxu0 %v7434
    %v7534 = vpop.f32.mrf.mxu0
    %v7535 = vadd.f32 0.0, %v7534
    %7536 = vmatmul.f32.gmra.mxu0 %v7435
    %v7537 = vpop.f32.mrf.mxu0
    %v7538 = vadd.f32 0.0, %v7537
    %7539 = vmatmul.f32.gmra.mxu0 %v7436
    %v7540 = vpop.f32.mrf.mxu0
    %v7541 = vadd.f32 0.0, %v7540
    %7542 = vmatmul.f32.gmra.mxu0 %v7437
    %v7543 = vpop.f32.mrf.mxu0
    %v7544 = vadd.f32 0.0, %v7543
    %7545 = vmatmul.f32.gmra.mxu0 %v7438
    %v7546 = vpop.f32.mrf.mxu0
    %v7547 = vadd.f32 0.0, %v7546
    %7548 = vmatmul.f32.gmra.mxu0 %v7439
    %v7549 = vpop.f32.mrf.mxu0
    %v7550 = vadd.f32 0.0, %v7549
    %7551 = vmatmul.f32.gmra.mxu0 %v7440
    %v7552 = vpop.f32.mrf.mxu0
    %v7553 = vadd.f32 0.0, %v7552
    %7554 = vmatmul.f32.gmra.mxu0 %v7441
    %v7555 = vpop.f32.mrf.mxu0
    %v7556 = vadd.f32 0.0, %v7555
    %7557 = vmatmul.f32.gmra.mxu0 %v7442
    %v7558 = vpop.f32.mrf.mxu0
    %v7559 = vadd.f32 0.0, %v7558
    %7560 = vmatmul.f32.gmra.mxu0 %v7443
    %v7561 = vpop.f32.mrf.mxu0
    %v7562 = vadd.f32 0.0, %v7561
    %7563 = vmatmul.f32.gmra.mxu0 %v7444
    %v7564 = vpop.f32.mrf.mxu0
    %v7565 = vadd.f32 0.0, %v7564
    %7566 = vmatmul.f32.gmra.mxu0 %v7445
    %v7567 = vpop.f32.mrf.mxu0
    %v7568 = vadd.f32 0.0, %v7567
    %7569 = vmatmul.f32.gmra.mxu0 %v7446
    %v7570 = vpop.f32.mrf.mxu0
    %v7571 = vadd.f32 0.0, %v7570
    %7572 = vmatmul.f32.gmra.mxu0 %v7447
    %v7573 = vpop.f32.mrf.mxu0
    %v7574 = vadd.f32 0.0, %v7573
    %7575 = vmatmul.f32.gmra.mxu0 %v7448
    %v7576 = vpop.f32.mrf.mxu0
    %v7577 = vadd.f32 0.0, %v7576
    %7578 = vmatmul.f32.gmra.mxu0 %v7449
    %v7579 = vpop.f32.mrf.mxu0
    %v7580 = vadd.f32 0.0, %v7579
    %7581 = vmatmul.f32.gmra.mxu0 %v7450
    %v7582 = vpop.f32.mrf.mxu0
    %v7583 = vadd.f32 0.0, %v7582
    %7584 = vmatmul.f32.gmra.mxu0 %v7451
    %v7585 = vpop.f32.mrf.mxu0
    %v7586 = vadd.f32 0.0, %v7585
    %7587 = vmatmul.f32.gmra.mxu0 %v7452
    %v7588 = vpop.f32.mrf.mxu0
    %v7589 = vadd.f32 0.0, %v7588
    %7590 = vmatmul.f32.gmra.mxu0 %v7453
    %v7591 = vpop.f32.mrf.mxu0
    %v7592 = vadd.f32 0.0, %v7591
    %7593 = vmatmul.f32.gmra.mxu0 %v7454
    %v7594 = vpop.f32.mrf.mxu0
    %v7595 = vadd.f32 0.0, %v7594
    %7596 = vmatmul.f32.gmra.mxu0 %v7455
    %v7597 = vpop.f32.mrf.mxu0
    %v7598 = vadd.f32 0.0, %v7597
    %7599 = vmatmul.f32.gmra.mxu0 %v7456
    %v7600 = vpop.f32.mrf.mxu0
    %v7601 = vadd.f32 0.0, %v7600
    %7602 = vmatmul.f32.gmra.mxu0 %v7457
    %v7603 = vpop.f32.mrf.mxu0
    %v7604 = vadd.f32 0.0, %v7603
    %7605 = vmatmul.f32.gmra.mxu0 %v7458
    %v7606 = vpop.f32.mrf.mxu0
    %v7607 = vadd.f32 0.0, %v7606
    %7608 = vmatmul.f32.gmra.mxu0 %v7459
    %v7609 = vpop.f32.mrf.mxu0
    %v7610 = vadd.f32 0.0, %v7609
    %7611 = vmatmul.f32.gmra.mxu0 %v7460
    %v7612 = vpop.f32.mrf.mxu0
    %v7613 = vadd.f32 0.0, %v7612
    %7614 = vmatmul.f32.gmra.mxu0 %v7461
    %v7615 = vpop.f32.mrf.mxu0
    %v7616 = vadd.f32 0.0, %v7615
    %7617 = vmatmul.f32.gmra.mxu0 %v7462
    %v7618 = vpop.f32.mrf.mxu0
    %v7619 = vadd.f32 0.0, %v7618
    %7620 = vmatmul.f32.gmra.mxu0 %v7463
    %v7621 = vpop.f32.mrf.mxu0
    %v7622 = vadd.f32 0.0, %v7621
    %7623 = vmatmul.f32.gmra.mxu0 %v7464
    %v7624 = vpop.f32.mrf.mxu0
    %v7625 = vadd.f32 0.0, %v7624
    %7626 = vmatmul.f32.gmra.mxu0 %v7465
    %v7627 = vpop.f32.mrf.mxu0
    %v7628 = vadd.f32 0.0, %v7627
    %7629 = vmatmul.f32.gmra.mxu0 %v7466
    %v7630 = vpop.f32.mrf.mxu0
    %v7631 = vadd.f32 0.0, %v7630
    %7632 = vmatmul.f32.gmra.mxu0 %v7467
    %v7633 = vpop.f32.mrf.mxu0
    %v7634 = vadd.f32 0.0, %v7633
    %7635 = vmatmul.f32.gmra.mxu0 %v7468
    %v7636 = vpop.f32.mrf.mxu0
    %v7637 = vadd.f32 0.0, %v7636
    %7638 = vmatmul.f32.gmra.mxu0 %v7469
    %v7639 = vpop.f32.mrf.mxu0
    %v7640 = vadd.f32 0.0, %v7639
    %7641 = vmatmul.f32.gmra.mxu0 %v7470
    %v7642 = vpop.f32.mrf.mxu0
    %v7643 = vadd.f32 0.0, %v7642
    %7644 = vmatmul.f32.gmra.mxu0 %v7471
    %v7645 = vpop.f32.mrf.mxu0
    %v7646 = vadd.f32 0.0, %v7645
    %7647 = vmatmul.f32.gmra.mxu0 %v7472
    %v7648 = vpop.f32.mrf.mxu0
    %v7649 = vadd.f32 0.0, %v7648
    %7650 = vmatmul.f32.gmra.mxu0 %v7473
    %v7651 = vpop.f32.mrf.mxu0
    %v7652 = vadd.f32 0.0, %v7651
    %7653 = vmatmul.f32.gmra.mxu0 %v7474
    %v7654 = vpop.f32.mrf.mxu0
    %v7655 = vadd.f32 0.0, %v7654
    %7656 = vmatmul.f32.gmra.mxu0 %v7475
    %v7657 = vpop.f32.mrf.mxu0
    %v7658 = vadd.f32 0.0, %v7657
    %7659 = vmatmul.f32.gmra.mxu0 %v7476
    %v7660 = vpop.f32.mrf.mxu0
    %v7661 = vadd.f32 0.0, %v7660
    %7662 = vmatmul.f32.gmra.mxu0 %v7477
    %v7663 = vpop.f32.mrf.mxu0
    %v7664 = vadd.f32 0.0, %v7663
    %7665 = vmatmul.f32.gmra.mxu0 %v7478
    %v7666 = vpop.f32.mrf.mxu0
    %v7667 = vadd.f32 0.0, %v7666
    %7668 = vmatmul.f32.gmra.mxu0 %v7479
    %v7669 = vpop.f32.mrf.mxu0
    %v7670 = vadd.f32 0.0, %v7669
    %7671 = vmatmul.f32.gmra.mxu0 %v7480
    %v7672 = vpop.f32.mrf.mxu0
    %v7673 = vadd.f32 0.0, %v7672
    %7674 = vmatmul.f32.gmra.mxu0 %v7481
    %v7675 = vpop.f32.mrf.mxu0
    %v7676 = vadd.f32 0.0, %v7675
    %7677 = vmatmul.f32.gmra.mxu0 %v7482
    %v7678 = vpop.f32.mrf.mxu0
    %v7679 = vadd.f32 0.0, %v7678
    %7680 = vmatmul.f32.gmra.mxu0 %v7483
    %v7681 = vpop.f32.mrf.mxu0
    %v7682 = vadd.f32 0.0, %v7681
    %7683 = vmatmul.f32.gmra.mxu0 %v7484
    %v7684 = vpop.f32.mrf.mxu0
    %v7685 = vadd.f32 0.0, %v7684
    %7686 = vmatmul.f32.gmra.mxu0 %v7485
    %v7687 = vpop.f32.mrf.mxu0
    %v7688 = vadd.f32 0.0, %v7687
    %7689 = vmatmul.f32.gmra.mxu0 %v7486
    %v7690 = vpop.f32.mrf.mxu0
    %v7691 = vadd.f32 0.0, %v7690
    %7692 = vmatmul.f32.gmra.mxu0 %v7487
    %v7693 = vpop.f32.mrf.mxu0
    %v7694 = vadd.f32 0.0, %v7693
    %7695 = vmatmul.f32.gmra.mxu0 %v7488
    %v7696 = vpop.f32.mrf.mxu0
    %v7697 = vadd.f32 0.0, %v7696
    %7698 = vmatmul.f32.gmra.mxu0 %v7489
    %v7699 = vpop.f32.mrf.mxu0
    %v7700 = vadd.f32 0.0, %v7699
    %7701 = vmatmul.f32.gmra.mxu0 %v7490
    %v7702 = vpop.f32.mrf.mxu0
    %v7703 = vadd.f32 0.0, %v7702
    %7704 = vmatmul.f32.gmra.mxu0 %v7491
    %v7705 = vpop.f32.mrf.mxu0
    %v7706 = vadd.f32 0.0, %v7705
    %7707 = vmatmul.f32.gmra.mxu0 %v7492
    %v7708 = vpop.f32.mrf.mxu0
    %v7709 = vadd.f32 0.0, %v7708
    %7710 = vmatmul.f32.gmra.mxu0 %v7493
    %v7711 = vpop.f32.mrf.mxu0
    %v7712 = vadd.f32 0.0, %v7711
    %7713 = vmatmul.f32.gmra.mxu0 %v7494
    %v7714 = vpop.f32.mrf.mxu0
    %v7715 = vadd.f32 0.0, %v7714
    %7716 = vmatmul.f32.gmra.mxu0 %v7495
    %v7717 = vpop.f32.mrf.mxu0
    %v7718 = vadd.f32 0.0, %v7717
    %7719 = vmatmul.f32.gmra.mxu0 %v7496
    %v7720 = vpop.f32.mrf.mxu0
    %v7721 = vadd.f32 0.0, %v7720
    %7722 = vdwg.mxu0
    %v7723 = vld [vmem:[#allocation3] sm:$0xff]
    %v7724 = vld [vmem:[#allocation3 + $0x8] sm:$0xff]
    %v7725 = vld [vmem:[#allocation3 + $0x10] sm:$0xff]
    %v7726 = vld [vmem:[#allocation3 + $0x18] sm:$0xff]
    %v7727 = vld [vmem:[#allocation3 + $0x20] sm:$0xff]
    %v7728 = vld [vmem:[#allocation3 + $0x28] sm:$0xff]
    %v7729 = vld [vmem:[#allocation3 + $0x30] sm:$0xff]
    %v7730 = vld [vmem:[#allocation3 + $0x38] sm:$0xff]
    %v7731 = vld [vmem:[#allocation3 + $0x40] sm:$0xff]
    %v7732 = vld [vmem:[#allocation3 + $0x48] sm:$0xff]
    %v7733 = vld [vmem:[#allocation3 + $0x50] sm:$0xff]
    %v7734 = vld [vmem:[#allocation3 + $0x58] sm:$0xff]
    %v7735 = vld [vmem:[#allocation3 + $0x60] sm:$0xff]
    %v7736 = vld [vmem:[#allocation3 + $0x68] sm:$0xff]
    %v7737 = vld [vmem:[#allocation3 + $0x70] sm:$0xff]
    %v7738 = vld [vmem:[#allocation3 + $0x78] sm:$0xff]
    %v7739 = vld [vmem:[#allocation3 + $0x80] sm:$0xff]
    %v7740 = vld [vmem:[#allocation3 + $0x88] sm:$0xff]
    %v7741 = vld [vmem:[#allocation3 + $0x90] sm:$0xff]
    %v7742 = vld [vmem:[#allocation3 + $0x98] sm:$0xff]
    %v7743 = vld [vmem:[#allocation3 + $0xa0] sm:$0xff]
    %v7744 = vld [vmem:[#allocation3 + $0xa8] sm:$0xff]
    %v7745 = vld [vmem:[#allocation3 + $0xb0] sm:$0xff]
    %v7746 = vld [vmem:[#allocation3 + $0xb8] sm:$0xff]
    %v7747 = vld [vmem:[#allocation3 + $0xc0] sm:$0xff]
    %v7748 = vld [vmem:[#allocation3 + $0xc8] sm:$0xff]
    %v7749 = vld [vmem:[#allocation3 + $0xd0] sm:$0xff]
    %v7750 = vld [vmem:[#allocation3 + $0xd8] sm:$0xff]
    %v7751 = vld [vmem:[#allocation3 + $0xe0] sm:$0xff]
    %v7752 = vld [vmem:[#allocation3 + $0xe8] sm:$0xff]
    %v7753 = vld [vmem:[#allocation3 + $0xf0] sm:$0xff]
    %v7754 = vld [vmem:[#allocation3 + $0xf8] sm:$0xff]
    %v7755 = vld [vmem:[#allocation3 + $0x100] sm:$0xff]
    %v7756 = vld [vmem:[#allocation3 + $0x108] sm:$0xff]
    %v7757 = vld [vmem:[#allocation3 + $0x110] sm:$0xff]
    %v7758 = vld [vmem:[#allocation3 + $0x118] sm:$0xff]
    %v7759 = vld [vmem:[#allocation3 + $0x120] sm:$0xff]
    %v7760 = vld [vmem:[#allocation3 + $0x128] sm:$0xff]
    %v7761 = vld [vmem:[#allocation3 + $0x130] sm:$0xff]
    %v7762 = vld [vmem:[#allocation3 + $0x138] sm:$0xff]
    %v7763 = vld [vmem:[#allocation3 + $0x140] sm:$0xff]
    %v7764 = vld [vmem:[#allocation3 + $0x148] sm:$0xff]
    %v7765 = vld [vmem:[#allocation3 + $0x150] sm:$0xff]
    %v7766 = vld [vmem:[#allocation3 + $0x158] sm:$0xff]
    %v7767 = vld [vmem:[#allocation3 + $0x160] sm:$0xff]
    %v7768 = vld [vmem:[#allocation3 + $0x168] sm:$0xff]
    %v7769 = vld [vmem:[#allocation3 + $0x170] sm:$0xff]
    %v7770 = vld [vmem:[#allocation3 + $0x178] sm:$0xff]
    %v7771 = vld [vmem:[#allocation3 + $0x180] sm:$0xff]
    %v7772 = vld [vmem:[#allocation3 + $0x188] sm:$0xff]
    %v7773 = vld [vmem:[#allocation3 + $0x190] sm:$0xff]
    %v7774 = vld [vmem:[#allocation3 + $0x198] sm:$0xff]
    %v7775 = vld [vmem:[#allocation3 + $0x1a0] sm:$0xff]
    %v7776 = vld [vmem:[#allocation3 + $0x1a8] sm:$0xff]
    %v7777 = vld [vmem:[#allocation3 + $0x1b0] sm:$0xff]
    %v7778 = vld [vmem:[#allocation3 + $0x1b8] sm:$0xff]
    %v7779 = vld [vmem:[#allocation3 + $0x1c0] sm:$0xff]
    %v7780 = vld [vmem:[#allocation3 + $0x1c8] sm:$0xff]
    %v7781 = vld [vmem:[#allocation3 + $0x1d0] sm:$0xff]
    %v7782 = vld [vmem:[#allocation3 + $0x1d8] sm:$0xff]
    %v7783 = vld [vmem:[#allocation3 + $0x1e0] sm:$0xff]
    %v7784 = vld [vmem:[#allocation3 + $0x1e8] sm:$0xff]
    %v7785 = vld [vmem:[#allocation3 + $0x1f0] sm:$0xff]
    %v7786 = vld [vmem:[#allocation3 + $0x1f8] sm:$0xff]
    %v7787 = vadd.f32 %v7723, %v7532
    %v7788 = vadd.f32 %v7724, %v7535
    %v7789 = vadd.f32 %v7725, %v7538
    %v7790 = vadd.f32 %v7726, %v7541
    %v7791 = vadd.f32 %v7727, %v7544
    %v7792 = vadd.f32 %v7728, %v7547
    %v7793 = vadd.f32 %v7729, %v7550
    %v7794 = vadd.f32 %v7730, %v7553
    %v7795 = vadd.f32 %v7731, %v7556
    %v7796 = vadd.f32 %v7732, %v7559
    %v7797 = vadd.f32 %v7733, %v7562
    %v7798 = vadd.f32 %v7734, %v7565
    %v7799 = vadd.f32 %v7735, %v7568
    %v7800 = vadd.f32 %v7736, %v7571
    %v7801 = vadd.f32 %v7737, %v7574
    %v7802 = vadd.f32 %v7738, %v7577
    %v7803 = vadd.f32 %v7739, %v7580
    %v7804 = vadd.f32 %v7740, %v7583
    %v7805 = vadd.f32 %v7741, %v7586
    %v7806 = vadd.f32 %v7742, %v7589
    %v7807 = vadd.f32 %v7743, %v7592
    %v7808 = vadd.f32 %v7744, %v7595
    %v7809 = vadd.f32 %v7745, %v7598
    %v7810 = vadd.f32 %v7746, %v7601
    %v7811 = vadd.f32 %v7747, %v7604
    %v7812 = vadd.f32 %v7748, %v7607
    %v7813 = vadd.f32 %v7749, %v7610
    %v7814 = vadd.f32 %v7750, %v7613
    %v7815 = vadd.f32 %v7751, %v7616
    %v7816 = vadd.f32 %v7752, %v7619
    %v7817 = vadd.f32 %v7753, %v7622
    %v7818 = vadd.f32 %v7754, %v7625
    %v7819 = vadd.f32 %v7755, %v7628
    %v7820 = vadd.f32 %v7756, %v7631
    %v7821 = vadd.f32 %v7757, %v7634
    %v7822 = vadd.f32 %v7758, %v7637
    %v7823 = vadd.f32 %v7759, %v7640
    %v7824 = vadd.f32 %v7760, %v7643
    %v7825 = vadd.f32 %v7761, %v7646
    %v7826 = vadd.f32 %v7762, %v7649
    %v7827 = vadd.f32 %v7763, %v7652
    %v7828 = vadd.f32 %v7764, %v7655
    %v7829 = vadd.f32 %v7765, %v7658
    %v7830 = vadd.f32 %v7766, %v7661
    %v7831 = vadd.f32 %v7767, %v7664
    %v7832 = vadd.f32 %v7768, %v7667
    %v7833 = vadd.f32 %v7769, %v7670
    %v7834 = vadd.f32 %v7770, %v7673
    %v7835 = vadd.f32 %v7771, %v7676
    %v7836 = vadd.f32 %v7772, %v7679
    %v7837 = vadd.f32 %v7773, %v7682
    %v7838 = vadd.f32 %v7774, %v7685
    %v7839 = vadd.f32 %v7775, %v7688
    %v7840 = vadd.f32 %v7776, %v7691
    %v7841 = vadd.f32 %v7777, %v7694
    %v7842 = vadd.f32 %v7778, %v7697
    %v7843 = vadd.f32 %v7779, %v7700
    %v7844 = vadd.f32 %v7780, %v7703
    %v7845 = vadd.f32 %v7781, %v7706
    %v7846 = vadd.f32 %v7782, %v7709
    %v7847 = vadd.f32 %v7783, %v7712
    %v7848 = vadd.f32 %v7784, %v7715
    %v7849 = vadd.f32 %v7785, %v7718
    %v7850 = vadd.f32 %v7786, %v7721
    %7851 = vst [vmem:[#allocation3] sm:$0xff] %v7787
    %7852 = vst [vmem:[#allocation3 + $0x8] sm:$0xff] %v7788
    %7853 = vst [vmem:[#allocation3 + $0x10] sm:$0xff] %v7789
    %7854 = vst [vmem:[#allocation3 + $0x18] sm:$0xff] %v7790
    %7855 = vst [vmem:[#allocation3 + $0x20] sm:$0xff] %v7791
    %7856 = vst [vmem:[#allocation3 + $0x28] sm:$0xff] %v7792
    %7857 = vst [vmem:[#allocation3 + $0x30] sm:$0xff] %v7793
    %7858 = vst [vmem:[#allocation3 + $0x38] sm:$0xff] %v7794
    %7859 = vst [vmem:[#allocation3 + $0x40] sm:$0xff] %v7795
    %7860 = vst [vmem:[#allocation3 + $0x48] sm:$0xff] %v7796
    %7861 = vst [vmem:[#allocation3 + $0x50] sm:$0xff] %v7797
    %7862 = vst [vmem:[#allocation3 + $0x58] sm:$0xff] %v7798
    %7863 = vst [vmem:[#allocation3 + $0x60] sm:$0xff] %v7799
    %7864 = vst [vmem:[#allocation3 + $0x68] sm:$0xff] %v7800
    %7865 = vst [vmem:[#allocation3 + $0x70] sm:$0xff] %v7801
    %7866 = vst [vmem:[#allocation3 + $0x78] sm:$0xff] %v7802
    %7867 = vst [vmem:[#allocation3 + $0x80] sm:$0xff] %v7803
    %7868 = vst [vmem:[#allocation3 + $0x88] sm:$0xff] %v7804
    %7869 = vst [vmem:[#allocation3 + $0x90] sm:$0xff] %v7805
    %7870 = vst [vmem:[#allocation3 + $0x98] sm:$0xff] %v7806
    %7871 = vst [vmem:[#allocation3 + $0xa0] sm:$0xff] %v7807
    %7872 = vst [vmem:[#allocation3 + $0xa8] sm:$0xff] %v7808
    %7873 = vst [vmem:[#allocation3 + $0xb0] sm:$0xff] %v7809
    %7874 = vst [vmem:[#allocation3 + $0xb8] sm:$0xff] %v7810
    %7875 = vst [vmem:[#allocation3 + $0xc0] sm:$0xff] %v7811
    %7876 = vst [vmem:[#allocation3 + $0xc8] sm:$0xff] %v7812
    %7877 = vst [vmem:[#allocation3 + $0xd0] sm:$0xff] %v7813
    %7878 = vst [vmem:[#allocation3 + $0xd8] sm:$0xff] %v7814
    %7879 = vst [vmem:[#allocation3 + $0xe0] sm:$0xff] %v7815
    %7880 = vst [vmem:[#allocation3 + $0xe8] sm:$0xff] %v7816
    %7881 = vst [vmem:[#allocation3 + $0xf0] sm:$0xff] %v7817
    %7882 = vst [vmem:[#allocation3 + $0xf8] sm:$0xff] %v7818
    %7883 = vst [vmem:[#allocation3 + $0x100] sm:$0xff] %v7819
    %7884 = vst [vmem:[#allocation3 + $0x108] sm:$0xff] %v7820
    %7885 = vst [vmem:[#allocation3 + $0x110] sm:$0xff] %v7821
    %7886 = vst [vmem:[#allocation3 + $0x118] sm:$0xff] %v7822
    %7887 = vst [vmem:[#allocation3 + $0x120] sm:$0xff] %v7823
    %7888 = vst [vmem:[#allocation3 + $0x128] sm:$0xff] %v7824
    %7889 = vst [vmem:[#allocation3 + $0x130] sm:$0xff] %v7825
    %7890 = vst [vmem:[#allocation3 + $0x138] sm:$0xff] %v7826
    %7891 = vst [vmem:[#allocation3 + $0x140] sm:$0xff] %v7827
    %7892 = vst [vmem:[#allocation3 + $0x148] sm:$0xff] %v7828
    %7893 = vst [vmem:[#allocation3 + $0x150] sm:$0xff] %v7829
    %7894 = vst [vmem:[#allocation3 + $0x158] sm:$0xff] %v7830
    %7895 = vst [vmem:[#allocation3 + $0x160] sm:$0xff] %v7831
    %7896 = vst [vmem:[#allocation3 + $0x168] sm:$0xff] %v7832
    %7897 = vst [vmem:[#allocation3 + $0x170] sm:$0xff] %v7833
    %7898 = vst [vmem:[#allocation3 + $0x178] sm:$0xff] %v7834
    %7899 = vst [vmem:[#allocation3 + $0x180] sm:$0xff] %v7835
    %7900 = vst [vmem:[#allocation3 + $0x188] sm:$0xff] %v7836
    %7901 = vst [vmem:[#allocation3 + $0x190] sm:$0xff] %v7837
    %7902 = vst [vmem:[#allocation3 + $0x198] sm:$0xff] %v7838
    %7903 = vst [vmem:[#allocation3 + $0x1a0] sm:$0xff] %v7839
    %7904 = vst [vmem:[#allocation3 + $0x1a8] sm:$0xff] %v7840
    %7905 = vst [vmem:[#allocation3 + $0x1b0] sm:$0xff] %v7841
    %7906 = vst [vmem:[#allocation3 + $0x1b8] sm:$0xff] %v7842
    %7907 = vst [vmem:[#allocation3 + $0x1c0] sm:$0xff] %v7843
    %7908 = vst [vmem:[#allocation3 + $0x1c8] sm:$0xff] %v7844
    %7909 = vst [vmem:[#allocation3 + $0x1d0] sm:$0xff] %v7845
    %7910 = vst [vmem:[#allocation3 + $0x1d8] sm:$0xff] %v7846
    %7911 = vst [vmem:[#allocation3 + $0x1e0] sm:$0xff] %v7847
    %7912 = vst [vmem:[#allocation3 + $0x1e8] sm:$0xff] %v7848
    %7913 = vst [vmem:[#allocation3 + $0x1f0] sm:$0xff] %v7849
    %7914 = vst [vmem:[#allocation3 + $0x1f8] sm:$0xff] %v7850
    %v7915 = vld [vmem:[%s7432 + $0x1] sm:$0xff]
    %v7916 = vld [vmem:[%s7432 + $0x9] sm:$0xff]
    %v7917 = vld [vmem:[%s7432 + $0x19] sm:$0xff]
    %v7918 = vld [vmem:[%s7432 + $0x21] sm:$0xff]
    %v7919 = vld [vmem:[%s7432 + $0x31] sm:$0xff]
    %v7920 = vld [vmem:[%s7432 + $0x39] sm:$0xff]
    %v7921 = vld [vmem:[%s7432 + $0x49] sm:$0xff]
    %v7922 = vld [vmem:[%s7432 + $0x51] sm:$0xff]
    %v7923 = vld [vmem:[%s7432 + $0x61] sm:$0xff]
    %v7924 = vld [vmem:[%s7432 + $0x69] sm:$0xff]
    %v7925 = vld [vmem:[%s7432 + $0x79] sm:$0xff]
    %v7926 = vld [vmem:[%s7432 + $0x81] sm:$0xff]
    %v7927 = vld [vmem:[%s7432 + $0x91] sm:$0xff]
    %v7928 = vld [vmem:[%s7432 + $0x99] sm:$0xff]
    %v7929 = vld [vmem:[%s7432 + $0xa9] sm:$0xff]
    %v7930 = vld [vmem:[%s7432 + $0xb1] sm:$0xff]
    %v7931 = vld [vmem:[%s7432 + $0xc1] sm:$0xff]
    %v7932 = vld [vmem:[%s7432 + $0xc9] sm:$0xff]
    %v7933 = vld [vmem:[%s7432 + $0xd9] sm:$0xff]
    %v7934 = vld [vmem:[%s7432 + $0xe1] sm:$0xff]
    %v7935 = vld [vmem:[%s7432 + $0xf1] sm:$0xff]
    %v7936 = vld [vmem:[%s7432 + $0xf9] sm:$0xff]
    %v7937 = vld [vmem:[%s7432 + $0x109] sm:$0xff]
    %v7938 = vld [vmem:[%s7432 + $0x111] sm:$0xff]
    %v7939 = vld [vmem:[%s7432 + $0x121] sm:$0xff]
    %v7940 = vld [vmem:[%s7432 + $0x129] sm:$0xff]
    %v7941 = vld [vmem:[%s7432 + $0x139] sm:$0xff]
    %v7942 = vld [vmem:[%s7432 + $0x141] sm:$0xff]
    %v7943 = vld [vmem:[%s7432 + $0x151] sm:$0xff]
    %v7944 = vld [vmem:[%s7432 + $0x159] sm:$0xff]
    %v7945 = vld [vmem:[%s7432 + $0x169] sm:$0xff]
    %v7946 = vld [vmem:[%s7432 + $0x171] sm:$0xff]
    %v7947 = vld [vmem:[%s7432 + $0x1b1] sm:$0xff]
    %v7948 = vld [vmem:[%s7432 + $0x1b9] sm:$0xff]
    %v7949 = vld [vmem:[%s7432 + $0x1c9] sm:$0xff]
    %v7950 = vld [vmem:[%s7432 + $0x1d1] sm:$0xff]
    %v7951 = vld [vmem:[%s7432 + $0x1e1] sm:$0xff]
    %v7952 = vld [vmem:[%s7432 + $0x1e9] sm:$0xff]
    %v7953 = vld [vmem:[%s7432 + $0x1f9] sm:$0xff]
    %v7954 = vld [vmem:[%s7432 + $0x201] sm:$0xff]
    %v7955 = vld [vmem:[%s7432 + $0x211] sm:$0xff]
    %v7956 = vld [vmem:[%s7432 + $0x219] sm:$0xff]
    %v7957 = vld [vmem:[%s7432 + $0x229] sm:$0xff]
    %v7958 = vld [vmem:[%s7432 + $0x231] sm:$0xff]
    %v7959 = vld [vmem:[%s7432 + $0x241] sm:$0xff]
    %v7960 = vld [vmem:[%s7432 + $0x249] sm:$0xff]
    %v7961 = vld [vmem:[%s7432 + $0x259] sm:$0xff]
    %v7962 = vld [vmem:[%s7432 + $0x261] sm:$0xff]
    %v7963 = vld [vmem:[%s7432 + $0x271] sm:$0xff]
    %v7964 = vld [vmem:[%s7432 + $0x279] sm:$0xff]
    %v7965 = vld [vmem:[%s7432 + $0x289] sm:$0xff]
    %v7966 = vld [vmem:[%s7432 + $0x291] sm:$0xff]
    %v7967 = vld [vmem:[%s7432 + $0x2a1] sm:$0xff]
    %v7968 = vld [vmem:[%s7432 + $0x2a9] sm:$0xff]
    %v7969 = vld [vmem:[%s7432 + $0x2b9] sm:$0xff]
    %v7970 = vld [vmem:[%s7432 + $0x2c1] sm:$0xff]
    %v7971 = vld [vmem:[%s7432 + $0x2d1] sm:$0xff]
    %v7972 = vld [vmem:[%s7432 + $0x2d9] sm:$0xff]
    %v7973 = vld [vmem:[%s7432 + $0x2e9] sm:$0xff]
    %v7974 = vld [vmem:[%s7432 + $0x2f1] sm:$0xff]
    %v7975 = vld [vmem:[%s7432 + $0x301] sm:$0xff]
    %v7976 = vld [vmem:[%s7432 + $0x309] sm:$0xff]
    %v7977 = vld [vmem:[%s7432 + $0x319] sm:$0xff]
    %v7978 = vld [vmem:[%s7432 + $0x321] sm:$0xff]
    %s7979 = scalar_lea.vmem [#allocation4], 896
    %v7980 = vld [vmem:[%s7979] sm:$0xff]
    %v7981 = vld [vmem:[%s7979 + $0x8] sm:$0xff]
    %v7982 = vld [vmem:[%s7979 + $0x10] sm:$0xff]
    %v7983 = vld [vmem:[%s7979 + $0x18] sm:$0xff]
    %v7984 = vld [vmem:[%s7979 + $0x20] sm:$0xff]
    %v7985 = vld [vmem:[%s7979 + $0x28] sm:$0xff]
    %v7986 = vld [vmem:[%s7979 + $0x30] sm:$0xff]
    %v7987 = vld [vmem:[%s7979 + $0x38] sm:$0xff]
    %v7988 = vld [vmem:[%s7979 + $0x40] sm:$0xff]
    %v7989 = vld [vmem:[%s7979 + $0x48] sm:$0xff]
    %v7990 = vld [vmem:[%s7979 + $0x50] sm:$0xff]
    %v7991 = vld [vmem:[%s7979 + $0x58] sm:$0xff]
    %v7992 = vld [vmem:[%s7979 + $0x60] sm:$0xff]
    %v7993 = vld [vmem:[%s7979 + $0x68] sm:$0xff]
    %v7994 = vld [vmem:[%s7979 + $0x70] sm:$0xff]
    %v7995 = vld [vmem:[%s7979 + $0x78] sm:$0xff]
    %7996 = vmatpush.msra.mxu0 %v7995
    %7997 = vmatpush.msra.mxu0 %v7994
    %7998 = vmatpush.msra.mxu0 %v7993
    %7999 = vmatpush.msra.mxu0 %v7992
    %8000 = vmatpush.msra.mxu0 %v7991
    %8001 = vmatpush.msra.mxu0 %v7990
    %8002 = vmatpush.msra.mxu0 %v7989
    %8003 = vmatpush.msra.mxu0 %v7988
    %8004 = vmatpush.msra.mxu0 %v7987
    %8005 = vmatpush.msra.mxu0 %v7986
    %8006 = vmatpush.msra.mxu0 %v7985
    %8007 = vmatpush.msra.mxu0 %v7984
    %8008 = vmatpush.msra.mxu0 %v7983
    %8009 = vmatpush.msra.mxu0 %v7982
    %8010 = vmatpush.msra.mxu0 %v7981
    %8011 = vmatpush.msra.mxu0 %v7980
    %8012 = vmatmul.f32.gmra.mxu0 %v7915
    %v8013 = vpop.f32.mrf.mxu0
    %v8014 = vadd.f32 0.0, %v8013
    %8015 = vmatmul.f32.gmra.mxu0 %v7916
    %v8016 = vpop.f32.mrf.mxu0
    %v8017 = vadd.f32 0.0, %v8016
    %8018 = vmatmul.f32.gmra.mxu0 %v7917
    %v8019 = vpop.f32.mrf.mxu0
    %v8020 = vadd.f32 0.0, %v8019
    %8021 = vmatmul.f32.gmra.mxu0 %v7918
    %v8022 = vpop.f32.mrf.mxu0
    %v8023 = vadd.f32 0.0, %v8022
    %8024 = vmatmul.f32.gmra.mxu0 %v7919
    %v8025 = vpop.f32.mrf.mxu0
    %v8026 = vadd.f32 0.0, %v8025
    %8027 = vmatmul.f32.gmra.mxu0 %v7920
    %v8028 = vpop.f32.mrf.mxu0
    %v8029 = vadd.f32 0.0, %v8028
    %8030 = vmatmul.f32.gmra.mxu0 %v7921
    %v8031 = vpop.f32.mrf.mxu0
    %v8032 = vadd.f32 0.0, %v8031
    %8033 = vmatmul.f32.gmra.mxu0 %v7922
    %v8034 = vpop.f32.mrf.mxu0
    %v8035 = vadd.f32 0.0, %v8034
    %8036 = vmatmul.f32.gmra.mxu0 %v7923
    %v8037 = vpop.f32.mrf.mxu0
    %v8038 = vadd.f32 0.0, %v8037
    %8039 = vmatmul.f32.gmra.mxu0 %v7924
    %v8040 = vpop.f32.mrf.mxu0
    %v8041 = vadd.f32 0.0, %v8040
    %8042 = vmatmul.f32.gmra.mxu0 %v7925
    %v8043 = vpop.f32.mrf.mxu0
    %v8044 = vadd.f32 0.0, %v8043
    %8045 = vmatmul.f32.gmra.mxu0 %v7926
    %v8046 = vpop.f32.mrf.mxu0
    %v8047 = vadd.f32 0.0, %v8046
    %8048 = vmatmul.f32.gmra.mxu0 %v7927
    %v8049 = vpop.f32.mrf.mxu0
    %v8050 = vadd.f32 0.0, %v8049
    %8051 = vmatmul.f32.gmra.mxu0 %v7928
    %v8052 = vpop.f32.mrf.mxu0
    %v8053 = vadd.f32 0.0, %v8052
    %8054 = vmatmul.f32.gmra.mxu0 %v7929
    %v8055 = vpop.f32.mrf.mxu0
    %v8056 = vadd.f32 0.0, %v8055
    %8057 = vmatmul.f32.gmra.mxu0 %v7930
    %v8058 = vpop.f32.mrf.mxu0
    %v8059 = vadd.f32 0.0, %v8058
    %8060 = vmatmul.f32.gmra.mxu0 %v7931
    %v8061 = vpop.f32.mrf.mxu0
    %v8062 = vadd.f32 0.0, %v8061
    %8063 = vmatmul.f32.gmra.mxu0 %v7932
    %v8064 = vpop.f32.mrf.mxu0
    %v8065 = vadd.f32 0.0, %v8064
    %8066 = vmatmul.f32.gmra.mxu0 %v7933
    %v8067 = vpop.f32.mrf.mxu0
    %v8068 = vadd.f32 0.0, %v8067
    %8069 = vmatmul.f32.gmra.mxu0 %v7934
    %v8070 = vpop.f32.mrf.mxu0
    %v8071 = vadd.f32 0.0, %v8070
    %8072 = vmatmul.f32.gmra.mxu0 %v7935
    %v8073 = vpop.f32.mrf.mxu0
    %v8074 = vadd.f32 0.0, %v8073
    %8075 = vmatmul.f32.gmra.mxu0 %v7936
    %v8076 = vpop.f32.mrf.mxu0
    %v8077 = vadd.f32 0.0, %v8076
    %8078 = vmatmul.f32.gmra.mxu0 %v7937
    %v8079 = vpop.f32.mrf.mxu0
    %v8080 = vadd.f32 0.0, %v8079
    %8081 = vmatmul.f32.gmra.mxu0 %v7938
    %v8082 = vpop.f32.mrf.mxu0
    %v8083 = vadd.f32 0.0, %v8082
    %8084 = vmatmul.f32.gmra.mxu0 %v7939
    %v8085 = vpop.f32.mrf.mxu0
    %v8086 = vadd.f32 0.0, %v8085
    %8087 = vmatmul.f32.gmra.mxu0 %v7940
    %v8088 = vpop.f32.mrf.mxu0
    %v8089 = vadd.f32 0.0, %v8088
    %8090 = vmatmul.f32.gmra.mxu0 %v7941
    %v8091 = vpop.f32.mrf.mxu0
    %v8092 = vadd.f32 0.0, %v8091
    %8093 = vmatmul.f32.gmra.mxu0 %v7942
    %v8094 = vpop.f32.mrf.mxu0
    %v8095 = vadd.f32 0.0, %v8094
    %8096 = vmatmul.f32.gmra.mxu0 %v7943
    %v8097 = vpop.f32.mrf.mxu0
    %v8098 = vadd.f32 0.0, %v8097
    %8099 = vmatmul.f32.gmra.mxu0 %v7944
    %v8100 = vpop.f32.mrf.mxu0
    %v8101 = vadd.f32 0.0, %v8100
    %8102 = vmatmul.f32.gmra.mxu0 %v7945
    %v8103 = vpop.f32.mrf.mxu0
    %v8104 = vadd.f32 0.0, %v8103
    %8105 = vmatmul.f32.gmra.mxu0 %v7946
    %v8106 = vpop.f32.mrf.mxu0
    %v8107 = vadd.f32 0.0, %v8106
    %8108 = vmatmul.f32.gmra.mxu0 %v7947
    %v8109 = vpop.f32.mrf.mxu0
    %v8110 = vadd.f32 0.0, %v8109
    %8111 = vmatmul.f32.gmra.mxu0 %v7948
    %v8112 = vpop.f32.mrf.mxu0
    %v8113 = vadd.f32 0.0, %v8112
    %8114 = vmatmul.f32.gmra.mxu0 %v7949
    %v8115 = vpop.f32.mrf.mxu0
    %v8116 = vadd.f32 0.0, %v8115
    %8117 = vmatmul.f32.gmra.mxu0 %v7950
    %v8118 = vpop.f32.mrf.mxu0
    %v8119 = vadd.f32 0.0, %v8118
    %8120 = vmatmul.f32.gmra.mxu0 %v7951
    %v8121 = vpop.f32.mrf.mxu0
    %v8122 = vadd.f32 0.0, %v8121
    %8123 = vmatmul.f32.gmra.mxu0 %v7952
    %v8124 = vpop.f32.mrf.mxu0
    %v8125 = vadd.f32 0.0, %v8124
    %8126 = vmatmul.f32.gmra.mxu0 %v7953
    %v8127 = vpop.f32.mrf.mxu0
    %v8128 = vadd.f32 0.0, %v8127
    %8129 = vmatmul.f32.gmra.mxu0 %v7954
    %v8130 = vpop.f32.mrf.mxu0
    %v8131 = vadd.f32 0.0, %v8130
    %8132 = vmatmul.f32.gmra.mxu0 %v7955
    %v8133 = vpop.f32.mrf.mxu0
    %v8134 = vadd.f32 0.0, %v8133
    %8135 = vmatmul.f32.gmra.mxu0 %v7956
    %v8136 = vpop.f32.mrf.mxu0
    %v8137 = vadd.f32 0.0, %v8136
    %8138 = vmatmul.f32.gmra.mxu0 %v7957
    %v8139 = vpop.f32.mrf.mxu0
    %v8140 = vadd.f32 0.0, %v8139
    %8141 = vmatmul.f32.gmra.mxu0 %v7958
    %v8142 = vpop.f32.mrf.mxu0
    %v8143 = vadd.f32 0.0, %v8142
    %8144 = vmatmul.f32.gmra.mxu0 %v7959
    %v8145 = vpop.f32.mrf.mxu0
    %v8146 = vadd.f32 0.0, %v8145
    %8147 = vmatmul.f32.gmra.mxu0 %v7960
    %v8148 = vpop.f32.mrf.mxu0
    %v8149 = vadd.f32 0.0, %v8148
    %8150 = vmatmul.f32.gmra.mxu0 %v7961
    %v8151 = vpop.f32.mrf.mxu0
    %v8152 = vadd.f32 0.0, %v8151
    %8153 = vmatmul.f32.gmra.mxu0 %v7962
    %v8154 = vpop.f32.mrf.mxu0
    %v8155 = vadd.f32 0.0, %v8154
    %8156 = vmatmul.f32.gmra.mxu0 %v7963
    %v8157 = vpop.f32.mrf.mxu0
    %v8158 = vadd.f32 0.0, %v8157
    %8159 = vmatmul.f32.gmra.mxu0 %v7964
    %v8160 = vpop.f32.mrf.mxu0
    %v8161 = vadd.f32 0.0, %v8160
    %8162 = vmatmul.f32.gmra.mxu0 %v7965
    %v8163 = vpop.f32.mrf.mxu0
    %v8164 = vadd.f32 0.0, %v8163
    %8165 = vmatmul.f32.gmra.mxu0 %v7966
    %v8166 = vpop.f32.mrf.mxu0
    %v8167 = vadd.f32 0.0, %v8166
    %8168 = vmatmul.f32.gmra.mxu0 %v7967
    %v8169 = vpop.f32.mrf.mxu0
    %v8170 = vadd.f32 0.0, %v8169
    %8171 = vmatmul.f32.gmra.mxu0 %v7968
    %v8172 = vpop.f32.mrf.mxu0
    %v8173 = vadd.f32 0.0, %v8172
    %8174 = vmatmul.f32.gmra.mxu0 %v7969
    %v8175 = vpop.f32.mrf.mxu0
    %v8176 = vadd.f32 0.0, %v8175
    %8177 = vmatmul.f32.gmra.mxu0 %v7970
    %v8178 = vpop.f32.mrf.mxu0
    %v8179 = vadd.f32 0.0, %v8178
    %8180 = vmatmul.f32.gmra.mxu0 %v7971
    %v8181 = vpop.f32.mrf.mxu0
    %v8182 = vadd.f32 0.0, %v8181
    %8183 = vmatmul.f32.gmra.mxu0 %v7972
    %v8184 = vpop.f32.mrf.mxu0
    %v8185 = vadd.f32 0.0, %v8184
    %8186 = vmatmul.f32.gmra.mxu0 %v7973
    %v8187 = vpop.f32.mrf.mxu0
    %v8188 = vadd.f32 0.0, %v8187
    %8189 = vmatmul.f32.gmra.mxu0 %v7974
    %v8190 = vpop.f32.mrf.mxu0
    %v8191 = vadd.f32 0.0, %v8190
    %8192 = vmatmul.f32.gmra.mxu0 %v7975
    %v8193 = vpop.f32.mrf.mxu0
    %v8194 = vadd.f32 0.0, %v8193
    %8195 = vmatmul.f32.gmra.mxu0 %v7976
    %v8196 = vpop.f32.mrf.mxu0
    %v8197 = vadd.f32 0.0, %v8196
    %8198 = vmatmul.f32.gmra.mxu0 %v7977
    %v8199 = vpop.f32.mrf.mxu0
    %v8200 = vadd.f32 0.0, %v8199
    %8201 = vmatmul.f32.gmra.mxu0 %v7978
    %v8202 = vpop.f32.mrf.mxu0
    %v8203 = vadd.f32 0.0, %v8202
    %8204 = vdwg.mxu0
    %v8205 = vld [vmem:[#allocation3] sm:$0xff]
    %v8206 = vld [vmem:[#allocation3 + $0x8] sm:$0xff]
    %v8207 = vld [vmem:[#allocation3 + $0x10] sm:$0xff]
    %v8208 = vld [vmem:[#allocation3 + $0x18] sm:$0xff]
    %v8209 = vld [vmem:[#allocation3 + $0x20] sm:$0xff]
    %v8210 = vld [vmem:[#allocation3 + $0x28] sm:$0xff]
    %v8211 = vld [vmem:[#allocation3 + $0x30] sm:$0xff]
    %v8212 = vld [vmem:[#allocation3 + $0x38] sm:$0xff]
    %v8213 = vld [vmem:[#allocation3 + $0x40] sm:$0xff]
    %v8214 = vld [vmem:[#allocation3 + $0x48] sm:$0xff]
    %v8215 = vld [vmem:[#allocation3 + $0x50] sm:$0xff]
    %v8216 = vld [vmem:[#allocation3 + $0x58] sm:$0xff]
    %v8217 = vld [vmem:[#allocation3 + $0x60] sm:$0xff]
    %v8218 = vld [vmem:[#allocation3 + $0x68] sm:$0xff]
    %v8219 = vld [vmem:[#allocation3 + $0x70] sm:$0xff]
    %v8220 = vld [vmem:[#allocation3 + $0x78] sm:$0xff]
    %v8221 = vld [vmem:[#allocation3 + $0x80] sm:$0xff]
    %v8222 = vld [vmem:[#allocation3 + $0x88] sm:$0xff]
    %v8223 = vld [vmem:[#allocation3 + $0x90] sm:$0xff]
    %v8224 = vld [vmem:[#allocation3 + $0x98] sm:$0xff]
    %v8225 = vld [vmem:[#allocation3 + $0xa0] sm:$0xff]
    %v8226 = vld [vmem:[#allocation3 + $0xa8] sm:$0xff]
    %v8227 = vld [vmem:[#allocation3 + $0xb0] sm:$0xff]
    %v8228 = vld [vmem:[#allocation3 + $0xb8] sm:$0xff]
    %v8229 = vld [vmem:[#allocation3 + $0xc0] sm:$0xff]
    %v8230 = vld [vmem:[#allocation3 + $0xc8] sm:$0xff]
    %v8231 = vld [vmem:[#allocation3 + $0xd0] sm:$0xff]
    %v8232 = vld [vmem:[#allocation3 + $0xd8] sm:$0xff]
    %v8233 = vld [vmem:[#allocation3 + $0xe0] sm:$0xff]
    %v8234 = vld [vmem:[#allocation3 + $0xe8] sm:$0xff]
    %v8235 = vld [vmem:[#allocation3 + $0xf0] sm:$0xff]
    %v8236 = vld [vmem:[#allocation3 + $0xf8] sm:$0xff]
    %v8237 = vld [vmem:[#allocation3 + $0x100] sm:$0xff]
    %v8238 = vld [vmem:[#allocation3 + $0x108] sm:$0xff]
    %v8239 = vld [vmem:[#allocation3 + $0x110] sm:$0xff]
    %v8240 = vld [vmem:[#allocation3 + $0x118] sm:$0xff]
    %v8241 = vld [vmem:[#allocation3 + $0x120] sm:$0xff]
    %v8242 = vld [vmem:[#allocation3 + $0x128] sm:$0xff]
    %v8243 = vld [vmem:[#allocation3 + $0x130] sm:$0xff]
    %v8244 = vld [vmem:[#allocation3 + $0x138] sm:$0xff]
    %v8245 = vld [vmem:[#allocation3 + $0x140] sm:$0xff]
    %v8246 = vld [vmem:[#allocation3 + $0x148] sm:$0xff]
    %v8247 = vld [vmem:[#allocation3 + $0x150] sm:$0xff]
    %v8248 = vld [vmem:[#allocation3 + $0x158] sm:$0xff]
    %v8249 = vld [vmem:[#allocation3 + $0x160] sm:$0xff]
    %v8250 = vld [vmem:[#allocation3 + $0x168] sm:$0xff]
    %v8251 = vld [vmem:[#allocation3 + $0x170] sm:$0xff]
    %v8252 = vld [vmem:[#allocation3 + $0x178] sm:$0xff]
    %v8253 = vld [vmem:[#allocation3 + $0x180] sm:$0xff]
    %v8254 = vld [vmem:[#allocation3 + $0x188] sm:$0xff]
    %v8255 = vld [vmem:[#allocation3 + $0x190] sm:$0xff]
    %v8256 = vld [vmem:[#allocation3 + $0x198] sm:$0xff]
    %v8257 = vld [vmem:[#allocation3 + $0x1a0] sm:$0xff]
    %v8258 = vld [vmem:[#allocation3 + $0x1a8] sm:$0xff]
    %v8259 = vld [vmem:[#allocation3 + $0x1b0] sm:$0xff]
    %v8260 = vld [vmem:[#allocation3 + $0x1b8] sm:$0xff]
    %v8261 = vld [vmem:[#allocation3 + $0x1c0] sm:$0xff]
    %v8262 = vld [vmem:[#allocation3 + $0x1c8] sm:$0xff]
    %v8263 = vld [vmem:[#allocation3 + $0x1d0] sm:$0xff]
    %v8264 = vld [vmem:[#allocation3 + $0x1d8] sm:$0xff]
    %v8265 = vld [vmem:[#allocation3 + $0x1e0] sm:$0xff]
    %v8266 = vld [vmem:[#allocation3 + $0x1e8] sm:$0xff]
    %v8267 = vld [vmem:[#allocation3 + $0x1f0] sm:$0xff]
    %v8268 = vld [vmem:[#allocation3 + $0x1f8] sm:$0xff]
    %v8269 = vadd.f32 %v8205, %v8014
    %v8270 = vadd.f32 %v8206, %v8017
    %v8271 = vadd.f32 %v8207, %v8020
    %v8272 = vadd.f32 %v8208, %v8023
    %v8273 = vadd.f32 %v8209, %v8026
    %v8274 = vadd.f32 %v8210, %v8029
    %v8275 = vadd.f32 %v8211, %v8032
    %v8276 = vadd.f32 %v8212, %v8035
    %v8277 = vadd.f32 %v8213, %v8038
    %v8278 = vadd.f32 %v8214, %v8041
    %v8279 = vadd.f32 %v8215, %v8044
    %v8280 = vadd.f32 %v8216, %v8047
    %v8281 = vadd.f32 %v8217, %v8050
    %v8282 = vadd.f32 %v8218, %v8053
    %v8283 = vadd.f32 %v8219, %v8056
    %v8284 = vadd.f32 %v8220, %v8059
    %v8285 = vadd.f32 %v8221, %v8062
    %v8286 = vadd.f32 %v8222, %v8065
    %v8287 = vadd.f32 %v8223, %v8068
    %v8288 = vadd.f32 %v8224, %v8071
    %v8289 = vadd.f32 %v8225, %v8074
    %v8290 = vadd.f32 %v8226, %v8077
    %v8291 = vadd.f32 %v8227, %v8080
    %v8292 = vadd.f32 %v8228, %v8083
    %v8293 = vadd.f32 %v8229, %v8086
    %v8294 = vadd.f32 %v8230, %v8089
    %v8295 = vadd.f32 %v8231, %v8092
    %v8296 = vadd.f32 %v8232, %v8095
    %v8297 = vadd.f32 %v8233, %v8098
    %v8298 = vadd.f32 %v8234, %v8101
    %v8299 = vadd.f32 %v8235, %v8104
    %v8300 = vadd.f32 %v8236, %v8107
    %v8301 = vadd.f32 %v8237, %v8110
    %v8302 = vadd.f32 %v8238, %v8113
    %v8303 = vadd.f32 %v8239, %v8116
    %v8304 = vadd.f32 %v8240, %v8119
    %v8305 = vadd.f32 %v8241, %v8122
    %v8306 = vadd.f32 %v8242, %v8125
    %v8307 = vadd.f32 %v8243, %v8128
    %v8308 = vadd.f32 %v8244, %v8131
    %v8309 = vadd.f32 %v8245, %v8134
    %v8310 = vadd.f32 %v8246, %v8137
    %v8311 = vadd.f32 %v8247, %v8140
    %v8312 = vadd.f32 %v8248, %v8143
    %v8313 = vadd.f32 %v8249, %v8146
    %v8314 = vadd.f32 %v8250, %v8149
    %v8315 = vadd.f32 %v8251, %v8152
    %v8316 = vadd.f32 %v8252, %v8155
    %v8317 = vadd.f32 %v8253, %v8158
    %v8318 = vadd.f32 %v8254, %v8161
    %v8319 = vadd.f32 %v8255, %v8164
    %v8320 = vadd.f32 %v8256, %v8167
    %v8321 = vadd.f32 %v8257, %v8170
    %v8322 = vadd.f32 %v8258, %v8173
    %v8323 = vadd.f32 %v8259, %v8176
    %v8324 = vadd.f32 %v8260, %v8179
    %v8325 = vadd.f32 %v8261, %v8182
    %v8326 = vadd.f32 %v8262, %v8185
    %v8327 = vadd.f32 %v8263, %v8188
    %v8328 = vadd.f32 %v8264, %v8191
    %v8329 = vadd.f32 %v8265, %v8194
    %v8330 = vadd.f32 %v8266, %v8197
    %v8331 = vadd.f32 %v8267, %v8200
    %v8332 = vadd.f32 %v8268, %v8203
    %8333 = vst [vmem:[#allocation3] sm:$0xff] %v8269
    %8334 = vst [vmem:[#allocation3 + $0x8] sm:$0xff] %v8270
    %8335 = vst [vmem:[#allocation3 + $0x10] sm:$0xff] %v8271
    %8336 = vst [vmem:[#allocation3 + $0x18] sm:$0xff] %v8272
    %8337 = vst [vmem:[#allocation3 + $0x20] sm:$0xff] %v8273
    %8338 = vst [vmem:[#allocation3 + $0x28] sm:$0xff] %v8274
    %8339 = vst [vmem:[#allocation3 + $0x30] sm:$0xff] %v8275
    %8340 = vst [vmem:[#allocation3 + $0x38] sm:$0xff] %v8276
    %8341 = vst [vmem:[#allocation3 + $0x40] sm:$0xff] %v8277
    %8342 = vst [vmem:[#allocation3 + $0x48] sm:$0xff] %v8278
    %8343 = vst [vmem:[#allocation3 + $0x50] sm:$0xff] %v8279
    %8344 = vst [vmem:[#allocation3 + $0x58] sm:$0xff] %v8280
    %8345 = vst [vmem:[#allocation3 + $0x60] sm:$0xff] %v8281
    %8346 = vst [vmem:[#allocation3 + $0x68] sm:$0xff] %v8282
    %8347 = vst [vmem:[#allocation3 + $0x70] sm:$0xff] %v8283
    %8348 = vst [vmem:[#allocation3 + $0x78] sm:$0xff] %v8284
    %8349 = vst [vmem:[#allocation3 + $0x80] sm:$0xff] %v8285
    %8350 = vst [vmem:[#allocation3 + $0x88] sm:$0xff] %v8286
    %8351 = vst [vmem:[#allocation3 + $0x90] sm:$0xff] %v8287
    %8352 = vst [vmem:[#allocation3 + $0x98] sm:$0xff] %v8288
    %8353 = vst [vmem:[#allocation3 + $0xa0] sm:$0xff] %v8289
    %8354 = vst [vmem:[#allocation3 + $0xa8] sm:$0xff] %v8290
    %8355 = vst [vmem:[#allocation3 + $0xb0] sm:$0xff] %v8291
    %8356 = vst [vmem:[#allocation3 + $0xb8] sm:$0xff] %v8292
    %8357 = vst [vmem:[#allocation3 + $0xc0] sm:$0xff] %v8293
    %8358 = vst [vmem:[#allocation3 + $0xc8] sm:$0xff] %v8294
    %8359 = vst [vmem:[#allocation3 + $0xd0] sm:$0xff] %v8295
    %8360 = vst [vmem:[#allocation3 + $0xd8] sm:$0xff] %v8296
    %8361 = vst [vmem:[#allocation3 + $0xe0] sm:$0xff] %v8297
    %8362 = vst [vmem:[#allocation3 + $0xe8] sm:$0xff] %v8298
    %8363 = vst [vmem:[#allocation3 + $0xf0] sm:$0xff] %v8299
    %8364 = vst [vmem:[#allocation3 + $0xf8] sm:$0xff] %v8300
    %8365 = vst [vmem:[#allocation3 + $0x100] sm:$0xff] %v8301
    %8366 = vst [vmem:[#allocation3 + $0x108] sm:$0xff] %v8302
    %8367 = vst [vmem:[#allocation3 + $0x110] sm:$0xff] %v8303
    %8368 = vst [vmem:[#allocation3 + $0x118] sm:$0xff] %v8304
    %8369 = vst [vmem:[#allocation3 + $0x120] sm:$0xff] %v8305
    %8370 = vst [vmem:[#allocation3 + $0x128] sm:$0xff] %v8306
    %8371 = vst [vmem:[#allocation3 + $0x130] sm:$0xff] %v8307
    %8372 = vst [vmem:[#allocation3 + $0x138] sm:$0xff] %v8308
    %8373 = vst [vmem:[#allocation3 + $0x140] sm:$0xff] %v8309
    %8374 = vst [vmem:[#allocation3 + $0x148] sm:$0xff] %v8310
    %8375 = vst [vmem:[#allocation3 + $0x150] sm:$0xff] %v8311
    %8376 = vst [vmem:[#allocation3 + $0x158] sm:$0xff] %v8312
    %8377 = vst [vmem:[#allocation3 + $0x160] sm:$0xff] %v8313
    %8378 = vst [vmem:[#allocation3 + $0x168] sm:$0xff] %v8314
    %8379 = vst [vmem:[#allocation3 + $0x170] sm:$0xff] %v8315
    %8380 = vst [vmem:[#allocation3 + $0x178] sm:$0xff] %v8316
    %8381 = vst [vmem:[#allocation3 + $0x180] sm:$0xff] %v8317
    %8382 = vst [vmem:[#allocation3 + $0x188] sm:$0xff] %v8318
    %8383 = vst [vmem:[#allocation3 + $0x190] sm:$0xff] %v8319
    %8384 = vst [vmem:[#allocation3 + $0x198] sm:$0xff] %v8320
    %8385 = vst [vmem:[#allocation3 + $0x1a0] sm:$0xff] %v8321
    %8386 = vst [vmem:[#allocation3 + $0x1a8] sm:$0xff] %v8322
    %8387 = vst [vmem:[#allocation3 + $0x1b0] sm:$0xff] %v8323
    %8388 = vst [vmem:[#allocation3 + $0x1b8] sm:$0xff] %v8324
    %8389 = vst [vmem:[#allocation3 + $0x1c0] sm:$0xff] %v8325
    %8390 = vst [vmem:[#allocation3 + $0x1c8] sm:$0xff] %v8326
    %8391 = vst [vmem:[#allocation3 + $0x1d0] sm:$0xff] %v8327
    %8392 = vst [vmem:[#allocation3 + $0x1d8] sm:$0xff] %v8328
    %8393 = vst [vmem:[#allocation3 + $0x1e0] sm:$0xff] %v8329
    %8394 = vst [vmem:[#allocation3 + $0x1e8] sm:$0xff] %v8330
    %8395 = vst [vmem:[#allocation3 + $0x1f0] sm:$0xff] %v8331
    %8396 = vst [vmem:[#allocation3 + $0x1f8] sm:$0xff] %v8332
    %v8397 = vld [vmem:[%s7432 + $0x2] sm:$0xff]
    %v8398 = vld [vmem:[%s7432 + $0xa] sm:$0xff]
    %v8399 = vld [vmem:[%s7432 + $0x1a] sm:$0xff]
    %v8400 = vld [vmem:[%s7432 + $0x22] sm:$0xff]
    %v8401 = vld [vmem:[%s7432 + $0x32] sm:$0xff]
    %v8402 = vld [vmem:[%s7432 + $0x3a] sm:$0xff]
    %v8403 = vld [vmem:[%s7432 + $0x4a] sm:$0xff]
    %v8404 = vld [vmem:[%s7432 + $0x52] sm:$0xff]
    %v8405 = vld [vmem:[%s7432 + $0x62] sm:$0xff]
    %v8406 = vld [vmem:[%s7432 + $0x6a] sm:$0xff]
    %v8407 = vld [vmem:[%s7432 + $0x7a] sm:$0xff]
    %v8408 = vld [vmem:[%s7432 + $0x82] sm:$0xff]
    %v8409 = vld [vmem:[%s7432 + $0x92] sm:$0xff]
    %v8410 = vld [vmem:[%s7432 + $0x9a] sm:$0xff]
    %v8411 = vld [vmem:[%s7432 + $0xaa] sm:$0xff]
    %v8412 = vld [vmem:[%s7432 + $0xb2] sm:$0xff]
    %v8413 = vld [vmem:[%s7432 + $0xc2] sm:$0xff]
    %v8414 = vld [vmem:[%s7432 + $0xca] sm:$0xff]
    %v8415 = vld [vmem:[%s7432 + $0xda] sm:$0xff]
    %v8416 = vld [vmem:[%s7432 + $0xe2] sm:$0xff]
    %v8417 = vld [vmem:[%s7432 + $0xf2] sm:$0xff]
    %v8418 = vld [vmem:[%s7432 + $0xfa] sm:$0xff]
    %v8419 = vld [vmem:[%s7432 + $0x10a] sm:$0xff]
    %v8420 = vld [vmem:[%s7432 + $0x112] sm:$0xff]
    %v8421 = vld [vmem:[%s7432 + $0x122] sm:$0xff]
    %v8422 = vld [vmem:[%s7432 + $0x12a] sm:$0xff]
    %v8423 = vld [vmem:[%s7432 + $0x13a] sm:$0xff]
    %v8424 = vld [vmem:[%s7432 + $0x142] sm:$0xff]
    %v8425 = vld [vmem:[%s7432 + $0x152] sm:$0xff]
    %v8426 = vld [vmem:[%s7432 + $0x15a] sm:$0xff]
    %v8427 = vld [vmem:[%s7432 + $0x16a] sm:$0xff]
    %v8428 = vld [vmem:[%s7432 + $0x172] sm:$0xff]
    %v8429 = vld [vmem:[%s7432 + $0x1b2] sm:$0xff]
    %v8430 = vld [vmem:[%s7432 + $0x1ba] sm:$0xff]
    %v8431 = vld [vmem:[%s7432 + $0x1ca] sm:$0xff]
    %v8432 = vld [vmem:[%s7432 + $0x1d2] sm:$0xff]
    %v8433 = vld [vmem:[%s7432 + $0x1e2] sm:$0xff]
    %v8434 = vld [vmem:[%s7432 + $0x1ea] sm:$0xff]
    %v8435 = vld [vmem:[%s7432 + $0x1fa] sm:$0xff]
    %v8436 = vld [vmem:[%s7432 + $0x202] sm:$0xff]
    %v8437 = vld [vmem:[%s7432 + $0x212] sm:$0xff]
    %v8438 = vld [vmem:[%s7432 + $0x21a] sm:$0xff]
    %v8439 = vld [vmem:[%s7432 + $0x22a] sm:$0xff]
    %v8440 = vld [vmem:[%s7432 + $0x232] sm:$0xff]
    %v8441 = vld [vmem:[%s7432 + $0x242] sm:$0xff]
    %v8442 = vld [vmem:[%s7432 + $0x24a] sm:$0xff]
    %v8443 = vld [vmem:[%s7432 + $0x25a] sm:$0xff]
    %v8444 = vld [vmem:[%s7432 + $0x262] sm:$0xff]
    %v8445 = vld [vmem:[%s7432 + $0x272] sm:$0xff]
    %v8446 = vld [vmem:[%s7432 + $0x27a] sm:$0xff]
    %v8447 = vld [vmem:[%s7432 + $0x28a] sm:$0xff]
    %v8448 = vld [vmem:[%s7432 + $0x292] sm:$0xff]
    %v8449 = vld [vmem:[%s7432 + $0x2a2] sm:$0xff]
    %v8450 = vld [vmem:[%s7432 + $0x2aa] sm:$0xff]
    %v8451 = vld [vmem:[%s7432 + $0x2ba] sm:$0xff]
    %v8452 = vld [vmem:[%s7432 + $0x2c2] sm:$0xff]
    %v8453 = vld [vmem:[%s7432 + $0x2d2] sm:$0xff]
    %v8454 = vld [vmem:[%s7432 + $0x2da] sm:$0xff]
    %v8455 = vld [vmem:[%s7432 + $0x2ea] sm:$0xff]
    %v8456 = vld [vmem:[%s7432 + $0x2f2] sm:$0xff]
    %v8457 = vld [vmem:[%s7432 + $0x302] sm:$0xff]
    %v8458 = vld [vmem:[%s7432 + $0x30a] sm:$0xff]
    %v8459 = vld [vmem:[%s7432 + $0x31a] sm:$0xff]
    %v8460 = vld [vmem:[%s7432 + $0x322] sm:$0xff]
    %s8461 = scalar_lea.vmem [#allocation4], 1024
    %v8462 = vld [vmem:[%s8461] sm:$0xff]
    %v8463 = vld [vmem:[%s8461 + $0x8] sm:$0xff]
    %v8464 = vld [vmem:[%s8461 + $0x10] sm:$0xff]
    %v8465 = vld [vmem:[%s8461 + $0x18] sm:$0xff]
    %v8466 = vld [vmem:[%s8461 + $0x20] sm:$0xff]
    %v8467 = vld [vmem:[%s8461 + $0x28] sm:$0xff]
    %v8468 = vld [vmem:[%s8461 + $0x30] sm:$0xff]
    %v8469 = vld [vmem:[%s8461 + $0x38] sm:$0xff]
    %v8470 = vld [vmem:[%s8461 + $0x40] sm:$0xff]
    %v8471 = vld [vmem:[%s8461 + $0x48] sm:$0xff]
    %v8472 = vld [vmem:[%s8461 + $0x50] sm:$0xff]
    %v8473 = vld [vmem:[%s8461 + $0x58] sm:$0xff]
    %v8474 = vld [vmem:[%s8461 + $0x60] sm:$0xff]
    %v8475 = vld [vmem:[%s8461 + $0x68] sm:$0xff]
    %v8476 = vld [vmem:[%s8461 + $0x70] sm:$0xff]
    %v8477 = vld [vmem:[%s8461 + $0x78] sm:$0xff]
    %8478 = vmatpush.msra.mxu0 %v8477
    %8479 = vmatpush.msra.mxu0 %v8476
    %8480 = vmatpush.msra.mxu0 %v8475
    %8481 = vmatpush.msra.mxu0 %v8474
    %8482 = vmatpush.msra.mxu0 %v8473
    %8483 = vmatpush.msra.mxu0 %v8472
    %8484 = vmatpush.msra.mxu0 %v8471
    %8485 = vmatpush.msra.mxu0 %v8470
    %8486 = vmatpush.msra.mxu0 %v8469
    %8487 = vmatpush.msra.mxu0 %v8468
    %8488 = vmatpush.msra.mxu0 %v8467
    %8489 = vmatpush.msra.mxu0 %v8466
    %8490 = vmatpush.msra.mxu0 %v8465
    %8491 = vmatpush.msra.mxu0 %v8464
    %8492 = vmatpush.msra.mxu0 %v8463
    %8493 = vmatpush.msra.mxu0 %v8462
    %8494 = vmatmul.f32.gmra.mxu0 %v8397
    %v8495 = vpop.f32.mrf.mxu0
    %v8496 = vadd.f32 0.0, %v8495
    %8497 = vmatmul.f32.gmra.mxu0 %v8398
    %v8498 = vpop.f32.mrf.mxu0
    %v8499 = vadd.f32 0.0, %v8498
    %8500 = vmatmul.f32.gmra.mxu0 %v8399
    %v8501 = vpop.f32.mrf.mxu0
    %v8502 = vadd.f32 0.0, %v8501
    %8503 = vmatmul.f32.gmra.mxu0 %v8400
    %v8504 = vpop.f32.mrf.mxu0
    %v8505 = vadd.f32 0.0, %v8504
    %8506 = vmatmul.f32.gmra.mxu0 %v8401
    %v8507 = vpop.f32.mrf.mxu0
    %v8508 = vadd.f32 0.0, %v8507
    %8509 = vmatmul.f32.gmra.mxu0 %v8402
    %v8510 = vpop.f32.mrf.mxu0
    %v8511 = vadd.f32 0.0, %v8510
    %8512 = vmatmul.f32.gmra.mxu0 %v8403
    %v8513 = vpop.f32.mrf.mxu0
    %v8514 = vadd.f32 0.0, %v8513
    %8515 = vmatmul.f32.gmra.mxu0 %v8404
    %v8516 = vpop.f32.mrf.mxu0
    %v8517 = vadd.f32 0.0, %v8516
    %8518 = vmatmul.f32.gmra.mxu0 %v8405
    %v8519 = vpop.f32.mrf.mxu0
    %v8520 = vadd.f32 0.0, %v8519
    %8521 = vmatmul.f32.gmra.mxu0 %v8406
    %v8522 = vpop.f32.mrf.mxu0
    %v8523 = vadd.f32 0.0, %v8522
    %8524 = vmatmul.f32.gmra.mxu0 %v8407
    %v8525 = vpop.f32.mrf.mxu0
    %v8526 = vadd.f32 0.0, %v8525
    %8527 = vmatmul.f32.gmra.mxu0 %v8408
    %v8528 = vpop.f32.mrf.mxu0
    %v8529 = vadd.f32 0.0, %v8528
    %8530 = vmatmul.f32.gmra.mxu0 %v8409
    %v8531 = vpop.f32.mrf.mxu0
    %v8532 = vadd.f32 0.0, %v8531
    %8533 = vmatmul.f32.gmra.mxu0 %v8410
    %v8534 = vpop.f32.mrf.mxu0
    %v8535 = vadd.f32 0.0, %v8534
    %8536 = vmatmul.f32.gmra.mxu0 %v8411
    %v8537 = vpop.f32.mrf.mxu0
    %v8538 = vadd.f32 0.0, %v8537
    %8539 = vmatmul.f32.gmra.mxu0 %v8412
    %v8540 = vpop.f32.mrf.mxu0
    %v8541 = vadd.f32 0.0, %v8540
    %8542 = vmatmul.f32.gmra.mxu0 %v8413
    %v8543 = vpop.f32.mrf.mxu0
    %v8544 = vadd.f32 0.0, %v8543
    %8545 = vmatmul.f32.gmra.mxu0 %v8414
    %v8546 = vpop.f32.mrf.mxu0
    %v8547 = vadd.f32 0.0, %v8546
    %8548 = vmatmul.f32.gmra.mxu0 %v8415
    %v8549 = vpop.f32.mrf.mxu0
    %v8550 = vadd.f32 0.0, %v8549
    %8551 = vmatmul.f32.gmra.mxu0 %v8416
    %v8552 = vpop.f32.mrf.mxu0
    %v8553 = vadd.f32 0.0, %v8552
    %8554 = vmatmul.f32.gmra.mxu0 %v8417
    %v8555 = vpop.f32.mrf.mxu0
    %v8556 = vadd.f32 0.0, %v8555
    %8557 = vmatmul.f32.gmra.mxu0 %v8418
    %v8558 = vpop.f32.mrf.mxu0
    %v8559 = vadd.f32 0.0, %v8558
    %8560 = vmatmul.f32.gmra.mxu0 %v8419
    %v8561 = vpop.f32.mrf.mxu0
    %v8562 = vadd.f32 0.0, %v8561
    %8563 = vmatmul.f32.gmra.mxu0 %v8420
    %v8564 = vpop.f32.mrf.mxu0
    %v8565 = vadd.f32 0.0, %v8564
    %8566 = vmatmul.f32.gmra.mxu0 %v8421
    %v8567 = vpop.f32.mrf.mxu0
    %v8568 = vadd.f32 0.0, %v8567
    %8569 = vmatmul.f32.gmra.mxu0 %v8422
    %v8570 = vpop.f32.mrf.mxu0
    %v8571 = vadd.f32 0.0, %v8570
    %8572 = vmatmul.f32.gmra.mxu0 %v8423
    %v8573 = vpop.f32.mrf.mxu0
    %v8574 = vadd.f32 0.0, %v8573
    %8575 = vmatmul.f32.gmra.mxu0 %v8424
    %v8576 = vpop.f32.mrf.mxu0
    %v8577 = vadd.f32 0.0, %v8576
    %8578 = vmatmul.f32.gmra.mxu0 %v8425
    %v8579 = vpop.f32.mrf.mxu0
    %v8580 = vadd.f32 0.0, %v8579
    %8581 = vmatmul.f32.gmra.mxu0 %v8426
    %v8582 = vpop.f32.mrf.mxu0
    %v8583 = vadd.f32 0.0, %v8582
    %8584 = vmatmul.f32.gmra.mxu0 %v8427
    %v8585 = vpop.f32.mrf.mxu0
    %v8586 = vadd.f32 0.0, %v8585
    %8587 = vmatmul.f32.gmra.mxu0 %v8428
    %v8588 = vpop.f32.mrf.mxu0
    %v8589 = vadd.f32 0.0, %v8588
    %8590 = vmatmul.f32.gmra.mxu0 %v8429
    %v8591 = vpop.f32.mrf.mxu0
    %v8592 = vadd.f32 0.0, %v8591
    %8593 = vmatmul.f32.gmra.mxu0 %v8430
    %v8594 = vpop.f32.mrf.mxu0
    %v8595 = vadd.f32 0.0, %v8594
    %8596 = vmatmul.f32.gmra.mxu0 %v8431
    %v8597 = vpop.f32.mrf.mxu0
    %v8598 = vadd.f32 0.0, %v8597
    %8599 = vmatmul.f32.gmra.mxu0 %v8432
    %v8600 = vpop.f32.mrf.mxu0
    %v8601 = vadd.f32 0.0, %v8600
    %8602 = vmatmul.f32.gmra.mxu0 %v8433
    %v8603 = vpop.f32.mrf.mxu0
    %v8604 = vadd.f32 0.0, %v8603
    %8605 = vmatmul.f32.gmra.mxu0 %v8434
    %v8606 = vpop.f32.mrf.mxu0
    %v8607 = vadd.f32 0.0, %v8606
    %8608 = vmatmul.f32.gmra.mxu0 %v8435
    %v8609 = vpop.f32.mrf.mxu0
    %v8610 = vadd.f32 0.0, %v8609
    %8611 = vmatmul.f32.gmra.mxu0 %v8436
    %v8612 = vpop.f32.mrf.mxu0
    %v8613 = vadd.f32 0.0, %v8612
    %8614 = vmatmul.f32.gmra.mxu0 %v8437
    %v8615 = vpop.f32.mrf.mxu0
    %v8616 = vadd.f32 0.0, %v8615
    %8617 = vmatmul.f32.gmra.mxu0 %v8438
    %v8618 = vpop.f32.mrf.mxu0
    %v8619 = vadd.f32 0.0, %v8618
    %8620 = vmatmul.f32.gmra.mxu0 %v8439
    %v8621 = vpop.f32.mrf.mxu0
    %v8622 = vadd.f32 0.0, %v8621
    %8623 = vmatmul.f32.gmra.mxu0 %v8440
    %v8624 = vpop.f32.mrf.mxu0
    %v8625 = vadd.f32 0.0, %v8624
    %8626 = vmatmul.f32.gmra.mxu0 %v8441
    %v8627 = vpop.f32.mrf.mxu0
    %v8628 = vadd.f32 0.0, %v8627
    %8629 = vmatmul.f32.gmra.mxu0 %v8442
    %v8630 = vpop.f32.mrf.mxu0
    %v8631 = vadd.f32 0.0, %v8630
    %8632 = vmatmul.f32.gmra.mxu0 %v8443
    %v8633 = vpop.f32.mrf.mxu0
    %v8634 = vadd.f32 0.0, %v8633
    %8635 = vmatmul.f32.gmra.mxu0 %v8444
    %v8636 = vpop.f32.mrf.mxu0
    %v8637 = vadd.f32 0.0, %v8636
    %8638 = vmatmul.f32.gmra.mxu0 %v8445
    %v8639 = vpop.f32.mrf.mxu0
    %v8640 = vadd.f32 0.0, %v8639
    %8641 = vmatmul.f32.gmra.mxu0 %v8446
    %v8642 = vpop.f32.mrf.mxu0
    %v8643 = vadd.f32 0.0, %v8642
    %8644 = vmatmul.f32.gmra.mxu0 %v8447
    %v8645 = vpop.f32.mrf.mxu0
    %v8646 = vadd.f32 0.0, %v8645
    %8647 = vmatmul.f32.gmra.mxu0 %v8448
    %v8648 = vpop.f32.mrf.mxu0
    %v8649 = vadd.f32 0.0, %v8648
    %8650 = vmatmul.f32.gmra.mxu0 %v8449
    %v8651 = vpop.f32.mrf.mxu0
    %v8652 = vadd.f32 0.0, %v8651
    %8653 = vmatmul.f32.gmra.mxu0 %v8450
    %v8654 = vpop.f32.mrf.mxu0
    %v8655 = vadd.f32 0.0, %v8654
    %8656 = vmatmul.f32.gmra.mxu0 %v8451
    %v8657 = vpop.f32.mrf.mxu0
    %v8658 = vadd.f32 0.0, %v8657
    %8659 = vmatmul.f32.gmra.mxu0 %v8452
    %v8660 = vpop.f32.mrf.mxu0
    %v8661 = vadd.f32 0.0, %v8660
    %8662 = vmatmul.f32.gmra.mxu0 %v8453
    %v8663 = vpop.f32.mrf.mxu0
    %v8664 = vadd.f32 0.0, %v8663
    %8665 = vmatmul.f32.gmra.mxu0 %v8454
    %v8666 = vpop.f32.mrf.mxu0
    %v8667 = vadd.f32 0.0, %v8666
    %8668 = vmatmul.f32.gmra.mxu0 %v8455
    %v8669 = vpop.f32.mrf.mxu0
    %v8670 = vadd.f32 0.0, %v8669
    %8671 = vmatmul.f32.gmra.mxu0 %v8456
    %v8672 = vpop.f32.mrf.mxu0
    %v8673 = vadd.f32 0.0, %v8672
    %8674 = vmatmul.f32.gmra.mxu0 %v8457
    %v8675 = vpop.f32.mrf.mxu0
    %v8676 = vadd.f32 0.0, %v8675
    %8677 = vmatmul.f32.gmra.mxu0 %v8458
    %v8678 = vpop.f32.mrf.mxu0
    %v8679 = vadd.f32 0.0, %v8678
    %8680 = vmatmul.f32.gmra.mxu0 %v8459
    %v8681 = vpop.f32.mrf.mxu0
    %v8682 = vadd.f32 0.0, %v8681
    %8683 = vmatmul.f32.gmra.mxu0 %v8460
    %v8684 = vpop.f32.mrf.mxu0
    %v8685 = vadd.f32 0.0, %v8684
    %8686 = vdwg.mxu0
    %v8687 = vld [vmem:[#allocation3] sm:$0xff]
    %v8688 = vld [vmem:[#allocation3 + $0x8] sm:$0xff]
    %v8689 = vld [vmem:[#allocation3 + $0x10] sm:$0xff]
    %v8690 = vld [vmem:[#allocation3 + $0x18] sm:$0xff]
    %v8691 = vld [vmem:[#allocation3 + $0x20] sm:$0xff]
    %v8692 = vld [vmem:[#allocation3 + $0x28] sm:$0xff]
    %v8693 = vld [vmem:[#allocation3 + $0x30] sm:$0xff]
    %v8694 = vld [vmem:[#allocation3 + $0x38] sm:$0xff]
    %v8695 = vld [vmem:[#allocation3 + $0x40] sm:$0xff]
    %v8696 = vld [vmem:[#allocation3 + $0x48] sm:$0xff]
    %v8697 = vld [vmem:[#allocation3 + $0x50] sm:$0xff]
    %v8698 = vld [vmem:[#allocation3 + $0x58] sm:$0xff]
    %v8699 = vld [vmem:[#allocation3 + $0x60] sm:$0xff]
    %v8700 = vld [vmem:[#allocation3 + $0x68] sm:$0xff]
    %v8701 = vld [vmem:[#allocation3 + $0x70] sm:$0xff]
    %v8702 = vld [vmem:[#allocation3 + $0x78] sm:$0xff]
    %v8703 = vld [vmem:[#allocation3 + $0x80] sm:$0xff]
    %v8704 = vld [vmem:[#allocation3 + $0x88] sm:$0xff]
    %v8705 = vld [vmem:[#allocation3 + $0x90] sm:$0xff]
    %v8706 = vld [vmem:[#allocation3 + $0x98] sm:$0xff]
    %v8707 = vld [vmem:[#allocation3 + $0xa0] sm:$0xff]
    %v8708 = vld [vmem:[#allocation3 + $0xa8] sm:$0xff]
    %v8709 = vld [vmem:[#allocation3 + $0xb0] sm:$0xff]
    %v8710 = vld [vmem:[#allocation3 + $0xb8] sm:$0xff]
    %v8711 = vld [vmem:[#allocation3 + $0xc0] sm:$0xff]
    %v8712 = vld [vmem:[#allocation3 + $0xc8] sm:$0xff]
    %v8713 = vld [vmem:[#allocation3 + $0xd0] sm:$0xff]
    %v8714 = vld [vmem:[#allocation3 + $0xd8] sm:$0xff]
    %v8715 = vld [vmem:[#allocation3 + $0xe0] sm:$0xff]
    %v8716 = vld [vmem:[#allocation3 + $0xe8] sm:$0xff]
    %v8717 = vld [vmem:[#allocation3 + $0xf0] sm:$0xff]
    %v8718 = vld [vmem:[#allocation3 + $0xf8] sm:$0xff]
    %v8719 = vld [vmem:[#allocation3 + $0x100] sm:$0xff]
    %v8720 = vld [vmem:[#allocation3 + $0x108] sm:$0xff]
    %v8721 = vld [vmem:[#allocation3 + $0x110] sm:$0xff]
    %v8722 = vld [vmem:[#allocation3 + $0x118] sm:$0xff]
    %v8723 = vld [vmem:[#allocation3 + $0x120] sm:$0xff]
    %v8724 = vld [vmem:[#allocation3 + $0x128] sm:$0xff]
    %v8725 = vld [vmem:[#allocation3 + $0x130] sm:$0xff]
    %v8726 = vld [vmem:[#allocation3 + $0x138] sm:$0xff]
    %v8727 = vld [vmem:[#allocation3 + $0x140] sm:$0xff]
    %v8728 = vld [vmem:[#allocation3 + $0x148] sm:$0xff]
    %v8729 = vld [vmem:[#allocation3 + $0x150] sm:$0xff]
    %v8730 = vld [vmem:[#allocation3 + $0x158] sm:$0xff]
    %v8731 = vld [vmem:[#allocation3 + $0x160] sm:$0xff]
    %v8732 = vld [vmem:[#allocation3 + $0x168] sm:$0xff]
    %v8733 = vld [vmem:[#allocation3 + $0x170] sm:$0xff]
    %v8734 = vld [vmem:[#allocation3 + $0x178] sm:$0xff]
    %v8735 = vld [vmem:[#allocation3 + $0x180] sm:$0xff]
    %v8736 = vld [vmem:[#allocation3 + $0x188] sm:$0xff]
    %v8737 = vld [vmem:[#allocation3 + $0x190] sm:$0xff]
    %v8738 = vld [vmem:[#allocation3 + $0x198] sm:$0xff]
    %v8739 = vld [vmem:[#allocation3 + $0x1a0] sm:$0xff]
    %v8740 = vld [vmem:[#allocation3 + $0x1a8] sm:$0xff]
    %v8741 = vld [vmem:[#allocation3 + $0x1b0] sm:$0xff]
    %v8742 = vld [vmem:[#allocation3 + $0x1b8] sm:$0xff]
    %v8743 = vld [vmem:[#allocation3 + $0x1c0] sm:$0xff]
    %v8744 = vld [vmem:[#allocation3 + $0x1c8] sm:$0xff]
    %v8745 = vld [vmem:[#allocation3 + $0x1d0] sm:$0xff]
    %v8746 = vld [vmem:[#allocation3 + $0x1d8] sm:$0xff]
    %v8747 = vld [vmem:[#allocation3 + $0x1e0] sm:$0xff]
    %v8748 = vld [vmem:[#allocation3 + $0x1e8] sm:$0xff]
    %v8749 = vld [vmem:[#allocation3 + $0x1f0] sm:$0xff]
    %v8750 = vld [vmem:[#allocation3 + $0x1f8] sm:$0xff]
    %v8751 = vadd.f32 %v8687, %v8496
    %v8752 = vadd.f32 %v8688, %v8499
    %v8753 = vadd.f32 %v8689, %v8502
    %v8754 = vadd.f32 %v8690, %v8505
    %v8755 = vadd.f32 %v8691, %v8508
    %v8756 = vadd.f32 %v8692, %v8511
    %v8757 = vadd.f32 %v8693, %v8514
    %v8758 = vadd.f32 %v8694, %v8517
    %v8759 = vadd.f32 %v8695, %v8520
    %v8760 = vadd.f32 %v8696, %v8523
    %v8761 = vadd.f32 %v8697, %v8526
    %v8762 = vadd.f32 %v8698, %v8529
    %v8763 = vadd.f32 %v8699, %v8532
    %v8764 = vadd.f32 %v8700, %v8535
    %v8765 = vadd.f32 %v8701, %v8538
    %v8766 = vadd.f32 %v8702, %v8541
    %v8767 = vadd.f32 %v8703, %v8544
    %v8768 = vadd.f32 %v8704, %v8547
    %v8769 = vadd.f32 %v8705, %v8550
    %v8770 = vadd.f32 %v8706, %v8553
    %v8771 = vadd.f32 %v8707, %v8556
    %v8772 = vadd.f32 %v8708, %v8559
    %v8773 = vadd.f32 %v8709, %v8562
    %v8774 = vadd.f32 %v8710, %v8565
    %v8775 = vadd.f32 %v8711, %v8568
    %v8776 = vadd.f32 %v8712, %v8571
    %v8777 = vadd.f32 %v8713, %v8574
    %v8778 = vadd.f32 %v8714, %v8577
    %v8779 = vadd.f32 %v8715, %v8580
    %v8780 = vadd.f32 %v8716, %v8583
    %v8781 = vadd.f32 %v8717, %v8586
    %v8782 = vadd.f32 %v8718, %v8589
    %v8783 = vadd.f32 %v8719, %v8592
    %v8784 = vadd.f32 %v8720, %v8595
    %v8785 = vadd.f32 %v8721, %v8598
    %v8786 = vadd.f32 %v8722, %v8601
    %v8787 = vadd.f32 %v8723, %v8604
    %v8788 = vadd.f32 %v8724, %v8607
    %v8789 = vadd.f32 %v8725, %v8610
    %v8790 = vadd.f32 %v8726, %v8613
    %v8791 = vadd.f32 %v8727, %v8616
    %v8792 = vadd.f32 %v8728, %v8619
    %v8793 = vadd.f32 %v8729, %v8622
    %v8794 = vadd.f32 %v8730, %v8625
    %v8795 = vadd.f32 %v8731, %v8628
    %v8796 = vadd.f32 %v8732, %v8631
    %v8797 = vadd.f32 %v8733, %v8634
    %v8798 = vadd.f32 %v8734, %v8637
    %v8799 = vadd.f32 %v8735, %v8640
    %v8800 = vadd.f32 %v8736, %v8643
    %v8801 = vadd.f32 %v8737, %v8646
    %v8802 = vadd.f32 %v8738, %v8649
    %v8803 = vadd.f32 %v8739, %v8652
    %v8804 = vadd.f32 %v8740, %v8655
    %v8805 = vadd.f32 %v8741, %v8658
    %v8806 = vadd.f32 %v8742, %v8661
    %v8807 = vadd.f32 %v8743, %v8664
    %v8808 = vadd.f32 %v8744, %v8667
    %v8809 = vadd.f32 %v8745, %v8670
    %v8810 = vadd.f32 %v8746, %v8673
    %v8811 = vadd.f32 %v8747, %v8676
    %v8812 = vadd.f32 %v8748, %v8679
    %v8813 = vadd.f32 %v8749, %v8682
    %v8814 = vadd.f32 %v8750, %v8685
    %8815 = vst [vmem:[#allocation3] sm:$0xff] %v8751
    %8816 = vst [vmem:[#allocation3 + $0x8] sm:$0xff] %v8752
    %8817 = vst [vmem:[#allocation3 + $0x10] sm:$0xff] %v8753
    %8818 = vst [vmem:[#allocation3 + $0x18] sm:$0xff] %v8754
    %8819 = vst [vmem:[#allocation3 + $0x20] sm:$0xff] %v8755
    %8820 = vst [vmem:[#allocation3 + $0x28] sm:$0xff] %v8756
    %8821 = vst [vmem:[#allocation3 + $0x30] sm:$0xff] %v8757
    %8822 = vst [vmem:[#allocation3 + $0x38] sm:$0xff] %v8758
    %8823 = vst [vmem:[#allocation3 + $0x40] sm:$0xff] %v8759
    %8824 = vst [vmem:[#allocation3 + $0x48] sm:$0xff] %v8760
    %8825 = vst [vmem:[#allocation3 + $0x50] sm:$0xff] %v8761
    %8826 = vst [vmem:[#allocation3 + $0x58] sm:$0xff] %v8762
    %8827 = vst [vmem:[#allocation3 + $0x60] sm:$0xff] %v8763
    %8828 = vst [vmem:[#allocation3 + $0x68] sm:$0xff] %v8764
    %8829 = vst [vmem:[#allocation3 + $0x70] sm:$0xff] %v8765
    %8830 = vst [vmem:[#allocation3 + $0x78] sm:$0xff] %v8766
    %8831 = vst [vmem:[#allocation3 + $0x80] sm:$0xff] %v8767
    %8832 = vst [vmem:[#allocation3 + $0x88] sm:$0xff] %v8768
    %8833 = vst [vmem:[#allocation3 + $0x90] sm:$0xff] %v8769
    %8834 = vst [vmem:[#allocation3 + $0x98] sm:$0xff] %v8770
    %8835 = vst [vmem:[#allocation3 + $0xa0] sm:$0xff] %v8771
    %8836 = vst [vmem:[#allocation3 + $0xa8] sm:$0xff] %v8772
    %8837 = vst [vmem:[#allocation3 + $0xb0] sm:$0xff] %v8773
    %8838 = vst [vmem:[#allocation3 + $0xb8] sm:$0xff] %v8774
    %8839 = vst [vmem:[#allocation3 + $0xc0] sm:$0xff] %v8775
    %8840 = vst [vmem:[#allocation3 + $0xc8] sm:$0xff] %v8776
    %8841 = vst [vmem:[#allocation3 + $0xd0] sm:$0xff] %v8777
    %8842 = vst [vmem:[#allocation3 + $0xd8] sm:$0xff] %v8778
    %8843 = vst [vmem:[#allocation3 + $0xe0] sm:$0xff] %v8779
    %8844 = vst [vmem:[#allocation3 + $0xe8] sm:$0xff] %v8780
    %8845 = vst [vmem:[#allocation3 + $0xf0] sm:$0xff] %v8781
    %8846 = vst [vmem:[#allocation3 + $0xf8] sm:$0xff] %v8782
    %8847 = vst [vmem:[#allocation3 + $0x100] sm:$0xff] %v8783
    %8848 = vst [vmem:[#allocation3 + $0x108] sm:$0xff] %v8784
    %8849 = vst [vmem:[#allocation3 + $0x110] sm:$0xff] %v8785
    %8850 = vst [vmem:[#allocation3 + $0x118] sm:$0xff] %v8786
    %8851 = vst [vmem:[#allocation3 + $0x120] sm:$0xff] %v8787
    %8852 = vst [vmem:[#allocation3 + $0x128] sm:$0xff] %v8788
    %8853 = vst [vmem:[#allocation3 + $0x130] sm:$0xff] %v8789
    %8854 = vst [vmem:[#allocation3 + $0x138] sm:$0xff] %v8790
    %8855 = vst [vmem:[#allocation3 + $0x140] sm:$0xff] %v8791
    %8856 = vst [vmem:[#allocation3 + $0x148] sm:$0xff] %v8792
    %8857 = vst [vmem:[#allocation3 + $0x150] sm:$0xff] %v8793
    %8858 = vst [vmem:[#allocation3 + $0x158] sm:$0xff] %v8794
    %8859 = vst [vmem:[#allocation3 + $0x160] sm:$0xff] %v8795
    %8860 = vst [vmem:[#allocation3 + $0x168] sm:$0xff] %v8796
    %8861 = vst [vmem:[#allocation3 + $0x170] sm:$0xff] %v8797
    %8862 = vst [vmem:[#allocation3 + $0x178] sm:$0xff] %v8798
    %8863 = vst [vmem:[#allocation3 + $0x180] sm:$0xff] %v8799
    %8864 = vst [vmem:[#allocation3 + $0x188] sm:$0xff] %v8800
    %8865 = vst [vmem:[#allocation3 + $0x190] sm:$0xff] %v8801
    %8866 = vst [vmem:[#allocation3 + $0x198] sm:$0xff] %v8802
    %8867 = vst [vmem:[#allocation3 + $0x1a0] sm:$0xff] %v8803
    %8868 = vst [vmem:[#allocation3 + $0x1a8] sm:$0xff] %v8804
    %8869 = vst [vmem:[#allocation3 + $0x1b0] sm:$0xff] %v8805
    %8870 = vst [vmem:[#allocation3 + $0x1b8] sm:$0xff] %v8806
    %8871 = vst [vmem:[#allocation3 + $0x1c0] sm:$0xff] %v8807
    %8872 = vst [vmem:[#allocation3 + $0x1c8] sm:$0xff] %v8808
    %8873 = vst [vmem:[#allocation3 + $0x1d0] sm:$0xff] %v8809
    %8874 = vst [vmem:[#allocation3 + $0x1d8] sm:$0xff] %v8810
    %8875 = vst [vmem:[#allocation3 + $0x1e0] sm:$0xff] %v8811
    %8876 = vst [vmem:[#allocation3 + $0x1e8] sm:$0xff] %v8812
    %8877 = vst [vmem:[#allocation3 + $0x1f0] sm:$0xff] %v8813
    %8878 = vst [vmem:[#allocation3 + $0x1f8] sm:$0xff] %v8814
    %v8879 = vld [vmem:[#allocation3] sm:$0xff]
    %v8880 = vld [vmem:[#allocation3 + $0x8] sm:$0xff]
    %v8881 = vld [vmem:[#allocation3 + $0x10] sm:$0xff]
    %v8882 = vld [vmem:[#allocation3 + $0x18] sm:$0xff]
    %v8883 = vld [vmem:[#allocation3 + $0x20] sm:$0xff]
    %v8884 = vld [vmem:[#allocation3 + $0x28] sm:$0xff]
    %v8885 = vld [vmem:[#allocation3 + $0x30] sm:$0xff]
    %v8886 = vld [vmem:[#allocation3 + $0x38] sm:$0xff]
    %v8887 = vld [vmem:[#allocation3 + $0x40] sm:$0xff]
    %v8888 = vld [vmem:[#allocation3 + $0x48] sm:$0xff]
    %v8889 = vld [vmem:[#allocation3 + $0x50] sm:$0xff]
    %v8890 = vld [vmem:[#allocation3 + $0x58] sm:$0xff]
    %v8891 = vld [vmem:[#allocation3 + $0x60] sm:$0xff]
    %v8892 = vld [vmem:[#allocation3 + $0x68] sm:$0xff]
    %v8893 = vld [vmem:[#allocation3 + $0x70] sm:$0xff]
    %v8894 = vld [vmem:[#allocation3 + $0x78] sm:$0xff]
    %v8895 = vld [vmem:[#allocation3 + $0x80] sm:$0xff]
    %v8896 = vld [vmem:[#allocation3 + $0x88] sm:$0xff]
    %v8897 = vld [vmem:[#allocation3 + $0x90] sm:$0xff]
    %v8898 = vld [vmem:[#allocation3 + $0x98] sm:$0xff]
    %v8899 = vld [vmem:[#allocation3 + $0xa0] sm:$0xff]
    %v8900 = vld [vmem:[#allocation3 + $0xa8] sm:$0xff]
    %v8901 = vld [vmem:[#allocation3 + $0xb0] sm:$0xff]
    %v8902 = vld [vmem:[#allocation3 + $0xb8] sm:$0xff]
    %v8903 = vld [vmem:[#allocation3 + $0xc0] sm:$0xff]
    %v8904 = vld [vmem:[#allocation3 + $0xc8] sm:$0xff]
    %v8905 = vld [vmem:[#allocation3 + $0xd0] sm:$0xff]
    %v8906 = vld [vmem:[#allocation3 + $0xd8] sm:$0xff]
    %v8907 = vld [vmem:[#allocation3 + $0xe0] sm:$0xff]
    %v8908 = vld [vmem:[#allocation3 + $0xe8] sm:$0xff]
    %v8909 = vld [vmem:[#allocation3 + $0xf0] sm:$0xff]
    %v8910 = vld [vmem:[#allocation3 + $0xf8] sm:$0xff]
    %v8911 = vld [vmem:[#allocation3 + $0x100] sm:$0xff]
    %v8912 = vld [vmem:[#allocation3 + $0x108] sm:$0xff]
    %v8913 = vld [vmem:[#allocation3 + $0x110] sm:$0xff]
    %v8914 = vld [vmem:[#allocation3 + $0x118] sm:$0xff]
    %v8915 = vld [vmem:[#allocation3 + $0x120] sm:$0xff]
    %v8916 = vld [vmem:[#allocation3 + $0x128] sm:$0xff]
    %v8917 = vld [vmem:[#allocation3 + $0x130] sm:$0xff]
    %v8918 = vld [vmem:[#allocation3 + $0x138] sm:$0xff]
    %v8919 = vld [vmem:[#allocation3 + $0x140] sm:$0xff]
    %v8920 = vld [vmem:[#allocation3 + $0x148] sm:$0xff]
    %v8921 = vld [vmem:[#allocation3 + $0x150] sm:$0xff]
    %v8922 = vld [vmem:[#allocation3 + $0x158] sm:$0xff]
    %v8923 = vld [vmem:[#allocation3 + $0x160] sm:$0xff]
    %v8924 = vld [vmem:[#allocation3 + $0x168] sm:$0xff]
    %v8925 = vld [vmem:[#allocation3 + $0x170] sm:$0xff]
    %v8926 = vld [vmem:[#allocation3 + $0x178] sm:$0xff]
    %v8927 = vld [vmem:[#allocation3 + $0x180] sm:$0xff]
    %v8928 = vld [vmem:[#allocation3 + $0x188] sm:$0xff]
    %v8929 = vld [vmem:[#allocation3 + $0x190] sm:$0xff]
    %v8930 = vld [vmem:[#allocation3 + $0x198] sm:$0xff]
    %v8931 = vld [vmem:[#allocation3 + $0x1a0] sm:$0xff]
    %v8932 = vld [vmem:[#allocation3 + $0x1a8] sm:$0xff]
    %v8933 = vld [vmem:[#allocation3 + $0x1b0] sm:$0xff]
    %v8934 = vld [vmem:[#allocation3 + $0x1b8] sm:$0xff]
    %v8935 = vld [vmem:[#allocation3 + $0x1c0] sm:$0xff]
    %v8936 = vld [vmem:[#allocation3 + $0x1c8] sm:$0xff]
    %v8937 = vld [vmem:[#allocation3 + $0x1d0] sm:$0xff]
    %v8938 = vld [vmem:[#allocation3 + $0x1d8] sm:$0xff]
    %v8939 = vld [vmem:[#allocation3 + $0x1e0] sm:$0xff]
    %v8940 = vld [vmem:[#allocation3 + $0x1e8] sm:$0xff]
    %v8941 = vld [vmem:[#allocation3 + $0x1f0] sm:$0xff]
    %v8942 = vld [vmem:[#allocation3 + $0x1f8] sm:$0xff]
    %v8943 = vld [vmem:[%s5] sm:$0x1]
    %v8945 = vperm.slane %v8943, 0
    %v8947 = vmul.f32 %v8879, %v8945
    %v8948 = vmul.f32 %v8880, %v8945
    %v8949 = vmul.f32 %v8881, %v8945
    %v8950 = vmul.f32 %v8882, %v8945
    %v8951 = vmul.f32 %v8883, %v8945
    %v8952 = vmul.f32 %v8884, %v8945
    %v8953 = vmul.f32 %v8885, %v8945
    %v8954 = vmul.f32 %v8886, %v8945
    %v8955 = vmul.f32 %v8887, %v8945
    %v8956 = vmul.f32 %v8888, %v8945
    %v8957 = vmul.f32 %v8889, %v8945
    %v8958 = vmul.f32 %v8890, %v8945
    %v8959 = vmul.f32 %v8891, %v8945
    %v8960 = vmul.f32 %v8892, %v8945
    %v8961 = vmul.f32 %v8893, %v8945
    %v8962 = vmul.f32 %v8894, %v8945
    %v8963 = vmul.f32 %v8895, %v8945
    %v8964 = vmul.f32 %v8896, %v8945
    %v8965 = vmul.f32 %v8897, %v8945
    %v8966 = vmul.f32 %v8898, %v8945
    %v8967 = vmul.f32 %v8899, %v8945
    %v8968 = vmul.f32 %v8900, %v8945
    %v8969 = vmul.f32 %v8901, %v8945
    %v8970 = vmul.f32 %v8902, %v8945
    %v8971 = vmul.f32 %v8903, %v8945
    %v8972 = vmul.f32 %v8904, %v8945
    %v8973 = vmul.f32 %v8905, %v8945
    %v8974 = vmul.f32 %v8906, %v8945
    %v8975 = vmul.f32 %v8907, %v8945
    %v8976 = vmul.f32 %v8908, %v8945
    %v8977 = vmul.f32 %v8909, %v8945
    %v8978 = vmul.f32 %v8910, %v8945
    %v8979 = vmul.f32 %v8911, %v8945
    %v8980 = vmul.f32 %v8912, %v8945
    %v8981 = vmul.f32 %v8913, %v8945
    %v8982 = vmul.f32 %v8914, %v8945
    %v8983 = vmul.f32 %v8915, %v8945
    %v8984 = vmul.f32 %v8916, %v8945
    %v8985 = vmul.f32 %v8917, %v8945
    %v8986 = vmul.f32 %v8918, %v8945
    %v8987 = vmul.f32 %v8919, %v8945
    %v8988 = vmul.f32 %v8920, %v8945
    %v8989 = vmul.f32 %v8921, %v8945
    %v8990 = vmul.f32 %v8922, %v8945
    %v8991 = vmul.f32 %v8923, %v8945
    %v8992 = vmul.f32 %v8924, %v8945
    %v8993 = vmul.f32 %v8925, %v8945
    %v8994 = vmul.f32 %v8926, %v8945
    %v8995 = vmul.f32 %v8927, %v8945
    %v8996 = vmul.f32 %v8928, %v8945
    %v8997 = vmul.f32 %v8929, %v8945
    %v8998 = vmul.f32 %v8930, %v8945
    %v8999 = vmul.f32 %v8931, %v8945
    %v9000 = vmul.f32 %v8932, %v8945
    %v9001 = vmul.f32 %v8933, %v8945
    %v9002 = vmul.f32 %v8934, %v8945
    %v9003 = vmul.f32 %v8935, %v8945
    %v9004 = vmul.f32 %v8936, %v8945
    %v9005 = vmul.f32 %v8937, %v8945
    %v9006 = vmul.f32 %v8938, %v8945
    %v9007 = vmul.f32 %v8939, %v8945
    %v9008 = vmul.f32 %v8940, %v8945
    %v9009 = vmul.f32 %v8941, %v8945
    %v9010 = vmul.f32 %v8942, %v8945
    %v9011 = vld [vmem:[%s6] sm:$0x1]
    %v9013 = vperm.slane %v9011, 0
    %v9015 = vadd.f32 %v8947, %v9013
    %v9016 = vadd.f32 %v8948, %v9013
    %v9017 = vadd.f32 %v8949, %v9013
    %v9018 = vadd.f32 %v8950, %v9013
    %v9019 = vadd.f32 %v8951, %v9013
    %v9020 = vadd.f32 %v8952, %v9013
    %v9021 = vadd.f32 %v8953, %v9013
    %v9022 = vadd.f32 %v8954, %v9013
    %v9023 = vadd.f32 %v8955, %v9013
    %v9024 = vadd.f32 %v8956, %v9013
    %v9025 = vadd.f32 %v8957, %v9013
    %v9026 = vadd.f32 %v8958, %v9013
    %v9027 = vadd.f32 %v8959, %v9013
    %v9028 = vadd.f32 %v8960, %v9013
    %v9029 = vadd.f32 %v8961, %v9013
    %v9030 = vadd.f32 %v8962, %v9013
    %v9031 = vadd.f32 %v8963, %v9013
    %v9032 = vadd.f32 %v8964, %v9013
    %v9033 = vadd.f32 %v8965, %v9013
    %v9034 = vadd.f32 %v8966, %v9013
    %v9035 = vadd.f32 %v8967, %v9013
    %v9036 = vadd.f32 %v8968, %v9013
    %v9037 = vadd.f32 %v8969, %v9013
    %v9038 = vadd.f32 %v8970, %v9013
    %v9039 = vadd.f32 %v8971, %v9013
    %v9040 = vadd.f32 %v8972, %v9013
    %v9041 = vadd.f32 %v8973, %v9013
    %v9042 = vadd.f32 %v8974, %v9013
    %v9043 = vadd.f32 %v8975, %v9013
    %v9044 = vadd.f32 %v8976, %v9013
    %v9045 = vadd.f32 %v8977, %v9013
    %v9046 = vadd.f32 %v8978, %v9013
    %v9047 = vadd.f32 %v8979, %v9013
    %v9048 = vadd.f32 %v8980, %v9013
    %v9049 = vadd.f32 %v8981, %v9013
    %v9050 = vadd.f32 %v8982, %v9013
    %v9051 = vadd.f32 %v8983, %v9013
    %v9052 = vadd.f32 %v8984, %v9013
    %v9053 = vadd.f32 %v8985, %v9013
    %v9054 = vadd.f32 %v8986, %v9013
    %v9055 = vadd.f32 %v8987, %v9013
    %v9056 = vadd.f32 %v8988, %v9013
    %v9057 = vadd.f32 %v8989, %v9013
    %v9058 = vadd.f32 %v8990, %v9013
    %v9059 = vadd.f32 %v8991, %v9013
    %v9060 = vadd.f32 %v8992, %v9013
    %v9061 = vadd.f32 %v8993, %v9013
    %v9062 = vadd.f32 %v8994, %v9013
    %v9063 = vadd.f32 %v8995, %v9013
    %v9064 = vadd.f32 %v8996, %v9013
    %v9065 = vadd.f32 %v8997, %v9013
    %v9066 = vadd.f32 %v8998, %v9013
    %v9067 = vadd.f32 %v8999, %v9013
    %v9068 = vadd.f32 %v9000, %v9013
    %v9069 = vadd.f32 %v9001, %v9013
    %v9070 = vadd.f32 %v9002, %v9013
    %v9071 = vadd.f32 %v9003, %v9013
    %v9072 = vadd.f32 %v9004, %v9013
    %v9073 = vadd.f32 %v9005, %v9013
    %v9074 = vadd.f32 %v9006, %v9013
    %v9075 = vadd.f32 %v9007, %v9013
    %v9076 = vadd.f32 %v9008, %v9013
    %v9077 = vadd.f32 %v9009, %v9013
    %v9078 = vadd.f32 %v9010, %v9013
    %v9079 = vld [vmem:[%s1447 + $0x1] sm:$0xff]
    %v9080 = vld [vmem:[%s1447 + $0x9] sm:$0xff]
    %v9081 = vld [vmem:[%s1447 + $0x19] sm:$0xff]
    %v9082 = vld [vmem:[%s1447 + $0x21] sm:$0xff]
    %v9083 = vld [vmem:[%s1447 + $0x31] sm:$0xff]
    %v9084 = vld [vmem:[%s1447 + $0x39] sm:$0xff]
    %v9085 = vld [vmem:[%s1447 + $0x49] sm:$0xff]
    %v9086 = vld [vmem:[%s1447 + $0x51] sm:$0xff]
    %v9087 = vld [vmem:[%s1447 + $0x61] sm:$0xff]
    %v9088 = vld [vmem:[%s1447 + $0x69] sm:$0xff]
    %v9089 = vld [vmem:[%s1447 + $0x79] sm:$0xff]
    %v9090 = vld [vmem:[%s1447 + $0x81] sm:$0xff]
    %v9091 = vld [vmem:[%s1447 + $0x91] sm:$0xff]
    %v9092 = vld [vmem:[%s1447 + $0x99] sm:$0xff]
    %v9093 = vld [vmem:[%s1447 + $0xa9] sm:$0xff]
    %v9094 = vld [vmem:[%s1447 + $0xb1] sm:$0xff]
    %v9095 = vld [vmem:[%s1447 + $0xc1] sm:$0xff]
    %v9096 = vld [vmem:[%s1447 + $0xc9] sm:$0xff]
    %v9097 = vld [vmem:[%s1447 + $0xd9] sm:$0xff]
    %v9098 = vld [vmem:[%s1447 + $0xe1] sm:$0xff]
    %v9099 = vld [vmem:[%s1447 + $0xf1] sm:$0xff]
    %v9100 = vld [vmem:[%s1447 + $0xf9] sm:$0xff]
    %v9101 = vld [vmem:[%s1447 + $0x109] sm:$0xff]
    %v9102 = vld [vmem:[%s1447 + $0x111] sm:$0xff]
    %v9103 = vld [vmem:[%s1447 + $0x121] sm:$0xff]
    %v9104 = vld [vmem:[%s1447 + $0x129] sm:$0xff]
    %v9105 = vld [vmem:[%s1447 + $0x139] sm:$0xff]
    %v9106 = vld [vmem:[%s1447 + $0x141] sm:$0xff]
    %v9107 = vld [vmem:[%s1447 + $0x151] sm:$0xff]
    %v9108 = vld [vmem:[%s1447 + $0x159] sm:$0xff]
    %v9109 = vld [vmem:[%s1447 + $0x169] sm:$0xff]
    %v9110 = vld [vmem:[%s1447 + $0x171] sm:$0xff]
    %v9111 = vld [vmem:[%s1447 + $0x1b1] sm:$0xff]
    %v9112 = vld [vmem:[%s1447 + $0x1b9] sm:$0xff]
    %v9113 = vld [vmem:[%s1447 + $0x1c9] sm:$0xff]
    %v9114 = vld [vmem:[%s1447 + $0x1d1] sm:$0xff]
    %v9115 = vld [vmem:[%s1447 + $0x1e1] sm:$0xff]
    %v9116 = vld [vmem:[%s1447 + $0x1e9] sm:$0xff]
    %v9117 = vld [vmem:[%s1447 + $0x1f9] sm:$0xff]
    %v9118 = vld [vmem:[%s1447 + $0x201] sm:$0xff]
    %v9119 = vld [vmem:[%s1447 + $0x211] sm:$0xff]
    %v9120 = vld [vmem:[%s1447 + $0x219] sm:$0xff]
    %v9121 = vld [vmem:[%s1447 + $0x229] sm:$0xff]
    %v9122 = vld [vmem:[%s1447 + $0x231] sm:$0xff]
    %v9123 = vld [vmem:[%s1447 + $0x241] sm:$0xff]
    %v9124 = vld [vmem:[%s1447 + $0x249] sm:$0xff]
    %v9125 = vld [vmem:[%s1447 + $0x259] sm:$0xff]
    %v9126 = vld [vmem:[%s1447 + $0x261] sm:$0xff]
    %v9127 = vld [vmem:[%s1447 + $0x271] sm:$0xff]
    %v9128 = vld [vmem:[%s1447 + $0x279] sm:$0xff]
    %v9129 = vld [vmem:[%s1447 + $0x289] sm:$0xff]
    %v9130 = vld [vmem:[%s1447 + $0x291] sm:$0xff]
    %v9131 = vld [vmem:[%s1447 + $0x2a1] sm:$0xff]
    %v9132 = vld [vmem:[%s1447 + $0x2a9] sm:$0xff]
    %v9133 = vld [vmem:[%s1447 + $0x2b9] sm:$0xff]
    %v9134 = vld [vmem:[%s1447 + $0x2c1] sm:$0xff]
    %v9135 = vld [vmem:[%s1447 + $0x2d1] sm:$0xff]
    %v9136 = vld [vmem:[%s1447 + $0x2d9] sm:$0xff]
    %v9137 = vld [vmem:[%s1447 + $0x2e9] sm:$0xff]
    %v9138 = vld [vmem:[%s1447 + $0x2f1] sm:$0xff]
    %v9139 = vld [vmem:[%s1447 + $0x301] sm:$0xff]
    %v9140 = vld [vmem:[%s1447 + $0x309] sm:$0xff]
    %v9141 = vld [vmem:[%s1447 + $0x319] sm:$0xff]
    %v9142 = vld [vmem:[%s1447 + $0x321] sm:$0xff]
    %v9143 = vld [vmem:[%s7] sm:$0xff]
    %v9144 = vld [vmem:[%s7 + $0x8] sm:$0xff]
    %v9145 = vld [vmem:[%s7 + $0x10] sm:$0xff]
    %v9146 = vld [vmem:[%s7 + $0x18] sm:$0xff]
    %v9147 = vld [vmem:[%s7 + $0x20] sm:$0xff]
    %v9148 = vld [vmem:[%s7 + $0x28] sm:$0xff]
    %v9149 = vld [vmem:[%s7 + $0x30] sm:$0xff]
    %v9150 = vld [vmem:[%s7 + $0x38] sm:$0xff]
    %v9151 = vld [vmem:[%s7 + $0x40] sm:$0xff]
    %v9152 = vld [vmem:[%s7 + $0x48] sm:$0xff]
    %v9153 = vld [vmem:[%s7 + $0x50] sm:$0xff]
    %v9154 = vld [vmem:[%s7 + $0x58] sm:$0xff]
    %v9155 = vld [vmem:[%s7 + $0x60] sm:$0xff]
    %v9156 = vld [vmem:[%s7 + $0x68] sm:$0xff]
    %v9157 = vld [vmem:[%s7 + $0x70] sm:$0xff]
    %v9158 = vld [vmem:[%s7 + $0x78] sm:$0xff]
    %9159 = vmatpush.msra.mxu0 %v9158
    %9160 = vmatpush.msra.mxu0 %v9157
    %9161 = vmatpush.msra.mxu0 %v9156
    %9162 = vmatpush.msra.mxu0 %v9155
    %9163 = vmatpush.msra.mxu0 %v9154
    %9164 = vmatpush.msra.mxu0 %v9153
    %9165 = vmatpush.msra.mxu0 %v9152
    %9166 = vmatpush.msra.mxu0 %v9151
    %9167 = vmatpush.msra.mxu0 %v9150
    %9168 = vmatpush.msra.mxu0 %v9149
    %9169 = vmatpush.msra.mxu0 %v9148
    %9170 = vmatpush.msra.mxu0 %v9147
    %9171 = vmatpush.msra.mxu0 %v9146
    %9172 = vmatpush.msra.mxu0 %v9145
    %9173 = vmatpush.msra.mxu0 %v9144
    %9174 = vmatpush.msra.mxu0 %v9143
    %9175 = vmatmul.f32.gmra.mxu0 %v9079
    %v9176 = vpop.f32.mrf.mxu0
    %v9177 = vadd.f32 0.0, %v9176
    %9178 = vmatmul.f32.gmra.mxu0 %v9080
    %v9179 = vpop.f32.mrf.mxu0
    %v9180 = vadd.f32 0.0, %v9179
    %9181 = vmatmul.f32.gmra.mxu0 %v9081
    %v9182 = vpop.f32.mrf.mxu0
    %v9183 = vadd.f32 0.0, %v9182
    %9184 = vmatmul.f32.gmra.mxu0 %v9082
    %v9185 = vpop.f32.mrf.mxu0
    %v9186 = vadd.f32 0.0, %v9185
    %9187 = vmatmul.f32.gmra.mxu0 %v9083
    %v9188 = vpop.f32.mrf.mxu0
    %v9189 = vadd.f32 0.0, %v9188
    %9190 = vmatmul.f32.gmra.mxu0 %v9084
    %v9191 = vpop.f32.mrf.mxu0
    %v9192 = vadd.f32 0.0, %v9191
    %9193 = vmatmul.f32.gmra.mxu0 %v9085
    %v9194 = vpop.f32.mrf.mxu0
    %v9195 = vadd.f32 0.0, %v9194
    %9196 = vmatmul.f32.gmra.mxu0 %v9086
    %v9197 = vpop.f32.mrf.mxu0
    %v9198 = vadd.f32 0.0, %v9197
    %9199 = vmatmul.f32.gmra.mxu0 %v9087
    %v9200 = vpop.f32.mrf.mxu0
    %v9201 = vadd.f32 0.0, %v9200
    %9202 = vmatmul.f32.gmra.mxu0 %v9088
    %v9203 = vpop.f32.mrf.mxu0
    %v9204 = vadd.f32 0.0, %v9203
    %9205 = vmatmul.f32.gmra.mxu0 %v9089
    %v9206 = vpop.f32.mrf.mxu0
    %v9207 = vadd.f32 0.0, %v9206
    %9208 = vmatmul.f32.gmra.mxu0 %v9090
    %v9209 = vpop.f32.mrf.mxu0
    %v9210 = vadd.f32 0.0, %v9209
    %9211 = vmatmul.f32.gmra.mxu0 %v9091
    %v9212 = vpop.f32.mrf.mxu0
    %v9213 = vadd.f32 0.0, %v9212
    %9214 = vmatmul.f32.gmra.mxu0 %v9092
    %v9215 = vpop.f32.mrf.mxu0
    %v9216 = vadd.f32 0.0, %v9215
    %9217 = vmatmul.f32.gmra.mxu0 %v9093
    %v9218 = vpop.f32.mrf.mxu0
    %v9219 = vadd.f32 0.0, %v9218
    %9220 = vmatmul.f32.gmra.mxu0 %v9094
    %v9221 = vpop.f32.mrf.mxu0
    %v9222 = vadd.f32 0.0, %v9221
    %9223 = vmatmul.f32.gmra.mxu0 %v9095
    %v9224 = vpop.f32.mrf.mxu0
    %v9225 = vadd.f32 0.0, %v9224
    %9226 = vmatmul.f32.gmra.mxu0 %v9096
    %v9227 = vpop.f32.mrf.mxu0
    %v9228 = vadd.f32 0.0, %v9227
    %9229 = vmatmul.f32.gmra.mxu0 %v9097
    %v9230 = vpop.f32.mrf.mxu0
    %v9231 = vadd.f32 0.0, %v9230
    %9232 = vmatmul.f32.gmra.mxu0 %v9098
    %v9233 = vpop.f32.mrf.mxu0
    %v9234 = vadd.f32 0.0, %v9233
    %9235 = vmatmul.f32.gmra.mxu0 %v9099
    %v9236 = vpop.f32.mrf.mxu0
    %v9237 = vadd.f32 0.0, %v9236
    %9238 = vmatmul.f32.gmra.mxu0 %v9100
    %v9239 = vpop.f32.mrf.mxu0
    %v9240 = vadd.f32 0.0, %v9239
    %9241 = vmatmul.f32.gmra.mxu0 %v9101
    %v9242 = vpop.f32.mrf.mxu0
    %v9243 = vadd.f32 0.0, %v9242
    %9244 = vmatmul.f32.gmra.mxu0 %v9102
    %v9245 = vpop.f32.mrf.mxu0
    %v9246 = vadd.f32 0.0, %v9245
    %9247 = vmatmul.f32.gmra.mxu0 %v9103
    %v9248 = vpop.f32.mrf.mxu0
    %v9249 = vadd.f32 0.0, %v9248
    %9250 = vmatmul.f32.gmra.mxu0 %v9104
    %v9251 = vpop.f32.mrf.mxu0
    %v9252 = vadd.f32 0.0, %v9251
    %9253 = vmatmul.f32.gmra.mxu0 %v9105
    %v9254 = vpop.f32.mrf.mxu0
    %v9255 = vadd.f32 0.0, %v9254
    %9256 = vmatmul.f32.gmra.mxu0 %v9106
    %v9257 = vpop.f32.mrf.mxu0
    %v9258 = vadd.f32 0.0, %v9257
    %9259 = vmatmul.f32.gmra.mxu0 %v9107
    %v9260 = vpop.f32.mrf.mxu0
    %v9261 = vadd.f32 0.0, %v9260
    %9262 = vmatmul.f32.gmra.mxu0 %v9108
    %v9263 = vpop.f32.mrf.mxu0
    %v9264 = vadd.f32 0.0, %v9263
    %9265 = vmatmul.f32.gmra.mxu0 %v9109
    %v9266 = vpop.f32.mrf.mxu0
    %v9267 = vadd.f32 0.0, %v9266
    %9268 = vmatmul.f32.gmra.mxu0 %v9110
    %v9269 = vpop.f32.mrf.mxu0
    %v9270 = vadd.f32 0.0, %v9269
    %9271 = vmatmul.f32.gmra.mxu0 %v9111
    %v9272 = vpop.f32.mrf.mxu0
    %v9273 = vadd.f32 0.0, %v9272
    %9274 = vmatmul.f32.gmra.mxu0 %v9112
    %v9275 = vpop.f32.mrf.mxu0
    %v9276 = vadd.f32 0.0, %v9275
    %9277 = vmatmul.f32.gmra.mxu0 %v9113
    %v9278 = vpop.f32.mrf.mxu0
    %v9279 = vadd.f32 0.0, %v9278
    %9280 = vmatmul.f32.gmra.mxu0 %v9114
    %v9281 = vpop.f32.mrf.mxu0
    %v9282 = vadd.f32 0.0, %v9281
    %9283 = vmatmul.f32.gmra.mxu0 %v9115
    %v9284 = vpop.f32.mrf.mxu0
    %v9285 = vadd.f32 0.0, %v9284
    %9286 = vmatmul.f32.gmra.mxu0 %v9116
    %v9287 = vpop.f32.mrf.mxu0
    %v9288 = vadd.f32 0.0, %v9287
    %9289 = vmatmul.f32.gmra.mxu0 %v9117
    %v9290 = vpop.f32.mrf.mxu0
    %v9291 = vadd.f32 0.0, %v9290
    %9292 = vmatmul.f32.gmra.mxu0 %v9118
    %v9293 = vpop.f32.mrf.mxu0
    %v9294 = vadd.f32 0.0, %v9293
    %9295 = vmatmul.f32.gmra.mxu0 %v9119
    %v9296 = vpop.f32.mrf.mxu0
    %v9297 = vadd.f32 0.0, %v9296
    %9298 = vmatmul.f32.gmra.mxu0 %v9120
    %v9299 = vpop.f32.mrf.mxu0
    %v9300 = vadd.f32 0.0, %v9299
    %9301 = vmatmul.f32.gmra.mxu0 %v9121
    %v9302 = vpop.f32.mrf.mxu0
    %v9303 = vadd.f32 0.0, %v9302
    %9304 = vmatmul.f32.gmra.mxu0 %v9122
    %v9305 = vpop.f32.mrf.mxu0
    %v9306 = vadd.f32 0.0, %v9305
    %9307 = vmatmul.f32.gmra.mxu0 %v9123
    %v9308 = vpop.f32.mrf.mxu0
    %v9309 = vadd.f32 0.0, %v9308
    %9310 = vmatmul.f32.gmra.mxu0 %v9124
    %v9311 = vpop.f32.mrf.mxu0
    %v9312 = vadd.f32 0.0, %v9311
    %9313 = vmatmul.f32.gmra.mxu0 %v9125
    %v9314 = vpop.f32.mrf.mxu0
    %v9315 = vadd.f32 0.0, %v9314
    %9316 = vmatmul.f32.gmra.mxu0 %v9126
    %v9317 = vpop.f32.mrf.mxu0
    %v9318 = vadd.f32 0.0, %v9317
    %9319 = vmatmul.f32.gmra.mxu0 %v9127
    %v9320 = vpop.f32.mrf.mxu0
    %v9321 = vadd.f32 0.0, %v9320
    %9322 = vmatmul.f32.gmra.mxu0 %v9128
    %v9323 = vpop.f32.mrf.mxu0
    %v9324 = vadd.f32 0.0, %v9323
    %9325 = vmatmul.f32.gmra.mxu0 %v9129
    %v9326 = vpop.f32.mrf.mxu0
    %v9327 = vadd.f32 0.0, %v9326
    %9328 = vmatmul.f32.gmra.mxu0 %v9130
    %v9329 = vpop.f32.mrf.mxu0
    %v9330 = vadd.f32 0.0, %v9329
    %9331 = vmatmul.f32.gmra.mxu0 %v9131
    %v9332 = vpop.f32.mrf.mxu0
    %v9333 = vadd.f32 0.0, %v9332
    %9334 = vmatmul.f32.gmra.mxu0 %v9132
    %v9335 = vpop.f32.mrf.mxu0
    %v9336 = vadd.f32 0.0, %v9335
    %9337 = vmatmul.f32.gmra.mxu0 %v9133
    %v9338 = vpop.f32.mrf.mxu0
    %v9339 = vadd.f32 0.0, %v9338
    %9340 = vmatmul.f32.gmra.mxu0 %v9134
    %v9341 = vpop.f32.mrf.mxu0
    %v9342 = vadd.f32 0.0, %v9341
    %9343 = vmatmul.f32.gmra.mxu0 %v9135
    %v9344 = vpop.f32.mrf.mxu0
    %v9345 = vadd.f32 0.0, %v9344
    %9346 = vmatmul.f32.gmra.mxu0 %v9136
    %v9347 = vpop.f32.mrf.mxu0
    %v9348 = vadd.f32 0.0, %v9347
    %9349 = vmatmul.f32.gmra.mxu0 %v9137
    %v9350 = vpop.f32.mrf.mxu0
    %v9351 = vadd.f32 0.0, %v9350
    %9352 = vmatmul.f32.gmra.mxu0 %v9138
    %v9353 = vpop.f32.mrf.mxu0
    %v9354 = vadd.f32 0.0, %v9353
    %9355 = vmatmul.f32.gmra.mxu0 %v9139
    %v9356 = vpop.f32.mrf.mxu0
    %v9357 = vadd.f32 0.0, %v9356
    %9358 = vmatmul.f32.gmra.mxu0 %v9140
    %v9359 = vpop.f32.mrf.mxu0
    %v9360 = vadd.f32 0.0, %v9359
    %9361 = vmatmul.f32.gmra.mxu0 %v9141
    %v9362 = vpop.f32.mrf.mxu0
    %v9363 = vadd.f32 0.0, %v9362
    %9364 = vmatmul.f32.gmra.mxu0 %v9142
    %v9365 = vpop.f32.mrf.mxu0
    %v9366 = vadd.f32 0.0, %v9365
    %9367 = vdwg.mxu0
    %v9368 = vld [vmem:[%s8] sm:$0x1]
    %v9370 = vperm.slane %v9368, 0
    %v9372 = vmul.f32 %v9177, %v9370
    %v9373 = vmul.f32 %v9180, %v9370
    %v9374 = vmul.f32 %v9183, %v9370
    %v9375 = vmul.f32 %v9186, %v9370
    %v9376 = vmul.f32 %v9189, %v9370
    %v9377 = vmul.f32 %v9192, %v9370
    %v9378 = vmul.f32 %v9195, %v9370
    %v9379 = vmul.f32 %v9198, %v9370
    %v9380 = vmul.f32 %v9201, %v9370
    %v9381 = vmul.f32 %v9204, %v9370
    %v9382 = vmul.f32 %v9207, %v9370
    %v9383 = vmul.f32 %v9210, %v9370
    %v9384 = vmul.f32 %v9213, %v9370
    %v9385 = vmul.f32 %v9216, %v9370
    %v9386 = vmul.f32 %v9219, %v9370
    %v9387 = vmul.f32 %v9222, %v9370
    %v9388 = vmul.f32 %v9225, %v9370
    %v9389 = vmul.f32 %v9228, %v9370
    %v9390 = vmul.f32 %v9231, %v9370
    %v9391 = vmul.f32 %v9234, %v9370
    %v9392 = vmul.f32 %v9237, %v9370
    %v9393 = vmul.f32 %v9240, %v9370
    %v9394 = vmul.f32 %v9243, %v9370
    %v9395 = vmul.f32 %v9246, %v9370
    %v9396 = vmul.f32 %v9249, %v9370
    %v9397 = vmul.f32 %v9252, %v9370
    %v9398 = vmul.f32 %v9255, %v9370
    %v9399 = vmul.f32 %v9258, %v9370
    %v9400 = vmul.f32 %v9261, %v9370
    %v9401 = vmul.f32 %v9264, %v9370
    %v9402 = vmul.f32 %v9267, %v9370
    %v9403 = vmul.f32 %v9270, %v9370
    %v9404 = vmul.f32 %v9273, %v9370
    %v9405 = vmul.f32 %v9276, %v9370
    %v9406 = vmul.f32 %v9279, %v9370
    %v9407 = vmul.f32 %v9282, %v9370
    %v9408 = vmul.f32 %v9285, %v9370
    %v9409 = vmul.f32 %v9288, %v9370
    %v9410 = vmul.f32 %v9291, %v9370
    %v9411 = vmul.f32 %v9294, %v9370
    %v9412 = vmul.f32 %v9297, %v9370
    %v9413 = vmul.f32 %v9300, %v9370
    %v9414 = vmul.f32 %v9303, %v9370
    %v9415 = vmul.f32 %v9306, %v9370
    %v9416 = vmul.f32 %v9309, %v9370
    %v9417 = vmul.f32 %v9312, %v9370
    %v9418 = vmul.f32 %v9315, %v9370
    %v9419 = vmul.f32 %v9318, %v9370
    %v9420 = vmul.f32 %v9321, %v9370
    %v9421 = vmul.f32 %v9324, %v9370
    %v9422 = vmul.f32 %v9327, %v9370
    %v9423 = vmul.f32 %v9330, %v9370
    %v9424 = vmul.f32 %v9333, %v9370
    %v9425 = vmul.f32 %v9336, %v9370
    %v9426 = vmul.f32 %v9339, %v9370
    %v9427 = vmul.f32 %v9342, %v9370
    %v9428 = vmul.f32 %v9345, %v9370
    %v9429 = vmul.f32 %v9348, %v9370
    %v9430 = vmul.f32 %v9351, %v9370
    %v9431 = vmul.f32 %v9354, %v9370
    %v9432 = vmul.f32 %v9357, %v9370
    %v9433 = vmul.f32 %v9360, %v9370
    %v9434 = vmul.f32 %v9363, %v9370
    %v9435 = vmul.f32 %v9366, %v9370
    %v9436 = vld [vmem:[%s9] sm:$0x1]
    %v9438 = vperm.slane %v9436, 0
    %v9440 = vadd.f32 %v9372, %v9438
    %v9441 = vadd.f32 %v9373, %v9438
    %v9442 = vadd.f32 %v9374, %v9438
    %v9443 = vadd.f32 %v9375, %v9438
    %v9444 = vadd.f32 %v9376, %v9438
    %v9445 = vadd.f32 %v9377, %v9438
    %v9446 = vadd.f32 %v9378, %v9438
    %v9447 = vadd.f32 %v9379, %v9438
    %v9448 = vadd.f32 %v9380, %v9438
    %v9449 = vadd.f32 %v9381, %v9438
    %v9450 = vadd.f32 %v9382, %v9438
    %v9451 = vadd.f32 %v9383, %v9438
    %v9452 = vadd.f32 %v9384, %v9438
    %v9453 = vadd.f32 %v9385, %v9438
    %v9454 = vadd.f32 %v9386, %v9438
    %v9455 = vadd.f32 %v9387, %v9438
    %v9456 = vadd.f32 %v9388, %v9438
    %v9457 = vadd.f32 %v9389, %v9438
    %v9458 = vadd.f32 %v9390, %v9438
    %v9459 = vadd.f32 %v9391, %v9438
    %v9460 = vadd.f32 %v9392, %v9438
    %v9461 = vadd.f32 %v9393, %v9438
    %v9462 = vadd.f32 %v9394, %v9438
    %v9463 = vadd.f32 %v9395, %v9438
    %v9464 = vadd.f32 %v9396, %v9438
    %v9465 = vadd.f32 %v9397, %v9438
    %v9466 = vadd.f32 %v9398, %v9438
    %v9467 = vadd.f32 %v9399, %v9438
    %v9468 = vadd.f32 %v9400, %v9438
    %v9469 = vadd.f32 %v9401, %v9438
    %v9470 = vadd.f32 %v9402, %v9438
    %v9471 = vadd.f32 %v9403, %v9438
    %v9472 = vadd.f32 %v9404, %v9438
    %v9473 = vadd.f32 %v9405, %v9438
    %v9474 = vadd.f32 %v9406, %v9438
    %v9475 = vadd.f32 %v9407, %v9438
    %v9476 = vadd.f32 %v9408, %v9438
    %v9477 = vadd.f32 %v9409, %v9438
    %v9478 = vadd.f32 %v9410, %v9438
    %v9479 = vadd.f32 %v9411, %v9438
    %v9480 = vadd.f32 %v9412, %v9438
    %v9481 = vadd.f32 %v9413, %v9438
    %v9482 = vadd.f32 %v9414, %v9438
    %v9483 = vadd.f32 %v9415, %v9438
    %v9484 = vadd.f32 %v9416, %v9438
    %v9485 = vadd.f32 %v9417, %v9438
    %v9486 = vadd.f32 %v9418, %v9438
    %v9487 = vadd.f32 %v9419, %v9438
    %v9488 = vadd.f32 %v9420, %v9438
    %v9489 = vadd.f32 %v9421, %v9438
    %v9490 = vadd.f32 %v9422, %v9438
    %v9491 = vadd.f32 %v9423, %v9438
    %v9492 = vadd.f32 %v9424, %v9438
    %v9493 = vadd.f32 %v9425, %v9438
    %v9494 = vadd.f32 %v9426, %v9438
    %v9495 = vadd.f32 %v9427, %v9438
    %v9496 = vadd.f32 %v9428, %v9438
    %v9497 = vadd.f32 %v9429, %v9438
    %v9498 = vadd.f32 %v9430, %v9438
    %v9499 = vadd.f32 %v9431, %v9438
    %v9500 = vadd.f32 %v9432, %v9438
    %v9501 = vadd.f32 %v9433, %v9438
    %v9502 = vadd.f32 %v9434, %v9438
    %v9503 = vadd.f32 %v9435, %v9438
    %v9504 = vadd.f32 %v9015, %v9440
    %v9505 = vadd.f32 %v9016, %v9441
    %v9506 = vadd.f32 %v9017, %v9442
    %v9507 = vadd.f32 %v9018, %v9443
    %v9508 = vadd.f32 %v9019, %v9444
    %v9509 = vadd.f32 %v9020, %v9445
    %v9510 = vadd.f32 %v9021, %v9446
    %v9511 = vadd.f32 %v9022, %v9447
    %v9512 = vadd.f32 %v9023, %v9448
    %v9513 = vadd.f32 %v9024, %v9449
    %v9514 = vadd.f32 %v9025, %v9450
    %v9515 = vadd.f32 %v9026, %v9451
    %v9516 = vadd.f32 %v9027, %v9452
    %v9517 = vadd.f32 %v9028, %v9453
    %v9518 = vadd.f32 %v9029, %v9454
    %v9519 = vadd.f32 %v9030, %v9455
    %v9520 = vadd.f32 %v9031, %v9456
    %v9521 = vadd.f32 %v9032, %v9457
    %v9522 = vadd.f32 %v9033, %v9458
    %v9523 = vadd.f32 %v9034, %v9459
    %v9524 = vadd.f32 %v9035, %v9460
    %v9525 = vadd.f32 %v9036, %v9461
    %v9526 = vadd.f32 %v9037, %v9462
    %v9527 = vadd.f32 %v9038, %v9463
    %v9528 = vadd.f32 %v9039, %v9464
    %v9529 = vadd.f32 %v9040, %v9465
    %v9530 = vadd.f32 %v9041, %v9466
    %v9531 = vadd.f32 %v9042, %v9467
    %v9532 = vadd.f32 %v9043, %v9468
    %v9533 = vadd.f32 %v9044, %v9469
    %v9534 = vadd.f32 %v9045, %v9470
    %v9535 = vadd.f32 %v9046, %v9471
    %v9536 = vadd.f32 %v9047, %v9472
    %v9537 = vadd.f32 %v9048, %v9473
    %v9538 = vadd.f32 %v9049, %v9474
    %v9539 = vadd.f32 %v9050, %v9475
    %v9540 = vadd.f32 %v9051, %v9476
    %v9541 = vadd.f32 %v9052, %v9477
    %v9542 = vadd.f32 %v9053, %v9478
    %v9543 = vadd.f32 %v9054, %v9479
    %v9544 = vadd.f32 %v9055, %v9480
    %v9545 = vadd.f32 %v9056, %v9481
    %v9546 = vadd.f32 %v9057, %v9482
    %v9547 = vadd.f32 %v9058, %v9483
    %v9548 = vadd.f32 %v9059, %v9484
    %v9549 = vadd.f32 %v9060, %v9485
    %v9550 = vadd.f32 %v9061, %v9486
    %v9551 = vadd.f32 %v9062, %v9487
    %v9552 = vadd.f32 %v9063, %v9488
    %v9553 = vadd.f32 %v9064, %v9489
    %v9554 = vadd.f32 %v9065, %v9490
    %v9555 = vadd.f32 %v9066, %v9491
    %v9556 = vadd.f32 %v9067, %v9492
    %v9557 = vadd.f32 %v9068, %v9493
    %v9558 = vadd.f32 %v9069, %v9494
    %v9559 = vadd.f32 %v9070, %v9495
    %v9560 = vadd.f32 %v9071, %v9496
    %v9561 = vadd.f32 %v9072, %v9497
    %v9562 = vadd.f32 %v9073, %v9498
    %v9563 = vadd.f32 %v9074, %v9499
    %v9564 = vadd.f32 %v9075, %v9500
    %v9565 = vadd.f32 %v9076, %v9501
    %v9566 = vadd.f32 %v9077, %v9502
    %v9567 = vadd.f32 %v9078, %v9503
    %v9568 = vmax.f32 %v9504, 0.0
    %v9569 = vmax.f32 %v9505, 0.0
    %v9570 = vmax.f32 %v9506, 0.0
    %v9571 = vmax.f32 %v9507, 0.0
    %v9572 = vmax.f32 %v9508, 0.0
    %v9573 = vmax.f32 %v9509, 0.0
    %v9574 = vmax.f32 %v9510, 0.0
    %v9575 = vmax.f32 %v9511, 0.0
    %v9576 = vmax.f32 %v9512, 0.0
    %v9577 = vmax.f32 %v9513, 0.0
    %v9578 = vmax.f32 %v9514, 0.0
    %v9579 = vmax.f32 %v9515, 0.0
    %v9580 = vmax.f32 %v9516, 0.0
    %v9581 = vmax.f32 %v9517, 0.0
    %v9582 = vmax.f32 %v9518, 0.0
    %v9583 = vmax.f32 %v9519, 0.0
    %v9584 = vmax.f32 %v9520, 0.0
    %v9585 = vmax.f32 %v9521, 0.0
    %v9586 = vmax.f32 %v9522, 0.0
    %v9587 = vmax.f32 %v9523, 0.0
    %v9588 = vmax.f32 %v9524, 0.0
    %v9589 = vmax.f32 %v9525, 0.0
    %v9590 = vmax.f32 %v9526, 0.0
    %v9591 = vmax.f32 %v9527, 0.0
    %v9592 = vmax.f32 %v9528, 0.0
    %v9593 = vmax.f32 %v9529, 0.0
    %v9594 = vmax.f32 %v9530, 0.0
    %v9595 = vmax.f32 %v9531, 0.0
    %v9596 = vmax.f32 %v9532, 0.0
    %v9597 = vmax.f32 %v9533, 0.0
    %v9598 = vmax.f32 %v9534, 0.0
    %v9599 = vmax.f32 %v9535, 0.0
    %v9600 = vmax.f32 %v9536, 0.0
    %v9601 = vmax.f32 %v9537, 0.0
    %v9602 = vmax.f32 %v9538, 0.0
    %v9603 = vmax.f32 %v9539, 0.0
    %v9604 = vmax.f32 %v9540, 0.0
    %v9605 = vmax.f32 %v9541, 0.0
    %v9606 = vmax.f32 %v9542, 0.0
    %v9607 = vmax.f32 %v9543, 0.0
    %v9608 = vmax.f32 %v9544, 0.0
    %v9609 = vmax.f32 %v9545, 0.0
    %v9610 = vmax.f32 %v9546, 0.0
    %v9611 = vmax.f32 %v9547, 0.0
    %v9612 = vmax.f32 %v9548, 0.0
    %v9613 = vmax.f32 %v9549, 0.0
    %v9614 = vmax.f32 %v9550, 0.0
    %v9615 = vmax.f32 %v9551, 0.0
    %v9616 = vmax.f32 %v9552, 0.0
    %v9617 = vmax.f32 %v9553, 0.0
    %v9618 = vmax.f32 %v9554, 0.0
    %v9619 = vmax.f32 %v9555, 0.0
    %v9620 = vmax.f32 %v9556, 0.0
    %v9621 = vmax.f32 %v9557, 0.0
    %v9622 = vmax.f32 %v9558, 0.0
    %v9623 = vmax.f32 %v9559, 0.0
    %v9624 = vmax.f32 %v9560, 0.0
    %v9625 = vmax.f32 %v9561, 0.0
    %v9626 = vmax.f32 %v9562, 0.0
    %v9627 = vmax.f32 %v9563, 0.0
    %v9628 = vmax.f32 %v9564, 0.0
    %v9629 = vmax.f32 %v9565, 0.0
    %v9630 = vmax.f32 %v9566, 0.0
    %v9631 = vmax.f32 %v9567, 0.0
    %9632 = vst [vmem:[#allocation7] sm:$0xff] %v9568
    %9633 = vst [vmem:[#allocation7 + $0x8] sm:$0xff] %v9569
    %9634 = vst [vmem:[#allocation7 + $0x10] sm:$0xff] %v9570
    %9635 = vst [vmem:[#allocation7 + $0x18] sm:$0xff] %v9571
    %9636 = vst [vmem:[#allocation7 + $0x20] sm:$0xff] %v9572
    %9637 = vst [vmem:[#allocation7 + $0x28] sm:$0xff] %v9573
    %9638 = vst [vmem:[#allocation7 + $0x30] sm:$0xff] %v9574
    %9639 = vst [vmem:[#allocation7 + $0x38] sm:$0xff] %v9575
    %9640 = vst [vmem:[#allocation7 + $0x40] sm:$0xff] %v9576
    %9641 = vst [vmem:[#allocation7 + $0x48] sm:$0xff] %v9577
    %9642 = vst [vmem:[#allocation7 + $0x50] sm:$0xff] %v9578
    %9643 = vst [vmem:[#allocation7 + $0x58] sm:$0xff] %v9579
    %9644 = vst [vmem:[#allocation7 + $0x60] sm:$0xff] %v9580
    %9645 = vst [vmem:[#allocation7 + $0x68] sm:$0xff] %v9581
    %9646 = vst [vmem:[#allocation7 + $0x70] sm:$0xff] %v9582
    %9647 = vst [vmem:[#allocation7 + $0x78] sm:$0xff] %v9583
    %9648 = vst [vmem:[#allocation7 + $0x80] sm:$0xff] %v9584
    %9649 = vst [vmem:[#allocation7 + $0x88] sm:$0xff] %v9585
    %9650 = vst [vmem:[#allocation7 + $0x90] sm:$0xff] %v9586
    %9651 = vst [vmem:[#allocation7 + $0x98] sm:$0xff] %v9587
    %9652 = vst [vmem:[#allocation7 + $0xa0] sm:$0xff] %v9588
    %9653 = vst [vmem:[#allocation7 + $0xa8] sm:$0xff] %v9589
    %9654 = vst [vmem:[#allocation7 + $0xb0] sm:$0xff] %v9590
    %9655 = vst [vmem:[#allocation7 + $0xb8] sm:$0xff] %v9591
    %9656 = vst [vmem:[#allocation7 + $0xc0] sm:$0xff] %v9592
    %9657 = vst [vmem:[#allocation7 + $0xc8] sm:$0xff] %v9593
    %9658 = vst [vmem:[#allocation7 + $0xd0] sm:$0xff] %v9594
    %9659 = vst [vmem:[#allocation7 + $0xd8] sm:$0xff] %v9595
    %9660 = vst [vmem:[#allocation7 + $0xe0] sm:$0xff] %v9596
    %9661 = vst [vmem:[#allocation7 + $0xe8] sm:$0xff] %v9597
    %9662 = vst [vmem:[#allocation7 + $0xf0] sm:$0xff] %v9598
    %9663 = vst [vmem:[#allocation7 + $0xf8] sm:$0xff] %v9599
    %9664 = vst [vmem:[#allocation7 + $0x100] sm:$0xff] %v9600
    %9665 = vst [vmem:[#allocation7 + $0x108] sm:$0xff] %v9601
    %9666 = vst [vmem:[#allocation7 + $0x110] sm:$0xff] %v9602
    %9667 = vst [vmem:[#allocation7 + $0x118] sm:$0xff] %v9603
    %9668 = vst [vmem:[#allocation7 + $0x120] sm:$0xff] %v9604
    %9669 = vst [vmem:[#allocation7 + $0x128] sm:$0xff] %v9605
    %9670 = vst [vmem:[#allocation7 + $0x130] sm:$0xff] %v9606
    %9671 = vst [vmem:[#allocation7 + $0x138] sm:$0xff] %v9607
    %9672 = vst [vmem:[#allocation7 + $0x140] sm:$0xff] %v9608
    %9673 = vst [vmem:[#allocation7 + $0x148] sm:$0xff] %v9609
    %9674 = vst [vmem:[#allocation7 + $0x150] sm:$0xff] %v9610
    %9675 = vst [vmem:[#allocation7 + $0x158] sm:$0xff] %v9611
    %9676 = vst [vmem:[#allocation7 + $0x160] sm:$0xff] %v9612
    %9677 = vst [vmem:[#allocation7 + $0x168] sm:$0xff] %v9613
    %9678 = vst [vmem:[#allocation7 + $0x170] sm:$0xff] %v9614
    %9679 = vst [vmem:[#allocation7 + $0x178] sm:$0xff] %v9615
    %9680 = vst [vmem:[#allocation7 + $0x180] sm:$0xff] %v9616
    %9681 = vst [vmem:[#allocation7 + $0x188] sm:$0xff] %v9617
    %9682 = vst [vmem:[#allocation7 + $0x190] sm:$0xff] %v9618
    %9683 = vst [vmem:[#allocation7 + $0x198] sm:$0xff] %v9619
    %9684 = vst [vmem:[#allocation7 + $0x1a0] sm:$0xff] %v9620
    %9685 = vst [vmem:[#allocation7 + $0x1a8] sm:$0xff] %v9621
    %9686 = vst [vmem:[#allocation7 + $0x1b0] sm:$0xff] %v9622
    %9687 = vst [vmem:[#allocation7 + $0x1b8] sm:$0xff] %v9623
    %9688 = vst [vmem:[#allocation7 + $0x1c0] sm:$0xff] %v9624
    %9689 = vst [vmem:[#allocation7 + $0x1c8] sm:$0xff] %v9625
    %9690 = vst [vmem:[#allocation7 + $0x1d0] sm:$0xff] %v9626
    %9691 = vst [vmem:[#allocation7 + $0x1d8] sm:$0xff] %v9627
    %9692 = vst [vmem:[#allocation7 + $0x1e0] sm:$0xff] %v9628
    %9693 = vst [vmem:[#allocation7 + $0x1e8] sm:$0xff] %v9629
    %9694 = vst [vmem:[#allocation7 + $0x1f0] sm:$0xff] %v9630
    %9695 = vst [vmem:[#allocation7 + $0x1f8] sm:$0xff] %v9631
    // Predicated region
    $region46: #{tpu_custom_call.1} parent=1 // pred_check
      _
    $region47: #{tpu_custom_call.1} parent=1 // pred_check_branch
      %9697 = sbr.rel (0) target = $region49
    $region48: #{tpu_custom_call.1} parent=1 // pred_region
      %9699 = vsyncadd [#allocation6], 0
      %s9700 = sshll.u32 [#allocation7], 4
      %s9701 = int_to_ptr.vmem [resolvable:$true] %s9700
      %s9702 = sshll.u32 %s10, 4
      %s9703 = int_to_ptr.hbm [resolvable:$true] %s9702
      %9708 = dma.vmem_to_hbm [thread:$0]  %s9701, 8192, %s9703, [#allocation6], 128, 128, 8
    $region49: #{tpu_custom_call.1} parent=1 // pred_fallthru
      _
    // Predicated region
    $region50: #{tpu_custom_call.1} parent=1 // pred_check
      _
    $region51: #{tpu_custom_call.1} parent=1 // pred_check_branch
      %9710 = sbr.rel (0) target = $region53
    $region52: #{tpu_custom_call.1} parent=1 // pred_region
      %9712 = dma.done [#allocation6], 8192
    $region53: #{tpu_custom_call.1} parent=1 // pred_fallthru
      _
    %9713 = vsyncpa [#allocation5], 1
    %9714 = vsyncpa [#allocation6], 1

</llo_original>
